<compile_context>
chip_gen: v5e
topology: v5e:2x2
jax: 0.10.0
libtpu: 0.0.40
codegen_flags: <defaults>
</compile_context>

<pallas_src>
import functools

import numpy as np
import jax
import jax.numpy as jnp
from jax import lax
from jax.experimental import pallas as pl
from jax.experimental.pallas import tpu as pltpu

NEG_SLOPE = 0.01   # F.leaky_relu default negative_slope

_LAYER_ORDER = ["conv_0", "conv_1", "conv_t_2", "conv_3", "conv_4",
                "conv_5", "conv_t_0", "conv_t_1", "final"]


def _layer_real_channels(in_channels):
    """Real (cin, cout) per layer, in forward order."""
    return ((in_channels, 16), (16, 16), (16, 8), (8, 8), (8, 4),
            (4, 4), (4, 8), (8, 16), (16, 1))


def _pad8(c):
    """Channel-padding tier: 8 for narrow layers, 16 otherwise (sublane = 8)."""
    assert c <= 16, "ShallowNetwork kernel packs channels into a 16-wide slab"
    return 8 if c <= 8 else 16


def _layer_tiers(in_channels):
    return tuple((_pad8(ci), _pad8(co))
                 for ci, co in _layer_real_channels(in_channels))


def _build_masks(H, W, BT):
    """(8, 16, BT*H*W) f32 border-validity masks, one per non-center 3x3 tap,
    ordered (dh, dw) = (-1,-1),(-1,0),(-1,1),(0,-1),(0,1),(1,-1),(1,0),(1,1).
    Batch is folded onto the lane axis, hence row = (lane // W) % H: the masks
    also zero any lane whose rolled read would cross an image boundary."""
    HW = H * W
    lane = np.arange(BT * HW, dtype=np.int64)
    col = lane % W
    row = (lane // W) % H
    masks = []
    for dh in (-1, 0, 1):
        for dw in (-1, 0, 1):
            if dh == 0 and dw == 0:
                continue
            ok = ((row + dh >= 0) & (row + dh < H) &
                  (col + dw >= 0) & (col + dw < W))
            masks.append(ok.astype(np.float32))
    m = np.stack(masks)                                   # (8, BT*HW)
    # Materialized at full channel height so every in-kernel use is a plain
    # elementwise multiply (no un-CSE'd broadcast_in_dim per tap per layer).
    return np.ascontiguousarray(np.broadcast_to(m[:, None, :], (8, 16, BT * HW)))


# ----------------------------------------------------------------------------
# Fused Pallas kernel: the entire 9-layer forward pass for BT images
# ----------------------------------------------------------------------------
def _fused_forward_kernel(x_ref, w_ref, b_ref, m_ref, o_ref, patch_ref,
                          *, W, L, tiers):
    """Channel-major layout, BT*H*W (= L) on the lane axis.

    x_ref:     (1, cin0_pad, L)  padded input activations for this block
    w_ref:     (9, 16, 144)      per-layer weights packed as (cout_pad, 9*cin_pad)
    b_ref:     (9, 16, 1)        per-layer biases (zero-padded)
    m_ref:     (8, 16, L)        per-tap SAME-padding / image-boundary masks
    o_ref:     (1, 1, L)         output (single real channel)
    patch_ref: (144, L) VMEM     reused im2col patch scratch
    """

    def lrelu(t):
        return jnp.where(t >= 0, t, NEG_SLOPE * t)

    def conv(act, li):
        cin_pad, cout_pad = tiers[li]
        K = 9 * cin_pad
        # Build the im2col patch (K, L) with 9 lane-rolls + masks, stored
        # lane-dense into the reused VMEM scratch, then one MXU matmul.
        t = 0
        mi = 0
        for dh in (-1, 0, 1):
            for dw in (-1, 0, 1):
                lo = t * cin_pad
                if dh == 0 and dw == 0:
                    patch_ref[lo:lo + cin_pad, :] = act
                else:
                    shift = (-(dh * W + dw)) % L
                    shifted = pltpu.roll(act, shift=shift, axis=1)
                    patch_ref[lo:lo + cin_pad, :] = (
                        shifted * m_ref[mi, :cin_pad, :])
                    mi += 1
                t += 1
        y = jnp.dot(w_ref[li, :cout_pad, :K], patch_ref[:K, :],
                    preferred_element_type=jnp.float32,
                    precision=lax.Precision.HIGHEST)
        # One (cout_pad,1)->(cout_pad,L) bias broadcast per layer (9 total).
        return y + b_ref[li, :cout_pad]

    act0 = x_ref[0]                            # (cin0_pad, L)

    # Exact ShallowNetwork.forward sequence (residual placement preserved).
    out = lrelu(conv(act0, 0))                 # conv_0
    temp = out
    out = lrelu(conv(out, 1) + temp)           # conv_1 + temp, then lrelu
    out = lrelu(conv(out, 2))                  # conv_t_2 (a Conv2d in the module)
    temp = out
    out = lrelu(conv(out, 3)) + temp           # lrelu(conv_3) + temp
    out = lrelu(conv(out, 4))                  # conv_4
    temp = out
    out = lrelu(conv(out, 5) + temp)           # conv_5 + temp, then lrelu
    out = lrelu(conv(out, 6))                  # conv_t_0 (ConvTranspose2d)
    out = lrelu(conv(out, 7))                  # conv_t_1 (ConvTranspose2d)
    out = conv(out, 8)                         # final (no activation)

    o_ref[0] = out[0:1, :]                     # only real output channel 0


@jax.jit
def shallow_network_forward(x_nchw, w_all, b_all):
    """x_nchw: (N, Cin, H, W) f32.  w_all: (9, 16, 144).  b_all: (9, 16, 1).
    Returns (N, 1, H, W) f32."""
    N, C, H, W = x_nchw.shape
    HW = H * W
    tiers = _layer_tiers(C)
    cin0_pad = tiers[0][0]

    # Batch blocking: keep >= 2 grid steps (both v7x TensorCores get work via
    # dimension_semantics=("parallel",)); BT images per step amortizes the
    # fixed per-step overhead on every generation.
    nblk = 2 if N >= 2 else 1
    bt = pl.cdiv(N, nblk)
    n_pad = nblk * bt
    L = bt * HW

    x = x_nchw.reshape(N, C, HW)
    if C < cin0_pad:
        x = jnp.pad(x, ((0, 0), (0, cin0_pad - C), (0, 0)))
    if n_pad > N:
        x = jnp.pad(x, ((0, n_pad - N), (0, 0), (0, 0)))
    # (n_pad, cin0_pad, HW) -> (nblk, cin0_pad, BT*HW): batch folded onto lanes.
    x = (x.reshape(nblk, bt, cin0_pad, HW)
           .transpose(0, 2, 1, 3)
           .reshape(nblk, cin0_pad, L))

    masks = jnp.asarray(_build_masks(H, W, bt))        # compile-time constant

    kernel = functools.partial(_fused_forward_kernel, W=W, L=L, tiers=tiers)
    out = pl.pallas_call(
        kernel,
        out_shape=jax.ShapeDtypeStruct((nblk, 1, L), jnp.float32),
        grid=(nblk,),
        in_specs=[
            pl.BlockSpec((1, cin0_pad, L), lambda g: (g, 0, 0)),     # x
            pl.BlockSpec((9, 16, 144), lambda g: (0, 0, 0)),         # weights
            pl.BlockSpec((9, 16, 1), lambda g: (0, 0, 0)),           # biases
            pl.BlockSpec((8, 16, L), lambda g: (0, 0, 0)),           # masks
        ],
        out_specs=pl.BlockSpec((1, 1, L), lambda g: (g, 0, 0)),
        scratch_shapes=[pltpu.VMEM((144, L), jnp.float32)],          # im2col patch
        compiler_params=pltpu.CompilerParams(
            dimension_semantics=("parallel",)),        # megacore-sharded on v7x
    )(x, w_all, b_all, masks)

    out = out.reshape(n_pad, 1, H, W)
    return out[:N]


# ----------------------------------------------------------------------------
# Parameter construction (deterministic, PyTorch-shaped, then converted)
# ----------------------------------------------------------------------------
def _init_conv(key, cin, cout, k=3):
    """nn.Conv2d-style params: weight (Cout, Cin, k, k), bias (Cout,)."""
    kw, kb = jax.random.split(key)
    bound = 1.0 / float(np.sqrt(cin * k * k))
    w = jax.random.uniform(kw, (cout, cin, k, k), jnp.float32, -bound, bound)
    b = jax.random.uniform(kb, (cout,), jnp.float32, -bound, bound)
    return w, b


def _init_conv_t(key, cin, cout, k=3):
    """nn.ConvTranspose2d-style params: weight (Cin, Cout, k, k), bias (Cout,)."""
    kw, kb = jax.random.split(key)
    bound = 1.0 / float(np.sqrt(cin * k * k))
    w = jax.random.uniform(kw, (cin, cout, k, k), jnp.float32, -bound, bound)
    b = jax.random.uniform(kb, (cout,), jnp.float32, -bound, bound)
    return w, b


def _conv_oihw_to_hwio(w):
    # Conv2d weight (Cout, Cin, kH, kW) -> (kH, kW, Cin, Cout)
    return jnp.transpose(w, (2, 3, 1, 0))


def _convt_iohw_to_hwio(w):
    # ConvTranspose2d (stride=1, pad=1, k=3) == Conv2d with spatially flipped
    # kernel and in/out channels swapped, pad = k-1-p = 1 ("same").
    return jnp.transpose(w[:, :, ::-1, ::-1], (2, 3, 0, 1))


def make_params(key, in_channels):
    keys = jax.random.split(key, 9)
    raw = {
        "conv_0":   _init_conv(keys[0], in_channels, 16),
        "conv_1":   _init_conv(keys[1], 16, 16),
        "conv_t_2": _init_conv(keys[2], 16, 8),    # a Conv2d despite its name
        "conv_3":   _init_conv(keys[3], 8, 8),
        "conv_4":   _init_conv(keys[4], 8, 4),
        "conv_5":   _init_conv(keys[5], 4, 4),
        "conv_t_0": _init_conv_t(keys[6], 4, 8),   # ConvTranspose2d
        "conv_t_1": _init_conv_t(keys[7], 8, 16),  # ConvTranspose2d
        "final":    _init_conv(keys[8], 16, 1),
    }
    params = {}
    for name, (w, b) in raw.items():
        if name in ("conv_t_0", "conv_t_1"):
            params[name] = (_convt_iohw_to_hwio(w), b)
        else:
            params[name] = (_conv_oihw_to_hwio(w), b)
    return params


def pack_params(params):
    """HWIO per-layer weights -> one (9, 16, 144) slab of matmul-form weights.

    Layer li occupies w_all[li, :cout_pad, :9*cin_pad] with column index
    (kh*3 + kw)*cin_pad + cin, matching the in-kernel patch row order for that
    layer's channel tier.  Padded rows/columns/biases are zero, so padded
    channels stay exactly zero through the whole network."""
    w_all = jnp.zeros((9, 16, 144), jnp.float32)
    b_all = jnp.zeros((9, 16, 1), jnp.float32)
    for li, name in enumerate(_LAYER_ORDER):
        w_hwio, b = params[name]                  # (3, 3, cin, cout)
        _, _, cin, cout = w_hwio.shape
        cin_pad, cout_pad = _pad8(cin), _pad8(cout)
        w_p = jnp.zeros((3, 3, cin_pad, cout_pad), jnp.float32)
        w_p = w_p.at[:, :, :cin, :cout].set(w_hwio)
        w_mat = jnp.transpose(w_p, (3, 0, 1, 2)).reshape(cout_pad, 9 * cin_pad)
        w_all = w_all.at[li, :cout_pad, :9 * cin_pad].set(w_mat)
        b_all = b_all.at[li, :cout, 0].set(b)
    return w_all, b_all


# ----------------------------------------------------------------------------
# Pure-JAX reference (correctness check only)
# ----------------------------------------------------------------------------
def _ref_conv(x, w, b):
    y = lax.conv_general_dilated(x, w, window_strides=(1, 1), padding="SAME",
                                 dimension_numbers=("NHWC", "HWIO", "NHWC"))
    return y + b[None, None, None, :]


def reference_forward(x_nchw, params):
    lrelu = lambda t: jnp.where(t >= 0, t, NEG_SLOPE * t)
    x = jnp.transpose(x_nchw, (0, 2, 3, 1))
    out = lrelu(_ref_conv(x, *params["conv_0"]))
    temp = out
    out = lrelu(_ref_conv(out, *params["conv_1"]) + temp)
    out = lrelu(_ref_conv(out, *params["conv_t_2"]))
    temp = out
    out = lrelu(_ref_conv(out, *params["conv_3"])) + temp
    out = lrelu(_ref_conv(out, *params["conv_4"]))
    temp = out
    out = lrelu(_ref_conv(out, *params["conv_5"]) + temp)
    out = lrelu(_ref_conv(out, *params["conv_t_0"]))
    out = lrelu(_ref_conv(out, *params["conv_t_1"]))
    out = _ref_conv(out, *params["final"])
    return jnp.transpose(out, (0, 3, 1, 2))


# ----------------------------------------------------------------------------
if __name__ == "__main__":
    input_shape = (2, 4, 16, 16)  # NCHW, matches ShallowNetwork(input_shape)
    key = jax.random.PRNGKey(0)
    k_x, k_p = jax.random.split(key)

    x = jax.random.normal(k_x, input_shape, dtype=jnp.float32)
    params = make_params(k_p, in_channels=input_shape[1])
    w_all, b_all = pack_params(params)

    out = shallow_network_forward(x, w_all, b_all)
    out = jax.block_until_ready(out)
    assert out.shape == (input_shape[0], 1, input_shape[2], input_shape[3]), out.shape

    ref = reference_forward(x, params)
    assert jnp.allclose(out, ref, atol=1e-4, rtol=1e-4), \
        f"max abs diff {jnp.max(jnp.abs(out - ref))}"

    print("KERNEL_OK")
</pallas_src>

<mosaic_0001>
module attributes {stable_mosaic.version = 11 : i64} {
  func.func @_fused_forward_kernel(%arg0: i32, %arg1: memref<1x8x256xf32, #tpu.memory_space<vmem>>, %arg2: memref<9x16x144xf32, #tpu.memory_space<vmem>>, %arg3: memref<9x16x1xf32, #tpu.memory_space<vmem>>, %arg4: memref<8x16x256xf32, #tpu.memory_space<vmem>>, %arg5: memref<1x1x256xf32, #tpu.memory_space<vmem>>, %arg6: memref<144x256xf32, #tpu.memory_space<vmem>>) attributes {dimension_semantics = [#tpu.dimension_semantics<parallel>], iteration_bounds = array<i64: 2>, scalar_prefetch = 0 : i64, scratch_operands = 1 : i64, tpu.core_type = #tpu.core_type<tc>, window_params = [{transform_indices = @transform_0, window_bounds = array<i64: 1, 8, 256>}, {pipeline_mode = #tpu.pipeline_mode<synchronous>, transform_indices = @transform_1, window_bounds = array<i64: 9, 16, 144>}, {pipeline_mode = #tpu.pipeline_mode<synchronous>, transform_indices = @transform_2, window_bounds = array<i64: 9, 16, 1>}, {pipeline_mode = #tpu.pipeline_mode<synchronous>, transform_indices = @transform_3, window_bounds = array<i64: 8, 16, 256>}, {transform_indices = @transform_4, window_bounds = array<i64: 1, 1, 256>}]} {
    %c0 = arith.constant 0 : index
    %c0_0 = arith.constant 0 : index
    %c0_1 = arith.constant 0 : index
    %0 = vector.load %arg1[%c0, %c0_0, %c0_1] : memref<1x8x256xf32, #tpu.memory_space<vmem>>, vector<1x8x256xf32>
    %1 = vector.shape_cast %0 : vector<1x8x256xf32> to vector<8x256xf32>
    %c17_i32 = arith.constant 17 : i32
    %2 = tpu.dynamic_rotate %1 by %c17_i32 dim 1 : vector<8x256xf32>, i32 -> vector<8x256xf32>
    %c0_2 = arith.constant 0 : index
    %c0_3 = arith.constant 0 : index
    %c0_4 = arith.constant 0 : index
    %3 = vector.load %arg4[%c0_2, %c0_3, %c0_4] : memref<8x16x256xf32, #tpu.memory_space<vmem>>, vector<1x8x256xf32>
    %4 = vector.shape_cast %3 : vector<1x8x256xf32> to vector<8x256xf32>
    %5 = arith.mulf %2, %4 : vector<8x256xf32>
    %c0_5 = arith.constant 0 : index
    %c0_6 = arith.constant 0 : index
    %6 = vector.load %arg6[%c0_5, %c0_6] : memref<144x256xf32, #tpu.memory_space<vmem>>, vector<8x256xf32>
    tpu.vector_store %arg6[%c0_5, %c0_6], %5 {strides = array<i32>} : memref<144x256xf32, #tpu.memory_space<vmem>>, vector<8x256xf32>,
    %c16_i32 = arith.constant 16 : i32
    %7 = tpu.dynamic_rotate %1 by %c16_i32 dim 1 : vector<8x256xf32>, i32 -> vector<8x256xf32>
    %c1 = arith.constant 1 : index
    %c0_7 = arith.constant 0 : index
    %c0_8 = arith.constant 0 : index
    %8 = vector.load %arg4[%c1, %c0_7, %c0_8] : memref<8x16x256xf32, #tpu.memory_space<vmem>>, vector<1x8x256xf32>
    %9 = vector.shape_cast %8 : vector<1x8x256xf32> to vector<8x256xf32>
    %10 = arith.mulf %7, %9 : vector<8x256xf32>
    %c8 = arith.constant 8 : index
    %c0_9 = arith.constant 0 : index
    %11 = vector.load %arg6[%c8, %c0_9] : memref<144x256xf32, #tpu.memory_space<vmem>>, vector<8x256xf32>
    tpu.vector_store %arg6[%c8, %c0_9], %10 {strides = array<i32>} : memref<144x256xf32, #tpu.memory_space<vmem>>, vector<8x256xf32>,
    %c15_i32 = arith.constant 15 : i32
    %12 = tpu.dynamic_rotate %1 by %c15_i32 dim 1 : vector<8x256xf32>, i32 -> vector<8x256xf32>
    %c2 = arith.constant 2 : index
    %c0_10 = arith.constant 0 : index
    %c0_11 = arith.constant 0 : index
    %13 = vector.load %arg4[%c2, %c0_10, %c0_11] : memref<8x16x256xf32, #tpu.memory_space<vmem>>, vector<1x8x256xf32>
    %14 = vector.shape_cast %13 : vector<1x8x256xf32> to vector<8x256xf32>
    %15 = arith.mulf %12, %14 : vector<8x256xf32>
    %c16 = arith.constant 16 : index
    %c0_12 = arith.constant 0 : index
    %16 = vector.load %arg6[%c16, %c0_12] : memref<144x256xf32, #tpu.memory_space<vmem>>, vector<8x256xf32>
    tpu.vector_store %arg6[%c16, %c0_12], %15 {strides = array<i32>} : memref<144x256xf32, #tpu.memory_space<vmem>>, vector<8x256xf32>,
    %c1_i32 = arith.constant 1 : i32
    %17 = tpu.dynamic_rotate %1 by %c1_i32 dim 1 : vector<8x256xf32>, i32 -> vector<8x256xf32>
    %c3 = arith.constant 3 : index
    %c0_13 = arith.constant 0 : index
    %c0_14 = arith.constant 0 : index
    %18 = vector.load %arg4[%c3, %c0_13, %c0_14] : memref<8x16x256xf32, #tpu.memory_space<vmem>>, vector<1x8x256xf32>
    %19 = vector.shape_cast %18 : vector<1x8x256xf32> to vector<8x256xf32>
    %20 = arith.mulf %17, %19 : vector<8x256xf32>
    %c24 = arith.constant 24 : index
    %c0_15 = arith.constant 0 : index
    %21 = vector.load %arg6[%c24, %c0_15] : memref<144x256xf32, #tpu.memory_space<vmem>>, vector<8x256xf32>
    tpu.vector_store %arg6[%c24, %c0_15], %20 {strides = array<i32>} : memref<144x256xf32, #tpu.memory_space<vmem>>, vector<8x256xf32>,
    %c32 = arith.constant 32 : index
    %c0_16 = arith.constant 0 : index
    %22 = vector.load %arg6[%c32, %c0_16] : memref<144x256xf32, #tpu.memory_space<vmem>>, vector<8x256xf32>
    tpu.vector_store %arg6[%c32, %c0_16], %1 {strides = array<i32>} : memref<144x256xf32, #tpu.memory_space<vmem>>, vector<8x256xf32>,
    %c255_i32 = arith.constant 255 : i32
    %23 = tpu.dynamic_rotate %1 by %c255_i32 dim 1 : vector<8x256xf32>, i32 -> vector<8x256xf32>
    %c4 = arith.constant 4 : index
    %c0_17 = arith.constant 0 : index
    %c0_18 = arith.constant 0 : index
    %24 = vector.load %arg4[%c4, %c0_17, %c0_18] : memref<8x16x256xf32, #tpu.memory_space<vmem>>, vector<1x8x256xf32>
    %25 = vector.shape_cast %24 : vector<1x8x256xf32> to vector<8x256xf32>
    %26 = arith.mulf %23, %25 : vector<8x256xf32>
    %c40 = arith.constant 40 : index
    %c0_19 = arith.constant 0 : index
    %27 = vector.load %arg6[%c40, %c0_19] : memref<144x256xf32, #tpu.memory_space<vmem>>, vector<8x256xf32>
    tpu.vector_store %arg6[%c40, %c0_19], %26 {strides = array<i32>} : memref<144x256xf32, #tpu.memory_space<vmem>>, vector<8x256xf32>,
    %c241_i32 = arith.constant 241 : i32
    %28 = tpu.dynamic_rotate %1 by %c241_i32 dim 1 : vector<8x256xf32>, i32 -> vector<8x256xf32>
    %c5 = arith.constant 5 : index
    %c0_20 = arith.constant 0 : index
    %c0_21 = arith.constant 0 : index
    %29 = vector.load %arg4[%c5, %c0_20, %c0_21] : memref<8x16x256xf32, #tpu.memory_space<vmem>>, vector<1x8x256xf32>
    %30 = vector.shape_cast %29 : vector<1x8x256xf32> to vector<8x256xf32>
    %31 = arith.mulf %28, %30 : vector<8x256xf32>
    %c48 = arith.constant 48 : index
    %c0_22 = arith.constant 0 : index
    %32 = vector.load %arg6[%c48, %c0_22] : memref<144x256xf32, #tpu.memory_space<vmem>>, vector<8x256xf32>
    tpu.vector_store %arg6[%c48, %c0_22], %31 {strides = array<i32>} : memref<144x256xf32, #tpu.memory_space<vmem>>, vector<8x256xf32>,
    %c240_i32 = arith.constant 240 : i32
    %33 = tpu.dynamic_rotate %1 by %c240_i32 dim 1 : vector<8x256xf32>, i32 -> vector<8x256xf32>
    %c6 = arith.constant 6 : index
    %c0_23 = arith.constant 0 : index
    %c0_24 = arith.constant 0 : index
    %34 = vector.load %arg4[%c6, %c0_23, %c0_24] : memref<8x16x256xf32, #tpu.memory_space<vmem>>, vector<1x8x256xf32>
    %35 = vector.shape_cast %34 : vector<1x8x256xf32> to vector<8x256xf32>
    %36 = arith.mulf %33, %35 : vector<8x256xf32>
    %c56 = arith.constant 56 : index
    %c0_25 = arith.constant 0 : index
    %37 = vector.load %arg6[%c56, %c0_25] : memref<144x256xf32, #tpu.memory_space<vmem>>, vector<8x256xf32>
    tpu.vector_store %arg6[%c56, %c0_25], %36 {strides = array<i32>} : memref<144x256xf32, #tpu.memory_space<vmem>>, vector<8x256xf32>,
    %c239_i32 = arith.constant 239 : i32
    %38 = tpu.dynamic_rotate %1 by %c239_i32 dim 1 : vector<8x256xf32>, i32 -> vector<8x256xf32>
    %c7 = arith.constant 7 : index
    %c0_26 = arith.constant 0 : index
    %c0_27 = arith.constant 0 : index
    %39 = vector.load %arg4[%c7, %c0_26, %c0_27] : memref<8x16x256xf32, #tpu.memory_space<vmem>>, vector<1x8x256xf32>
    %40 = vector.shape_cast %39 : vector<1x8x256xf32> to vector<8x256xf32>
    %41 = arith.mulf %38, %40 : vector<8x256xf32>
    %c64 = arith.constant 64 : index
    %c0_28 = arith.constant 0 : index
    %42 = vector.load %arg6[%c64, %c0_28] : memref<144x256xf32, #tpu.memory_space<vmem>>, vector<8x256xf32>
    tpu.vector_store %arg6[%c64, %c0_28], %41 {strides = array<i32>} : memref<144x256xf32, #tpu.memory_space<vmem>>, vector<8x256xf32>,
    %c0_29 = arith.constant 0 : index
    %c0_30 = arith.constant 0 : index
    %c0_31 = arith.constant 0 : index
    %43 = vector.load %arg2[%c0_29, %c0_30, %c0_31] : memref<9x16x144xf32, #tpu.memory_space<vmem>>, vector<1x16x72xf32>
    %44 = vector.shape_cast %43 : vector<1x16x72xf32> to vector<16x72xf32>
    %c0_32 = arith.constant 0 : index
    %c0_33 = arith.constant 0 : index
    %45 = vector.load %arg6[%c0_32, %c0_33] : memref<144x256xf32, #tpu.memory_space<vmem>>, vector<72x256xf32>
    %cst = arith.constant dense<0.000000e+00> : vector<16x256xf32>
    %46 = tpu.matmul %44, %45, %cst {dimension_numbers = #tpu.dot_dimension_numbers<[1], [0], [0], [1], [0, 0, 1, 1], [], []>, precision = #tpu.contract_precision<fp32>} : vector<16x72xf32>, vector<72x256xf32>, vector<16x256xf32> -> vector<16x256xf32>
    %c0_34 = arith.constant 0 : index
    %c0_35 = arith.constant 0 : index
    %c0_36 = arith.constant 0 : index
    %47 = vector.load %arg3[%c0_34, %c0_35, %c0_36] : memref<9x16x1xf32, #tpu.memory_space<vmem>>, vector<1x16x1xf32>
    %48 = vector.shape_cast %47 : vector<1x16x1xf32> to vector<16x1xf32>
    %49 = vector.broadcast %48 : vector<16x1xf32> to vector<16x256xf32>
    %50 = arith.addf %46, %49 : vector<16x256xf32>
    %cst_37 = arith.constant 0.000000e+00 : f32
    %51 = vector.broadcast %cst_37 : f32 to vector<16x256xf32>
    %52 = arith.cmpf oge, %50, %51 : vector<16x256xf32>
    %cst_38 = arith.constant 0.00999999977 : f32
    %53 = vector.broadcast %cst_38 : f32 to vector<16x256xf32>
    %54 = arith.mulf %53, %50 : vector<16x256xf32>
    %55 = arith.select %52, %50, %54 : vector<16x256xi1>, vector<16x256xf32>
    %c17_i32_39 = arith.constant 17 : i32
    %56 = tpu.dynamic_rotate %55 by %c17_i32_39 dim 1 : vector<16x256xf32>, i32 -> vector<16x256xf32>
    %c0_40 = arith.constant 0 : index
    %c0_41 = arith.constant 0 : index
    %c0_42 = arith.constant 0 : index
    %57 = vector.load %arg4[%c0_40, %c0_41, %c0_42] : memref<8x16x256xf32, #tpu.memory_space<vmem>>, vector<1x16x256xf32>
    %58 = vector.shape_cast %57 : vector<1x16x256xf32> to vector<16x256xf32>
    %59 = arith.mulf %56, %58 : vector<16x256xf32>
    %c0_43 = arith.constant 0 : index
    %c0_44 = arith.constant 0 : index
    %60 = vector.load %arg6[%c0_43, %c0_44] : memref<144x256xf32, #tpu.memory_space<vmem>>, vector<16x256xf32>
    tpu.vector_store %arg6[%c0_43, %c0_44], %59 {strides = array<i32>} : memref<144x256xf32, #tpu.memory_space<vmem>>, vector<16x256xf32>,
    %c16_i32_45 = arith.constant 16 : i32
    %61 = tpu.dynamic_rotate %55 by %c16_i32_45 dim 1 : vector<16x256xf32>, i32 -> vector<16x256xf32>
    %c1_46 = arith.constant 1 : index
    %c0_47 = arith.constant 0 : index
    %c0_48 = arith.constant 0 : index
    %62 = vector.load %arg4[%c1_46, %c0_47, %c0_48] : memref<8x16x256xf32, #tpu.memory_space<vmem>>, vector<1x16x256xf32>
    %63 = vector.shape_cast %62 : vector<1x16x256xf32> to vector<16x256xf32>
    %64 = arith.mulf %61, %63 : vector<16x256xf32>
    %c16_49 = arith.constant 16 : index
    %c0_50 = arith.constant 0 : index
    %65 = vector.load %arg6[%c16_49, %c0_50] : memref<144x256xf32, #tpu.memory_space<vmem>>, vector<16x256xf32>
    tpu.vector_store %arg6[%c16_49, %c0_50], %64 {strides = array<i32>} : memref<144x256xf32, #tpu.memory_space<vmem>>, vector<16x256xf32>,
    %c15_i32_51 = arith.constant 15 : i32
    %66 = tpu.dynamic_rotate %55 by %c15_i32_51 dim 1 : vector<16x256xf32>, i32 -> vector<16x256xf32>
    %c2_52 = arith.constant 2 : index
    %c0_53 = arith.constant 0 : index
    %c0_54 = arith.constant 0 : index
    %67 = vector.load %arg4[%c2_52, %c0_53, %c0_54] : memref<8x16x256xf32, #tpu.memory_space<vmem>>, vector<1x16x256xf32>
    %68 = vector.shape_cast %67 : vector<1x16x256xf32> to vector<16x256xf32>
    %69 = arith.mulf %66, %68 : vector<16x256xf32>
    %c32_55 = arith.constant 32 : index
    %c0_56 = arith.constant 0 : index
    %70 = vector.load %arg6[%c32_55, %c0_56] : memref<144x256xf32, #tpu.memory_space<vmem>>, vector<16x256xf32>
    tpu.vector_store %arg6[%c32_55, %c0_56], %69 {strides = array<i32>} : memref<144x256xf32, #tpu.memory_space<vmem>>, vector<16x256xf32>,
    %c1_i32_57 = arith.constant 1 : i32
    %71 = tpu.dynamic_rotate %55 by %c1_i32_57 dim 1 : vector<16x256xf32>, i32 -> vector<16x256xf32>
    %c3_58 = arith.constant 3 : index
    %c0_59 = arith.constant 0 : index
    %c0_60 = arith.constant 0 : index
    %72 = vector.load %arg4[%c3_58, %c0_59, %c0_60] : memref<8x16x256xf32, #tpu.memory_space<vmem>>, vector<1x16x256xf32>
    %73 = vector.shape_cast %72 : vector<1x16x256xf32> to vector<16x256xf32>
    %74 = arith.mulf %71, %73 : vector<16x256xf32>
    %c48_61 = arith.constant 48 : index
    %c0_62 = arith.constant 0 : index
    %75 = vector.load %arg6[%c48_61, %c0_62] : memref<144x256xf32, #tpu.memory_space<vmem>>, vector<16x256xf32>
    tpu.vector_store %arg6[%c48_61, %c0_62], %74 {strides = array<i32>} : memref<144x256xf32, #tpu.memory_space<vmem>>, vector<16x256xf32>,
    %c64_63 = arith.constant 64 : index
    %c0_64 = arith.constant 0 : index
    %76 = vector.load %arg6[%c64_63, %c0_64] : memref<144x256xf32, #tpu.memory_space<vmem>>, vector<16x256xf32>
    tpu.vector_store %arg6[%c64_63, %c0_64], %55 {strides = array<i32>} : memref<144x256xf32, #tpu.memory_space<vmem>>, vector<16x256xf32>,
    %c255_i32_65 = arith.constant 255 : i32
    %77 = tpu.dynamic_rotate %55 by %c255_i32_65 dim 1 : vector<16x256xf32>, i32 -> vector<16x256xf32>
    %c4_66 = arith.constant 4 : index
    %c0_67 = arith.constant 0 : index
    %c0_68 = arith.constant 0 : index
    %78 = vector.load %arg4[%c4_66, %c0_67, %c0_68] : memref<8x16x256xf32, #tpu.memory_space<vmem>>, vector<1x16x256xf32>
    %79 = vector.shape_cast %78 : vector<1x16x256xf32> to vector<16x256xf32>
    %80 = arith.mulf %77, %79 : vector<16x256xf32>
    %c80 = arith.constant 80 : index
    %c0_69 = arith.constant 0 : index
    %81 = vector.load %arg6[%c80, %c0_69] : memref<144x256xf32, #tpu.memory_space<vmem>>, vector<16x256xf32>
    tpu.vector_store %arg6[%c80, %c0_69], %80 {strides = array<i32>} : memref<144x256xf32, #tpu.memory_space<vmem>>, vector<16x256xf32>,
    %c241_i32_70 = arith.constant 241 : i32
    %82 = tpu.dynamic_rotate %55 by %c241_i32_70 dim 1 : vector<16x256xf32>, i32 -> vector<16x256xf32>
    %c5_71 = arith.constant 5 : index
    %c0_72 = arith.constant 0 : index
    %c0_73 = arith.constant 0 : index
    %83 = vector.load %arg4[%c5_71, %c0_72, %c0_73] : memref<8x16x256xf32, #tpu.memory_space<vmem>>, vector<1x16x256xf32>
    %84 = vector.shape_cast %83 : vector<1x16x256xf32> to vector<16x256xf32>
    %85 = arith.mulf %82, %84 : vector<16x256xf32>
    %c96 = arith.constant 96 : index
    %c0_74 = arith.constant 0 : index
    %86 = vector.load %arg6[%c96, %c0_74] : memref<144x256xf32, #tpu.memory_space<vmem>>, vector<16x256xf32>
    tpu.vector_store %arg6[%c96, %c0_74], %85 {strides = array<i32>} : memref<144x256xf32, #tpu.memory_space<vmem>>, vector<16x256xf32>,
    %c240_i32_75 = arith.constant 240 : i32
    %87 = tpu.dynamic_rotate %55 by %c240_i32_75 dim 1 : vector<16x256xf32>, i32 -> vector<16x256xf32>
    %c6_76 = arith.constant 6 : index
    %c0_77 = arith.constant 0 : index
    %c0_78 = arith.constant 0 : index
    %88 = vector.load %arg4[%c6_76, %c0_77, %c0_78] : memref<8x16x256xf32, #tpu.memory_space<vmem>>, vector<1x16x256xf32>
    %89 = vector.shape_cast %88 : vector<1x16x256xf32> to vector<16x256xf32>
    %90 = arith.mulf %87, %89 : vector<16x256xf32>
    %c112 = arith.constant 112 : index
    %c0_79 = arith.constant 0 : index
    %91 = vector.load %arg6[%c112, %c0_79] : memref<144x256xf32, #tpu.memory_space<vmem>>, vector<16x256xf32>
    tpu.vector_store %arg6[%c112, %c0_79], %90 {strides = array<i32>} : memref<144x256xf32, #tpu.memory_space<vmem>>, vector<16x256xf32>,
    %c239_i32_80 = arith.constant 239 : i32
    %92 = tpu.dynamic_rotate %55 by %c239_i32_80 dim 1 : vector<16x256xf32>, i32 -> vector<16x256xf32>
    %c7_81 = arith.constant 7 : index
    %c0_82 = arith.constant 0 : index
    %c0_83 = arith.constant 0 : index
    %93 = vector.load %arg4[%c7_81, %c0_82, %c0_83] : memref<8x16x256xf32, #tpu.memory_space<vmem>>, vector<1x16x256xf32>
    %94 = vector.shape_cast %93 : vector<1x16x256xf32> to vector<16x256xf32>
    %95 = arith.mulf %92, %94 : vector<16x256xf32>
    %c128 = arith.constant 128 : index
    %c0_84 = arith.constant 0 : index
    %96 = vector.load %arg6[%c128, %c0_84] : memref<144x256xf32, #tpu.memory_space<vmem>>, vector<16x256xf32>
    tpu.vector_store %arg6[%c128, %c0_84], %95 {strides = array<i32>} : memref<144x256xf32, #tpu.memory_space<vmem>>, vector<16x256xf32>,
    %c1_85 = arith.constant 1 : index
    %c0_86 = arith.constant 0 : index
    %c0_87 = arith.constant 0 : index
    %97 = vector.load %arg2[%c1_85, %c0_86, %c0_87] : memref<9x16x144xf32, #tpu.memory_space<vmem>>, vector<1x16x144xf32>
    %98 = vector.shape_cast %97 : vector<1x16x144xf32> to vector<16x144xf32>
    %c0_88 = arith.constant 0 : index
    %c0_89 = arith.constant 0 : index
    %99 = vector.load %arg6[%c0_88, %c0_89] : memref<144x256xf32, #tpu.memory_space<vmem>>, vector<144x256xf32>
    %cst_90 = arith.constant dense<0.000000e+00> : vector<16x256xf32>
    %100 = tpu.matmul %98, %99, %cst_90 {dimension_numbers = #tpu.dot_dimension_numbers<[1], [0], [0], [1], [0, 0, 1, 1], [], []>, precision = #tpu.contract_precision<fp32>} : vector<16x144xf32>, vector<144x256xf32>, vector<16x256xf32> -> vector<16x256xf32>
    %c1_91 = arith.constant 1 : index
    %c0_92 = arith.constant 0 : index
    %c0_93 = arith.constant 0 : index
    %101 = vector.load %arg3[%c1_91, %c0_92, %c0_93] : memref<9x16x1xf32, #tpu.memory_space<vmem>>, vector<1x16x1xf32>
    %102 = vector.shape_cast %101 : vector<1x16x1xf32> to vector<16x1xf32>
    %103 = vector.broadcast %102 : vector<16x1xf32> to vector<16x256xf32>
    %104 = arith.addf %100, %103 : vector<16x256xf32>
    %105 = arith.addf %104, %55 : vector<16x256xf32>
    %cst_94 = arith.constant 0.000000e+00 : f32
    %106 = vector.broadcast %cst_94 : f32 to vector<16x256xf32>
    %107 = arith.cmpf oge, %105, %106 : vector<16x256xf32>
    %cst_95 = arith.constant 0.00999999977 : f32
    %108 = vector.broadcast %cst_95 : f32 to vector<16x256xf32>
    %109 = arith.mulf %108, %105 : vector<16x256xf32>
    %110 = arith.select %107, %105, %109 : vector<16x256xi1>, vector<16x256xf32>
    %c17_i32_96 = arith.constant 17 : i32
    %111 = tpu.dynamic_rotate %110 by %c17_i32_96 dim 1 : vector<16x256xf32>, i32 -> vector<16x256xf32>
    %c0_97 = arith.constant 0 : index
    %c0_98 = arith.constant 0 : index
    %c0_99 = arith.constant 0 : index
    %112 = vector.load %arg4[%c0_97, %c0_98, %c0_99] : memref<8x16x256xf32, #tpu.memory_space<vmem>>, vector<1x16x256xf32>
    %113 = vector.shape_cast %112 : vector<1x16x256xf32> to vector<16x256xf32>
    %114 = arith.mulf %111, %113 : vector<16x256xf32>
    %c0_100 = arith.constant 0 : index
    %c0_101 = arith.constant 0 : index
    %115 = vector.load %arg6[%c0_100, %c0_101] : memref<144x256xf32, #tpu.memory_space<vmem>>, vector<16x256xf32>
    tpu.vector_store %arg6[%c0_100, %c0_101], %114 {strides = array<i32>} : memref<144x256xf32, #tpu.memory_space<vmem>>, vector<16x256xf32>,
    %c16_i32_102 = arith.constant 16 : i32
    %116 = tpu.dynamic_rotate %110 by %c16_i32_102 dim 1 : vector<16x256xf32>, i32 -> vector<16x256xf32>
    %c1_103 = arith.constant 1 : index
    %c0_104 = arith.constant 0 : index
    %c0_105 = arith.constant 0 : index
    %117 = vector.load %arg4[%c1_103, %c0_104, %c0_105] : memref<8x16x256xf32, #tpu.memory_space<vmem>>, vector<1x16x256xf32>
    %118 = vector.shape_cast %117 : vector<1x16x256xf32> to vector<16x256xf32>
    %119 = arith.mulf %116, %118 : vector<16x256xf32>
    %c16_106 = arith.constant 16 : index
    %c0_107 = arith.constant 0 : index
    %120 = vector.load %arg6[%c16_106, %c0_107] : memref<144x256xf32, #tpu.memory_space<vmem>>, vector<16x256xf32>
    tpu.vector_store %arg6[%c16_106, %c0_107], %119 {strides = array<i32>} : memref<144x256xf32, #tpu.memory_space<vmem>>, vector<16x256xf32>,
    %c15_i32_108 = arith.constant 15 : i32
    %121 = tpu.dynamic_rotate %110 by %c15_i32_108 dim 1 : vector<16x256xf32>, i32 -> vector<16x256xf32>
    %c2_109 = arith.constant 2 : index
    %c0_110 = arith.constant 0 : index
    %c0_111 = arith.constant 0 : index
    %122 = vector.load %arg4[%c2_109, %c0_110, %c0_111] : memref<8x16x256xf32, #tpu.memory_space<vmem>>, vector<1x16x256xf32>
    %123 = vector.shape_cast %122 : vector<1x16x256xf32> to vector<16x256xf32>
    %124 = arith.mulf %121, %123 : vector<16x256xf32>
    %c32_112 = arith.constant 32 : index
    %c0_113 = arith.constant 0 : index
    %125 = vector.load %arg6[%c32_112, %c0_113] : memref<144x256xf32, #tpu.memory_space<vmem>>, vector<16x256xf32>
    tpu.vector_store %arg6[%c32_112, %c0_113], %124 {strides = array<i32>} : memref<144x256xf32, #tpu.memory_space<vmem>>, vector<16x256xf32>,
    %c1_i32_114 = arith.constant 1 : i32
    %126 = tpu.dynamic_rotate %110 by %c1_i32_114 dim 1 : vector<16x256xf32>, i32 -> vector<16x256xf32>
    %c3_115 = arith.constant 3 : index
    %c0_116 = arith.constant 0 : index
    %c0_117 = arith.constant 0 : index
    %127 = vector.load %arg4[%c3_115, %c0_116, %c0_117] : memref<8x16x256xf32, #tpu.memory_space<vmem>>, vector<1x16x256xf32>
    %128 = vector.shape_cast %127 : vector<1x16x256xf32> to vector<16x256xf32>
    %129 = arith.mulf %126, %128 : vector<16x256xf32>
    %c48_118 = arith.constant 48 : index
    %c0_119 = arith.constant 0 : index
    %130 = vector.load %arg6[%c48_118, %c0_119] : memref<144x256xf32, #tpu.memory_space<vmem>>, vector<16x256xf32>
    tpu.vector_store %arg6[%c48_118, %c0_119], %129 {strides = array<i32>} : memref<144x256xf32, #tpu.memory_space<vmem>>, vector<16x256xf32>,
    %c64_120 = arith.constant 64 : index
    %c0_121 = arith.constant 0 : index
    %131 = vector.load %arg6[%c64_120, %c0_121] : memref<144x256xf32, #tpu.memory_space<vmem>>, vector<16x256xf32>
    tpu.vector_store %arg6[%c64_120, %c0_121], %110 {strides = array<i32>} : memref<144x256xf32, #tpu.memory_space<vmem>>, vector<16x256xf32>,
    %c255_i32_122 = arith.constant 255 : i32
    %132 = tpu.dynamic_rotate %110 by %c255_i32_122 dim 1 : vector<16x256xf32>, i32 -> vector<16x256xf32>
    %c4_123 = arith.constant 4 : index
    %c0_124 = arith.constant 0 : index
    %c0_125 = arith.constant 0 : index
    %133 = vector.load %arg4[%c4_123, %c0_124, %c0_125] : memref<8x16x256xf32, #tpu.memory_space<vmem>>, vector<1x16x256xf32>
    %134 = vector.shape_cast %133 : vector<1x16x256xf32> to vector<16x256xf32>
    %135 = arith.mulf %132, %134 : vector<16x256xf32>
    %c80_126 = arith.constant 80 : index
    %c0_127 = arith.constant 0 : index
    %136 = vector.load %arg6[%c80_126, %c0_127] : memref<144x256xf32, #tpu.memory_space<vmem>>, vector<16x256xf32>
    tpu.vector_store %arg6[%c80_126, %c0_127], %135 {strides = array<i32>} : memref<144x256xf32, #tpu.memory_space<vmem>>, vector<16x256xf32>,
    %c241_i32_128 = arith.constant 241 : i32
    %137 = tpu.dynamic_rotate %110 by %c241_i32_128 dim 1 : vector<16x256xf32>, i32 -> vector<16x256xf32>
    %c5_129 = arith.constant 5 : index
    %c0_130 = arith.constant 0 : index
    %c0_131 = arith.constant 0 : index
    %138 = vector.load %arg4[%c5_129, %c0_130, %c0_131] : memref<8x16x256xf32, #tpu.memory_space<vmem>>, vector<1x16x256xf32>
    %139 = vector.shape_cast %138 : vector<1x16x256xf32> to vector<16x256xf32>
    %140 = arith.mulf %137, %139 : vector<16x256xf32>
    %c96_132 = arith.constant 96 : index
    %c0_133 = arith.constant 0 : index
    %141 = vector.load %arg6[%c96_132, %c0_133] : memref<144x256xf32, #tpu.memory_space<vmem>>, vector<16x256xf32>
    tpu.vector_store %arg6[%c96_132, %c0_133], %140 {strides = array<i32>} : memref<144x256xf32, #tpu.memory_space<vmem>>, vector<16x256xf32>,
    %c240_i32_134 = arith.constant 240 : i32
    %142 = tpu.dynamic_rotate %110 by %c240_i32_134 dim 1 : vector<16x256xf32>, i32 -> vector<16x256xf32>
    %c6_135 = arith.constant 6 : index
    %c0_136 = arith.constant 0 : index
    %c0_137 = arith.constant 0 : index
    %143 = vector.load %arg4[%c6_135, %c0_136, %c0_137] : memref<8x16x256xf32, #tpu.memory_space<vmem>>, vector<1x16x256xf32>
    %144 = vector.shape_cast %143 : vector<1x16x256xf32> to vector<16x256xf32>
    %145 = arith.mulf %142, %144 : vector<16x256xf32>
    %c112_138 = arith.constant 112 : index
    %c0_139 = arith.constant 0 : index
    %146 = vector.load %arg6[%c112_138, %c0_139] : memref<144x256xf32, #tpu.memory_space<vmem>>, vector<16x256xf32>
    tpu.vector_store %arg6[%c112_138, %c0_139], %145 {strides = array<i32>} : memref<144x256xf32, #tpu.memory_space<vmem>>, vector<16x256xf32>,
    %c239_i32_140 = arith.constant 239 : i32
    %147 = tpu.dynamic_rotate %110 by %c239_i32_140 dim 1 : vector<16x256xf32>, i32 -> vector<16x256xf32>
    %c7_141 = arith.constant 7 : index
    %c0_142 = arith.constant 0 : index
    %c0_143 = arith.constant 0 : index
    %148 = vector.load %arg4[%c7_141, %c0_142, %c0_143] : memref<8x16x256xf32, #tpu.memory_space<vmem>>, vector<1x16x256xf32>
    %149 = vector.shape_cast %148 : vector<1x16x256xf32> to vector<16x256xf32>
    %150 = arith.mulf %147, %149 : vector<16x256xf32>
    %c128_144 = arith.constant 128 : index
    %c0_145 = arith.constant 0 : index
    %151 = vector.load %arg6[%c128_144, %c0_145] : memref<144x256xf32, #tpu.memory_space<vmem>>, vector<16x256xf32>
    tpu.vector_store %arg6[%c128_144, %c0_145], %150 {strides = array<i32>} : memref<144x256xf32, #tpu.memory_space<vmem>>, vector<16x256xf32>,
    %c2_146 = arith.constant 2 : index
    %c0_147 = arith.constant 0 : index
    %c0_148 = arith.constant 0 : index
    %152 = vector.load %arg2[%c2_146, %c0_147, %c0_148] : memref<9x16x144xf32, #tpu.memory_space<vmem>>, vector<1x8x144xf32>
    %153 = vector.shape_cast %152 : vector<1x8x144xf32> to vector<8x144xf32>
    %c0_149 = arith.constant 0 : index
    %c0_150 = arith.constant 0 : index
    %154 = vector.load %arg6[%c0_149, %c0_150] : memref<144x256xf32, #tpu.memory_space<vmem>>, vector<144x256xf32>
    %cst_151 = arith.constant dense<0.000000e+00> : vector<8x256xf32>
    %155 = tpu.matmul %153, %154, %cst_151 {dimension_numbers = #tpu.dot_dimension_numbers<[1], [0], [0], [1], [0, 0, 1, 1], [], []>, precision = #tpu.contract_precision<fp32>} : vector<8x144xf32>, vector<144x256xf32>, vector<8x256xf32> -> vector<8x256xf32>
    %c2_152 = arith.constant 2 : index
    %c0_153 = arith.constant 0 : index
    %c0_154 = arith.constant 0 : index
    %156 = vector.load %arg3[%c2_152, %c0_153, %c0_154] : memref<9x16x1xf32, #tpu.memory_space<vmem>>, vector<1x8x1xf32>
    %157 = vector.shape_cast %156 : vector<1x8x1xf32> to vector<8x1xf32>
    %158 = vector.broadcast %157 : vector<8x1xf32> to vector<8x256xf32>
    %159 = arith.addf %155, %158 : vector<8x256xf32>
    %cst_155 = arith.constant 0.000000e+00 : f32
    %160 = vector.broadcast %cst_155 : f32 to vector<8x256xf32>
    %161 = arith.cmpf oge, %159, %160 : vector<8x256xf32>
    %cst_156 = arith.constant 0.00999999977 : f32
    %162 = vector.broadcast %cst_156 : f32 to vector<8x256xf32>
    %163 = arith.mulf %162, %159 : vector<8x256xf32>
    %164 = arith.select %161, %159, %163 : vector<8x256xi1>, vector<8x256xf32>
    %c17_i32_157 = arith.constant 17 : i32
    %165 = tpu.dynamic_rotate %164 by %c17_i32_157 dim 1 : vector<8x256xf32>, i32 -> vector<8x256xf32>
    %c0_158 = arith.constant 0 : index
    %c0_159 = arith.constant 0 : index
    %c0_160 = arith.constant 0 : index
    %166 = vector.load %arg4[%c0_158, %c0_159, %c0_160] : memref<8x16x256xf32, #tpu.memory_space<vmem>>, vector<1x8x256xf32>
    %167 = vector.shape_cast %166 : vector<1x8x256xf32> to vector<8x256xf32>
    %168 = arith.mulf %165, %167 : vector<8x256xf32>
    %c0_161 = arith.constant 0 : index
    %c0_162 = arith.constant 0 : index
    %169 = vector.load %arg6[%c0_161, %c0_162] : memref<144x256xf32, #tpu.memory_space<vmem>>, vector<8x256xf32>
    tpu.vector_store %arg6[%c0_161, %c0_162], %168 {strides = array<i32>} : memref<144x256xf32, #tpu.memory_space<vmem>>, vector<8x256xf32>,
    %c16_i32_163 = arith.constant 16 : i32
    %170 = tpu.dynamic_rotate %164 by %c16_i32_163 dim 1 : vector<8x256xf32>, i32 -> vector<8x256xf32>
    %c1_164 = arith.constant 1 : index
    %c0_165 = arith.constant 0 : index
    %c0_166 = arith.constant 0 : index
    %171 = vector.load %arg4[%c1_164, %c0_165, %c0_166] : memref<8x16x256xf32, #tpu.memory_space<vmem>>, vector<1x8x256xf32>
    %172 = vector.shape_cast %171 : vector<1x8x256xf32> to vector<8x256xf32>
    %173 = arith.mulf %170, %172 : vector<8x256xf32>
    %c8_167 = arith.constant 8 : index
    %c0_168 = arith.constant 0 : index
    %174 = vector.load %arg6[%c8_167, %c0_168] : memref<144x256xf32, #tpu.memory_space<vmem>>, vector<8x256xf32>
    tpu.vector_store %arg6[%c8_167, %c0_168], %173 {strides = array<i32>} : memref<144x256xf32, #tpu.memory_space<vmem>>, vector<8x256xf32>,
    %c15_i32_169 = arith.constant 15 : i32
    %175 = tpu.dynamic_rotate %164 by %c15_i32_169 dim 1 : vector<8x256xf32>, i32 -> vector<8x256xf32>
    %c2_170 = arith.constant 2 : index
    %c0_171 = arith.constant 0 : index
    %c0_172 = arith.constant 0 : index
    %176 = vector.load %arg4[%c2_170, %c0_171, %c0_172] : memref<8x16x256xf32, #tpu.memory_space<vmem>>, vector<1x8x256xf32>
    %177 = vector.shape_cast %176 : vector<1x8x256xf32> to vector<8x256xf32>
    %178 = arith.mulf %175, %177 : vector<8x256xf32>
    %c16_173 = arith.constant 16 : index
    %c0_174 = arith.constant 0 : index
    %179 = vector.load %arg6[%c16_173, %c0_174] : memref<144x256xf32, #tpu.memory_space<vmem>>, vector<8x256xf32>
    tpu.vector_store %arg6[%c16_173, %c0_174], %178 {strides = array<i32>} : memref<144x256xf32, #tpu.memory_space<vmem>>, vector<8x256xf32>,
    %c1_i32_175 = arith.constant 1 : i32
    %180 = tpu.dynamic_rotate %164 by %c1_i32_175 dim 1 : vector<8x256xf32>, i32 -> vector<8x256xf32>
    %c3_176 = arith.constant 3 : index
    %c0_177 = arith.constant 0 : index
    %c0_178 = arith.constant 0 : index
    %181 = vector.load %arg4[%c3_176, %c0_177, %c0_178] : memref<8x16x256xf32, #tpu.memory_space<vmem>>, vector<1x8x256xf32>
    %182 = vector.shape_cast %181 : vector<1x8x256xf32> to vector<8x256xf32>
    %183 = arith.mulf %180, %182 : vector<8x256xf32>
    %c24_179 = arith.constant 24 : index
    %c0_180 = arith.constant 0 : index
    %184 = vector.load %arg6[%c24_179, %c0_180] : memref<144x256xf32, #tpu.memory_space<vmem>>, vector<8x256xf32>
    tpu.vector_store %arg6[%c24_179, %c0_180], %183 {strides = array<i32>} : memref<144x256xf32, #tpu.memory_space<vmem>>, vector<8x256xf32>,
    %c32_181 = arith.constant 32 : index
    %c0_182 = arith.constant 0 : index
    %185 = vector.load %arg6[%c32_181, %c0_182] : memref<144x256xf32, #tpu.memory_space<vmem>>, vector<8x256xf32>
    tpu.vector_store %arg6[%c32_181, %c0_182], %164 {strides = array<i32>} : memref<144x256xf32, #tpu.memory_space<vmem>>, vector<8x256xf32>,
    %c255_i32_183 = arith.constant 255 : i32
    %186 = tpu.dynamic_rotate %164 by %c255_i32_183 dim 1 : vector<8x256xf32>, i32 -> vector<8x256xf32>
    %c4_184 = arith.constant 4 : index
    %c0_185 = arith.constant 0 : index
    %c0_186 = arith.constant 0 : index
    %187 = vector.load %arg4[%c4_184, %c0_185, %c0_186] : memref<8x16x256xf32, #tpu.memory_space<vmem>>, vector<1x8x256xf32>
    %188 = vector.shape_cast %187 : vector<1x8x256xf32> to vector<8x256xf32>
    %189 = arith.mulf %186, %188 : vector<8x256xf32>
    %c40_187 = arith.constant 40 : index
    %c0_188 = arith.constant 0 : index
    %190 = vector.load %arg6[%c40_187, %c0_188] : memref<144x256xf32, #tpu.memory_space<vmem>>, vector<8x256xf32>
    tpu.vector_store %arg6[%c40_187, %c0_188], %189 {strides = array<i32>} : memref<144x256xf32, #tpu.memory_space<vmem>>, vector<8x256xf32>,
    %c241_i32_189 = arith.constant 241 : i32
    %191 = tpu.dynamic_rotate %164 by %c241_i32_189 dim 1 : vector<8x256xf32>, i32 -> vector<8x256xf32>
    %c5_190 = arith.constant 5 : index
    %c0_191 = arith.constant 0 : index
    %c0_192 = arith.constant 0 : index
    %192 = vector.load %arg4[%c5_190, %c0_191, %c0_192] : memref<8x16x256xf32, #tpu.memory_space<vmem>>, vector<1x8x256xf32>
    %193 = vector.shape_cast %192 : vector<1x8x256xf32> to vector<8x256xf32>
    %194 = arith.mulf %191, %193 : vector<8x256xf32>
    %c48_193 = arith.constant 48 : index
    %c0_194 = arith.constant 0 : index
    %195 = vector.load %arg6[%c48_193, %c0_194] : memref<144x256xf32, #tpu.memory_space<vmem>>, vector<8x256xf32>
    tpu.vector_store %arg6[%c48_193, %c0_194], %194 {strides = array<i32>} : memref<144x256xf32, #tpu.memory_space<vmem>>, vector<8x256xf32>,
    %c240_i32_195 = arith.constant 240 : i32
    %196 = tpu.dynamic_rotate %164 by %c240_i32_195 dim 1 : vector<8x256xf32>, i32 -> vector<8x256xf32>
    %c6_196 = arith.constant 6 : index
    %c0_197 = arith.constant 0 : index
    %c0_198 = arith.constant 0 : index
    %197 = vector.load %arg4[%c6_196, %c0_197, %c0_198] : memref<8x16x256xf32, #tpu.memory_space<vmem>>, vector<1x8x256xf32>
    %198 = vector.shape_cast %197 : vector<1x8x256xf32> to vector<8x256xf32>
    %199 = arith.mulf %196, %198 : vector<8x256xf32>
    %c56_199 = arith.constant 56 : index
    %c0_200 = arith.constant 0 : index
    %200 = vector.load %arg6[%c56_199, %c0_200] : memref<144x256xf32, #tpu.memory_space<vmem>>, vector<8x256xf32>
    tpu.vector_store %arg6[%c56_199, %c0_200], %199 {strides = array<i32>} : memref<144x256xf32, #tpu.memory_space<vmem>>, vector<8x256xf32>,
    %c239_i32_201 = arith.constant 239 : i32
    %201 = tpu.dynamic_rotate %164 by %c239_i32_201 dim 1 : vector<8x256xf32>, i32 -> vector<8x256xf32>
    %c7_202 = arith.constant 7 : index
    %c0_203 = arith.constant 0 : index
    %c0_204 = arith.constant 0 : index
    %202 = vector.load %arg4[%c7_202, %c0_203, %c0_204] : memref<8x16x256xf32, #tpu.memory_space<vmem>>, vector<1x8x256xf32>
    %203 = vector.shape_cast %202 : vector<1x8x256xf32> to vector<8x256xf32>
    %204 = arith.mulf %201, %203 : vector<8x256xf32>
    %c64_205 = arith.constant 64 : index
    %c0_206 = arith.constant 0 : index
    %205 = vector.load %arg6[%c64_205, %c0_206] : memref<144x256xf32, #tpu.memory_space<vmem>>, vector<8x256xf32>
    tpu.vector_store %arg6[%c64_205, %c0_206], %204 {strides = array<i32>} : memref<144x256xf32, #tpu.memory_space<vmem>>, vector<8x256xf32>,
    %c3_207 = arith.constant 3 : index
    %c0_208 = arith.constant 0 : index
    %c0_209 = arith.constant 0 : index
    %206 = vector.load %arg2[%c3_207, %c0_208, %c0_209] : memref<9x16x144xf32, #tpu.memory_space<vmem>>, vector<1x8x72xf32>
    %207 = vector.shape_cast %206 : vector<1x8x72xf32> to vector<8x72xf32>
    %c0_210 = arith.constant 0 : index
    %c0_211 = arith.constant 0 : index
    %208 = vector.load %arg6[%c0_210, %c0_211] : memref<144x256xf32, #tpu.memory_space<vmem>>, vector<72x256xf32>
    %cst_212 = arith.constant dense<0.000000e+00> : vector<8x256xf32>
    %209 = tpu.matmul %207, %208, %cst_212 {dimension_numbers = #tpu.dot_dimension_numbers<[1], [0], [0], [1], [0, 0, 1, 1], [], []>, precision = #tpu.contract_precision<fp32>} : vector<8x72xf32>, vector<72x256xf32>, vector<8x256xf32> -> vector<8x256xf32>
    %c3_213 = arith.constant 3 : index
    %c0_214 = arith.constant 0 : index
    %c0_215 = arith.constant 0 : index
    %210 = vector.load %arg3[%c3_213, %c0_214, %c0_215] : memref<9x16x1xf32, #tpu.memory_space<vmem>>, vector<1x8x1xf32>
    %211 = vector.shape_cast %210 : vector<1x8x1xf32> to vector<8x1xf32>
    %212 = vector.broadcast %211 : vector<8x1xf32> to vector<8x256xf32>
    %213 = arith.addf %209, %212 : vector<8x256xf32>
    %cst_216 = arith.constant 0.000000e+00 : f32
    %214 = vector.broadcast %cst_216 : f32 to vector<8x256xf32>
    %215 = arith.cmpf oge, %213, %214 : vector<8x256xf32>
    %cst_217 = arith.constant 0.00999999977 : f32
    %216 = vector.broadcast %cst_217 : f32 to vector<8x256xf32>
    %217 = arith.mulf %216, %213 : vector<8x256xf32>
    %218 = arith.select %215, %213, %217 : vector<8x256xi1>, vector<8x256xf32>
    %219 = arith.addf %218, %164 : vector<8x256xf32>
    %c17_i32_218 = arith.constant 17 : i32
    %220 = tpu.dynamic_rotate %219 by %c17_i32_218 dim 1 : vector<8x256xf32>, i32 -> vector<8x256xf32>
    %c0_219 = arith.constant 0 : index
    %c0_220 = arith.constant 0 : index
    %c0_221 = arith.constant 0 : index
    %221 = vector.load %arg4[%c0_219, %c0_220, %c0_221] : memref<8x16x256xf32, #tpu.memory_space<vmem>>, vector<1x8x256xf32>
    %222 = vector.shape_cast %221 : vector<1x8x256xf32> to vector<8x256xf32>
    %223 = arith.mulf %220, %222 : vector<8x256xf32>
    %c0_222 = arith.constant 0 : index
    %c0_223 = arith.constant 0 : index
    %224 = vector.load %arg6[%c0_222, %c0_223] : memref<144x256xf32, #tpu.memory_space<vmem>>, vector<8x256xf32>
    tpu.vector_store %arg6[%c0_222, %c0_223], %223 {strides = array<i32>} : memref<144x256xf32, #tpu.memory_space<vmem>>, vector<8x256xf32>,
    %c16_i32_224 = arith.constant 16 : i32
    %225 = tpu.dynamic_rotate %219 by %c16_i32_224 dim 1 : vector<8x256xf32>, i32 -> vector<8x256xf32>
    %c1_225 = arith.constant 1 : index
    %c0_226 = arith.constant 0 : index
    %c0_227 = arith.constant 0 : index
    %226 = vector.load %arg4[%c1_225, %c0_226, %c0_227] : memref<8x16x256xf32, #tpu.memory_space<vmem>>, vector<1x8x256xf32>
    %227 = vector.shape_cast %226 : vector<1x8x256xf32> to vector<8x256xf32>
    %228 = arith.mulf %225, %227 : vector<8x256xf32>
    %c8_228 = arith.constant 8 : index
    %c0_229 = arith.constant 0 : index
    %229 = vector.load %arg6[%c8_228, %c0_229] : memref<144x256xf32, #tpu.memory_space<vmem>>, vector<8x256xf32>
    tpu.vector_store %arg6[%c8_228, %c0_229], %228 {strides = array<i32>} : memref<144x256xf32, #tpu.memory_space<vmem>>, vector<8x256xf32>,
    %c15_i32_230 = arith.constant 15 : i32
    %230 = tpu.dynamic_rotate %219 by %c15_i32_230 dim 1 : vector<8x256xf32>, i32 -> vector<8x256xf32>
    %c2_231 = arith.constant 2 : index
    %c0_232 = arith.constant 0 : index
    %c0_233 = arith.constant 0 : index
    %231 = vector.load %arg4[%c2_231, %c0_232, %c0_233] : memref<8x16x256xf32, #tpu.memory_space<vmem>>, vector<1x8x256xf32>
    %232 = vector.shape_cast %231 : vector<1x8x256xf32> to vector<8x256xf32>
    %233 = arith.mulf %230, %232 : vector<8x256xf32>
    %c16_234 = arith.constant 16 : index
    %c0_235 = arith.constant 0 : index
    %234 = vector.load %arg6[%c16_234, %c0_235] : memref<144x256xf32, #tpu.memory_space<vmem>>, vector<8x256xf32>
    tpu.vector_store %arg6[%c16_234, %c0_235], %233 {strides = array<i32>} : memref<144x256xf32, #tpu.memory_space<vmem>>, vector<8x256xf32>,
    %c1_i32_236 = arith.constant 1 : i32
    %235 = tpu.dynamic_rotate %219 by %c1_i32_236 dim 1 : vector<8x256xf32>, i32 -> vector<8x256xf32>
    %c3_237 = arith.constant 3 : index
    %c0_238 = arith.constant 0 : index
    %c0_239 = arith.constant 0 : index
    %236 = vector.load %arg4[%c3_237, %c0_238, %c0_239] : memref<8x16x256xf32, #tpu.memory_space<vmem>>, vector<1x8x256xf32>
    %237 = vector.shape_cast %236 : vector<1x8x256xf32> to vector<8x256xf32>
    %238 = arith.mulf %235, %237 : vector<8x256xf32>
    %c24_240 = arith.constant 24 : index
    %c0_241 = arith.constant 0 : index
    %239 = vector.load %arg6[%c24_240, %c0_241] : memref<144x256xf32, #tpu.memory_space<vmem>>, vector<8x256xf32>
    tpu.vector_store %arg6[%c24_240, %c0_241], %238 {strides = array<i32>} : memref<144x256xf32, #tpu.memory_space<vmem>>, vector<8x256xf32>,
    %c32_242 = arith.constant 32 : index
    %c0_243 = arith.constant 0 : index
    %240 = vector.load %arg6[%c32_242, %c0_243] : memref<144x256xf32, #tpu.memory_space<vmem>>, vector<8x256xf32>
    tpu.vector_store %arg6[%c32_242, %c0_243], %219 {strides = array<i32>} : memref<144x256xf32, #tpu.memory_space<vmem>>, vector<8x256xf32>,
    %c255_i32_244 = arith.constant 255 : i32
    %241 = tpu.dynamic_rotate %219 by %c255_i32_244 dim 1 : vector<8x256xf32>, i32 -> vector<8x256xf32>
    %c4_245 = arith.constant 4 : index
    %c0_246 = arith.constant 0 : index
    %c0_247 = arith.constant 0 : index
    %242 = vector.load %arg4[%c4_245, %c0_246, %c0_247] : memref<8x16x256xf32, #tpu.memory_space<vmem>>, vector<1x8x256xf32>
    %243 = vector.shape_cast %242 : vector<1x8x256xf32> to vector<8x256xf32>
    %244 = arith.mulf %241, %243 : vector<8x256xf32>
    %c40_248 = arith.constant 40 : index
    %c0_249 = arith.constant 0 : index
    %245 = vector.load %arg6[%c40_248, %c0_249] : memref<144x256xf32, #tpu.memory_space<vmem>>, vector<8x256xf32>
    tpu.vector_store %arg6[%c40_248, %c0_249], %244 {strides = array<i32>} : memref<144x256xf32, #tpu.memory_space<vmem>>, vector<8x256xf32>,
    %c241_i32_250 = arith.constant 241 : i32
    %246 = tpu.dynamic_rotate %219 by %c241_i32_250 dim 1 : vector<8x256xf32>, i32 -> vector<8x256xf32>
    %c5_251 = arith.constant 5 : index
    %c0_252 = arith.constant 0 : index
    %c0_253 = arith.constant 0 : index
    %247 = vector.load %arg4[%c5_251, %c0_252, %c0_253] : memref<8x16x256xf32, #tpu.memory_space<vmem>>, vector<1x8x256xf32>
    %248 = vector.shape_cast %247 : vector<1x8x256xf32> to vector<8x256xf32>
    %249 = arith.mulf %246, %248 : vector<8x256xf32>
    %c48_254 = arith.constant 48 : index
    %c0_255 = arith.constant 0 : index
    %250 = vector.load %arg6[%c48_254, %c0_255] : memref<144x256xf32, #tpu.memory_space<vmem>>, vector<8x256xf32>
    tpu.vector_store %arg6[%c48_254, %c0_255], %249 {strides = array<i32>} : memref<144x256xf32, #tpu.memory_space<vmem>>, vector<8x256xf32>,
    %c240_i32_256 = arith.constant 240 : i32
    %251 = tpu.dynamic_rotate %219 by %c240_i32_256 dim 1 : vector<8x256xf32>, i32 -> vector<8x256xf32>
    %c6_257 = arith.constant 6 : index
    %c0_258 = arith.constant 0 : index
    %c0_259 = arith.constant 0 : index
    %252 = vector.load %arg4[%c6_257, %c0_258, %c0_259] : memref<8x16x256xf32, #tpu.memory_space<vmem>>, vector<1x8x256xf32>
    %253 = vector.shape_cast %252 : vector<1x8x256xf32> to vector<8x256xf32>
    %254 = arith.mulf %251, %253 : vector<8x256xf32>
    %c56_260 = arith.constant 56 : index
    %c0_261 = arith.constant 0 : index
    %255 = vector.load %arg6[%c56_260, %c0_261] : memref<144x256xf32, #tpu.memory_space<vmem>>, vector<8x256xf32>
    tpu.vector_store %arg6[%c56_260, %c0_261], %254 {strides = array<i32>} : memref<144x256xf32, #tpu.memory_space<vmem>>, vector<8x256xf32>,
    %c239_i32_262 = arith.constant 239 : i32
    %256 = tpu.dynamic_rotate %219 by %c239_i32_262 dim 1 : vector<8x256xf32>, i32 -> vector<8x256xf32>
    %c7_263 = arith.constant 7 : index
    %c0_264 = arith.constant 0 : index
    %c0_265 = arith.constant 0 : index
    %257 = vector.load %arg4[%c7_263, %c0_264, %c0_265] : memref<8x16x256xf32, #tpu.memory_space<vmem>>, vector<1x8x256xf32>
    %258 = vector.shape_cast %257 : vector<1x8x256xf32> to vector<8x256xf32>
    %259 = arith.mulf %256, %258 : vector<8x256xf32>
    %c64_266 = arith.constant 64 : index
    %c0_267 = arith.constant 0 : index
    %260 = vector.load %arg6[%c64_266, %c0_267] : memref<144x256xf32, #tpu.memory_space<vmem>>, vector<8x256xf32>
    tpu.vector_store %arg6[%c64_266, %c0_267], %259 {strides = array<i32>} : memref<144x256xf32, #tpu.memory_space<vmem>>, vector<8x256xf32>,
    %c4_268 = arith.constant 4 : index
    %c0_269 = arith.constant 0 : index
    %c0_270 = arith.constant 0 : index
    %261 = vector.load %arg2[%c4_268, %c0_269, %c0_270] : memref<9x16x144xf32, #tpu.memory_space<vmem>>, vector<1x8x72xf32>
    %262 = vector.shape_cast %261 : vector<1x8x72xf32> to vector<8x72xf32>
    %c0_271 = arith.constant 0 : index
    %c0_272 = arith.constant 0 : index
    %263 = vector.load %arg6[%c0_271, %c0_272] : memref<144x256xf32, #tpu.memory_space<vmem>>, vector<72x256xf32>
    %cst_273 = arith.constant dense<0.000000e+00> : vector<8x256xf32>
    %264 = tpu.matmul %262, %263, %cst_273 {dimension_numbers = #tpu.dot_dimension_numbers<[1], [0], [0], [1], [0, 0, 1, 1], [], []>, precision = #tpu.contract_precision<fp32>} : vector<8x72xf32>, vector<72x256xf32>, vector<8x256xf32> -> vector<8x256xf32>
    %c4_274 = arith.constant 4 : index
    %c0_275 = arith.constant 0 : index
    %c0_276 = arith.constant 0 : index
    %265 = vector.load %arg3[%c4_274, %c0_275, %c0_276] : memref<9x16x1xf32, #tpu.memory_space<vmem>>, vector<1x8x1xf32>
    %266 = vector.shape_cast %265 : vector<1x8x1xf32> to vector<8x1xf32>
    %267 = vector.broadcast %266 : vector<8x1xf32> to vector<8x256xf32>
    %268 = arith.addf %264, %267 : vector<8x256xf32>
    %cst_277 = arith.constant 0.000000e+00 : f32
    %269 = vector.broadcast %cst_277 : f32 to vector<8x256xf32>
    %270 = arith.cmpf oge, %268, %269 : vector<8x256xf32>
    %cst_278 = arith.constant 0.00999999977 : f32
    %271 = vector.broadcast %cst_278 : f32 to vector<8x256xf32>
    %272 = arith.mulf %271, %268 : vector<8x256xf32>
    %273 = arith.select %270, %268, %272 : vector<8x256xi1>, vector<8x256xf32>
    %c17_i32_279 = arith.constant 17 : i32
    %274 = tpu.dynamic_rotate %273 by %c17_i32_279 dim 1 : vector<8x256xf32>, i32 -> vector<8x256xf32>
    %c0_280 = arith.constant 0 : index
    %c0_281 = arith.constant 0 : index
    %c0_282 = arith.constant 0 : index
    %275 = vector.load %arg4[%c0_280, %c0_281, %c0_282] : memref<8x16x256xf32, #tpu.memory_space<vmem>>, vector<1x8x256xf32>
    %276 = vector.shape_cast %275 : vector<1x8x256xf32> to vector<8x256xf32>
    %277 = arith.mulf %274, %276 : vector<8x256xf32>
    %c0_283 = arith.constant 0 : index
    %c0_284 = arith.constant 0 : index
    %278 = vector.load %arg6[%c0_283, %c0_284] : memref<144x256xf32, #tpu.memory_space<vmem>>, vector<8x256xf32>
    tpu.vector_store %arg6[%c0_283, %c0_284], %277 {strides = array<i32>} : memref<144x256xf32, #tpu.memory_space<vmem>>, vector<8x256xf32>,
    %c16_i32_285 = arith.constant 16 : i32
    %279 = tpu.dynamic_rotate %273 by %c16_i32_285 dim 1 : vector<8x256xf32>, i32 -> vector<8x256xf32>
    %c1_286 = arith.constant 1 : index
    %c0_287 = arith.constant 0 : index
    %c0_288 = arith.constant 0 : index
    %280 = vector.load %arg4[%c1_286, %c0_287, %c0_288] : memref<8x16x256xf32, #tpu.memory_space<vmem>>, vector<1x8x256xf32>
    %281 = vector.shape_cast %280 : vector<1x8x256xf32> to vector<8x256xf32>
    %282 = arith.mulf %279, %281 : vector<8x256xf32>
    %c8_289 = arith.constant 8 : index
    %c0_290 = arith.constant 0 : index
    %283 = vector.load %arg6[%c8_289, %c0_290] : memref<144x256xf32, #tpu.memory_space<vmem>>, vector<8x256xf32>
    tpu.vector_store %arg6[%c8_289, %c0_290], %282 {strides = array<i32>} : memref<144x256xf32, #tpu.memory_space<vmem>>, vector<8x256xf32>,
    %c15_i32_291 = arith.constant 15 : i32
    %284 = tpu.dynamic_rotate %273 by %c15_i32_291 dim 1 : vector<8x256xf32>, i32 -> vector<8x256xf32>
    %c2_292 = arith.constant 2 : index
    %c0_293 = arith.constant 0 : index
    %c0_294 = arith.constant 0 : index
    %285 = vector.load %arg4[%c2_292, %c0_293, %c0_294] : memref<8x16x256xf32, #tpu.memory_space<vmem>>, vector<1x8x256xf32>
    %286 = vector.shape_cast %285 : vector<1x8x256xf32> to vector<8x256xf32>
    %287 = arith.mulf %284, %286 : vector<8x256xf32>
    %c16_295 = arith.constant 16 : index
    %c0_296 = arith.constant 0 : index
    %288 = vector.load %arg6[%c16_295, %c0_296] : memref<144x256xf32, #tpu.memory_space<vmem>>, vector<8x256xf32>
    tpu.vector_store %arg6[%c16_295, %c0_296], %287 {strides = array<i32>} : memref<144x256xf32, #tpu.memory_space<vmem>>, vector<8x256xf32>,
    %c1_i32_297 = arith.constant 1 : i32
    %289 = tpu.dynamic_rotate %273 by %c1_i32_297 dim 1 : vector<8x256xf32>, i32 -> vector<8x256xf32>
    %c3_298 = arith.constant 3 : index
    %c0_299 = arith.constant 0 : index
    %c0_300 = arith.constant 0 : index
    %290 = vector.load %arg4[%c3_298, %c0_299, %c0_300] : memref<8x16x256xf32, #tpu.memory_space<vmem>>, vector<1x8x256xf32>
    %291 = vector.shape_cast %290 : vector<1x8x256xf32> to vector<8x256xf32>
    %292 = arith.mulf %289, %291 : vector<8x256xf32>
    %c24_301 = arith.constant 24 : index
    %c0_302 = arith.constant 0 : index
    %293 = vector.load %arg6[%c24_301, %c0_302] : memref<144x256xf32, #tpu.memory_space<vmem>>, vector<8x256xf32>
    tpu.vector_store %arg6[%c24_301, %c0_302], %292 {strides = array<i32>} : memref<144x256xf32, #tpu.memory_space<vmem>>, vector<8x256xf32>,
    %c32_303 = arith.constant 32 : index
    %c0_304 = arith.constant 0 : index
    %294 = vector.load %arg6[%c32_303, %c0_304] : memref<144x256xf32, #tpu.memory_space<vmem>>, vector<8x256xf32>
    tpu.vector_store %arg6[%c32_303, %c0_304], %273 {strides = array<i32>} : memref<144x256xf32, #tpu.memory_space<vmem>>, vector<8x256xf32>,
    %c255_i32_305 = arith.constant 255 : i32
    %295 = tpu.dynamic_rotate %273 by %c255_i32_305 dim 1 : vector<8x256xf32>, i32 -> vector<8x256xf32>
    %c4_306 = arith.constant 4 : index
    %c0_307 = arith.constant 0 : index
    %c0_308 = arith.constant 0 : index
    %296 = vector.load %arg4[%c4_306, %c0_307, %c0_308] : memref<8x16x256xf32, #tpu.memory_space<vmem>>, vector<1x8x256xf32>
    %297 = vector.shape_cast %296 : vector<1x8x256xf32> to vector<8x256xf32>
    %298 = arith.mulf %295, %297 : vector<8x256xf32>
    %c40_309 = arith.constant 40 : index
    %c0_310 = arith.constant 0 : index
    %299 = vector.load %arg6[%c40_309, %c0_310] : memref<144x256xf32, #tpu.memory_space<vmem>>, vector<8x256xf32>
    tpu.vector_store %arg6[%c40_309, %c0_310], %298 {strides = array<i32>} : memref<144x256xf32, #tpu.memory_space<vmem>>, vector<8x256xf32>,
    %c241_i32_311 = arith.constant 241 : i32
    %300 = tpu.dynamic_rotate %273 by %c241_i32_311 dim 1 : vector<8x256xf32>, i32 -> vector<8x256xf32>
    %c5_312 = arith.constant 5 : index
    %c0_313 = arith.constant 0 : index
    %c0_314 = arith.constant 0 : index
    %301 = vector.load %arg4[%c5_312, %c0_313, %c0_314] : memref<8x16x256xf32, #tpu.memory_space<vmem>>, vector<1x8x256xf32>
    %302 = vector.shape_cast %301 : vector<1x8x256xf32> to vector<8x256xf32>
    %303 = arith.mulf %300, %302 : vector<8x256xf32>
    %c48_315 = arith.constant 48 : index
    %c0_316 = arith.constant 0 : index
    %304 = vector.load %arg6[%c48_315, %c0_316] : memref<144x256xf32, #tpu.memory_space<vmem>>, vector<8x256xf32>
    tpu.vector_store %arg6[%c48_315, %c0_316], %303 {strides = array<i32>} : memref<144x256xf32, #tpu.memory_space<vmem>>, vector<8x256xf32>,
    %c240_i32_317 = arith.constant 240 : i32
    %305 = tpu.dynamic_rotate %273 by %c240_i32_317 dim 1 : vector<8x256xf32>, i32 -> vector<8x256xf32>
    %c6_318 = arith.constant 6 : index
    %c0_319 = arith.constant 0 : index
    %c0_320 = arith.constant 0 : index
    %306 = vector.load %arg4[%c6_318, %c0_319, %c0_320] : memref<8x16x256xf32, #tpu.memory_space<vmem>>, vector<1x8x256xf32>
    %307 = vector.shape_cast %306 : vector<1x8x256xf32> to vector<8x256xf32>
    %308 = arith.mulf %305, %307 : vector<8x256xf32>
    %c56_321 = arith.constant 56 : index
    %c0_322 = arith.constant 0 : index
    %309 = vector.load %arg6[%c56_321, %c0_322] : memref<144x256xf32, #tpu.memory_space<vmem>>, vector<8x256xf32>
    tpu.vector_store %arg6[%c56_321, %c0_322], %308 {strides = array<i32>} : memref<144x256xf32, #tpu.memory_space<vmem>>, vector<8x256xf32>,
    %c239_i32_323 = arith.constant 239 : i32
    %310 = tpu.dynamic_rotate %273 by %c239_i32_323 dim 1 : vector<8x256xf32>, i32 -> vector<8x256xf32>
    %c7_324 = arith.constant 7 : index
    %c0_325 = arith.constant 0 : index
    %c0_326 = arith.constant 0 : index
    %311 = vector.load %arg4[%c7_324, %c0_325, %c0_326] : memref<8x16x256xf32, #tpu.memory_space<vmem>>, vector<1x8x256xf32>
    %312 = vector.shape_cast %311 : vector<1x8x256xf32> to vector<8x256xf32>
    %313 = arith.mulf %310, %312 : vector<8x256xf32>
    %c64_327 = arith.constant 64 : index
    %c0_328 = arith.constant 0 : index
    %314 = vector.load %arg6[%c64_327, %c0_328] : memref<144x256xf32, #tpu.memory_space<vmem>>, vector<8x256xf32>
    tpu.vector_store %arg6[%c64_327, %c0_328], %313 {strides = array<i32>} : memref<144x256xf32, #tpu.memory_space<vmem>>, vector<8x256xf32>,
    %c5_329 = arith.constant 5 : index
    %c0_330 = arith.constant 0 : index
    %c0_331 = arith.constant 0 : index
    %315 = vector.load %arg2[%c5_329, %c0_330, %c0_331] : memref<9x16x144xf32, #tpu.memory_space<vmem>>, vector<1x8x72xf32>
    %316 = vector.shape_cast %315 : vector<1x8x72xf32> to vector<8x72xf32>
    %c0_332 = arith.constant 0 : index
    %c0_333 = arith.constant 0 : index
    %317 = vector.load %arg6[%c0_332, %c0_333] : memref<144x256xf32, #tpu.memory_space<vmem>>, vector<72x256xf32>
    %cst_334 = arith.constant dense<0.000000e+00> : vector<8x256xf32>
    %318 = tpu.matmul %316, %317, %cst_334 {dimension_numbers = #tpu.dot_dimension_numbers<[1], [0], [0], [1], [0, 0, 1, 1], [], []>, precision = #tpu.contract_precision<fp32>} : vector<8x72xf32>, vector<72x256xf32>, vector<8x256xf32> -> vector<8x256xf32>
    %c5_335 = arith.constant 5 : index
    %c0_336 = arith.constant 0 : index
    %c0_337 = arith.constant 0 : index
    %319 = vector.load %arg3[%c5_335, %c0_336, %c0_337] : memref<9x16x1xf32, #tpu.memory_space<vmem>>, vector<1x8x1xf32>
    %320 = vector.shape_cast %319 : vector<1x8x1xf32> to vector<8x1xf32>
    %321 = vector.broadcast %320 : vector<8x1xf32> to vector<8x256xf32>
    %322 = arith.addf %318, %321 : vector<8x256xf32>
    %323 = arith.addf %322, %273 : vector<8x256xf32>
    %cst_338 = arith.constant 0.000000e+00 : f32
    %324 = vector.broadcast %cst_338 : f32 to vector<8x256xf32>
    %325 = arith.cmpf oge, %323, %324 : vector<8x256xf32>
    %cst_339 = arith.constant 0.00999999977 : f32
    %326 = vector.broadcast %cst_339 : f32 to vector<8x256xf32>
    %327 = arith.mulf %326, %323 : vector<8x256xf32>
    %328 = arith.select %325, %323, %327 : vector<8x256xi1>, vector<8x256xf32>
    %c17_i32_340 = arith.constant 17 : i32
    %329 = tpu.dynamic_rotate %328 by %c17_i32_340 dim 1 : vector<8x256xf32>, i32 -> vector<8x256xf32>
    %c0_341 = arith.constant 0 : index
    %c0_342 = arith.constant 0 : index
    %c0_343 = arith.constant 0 : index
    %330 = vector.load %arg4[%c0_341, %c0_342, %c0_343] : memref<8x16x256xf32, #tpu.memory_space<vmem>>, vector<1x8x256xf32>
    %331 = vector.shape_cast %330 : vector<1x8x256xf32> to vector<8x256xf32>
    %332 = arith.mulf %329, %331 : vector<8x256xf32>
    %c0_344 = arith.constant 0 : index
    %c0_345 = arith.constant 0 : index
    %333 = vector.load %arg6[%c0_344, %c0_345] : memref<144x256xf32, #tpu.memory_space<vmem>>, vector<8x256xf32>
    tpu.vector_store %arg6[%c0_344, %c0_345], %332 {strides = array<i32>} : memref<144x256xf32, #tpu.memory_space<vmem>>, vector<8x256xf32>,
    %c16_i32_346 = arith.constant 16 : i32
    %334 = tpu.dynamic_rotate %328 by %c16_i32_346 dim 1 : vector<8x256xf32>, i32 -> vector<8x256xf32>
    %c1_347 = arith.constant 1 : index
    %c0_348 = arith.constant 0 : index
    %c0_349 = arith.constant 0 : index
    %335 = vector.load %arg4[%c1_347, %c0_348, %c0_349] : memref<8x16x256xf32, #tpu.memory_space<vmem>>, vector<1x8x256xf32>
    %336 = vector.shape_cast %335 : vector<1x8x256xf32> to vector<8x256xf32>
    %337 = arith.mulf %334, %336 : vector<8x256xf32>
    %c8_350 = arith.constant 8 : index
    %c0_351 = arith.constant 0 : index
    %338 = vector.load %arg6[%c8_350, %c0_351] : memref<144x256xf32, #tpu.memory_space<vmem>>, vector<8x256xf32>
    tpu.vector_store %arg6[%c8_350, %c0_351], %337 {strides = array<i32>} : memref<144x256xf32, #tpu.memory_space<vmem>>, vector<8x256xf32>,
    %c15_i32_352 = arith.constant 15 : i32
    %339 = tpu.dynamic_rotate %328 by %c15_i32_352 dim 1 : vector<8x256xf32>, i32 -> vector<8x256xf32>
    %c2_353 = arith.constant 2 : index
    %c0_354 = arith.constant 0 : index
    %c0_355 = arith.constant 0 : index
    %340 = vector.load %arg4[%c2_353, %c0_354, %c0_355] : memref<8x16x256xf32, #tpu.memory_space<vmem>>, vector<1x8x256xf32>
    %341 = vector.shape_cast %340 : vector<1x8x256xf32> to vector<8x256xf32>
    %342 = arith.mulf %339, %341 : vector<8x256xf32>
    %c16_356 = arith.constant 16 : index
    %c0_357 = arith.constant 0 : index
    %343 = vector.load %arg6[%c16_356, %c0_357] : memref<144x256xf32, #tpu.memory_space<vmem>>, vector<8x256xf32>
    tpu.vector_store %arg6[%c16_356, %c0_357], %342 {strides = array<i32>} : memref<144x256xf32, #tpu.memory_space<vmem>>, vector<8x256xf32>,
    %c1_i32_358 = arith.constant 1 : i32
    %344 = tpu.dynamic_rotate %328 by %c1_i32_358 dim 1 : vector<8x256xf32>, i32 -> vector<8x256xf32>
    %c3_359 = arith.constant 3 : index
    %c0_360 = arith.constant 0 : index
    %c0_361 = arith.constant 0 : index
    %345 = vector.load %arg4[%c3_359, %c0_360, %c0_361] : memref<8x16x256xf32, #tpu.memory_space<vmem>>, vector<1x8x256xf32>
    %346 = vector.shape_cast %345 : vector<1x8x256xf32> to vector<8x256xf32>
    %347 = arith.mulf %344, %346 : vector<8x256xf32>
    %c24_362 = arith.constant 24 : index
    %c0_363 = arith.constant 0 : index
    %348 = vector.load %arg6[%c24_362, %c0_363] : memref<144x256xf32, #tpu.memory_space<vmem>>, vector<8x256xf32>
    tpu.vector_store %arg6[%c24_362, %c0_363], %347 {strides = array<i32>} : memref<144x256xf32, #tpu.memory_space<vmem>>, vector<8x256xf32>,
    %c32_364 = arith.constant 32 : index
    %c0_365 = arith.constant 0 : index
    %349 = vector.load %arg6[%c32_364, %c0_365] : memref<144x256xf32, #tpu.memory_space<vmem>>, vector<8x256xf32>
    tpu.vector_store %arg6[%c32_364, %c0_365], %328 {strides = array<i32>} : memref<144x256xf32, #tpu.memory_space<vmem>>, vector<8x256xf32>,
    %c255_i32_366 = arith.constant 255 : i32
    %350 = tpu.dynamic_rotate %328 by %c255_i32_366 dim 1 : vector<8x256xf32>, i32 -> vector<8x256xf32>
    %c4_367 = arith.constant 4 : index
    %c0_368 = arith.constant 0 : index
    %c0_369 = arith.constant 0 : index
    %351 = vector.load %arg4[%c4_367, %c0_368, %c0_369] : memref<8x16x256xf32, #tpu.memory_space<vmem>>, vector<1x8x256xf32>
    %352 = vector.shape_cast %351 : vector<1x8x256xf32> to vector<8x256xf32>
    %353 = arith.mulf %350, %352 : vector<8x256xf32>
    %c40_370 = arith.constant 40 : index
    %c0_371 = arith.constant 0 : index
    %354 = vector.load %arg6[%c40_370, %c0_371] : memref<144x256xf32, #tpu.memory_space<vmem>>, vector<8x256xf32>
    tpu.vector_store %arg6[%c40_370, %c0_371], %353 {strides = array<i32>} : memref<144x256xf32, #tpu.memory_space<vmem>>, vector<8x256xf32>,
    %c241_i32_372 = arith.constant 241 : i32
    %355 = tpu.dynamic_rotate %328 by %c241_i32_372 dim 1 : vector<8x256xf32>, i32 -> vector<8x256xf32>
    %c5_373 = arith.constant 5 : index
    %c0_374 = arith.constant 0 : index
    %c0_375 = arith.constant 0 : index
    %356 = vector.load %arg4[%c5_373, %c0_374, %c0_375] : memref<8x16x256xf32, #tpu.memory_space<vmem>>, vector<1x8x256xf32>
    %357 = vector.shape_cast %356 : vector<1x8x256xf32> to vector<8x256xf32>
    %358 = arith.mulf %355, %357 : vector<8x256xf32>
    %c48_376 = arith.constant 48 : index
    %c0_377 = arith.constant 0 : index
    %359 = vector.load %arg6[%c48_376, %c0_377] : memref<144x256xf32, #tpu.memory_space<vmem>>, vector<8x256xf32>
    tpu.vector_store %arg6[%c48_376, %c0_377], %358 {strides = array<i32>} : memref<144x256xf32, #tpu.memory_space<vmem>>, vector<8x256xf32>,
    %c240_i32_378 = arith.constant 240 : i32
    %360 = tpu.dynamic_rotate %328 by %c240_i32_378 dim 1 : vector<8x256xf32>, i32 -> vector<8x256xf32>
    %c6_379 = arith.constant 6 : index
    %c0_380 = arith.constant 0 : index
    %c0_381 = arith.constant 0 : index
    %361 = vector.load %arg4[%c6_379, %c0_380, %c0_381] : memref<8x16x256xf32, #tpu.memory_space<vmem>>, vector<1x8x256xf32>
    %362 = vector.shape_cast %361 : vector<1x8x256xf32> to vector<8x256xf32>
    %363 = arith.mulf %360, %362 : vector<8x256xf32>
    %c56_382 = arith.constant 56 : index
    %c0_383 = arith.constant 0 : index
    %364 = vector.load %arg6[%c56_382, %c0_383] : memref<144x256xf32, #tpu.memory_space<vmem>>, vector<8x256xf32>
    tpu.vector_store %arg6[%c56_382, %c0_383], %363 {strides = array<i32>} : memref<144x256xf32, #tpu.memory_space<vmem>>, vector<8x256xf32>,
    %c239_i32_384 = arith.constant 239 : i32
    %365 = tpu.dynamic_rotate %328 by %c239_i32_384 dim 1 : vector<8x256xf32>, i32 -> vector<8x256xf32>
    %c7_385 = arith.constant 7 : index
    %c0_386 = arith.constant 0 : index
    %c0_387 = arith.constant 0 : index
    %366 = vector.load %arg4[%c7_385, %c0_386, %c0_387] : memref<8x16x256xf32, #tpu.memory_space<vmem>>, vector<1x8x256xf32>
    %367 = vector.shape_cast %366 : vector<1x8x256xf32> to vector<8x256xf32>
    %368 = arith.mulf %365, %367 : vector<8x256xf32>
    %c64_388 = arith.constant 64 : index
    %c0_389 = arith.constant 0 : index
    %369 = vector.load %arg6[%c64_388, %c0_389] : memref<144x256xf32, #tpu.memory_space<vmem>>, vector<8x256xf32>
    tpu.vector_store %arg6[%c64_388, %c0_389], %368 {strides = array<i32>} : memref<144x256xf32, #tpu.memory_space<vmem>>, vector<8x256xf32>,
    %c6_390 = arith.constant 6 : index
    %c0_391 = arith.constant 0 : index
    %c0_392 = arith.constant 0 : index
    %370 = vector.load %arg2[%c6_390, %c0_391, %c0_392] : memref<9x16x144xf32, #tpu.memory_space<vmem>>, vector<1x8x72xf32>
    %371 = vector.shape_cast %370 : vector<1x8x72xf32> to vector<8x72xf32>
    %c0_393 = arith.constant 0 : index
    %c0_394 = arith.constant 0 : index
    %372 = vector.load %arg6[%c0_393, %c0_394] : memref<144x256xf32, #tpu.memory_space<vmem>>, vector<72x256xf32>
    %cst_395 = arith.constant dense<0.000000e+00> : vector<8x256xf32>
    %373 = tpu.matmul %371, %372, %cst_395 {dimension_numbers = #tpu.dot_dimension_numbers<[1], [0], [0], [1], [0, 0, 1, 1], [], []>, precision = #tpu.contract_precision<fp32>} : vector<8x72xf32>, vector<72x256xf32>, vector<8x256xf32> -> vector<8x256xf32>
    %c6_396 = arith.constant 6 : index
    %c0_397 = arith.constant 0 : index
    %c0_398 = arith.constant 0 : index
    %374 = vector.load %arg3[%c6_396, %c0_397, %c0_398] : memref<9x16x1xf32, #tpu.memory_space<vmem>>, vector<1x8x1xf32>
    %375 = vector.shape_cast %374 : vector<1x8x1xf32> to vector<8x1xf32>
    %376 = vector.broadcast %375 : vector<8x1xf32> to vector<8x256xf32>
    %377 = arith.addf %373, %376 : vector<8x256xf32>
    %cst_399 = arith.constant 0.000000e+00 : f32
    %378 = vector.broadcast %cst_399 : f32 to vector<8x256xf32>
    %379 = arith.cmpf oge, %377, %378 : vector<8x256xf32>
    %cst_400 = arith.constant 0.00999999977 : f32
    %380 = vector.broadcast %cst_400 : f32 to vector<8x256xf32>
    %381 = arith.mulf %380, %377 : vector<8x256xf32>
    %382 = arith.select %379, %377, %381 : vector<8x256xi1>, vector<8x256xf32>
    %c17_i32_401 = arith.constant 17 : i32
    %383 = tpu.dynamic_rotate %382 by %c17_i32_401 dim 1 : vector<8x256xf32>, i32 -> vector<8x256xf32>
    %c0_402 = arith.constant 0 : index
    %c0_403 = arith.constant 0 : index
    %c0_404 = arith.constant 0 : index
    %384 = vector.load %arg4[%c0_402, %c0_403, %c0_404] : memref<8x16x256xf32, #tpu.memory_space<vmem>>, vector<1x8x256xf32>
    %385 = vector.shape_cast %384 : vector<1x8x256xf32> to vector<8x256xf32>
    %386 = arith.mulf %383, %385 : vector<8x256xf32>
    %c0_405 = arith.constant 0 : index
    %c0_406 = arith.constant 0 : index
    %387 = vector.load %arg6[%c0_405, %c0_406] : memref<144x256xf32, #tpu.memory_space<vmem>>, vector<8x256xf32>
    tpu.vector_store %arg6[%c0_405, %c0_406], %386 {strides = array<i32>} : memref<144x256xf32, #tpu.memory_space<vmem>>, vector<8x256xf32>,
    %c16_i32_407 = arith.constant 16 : i32
    %388 = tpu.dynamic_rotate %382 by %c16_i32_407 dim 1 : vector<8x256xf32>, i32 -> vector<8x256xf32>
    %c1_408 = arith.constant 1 : index
    %c0_409 = arith.constant 0 : index
    %c0_410 = arith.constant 0 : index
    %389 = vector.load %arg4[%c1_408, %c0_409, %c0_410] : memref<8x16x256xf32, #tpu.memory_space<vmem>>, vector<1x8x256xf32>
    %390 = vector.shape_cast %389 : vector<1x8x256xf32> to vector<8x256xf32>
    %391 = arith.mulf %388, %390 : vector<8x256xf32>
    %c8_411 = arith.constant 8 : index
    %c0_412 = arith.constant 0 : index
    %392 = vector.load %arg6[%c8_411, %c0_412] : memref<144x256xf32, #tpu.memory_space<vmem>>, vector<8x256xf32>
    tpu.vector_store %arg6[%c8_411, %c0_412], %391 {strides = array<i32>} : memref<144x256xf32, #tpu.memory_space<vmem>>, vector<8x256xf32>,
    %c15_i32_413 = arith.constant 15 : i32
    %393 = tpu.dynamic_rotate %382 by %c15_i32_413 dim 1 : vector<8x256xf32>, i32 -> vector<8x256xf32>
    %c2_414 = arith.constant 2 : index
    %c0_415 = arith.constant 0 : index
    %c0_416 = arith.constant 0 : index
    %394 = vector.load %arg4[%c2_414, %c0_415, %c0_416] : memref<8x16x256xf32, #tpu.memory_space<vmem>>, vector<1x8x256xf32>
    %395 = vector.shape_cast %394 : vector<1x8x256xf32> to vector<8x256xf32>
    %396 = arith.mulf %393, %395 : vector<8x256xf32>
    %c16_417 = arith.constant 16 : index
    %c0_418 = arith.constant 0 : index
    %397 = vector.load %arg6[%c16_417, %c0_418] : memref<144x256xf32, #tpu.memory_space<vmem>>, vector<8x256xf32>
    tpu.vector_store %arg6[%c16_417, %c0_418], %396 {strides = array<i32>} : memref<144x256xf32, #tpu.memory_space<vmem>>, vector<8x256xf32>,
    %c1_i32_419 = arith.constant 1 : i32
    %398 = tpu.dynamic_rotate %382 by %c1_i32_419 dim 1 : vector<8x256xf32>, i32 -> vector<8x256xf32>
    %c3_420 = arith.constant 3 : index
    %c0_421 = arith.constant 0 : index
    %c0_422 = arith.constant 0 : index
    %399 = vector.load %arg4[%c3_420, %c0_421, %c0_422] : memref<8x16x256xf32, #tpu.memory_space<vmem>>, vector<1x8x256xf32>
    %400 = vector.shape_cast %399 : vector<1x8x256xf32> to vector<8x256xf32>
    %401 = arith.mulf %398, %400 : vector<8x256xf32>
    %c24_423 = arith.constant 24 : index
    %c0_424 = arith.constant 0 : index
    %402 = vector.load %arg6[%c24_423, %c0_424] : memref<144x256xf32, #tpu.memory_space<vmem>>, vector<8x256xf32>
    tpu.vector_store %arg6[%c24_423, %c0_424], %401 {strides = array<i32>} : memref<144x256xf32, #tpu.memory_space<vmem>>, vector<8x256xf32>,
    %c32_425 = arith.constant 32 : index
    %c0_426 = arith.constant 0 : index
    %403 = vector.load %arg6[%c32_425, %c0_426] : memref<144x256xf32, #tpu.memory_space<vmem>>, vector<8x256xf32>
    tpu.vector_store %arg6[%c32_425, %c0_426], %382 {strides = array<i32>} : memref<144x256xf32, #tpu.memory_space<vmem>>, vector<8x256xf32>,
    %c255_i32_427 = arith.constant 255 : i32
    %404 = tpu.dynamic_rotate %382 by %c255_i32_427 dim 1 : vector<8x256xf32>, i32 -> vector<8x256xf32>
    %c4_428 = arith.constant 4 : index
    %c0_429 = arith.constant 0 : index
    %c0_430 = arith.constant 0 : index
    %405 = vector.load %arg4[%c4_428, %c0_429, %c0_430] : memref<8x16x256xf32, #tpu.memory_space<vmem>>, vector<1x8x256xf32>
    %406 = vector.shape_cast %405 : vector<1x8x256xf32> to vector<8x256xf32>
    %407 = arith.mulf %404, %406 : vector<8x256xf32>
    %c40_431 = arith.constant 40 : index
    %c0_432 = arith.constant 0 : index
    %408 = vector.load %arg6[%c40_431, %c0_432] : memref<144x256xf32, #tpu.memory_space<vmem>>, vector<8x256xf32>
    tpu.vector_store %arg6[%c40_431, %c0_432], %407 {strides = array<i32>} : memref<144x256xf32, #tpu.memory_space<vmem>>, vector<8x256xf32>,
    %c241_i32_433 = arith.constant 241 : i32
    %409 = tpu.dynamic_rotate %382 by %c241_i32_433 dim 1 : vector<8x256xf32>, i32 -> vector<8x256xf32>
    %c5_434 = arith.constant 5 : index
    %c0_435 = arith.constant 0 : index
    %c0_436 = arith.constant 0 : index
    %410 = vector.load %arg4[%c5_434, %c0_435, %c0_436] : memref<8x16x256xf32, #tpu.memory_space<vmem>>, vector<1x8x256xf32>
    %411 = vector.shape_cast %410 : vector<1x8x256xf32> to vector<8x256xf32>
    %412 = arith.mulf %409, %411 : vector<8x256xf32>
    %c48_437 = arith.constant 48 : index
    %c0_438 = arith.constant 0 : index
    %413 = vector.load %arg6[%c48_437, %c0_438] : memref<144x256xf32, #tpu.memory_space<vmem>>, vector<8x256xf32>
    tpu.vector_store %arg6[%c48_437, %c0_438], %412 {strides = array<i32>} : memref<144x256xf32, #tpu.memory_space<vmem>>, vector<8x256xf32>,
    %c240_i32_439 = arith.constant 240 : i32
    %414 = tpu.dynamic_rotate %382 by %c240_i32_439 dim 1 : vector<8x256xf32>, i32 -> vector<8x256xf32>
    %c6_440 = arith.constant 6 : index
    %c0_441 = arith.constant 0 : index
    %c0_442 = arith.constant 0 : index
    %415 = vector.load %arg4[%c6_440, %c0_441, %c0_442] : memref<8x16x256xf32, #tpu.memory_space<vmem>>, vector<1x8x256xf32>
    %416 = vector.shape_cast %415 : vector<1x8x256xf32> to vector<8x256xf32>
    %417 = arith.mulf %414, %416 : vector<8x256xf32>
    %c56_443 = arith.constant 56 : index
    %c0_444 = arith.constant 0 : index
    %418 = vector.load %arg6[%c56_443, %c0_444] : memref<144x256xf32, #tpu.memory_space<vmem>>, vector<8x256xf32>
    tpu.vector_store %arg6[%c56_443, %c0_444], %417 {strides = array<i32>} : memref<144x256xf32, #tpu.memory_space<vmem>>, vector<8x256xf32>,
    %c239_i32_445 = arith.constant 239 : i32
    %419 = tpu.dynamic_rotate %382 by %c239_i32_445 dim 1 : vector<8x256xf32>, i32 -> vector<8x256xf32>
    %c7_446 = arith.constant 7 : index
    %c0_447 = arith.constant 0 : index
    %c0_448 = arith.constant 0 : index
    %420 = vector.load %arg4[%c7_446, %c0_447, %c0_448] : memref<8x16x256xf32, #tpu.memory_space<vmem>>, vector<1x8x256xf32>
    %421 = vector.shape_cast %420 : vector<1x8x256xf32> to vector<8x256xf32>
    %422 = arith.mulf %419, %421 : vector<8x256xf32>
    %c64_449 = arith.constant 64 : index
    %c0_450 = arith.constant 0 : index
    %423 = vector.load %arg6[%c64_449, %c0_450] : memref<144x256xf32, #tpu.memory_space<vmem>>, vector<8x256xf32>
    tpu.vector_store %arg6[%c64_449, %c0_450], %422 {strides = array<i32>} : memref<144x256xf32, #tpu.memory_space<vmem>>, vector<8x256xf32>,
    %c7_451 = arith.constant 7 : index
    %c0_452 = arith.constant 0 : index
    %c0_453 = arith.constant 0 : index
    %424 = vector.load %arg2[%c7_451, %c0_452, %c0_453] : memref<9x16x144xf32, #tpu.memory_space<vmem>>, vector<1x16x72xf32>
    %425 = vector.shape_cast %424 : vector<1x16x72xf32> to vector<16x72xf32>
    %c0_454 = arith.constant 0 : index
    %c0_455 = arith.constant 0 : index
    %426 = vector.load %arg6[%c0_454, %c0_455] : memref<144x256xf32, #tpu.memory_space<vmem>>, vector<72x256xf32>
    %cst_456 = arith.constant dense<0.000000e+00> : vector<16x256xf32>
    %427 = tpu.matmul %425, %426, %cst_456 {dimension_numbers = #tpu.dot_dimension_numbers<[1], [0], [0], [1], [0, 0, 1, 1], [], []>, precision = #tpu.contract_precision<fp32>} : vector<16x72xf32>, vector<72x256xf32>, vector<16x256xf32> -> vector<16x256xf32>
    %c7_457 = arith.constant 7 : index
    %c0_458 = arith.constant 0 : index
    %c0_459 = arith.constant 0 : index
    %428 = vector.load %arg3[%c7_457, %c0_458, %c0_459] : memref<9x16x1xf32, #tpu.memory_space<vmem>>, vector<1x16x1xf32>
    %429 = vector.shape_cast %428 : vector<1x16x1xf32> to vector<16x1xf32>
    %430 = vector.broadcast %429 : vector<16x1xf32> to vector<16x256xf32>
    %431 = arith.addf %427, %430 : vector<16x256xf32>
    %cst_460 = arith.constant 0.000000e+00 : f32
    %432 = vector.broadcast %cst_460 : f32 to vector<16x256xf32>
    %433 = arith.cmpf oge, %431, %432 : vector<16x256xf32>
    %cst_461 = arith.constant 0.00999999977 : f32
    %434 = vector.broadcast %cst_461 : f32 to vector<16x256xf32>
    %435 = arith.mulf %434, %431 : vector<16x256xf32>
    %436 = arith.select %433, %431, %435 : vector<16x256xi1>, vector<16x256xf32>
    %c17_i32_462 = arith.constant 17 : i32
    %437 = tpu.dynamic_rotate %436 by %c17_i32_462 dim 1 : vector<16x256xf32>, i32 -> vector<16x256xf32>
    %c0_463 = arith.constant 0 : index
    %c0_464 = arith.constant 0 : index
    %c0_465 = arith.constant 0 : index
    %438 = vector.load %arg4[%c0_463, %c0_464, %c0_465] : memref<8x16x256xf32, #tpu.memory_space<vmem>>, vector<1x16x256xf32>
    %439 = vector.shape_cast %438 : vector<1x16x256xf32> to vector<16x256xf32>
    %440 = arith.mulf %437, %439 : vector<16x256xf32>
    %c0_466 = arith.constant 0 : index
    %c0_467 = arith.constant 0 : index
    %441 = vector.load %arg6[%c0_466, %c0_467] : memref<144x256xf32, #tpu.memory_space<vmem>>, vector<16x256xf32>
    tpu.vector_store %arg6[%c0_466, %c0_467], %440 {strides = array<i32>} : memref<144x256xf32, #tpu.memory_space<vmem>>, vector<16x256xf32>,
    %c16_i32_468 = arith.constant 16 : i32
    %442 = tpu.dynamic_rotate %436 by %c16_i32_468 dim 1 : vector<16x256xf32>, i32 -> vector<16x256xf32>
    %c1_469 = arith.constant 1 : index
    %c0_470 = arith.constant 0 : index
    %c0_471 = arith.constant 0 : index
    %443 = vector.load %arg4[%c1_469, %c0_470, %c0_471] : memref<8x16x256xf32, #tpu.memory_space<vmem>>, vector<1x16x256xf32>
    %444 = vector.shape_cast %443 : vector<1x16x256xf32> to vector<16x256xf32>
    %445 = arith.mulf %442, %444 : vector<16x256xf32>
    %c16_472 = arith.constant 16 : index
    %c0_473 = arith.constant 0 : index
    %446 = vector.load %arg6[%c16_472, %c0_473] : memref<144x256xf32, #tpu.memory_space<vmem>>, vector<16x256xf32>
    tpu.vector_store %arg6[%c16_472, %c0_473], %445 {strides = array<i32>} : memref<144x256xf32, #tpu.memory_space<vmem>>, vector<16x256xf32>,
    %c15_i32_474 = arith.constant 15 : i32
    %447 = tpu.dynamic_rotate %436 by %c15_i32_474 dim 1 : vector<16x256xf32>, i32 -> vector<16x256xf32>
    %c2_475 = arith.constant 2 : index
    %c0_476 = arith.constant 0 : index
    %c0_477 = arith.constant 0 : index
    %448 = vector.load %arg4[%c2_475, %c0_476, %c0_477] : memref<8x16x256xf32, #tpu.memory_space<vmem>>, vector<1x16x256xf32>
    %449 = vector.shape_cast %448 : vector<1x16x256xf32> to vector<16x256xf32>
    %450 = arith.mulf %447, %449 : vector<16x256xf32>
    %c32_478 = arith.constant 32 : index
    %c0_479 = arith.constant 0 : index
    %451 = vector.load %arg6[%c32_478, %c0_479] : memref<144x256xf32, #tpu.memory_space<vmem>>, vector<16x256xf32>
    tpu.vector_store %arg6[%c32_478, %c0_479], %450 {strides = array<i32>} : memref<144x256xf32, #tpu.memory_space<vmem>>, vector<16x256xf32>,
    %c1_i32_480 = arith.constant 1 : i32
    %452 = tpu.dynamic_rotate %436 by %c1_i32_480 dim 1 : vector<16x256xf32>, i32 -> vector<16x256xf32>
    %c3_481 = arith.constant 3 : index
    %c0_482 = arith.constant 0 : index
    %c0_483 = arith.constant 0 : index
    %453 = vector.load %arg4[%c3_481, %c0_482, %c0_483] : memref<8x16x256xf32, #tpu.memory_space<vmem>>, vector<1x16x256xf32>
    %454 = vector.shape_cast %453 : vector<1x16x256xf32> to vector<16x256xf32>
    %455 = arith.mulf %452, %454 : vector<16x256xf32>
    %c48_484 = arith.constant 48 : index
    %c0_485 = arith.constant 0 : index
    %456 = vector.load %arg6[%c48_484, %c0_485] : memref<144x256xf32, #tpu.memory_space<vmem>>, vector<16x256xf32>
    tpu.vector_store %arg6[%c48_484, %c0_485], %455 {strides = array<i32>} : memref<144x256xf32, #tpu.memory_space<vmem>>, vector<16x256xf32>,
    %c64_486 = arith.constant 64 : index
    %c0_487 = arith.constant 0 : index
    %457 = vector.load %arg6[%c64_486, %c0_487] : memref<144x256xf32, #tpu.memory_space<vmem>>, vector<16x256xf32>
    tpu.vector_store %arg6[%c64_486, %c0_487], %436 {strides = array<i32>} : memref<144x256xf32, #tpu.memory_space<vmem>>, vector<16x256xf32>,
    %c255_i32_488 = arith.constant 255 : i32
    %458 = tpu.dynamic_rotate %436 by %c255_i32_488 dim 1 : vector<16x256xf32>, i32 -> vector<16x256xf32>
    %c4_489 = arith.constant 4 : index
    %c0_490 = arith.constant 0 : index
    %c0_491 = arith.constant 0 : index
    %459 = vector.load %arg4[%c4_489, %c0_490, %c0_491] : memref<8x16x256xf32, #tpu.memory_space<vmem>>, vector<1x16x256xf32>
    %460 = vector.shape_cast %459 : vector<1x16x256xf32> to vector<16x256xf32>
    %461 = arith.mulf %458, %460 : vector<16x256xf32>
    %c80_492 = arith.constant 80 : index
    %c0_493 = arith.constant 0 : index
    %462 = vector.load %arg6[%c80_492, %c0_493] : memref<144x256xf32, #tpu.memory_space<vmem>>, vector<16x256xf32>
    tpu.vector_store %arg6[%c80_492, %c0_493], %461 {strides = array<i32>} : memref<144x256xf32, #tpu.memory_space<vmem>>, vector<16x256xf32>,
    %c241_i32_494 = arith.constant 241 : i32
    %463 = tpu.dynamic_rotate %436 by %c241_i32_494 dim 1 : vector<16x256xf32>, i32 -> vector<16x256xf32>
    %c5_495 = arith.constant 5 : index
    %c0_496 = arith.constant 0 : index
    %c0_497 = arith.constant 0 : index
    %464 = vector.load %arg4[%c5_495, %c0_496, %c0_497] : memref<8x16x256xf32, #tpu.memory_space<vmem>>, vector<1x16x256xf32>
    %465 = vector.shape_cast %464 : vector<1x16x256xf32> to vector<16x256xf32>
    %466 = arith.mulf %463, %465 : vector<16x256xf32>
    %c96_498 = arith.constant 96 : index
    %c0_499 = arith.constant 0 : index
    %467 = vector.load %arg6[%c96_498, %c0_499] : memref<144x256xf32, #tpu.memory_space<vmem>>, vector<16x256xf32>
    tpu.vector_store %arg6[%c96_498, %c0_499], %466 {strides = array<i32>} : memref<144x256xf32, #tpu.memory_space<vmem>>, vector<16x256xf32>,
    %c240_i32_500 = arith.constant 240 : i32
    %468 = tpu.dynamic_rotate %436 by %c240_i32_500 dim 1 : vector<16x256xf32>, i32 -> vector<16x256xf32>
    %c6_501 = arith.constant 6 : index
    %c0_502 = arith.constant 0 : index
    %c0_503 = arith.constant 0 : index
    %469 = vector.load %arg4[%c6_501, %c0_502, %c0_503] : memref<8x16x256xf32, #tpu.memory_space<vmem>>, vector<1x16x256xf32>
    %470 = vector.shape_cast %469 : vector<1x16x256xf32> to vector<16x256xf32>
    %471 = arith.mulf %468, %470 : vector<16x256xf32>
    %c112_504 = arith.constant 112 : index
    %c0_505 = arith.constant 0 : index
    %472 = vector.load %arg6[%c112_504, %c0_505] : memref<144x256xf32, #tpu.memory_space<vmem>>, vector<16x256xf32>
    tpu.vector_store %arg6[%c112_504, %c0_505], %471 {strides = array<i32>} : memref<144x256xf32, #tpu.memory_space<vmem>>, vector<16x256xf32>,
    %c239_i32_506 = arith.constant 239 : i32
    %473 = tpu.dynamic_rotate %436 by %c239_i32_506 dim 1 : vector<16x256xf32>, i32 -> vector<16x256xf32>
    %c7_507 = arith.constant 7 : index
    %c0_508 = arith.constant 0 : index
    %c0_509 = arith.constant 0 : index
    %474 = vector.load %arg4[%c7_507, %c0_508, %c0_509] : memref<8x16x256xf32, #tpu.memory_space<vmem>>, vector<1x16x256xf32>
    %475 = vector.shape_cast %474 : vector<1x16x256xf32> to vector<16x256xf32>
    %476 = arith.mulf %473, %475 : vector<16x256xf32>
    %c128_510 = arith.constant 128 : index
    %c0_511 = arith.constant 0 : index
    %477 = vector.load %arg6[%c128_510, %c0_511] : memref<144x256xf32, #tpu.memory_space<vmem>>, vector<16x256xf32>
    tpu.vector_store %arg6[%c128_510, %c0_511], %476 {strides = array<i32>} : memref<144x256xf32, #tpu.memory_space<vmem>>, vector<16x256xf32>,
    %c8_512 = arith.constant 8 : index
    %c0_513 = arith.constant 0 : index
    %c0_514 = arith.constant 0 : index
    %478 = vector.load %arg2[%c8_512, %c0_513, %c0_514] : memref<9x16x144xf32, #tpu.memory_space<vmem>>, vector<1x8x144xf32>
    %479 = vector.shape_cast %478 : vector<1x8x144xf32> to vector<8x144xf32>
    %c0_515 = arith.constant 0 : index
    %c0_516 = arith.constant 0 : index
    %480 = vector.load %arg6[%c0_515, %c0_516] : memref<144x256xf32, #tpu.memory_space<vmem>>, vector<144x256xf32>
    %cst_517 = arith.constant dense<0.000000e+00> : vector<8x256xf32>
    %481 = tpu.matmul %479, %480, %cst_517 {dimension_numbers = #tpu.dot_dimension_numbers<[1], [0], [0], [1], [0, 0, 1, 1], [], []>, precision = #tpu.contract_precision<fp32>} : vector<8x144xf32>, vector<144x256xf32>, vector<8x256xf32> -> vector<8x256xf32>
    %c8_518 = arith.constant 8 : index
    %c0_519 = arith.constant 0 : index
    %c0_520 = arith.constant 0 : index
    %482 = vector.load %arg3[%c8_518, %c0_519, %c0_520] : memref<9x16x1xf32, #tpu.memory_space<vmem>>, vector<1x8x1xf32>
    %483 = vector.shape_cast %482 : vector<1x8x1xf32> to vector<8x1xf32>
    %484 = vector.broadcast %483 : vector<8x1xf32> to vector<8x256xf32>
    %485 = arith.addf %481, %484 : vector<8x256xf32>
    %486 = vector.extract_strided_slice %485 {offsets = [0, 0], sizes = [1, 256], strides = [1, 1]} : vector<8x256xf32> to vector<1x256xf32>
    %c0_521 = arith.constant 0 : index
    %c0_522 = arith.constant 0 : index
    %c0_523 = arith.constant 0 : index
    %487 = vector.load %arg5[%c0_521, %c0_522, %c0_523] : memref<1x1x256xf32, #tpu.memory_space<vmem>>, vector<1x1x256xf32>
    %488 = vector.shape_cast %487 : vector<1x1x256xf32> to vector<1x256xf32>
    %489 = vector.shape_cast %486 : vector<1x256xf32> to vector<1x1x256xf32>
    tpu.vector_store %arg5[%c0_521, %c0_522, %c0_523], %489 {strides = array<i32>} : memref<1x1x256xf32, #tpu.memory_space<vmem>>, vector<1x1x256xf32>,
    return
  }
  func.func @transform_0(%arg0: i32) -> (i32, i32, i32) {
    %c0_i32 = arith.constant 0 : i32
    %c0_i32_0 = arith.constant 0 : i32
    %c0_i32_1 = arith.constant 0 : i32
    return %arg0, %c0_i32, %c0_i32_0 : i32, i32, i32
  }
  func.func @transform_1(%arg0: i32) -> (i32, i32, i32) {
    %c0_i32 = arith.constant 0 : i32
    %c0_i32_0 = arith.constant 0 : i32
    %c0_i32_1 = arith.constant 0 : i32
    %c0_i32_2 = arith.constant 0 : i32
    return %c0_i32, %c0_i32_0, %c0_i32_1 : i32, i32, i32
  }
  func.func @transform_2(%arg0: i32) -> (i32, i32, i32) {
    %c0_i32 = arith.constant 0 : i32
    %c0_i32_0 = arith.constant 0 : i32
    %c0_i32_1 = arith.constant 0 : i32
    %c0_i32_2 = arith.constant 0 : i32
    return %c0_i32, %c0_i32_0, %c0_i32_1 : i32, i32, i32
  }
  func.func @transform_3(%arg0: i32) -> (i32, i32, i32) {
    %c0_i32 = arith.constant 0 : i32
    %c0_i32_0 = arith.constant 0 : i32
    %c0_i32_1 = arith.constant 0 : i32
    %c0_i32_2 = arith.constant 0 : i32
    return %c0_i32, %c0_i32_0, %c0_i32_1 : i32, i32, i32
  }
  func.func @transform_4(%arg0: i32) -> (i32, i32, i32) {
    %c0_i32 = arith.constant 0 : i32
    %c0_i32_0 = arith.constant 0 : i32
    %c0_i32_1 = arith.constant 0 : i32
    return %arg0, %c0_i32, %c0_i32_0 : i32, i32, i32
  }
}

</mosaic_0001>

<llo_original>
// kernel: shallow_network_forward.1
$region0: #{shallow_network_forward.1}
  #allocation0 [shape = 'u32[]', space=smem, size = 0x4, offset = 0x4, fixed_abs, tag = 'smem constant byte address 0x4 - core index']
  #allocation1 [shape = 'u32[72,128]{1,0:T(1,128)}', space=vmem, size = 0x9000, scoped, tag = 'internal scratch']
  #allocation2 [shape = 'f32[144,256]{1,0:T(8,128)}', space=vmem, size = 0x24000, scoped, tag = 'scratch operand']
  %s0 = inlined_call_operand.vmem [shape: f32[2,8,256], index: 0, kind: input, shape index: {}]
  %s1 = inlined_call_operand.hbm [shape: f32[9,16,144], index: 1, kind: input, shape index: {}]
  %s2 = inlined_call_operand.vmem [shape: f32[9,16,1], index: 2, kind: input, shape index: {}]
  %s3 = inlined_call_operand.hbm [shape: f32[8,16,256], index: 3, kind: input, shape index: {}]
  %s4 = inlined_call_operand.vmem [shape: f32[2,1,256], index: 4, kind: output, shape index: {}]
  %s5 = sld [smem:[#allocation0]]
  $region57: #{shallow_network_forward.1} parent=0
    _
  %s7 = ssub.s32 1, %s5
  %s8 = scalar_select 0, %s7, %s5
  $region1: #{shallow_network_forward.1} parent=0
    #allocation3 [shape = 'u8[147456]{0}', space=vmem, size = 0x24000, scoped, tag = 'input window, operand 1, single buffered']
    #allocation4 [shape = 's32[2]{0}', space=sflag, size = 0x8, scoped, tag = 'scoped memory for shallow_network_forward.1']
    #allocation5 [shape = 'u8[131072]{0}', space=vmem, size = 0x20000, scoped, tag = 'input window, operand 3, single buffered']
    #allocation6 [shape = 's32[1]{0}', space=sflag, size = 0x4, scoped, tag = 'scoped memory for shallow_network_forward.1']
    %9 = vsyncpa [#allocation4], 0
    %10 = vsyncpa [#allocation6], 0
    loop: start=0, step=1, limit=4
    $region2: #{shallow_network_forward.1} parent=1 // loop_pre_header
      _
    $region3: #{shallow_network_forward.1} parent=1 // loop_header
      %s12 = sphi 0, %s16
      %p13 = scmp.ge.s32.totalorder %s12, 4
      %s22 = sphi 0, %s24
      %s25 = sphi 0, %s22
      %s26 = sphi 0, %s25
      %s42 = sphi 0, %s26
      %s46 = sphi 0, %s46
      %s48 = sphi 0, %s46
      %s49 = sphi 0, %s48
      %s63 = sphi 0, %s49
      %s67 = sphi 0, %s67
      %s69 = sphi 0, %s67
      %s70 = sphi 0, %s69
      %s84 = sphi 0, %s70
      %s88 = sphi 0, %s88
      %s90 = sphi 0, %s88
      %s91 = sphi 0, %s90
      %s105 = sphi 0, %s91
      %s111 = sphi 0, %s113
      %s114 = sphi 0, %s111
      %s115 = sphi 0, %s114
      %s131 = sphi 0, %s115
    $region4: #{shallow_network_forward.1} parent=1 // loop_header_branch
      %15 = sbr.rel (%p13) target = $region8
    $region5: #{shallow_network_forward.1} parent=1 // loop_body
      %s17 = ssub.s32 %s12, 1
      %s18 = ssub.s32 %s12, 2
      %s19 = sadd.s32 %s12, 1
      %s20 = ssub.s32 %s12, %s19
      %p21 = scmp.eq.s32.totalorder %s20, 0
      %s23 = sadd.s32 %s22, 1
      %s24 = scalar_select %p21, %s22, %s23
      %p27 = pneg %p21
      %p28 = scmp.eq.s32.totalorder %s12, 1
      %p29 = por %p27, %p28
      %p30 = scmp.ne.s32.totalorder %s22, %s25
      %p31 = scmp.eq.s32.totalorder %s12, 0
      %p32 = por %p30, %p31
      %p33 = scmp.ne.s32.totalorder %s22, %s25
      %p34 = scmp.eq.s32.totalorder %s17, 1
      %p35 = por %p33, %p34
      %p36 = scmp.ne.s32.totalorder %s25, %s26
      %p37 = scmp.eq.s32.totalorder %s17, 0
      %p38 = por %p36, %p37
      %p39 = scmp.ne.s32.totalorder %s25, %s26
      %p40 = scmp.eq.s32.totalorder %s18, 1
      %p41 = por %p39, %p40
      %p43 = scmp.ne.s32.totalorder %s26, %s42
      %p44 = scmp.eq.s32.totalorder %s18, 0
      %p45 = por %p43, %p44
      %s47 = sadd.s32 %s46, 1
      %p50 = scmp.eq.s32.totalorder %s12, 1
      %p51 = scmp.ne.s32.totalorder %s46, %s48
      %p52 = scmp.eq.s32.totalorder %s12, 0
      %p53 = por %p51, %p52
      %p54 = scmp.ne.s32.totalorder %s46, %s48
      %p55 = scmp.eq.s32.totalorder %s17, 1
      %p56 = por %p54, %p55
      %p57 = scmp.ne.s32.totalorder %s48, %s49
      %p58 = scmp.eq.s32.totalorder %s17, 0
      %p59 = por %p57, %p58
      %p60 = scmp.ne.s32.totalorder %s48, %s49
      %p61 = scmp.eq.s32.totalorder %s18, 1
      %p62 = por %p60, %p61
      %p64 = scmp.ne.s32.totalorder %s49, %s63
      %p65 = scmp.eq.s32.totalorder %s18, 0
      %p66 = por %p64, %p65
      %s68 = sadd.s32 %s67, 1
      %p71 = scmp.eq.s32.totalorder %s12, 1
      %p72 = scmp.ne.s32.totalorder %s67, %s69
      %p73 = scmp.eq.s32.totalorder %s12, 0
      %p74 = por %p72, %p73
      %p75 = scmp.ne.s32.totalorder %s67, %s69
      %p76 = scmp.eq.s32.totalorder %s17, 1
      %p77 = por %p75, %p76
      %p78 = scmp.ne.s32.totalorder %s69, %s70
      %p79 = scmp.eq.s32.totalorder %s17, 0
      %p80 = por %p78, %p79
      %p81 = scmp.ne.s32.totalorder %s69, %s70
      %p82 = scmp.eq.s32.totalorder %s18, 1
      %p83 = por %p81, %p82
      %p85 = scmp.ne.s32.totalorder %s70, %s84
      %p86 = scmp.eq.s32.totalorder %s18, 0
      %p87 = por %p85, %p86
      %s89 = sadd.s32 %s88, 1
      %p92 = scmp.eq.s32.totalorder %s12, 1
      %p93 = scmp.ne.s32.totalorder %s88, %s90
      %p94 = scmp.eq.s32.totalorder %s12, 0
      %p95 = por %p93, %p94
      %p96 = scmp.ne.s32.totalorder %s88, %s90
      %p97 = scmp.eq.s32.totalorder %s17, 1
      %p98 = por %p96, %p97
      %p99 = scmp.ne.s32.totalorder %s90, %s91
      %p100 = scmp.eq.s32.totalorder %s17, 0
      %p101 = por %p99, %p100
      %p102 = scmp.ne.s32.totalorder %s90, %s91
      %p103 = scmp.eq.s32.totalorder %s18, 1
      %p104 = por %p102, %p103
      %p106 = scmp.ne.s32.totalorder %s91, %s105
      %p107 = scmp.eq.s32.totalorder %s18, 0
      %p108 = por %p106, %p107
      %s109 = ssub.s32 %s12, %s19
      %p110 = scmp.eq.s32.totalorder %s109, 0
      %s112 = sadd.s32 %s111, 1
      %s113 = scalar_select %p110, %s111, %s112
      %p116 = pneg %p110
      %p117 = scmp.eq.s32.totalorder %s12, 1
      %p118 = por %p116, %p117
      %p119 = scmp.ne.s32.totalorder %s111, %s114
      %p120 = scmp.eq.s32.totalorder %s12, 0
      %p121 = por %p119, %p120
      %p122 = scmp.ne.s32.totalorder %s111, %s114
      %p123 = scmp.eq.s32.totalorder %s17, 1
      %p124 = por %p122, %p123
      %p125 = scmp.ne.s32.totalorder %s114, %s115
      %p126 = scmp.eq.s32.totalorder %s17, 0
      %p127 = por %p125, %p126
      %p128 = scmp.ne.s32.totalorder %s114, %s115
      %p129 = scmp.eq.s32.totalorder %s18, 1
      %p130 = por %p128, %p129
      %p132 = scmp.ne.s32.totalorder %s115, %s131
      %p133 = scmp.eq.s32.totalorder %s18, 0
      %p134 = por %p132, %p133
      %p135 = scmp.le.s32.totalorder 1, %s12
      %p136 = scmp.lt.s32.totalorder %s12, 3
      %p137 = pnand %p135, %p136
      %p138 = pneg %p137
      // Predicated region
      $region9: #{shallow_network_forward.1} parent=5 // pred_check
        _
      $region10: #{shallow_network_forward.1} parent=5 // pred_check_branch
        %140 = sbr.rel (%p137) target = $region12
      $region11: #{shallow_network_forward.1} parent=5 // pred_region
        %s141 = ssub.s32 %s12, 1
        // Predicated region
        $region13: #{shallow_network_forward.1} parent=11 // pred_check
          %p142 = pneg %p59
        $region14: #{shallow_network_forward.1} parent=11 // pred_check_branch
          %144 = sbr.rel (%p142) target = $region16
        $region15: #{shallow_network_forward.1} parent=11 // pred_region
          %146 = vsyncadd [#allocation4], 0
          %s147 = sshll.u32 %s1, 4
          %s148 = int_to_ptr.hbm [resolvable:$true] %s147
          %s149 = sshll.u32 [#allocation3], 4
          %s150 = int_to_ptr.vmem [resolvable:$true] %s149
          %155 = dma.hbm_to_vmem [thread:$0]  %s148, 4608, %s150, [#allocation4], 256, 256, 16
        $region16: #{shallow_network_forward.1} parent=11 // pred_fallthru
          _
        // Predicated region
        $region17: #{shallow_network_forward.1} parent=11 // pred_check
          %p156 = pneg %p80
        $region18: #{shallow_network_forward.1} parent=11 // pred_check_branch
          %158 = sbr.rel (%p156) target = $region20
        $region19: #{shallow_network_forward.1} parent=11 // pred_region
          _
        $region20: #{shallow_network_forward.1} parent=11 // pred_fallthru
          _
        // Predicated region
        $region21: #{shallow_network_forward.1} parent=11 // pred_check
          %p159 = pneg %p101
        $region22: #{shallow_network_forward.1} parent=11 // pred_check_branch
          %161 = sbr.rel (%p159) target = $region24
        $region23: #{shallow_network_forward.1} parent=11 // pred_region
          %163 = vsyncadd [#allocation6], 0
          %s164 = sshll.u32 %s3, 4
          %s165 = int_to_ptr.hbm [resolvable:$true] %s164
          %s166 = sshll.u32 [#allocation5], 4
          %s167 = int_to_ptr.vmem [resolvable:$true] %s166
          %172 = dma.hbm_to_vmem [thread:$0]  %s165, 4096, %s167, [#allocation6], 256, 256, 16
        $region24: #{shallow_network_forward.1} parent=11 // pred_fallthru
          _
      $region12: #{shallow_network_forward.1} parent=5 // pred_fallthru
        _
      %p173 = scmp.lt.s32.totalorder %s12, 2
      // Predicated region
      $region25: #{shallow_network_forward.1} parent=5 // pred_check
        %p174 = pneg %p173
      $region26: #{shallow_network_forward.1} parent=5 // pred_check_branch
        %176 = sbr.rel (%p174) target = $region28
      $region27: #{shallow_network_forward.1} parent=5 // pred_region
        // Predicated region
        $region29: #{shallow_network_forward.1} parent=27 // pred_check
          %p177 = pneg %p32
        $region30: #{shallow_network_forward.1} parent=27 // pred_check_branch
          %179 = sbr.rel (%p177) target = $region32
        $region31: #{shallow_network_forward.1} parent=27 // pred_region
          %p180 = scmp.lt.s32.totalorder %s12, 1
          %s181 = scalar_select %p180, %s12, 1
          %s182 = smul.addr %s181, 2
          %s183 = smul.addr %s182, 8
          %s184 = scalar_lea.vmem %s0, %s183
        $region32: #{shallow_network_forward.1} parent=27 // pred_fallthru
          _
      $region28: #{shallow_network_forward.1} parent=5 // pred_fallthru
        _
      %p185 = scmp.le.s32.totalorder 1, %s12
      %p186 = scmp.lt.s32.totalorder %s12, 3
      %p187 = pnand %p185, %p186
      %p188 = pneg %p187
      // Predicated region
      $region33: #{shallow_network_forward.1} parent=5 // pred_check
        _
      $region34: #{shallow_network_forward.1} parent=5 // pred_check_branch
        %190 = sbr.rel (%p187) target = $region36
      $region35: #{shallow_network_forward.1} parent=5 // pred_region
        %s191 = ssub.s32 %s12, 1
        // Predicated region
        $region37: #{shallow_network_forward.1} parent=35 // pred_check
          %p192 = pneg %p59
        $region38: #{shallow_network_forward.1} parent=35 // pred_check_branch
          %194 = sbr.rel (%p192) target = $region40
        $region39: #{shallow_network_forward.1} parent=35 // pred_region
          %196 = dma.done [#allocation4], 4608
        $region40: #{shallow_network_forward.1} parent=35 // pred_fallthru
          _
        // Predicated region
        $region41: #{shallow_network_forward.1} parent=35 // pred_check
          %p197 = pneg %p101
        $region42: #{shallow_network_forward.1} parent=35 // pred_check_branch
          %199 = sbr.rel (%p197) target = $region44
        $region43: #{shallow_network_forward.1} parent=35 // pred_region
          %201 = dma.done [#allocation6], 4096
        $region44: #{shallow_network_forward.1} parent=35 // pred_fallthru
          _
        %p202 = scmp.lt.s32.totalorder %s17, 1
        %s203 = scalar_select %p202, %s17, 1
        %s204 = smul.addr %s203, 2
        %s205 = smul.addr %s204, 8
        %s206 = scalar_lea.vmem %s0, %s205
        %p207 = pneg %p38
        %p208 = pneg %p35
        %p209 = pneg %p59
        %p210 = pneg %p56
        %p211 = pneg %p80
        %p212 = pneg %p77
        %p213 = pneg %p101
        %p214 = pneg %p98
        %p215 = pneg %p127
        %p216 = pneg %p124
        %p217 = scmp.lt.s32.totalorder %s17, 1
        %s218 = scalar_select %p217, %s17, 1
        %s219 = smul.addr %s218, 2
        %s220 = scalar_lea.vmem %s4, %s219
        %p221 = scmp.lt.s32.totalorder %s17, 1
        %s222 = scalar_select %p221, %s17, 1
        %s223 = smul.addr %s222, 2
        %s224 = smul.addr %s223, 8
        %s225 = scalar_lea.vmem %s0, %s224
        %p226 = scmp.lt.s32.totalorder %s17, 1
        %s227 = scalar_select %p226, %s17, 1
        %s228 = smul.addr %s227, 2
        %s229 = scalar_lea.vmem %s4, %s228
        %v230 = vld [vmem:[%s225] sm:$0xff]
        %v231 = vld [vmem:[%s225 + $0x8] sm:$0xff]
        %232 = vrot.lane.b32.xlu0 %v230, 17
        %v233 = vpop.permute.xlu0 %232
        %234 = vrot.lane.b32.xlu0 %v231, 17
        %v235 = vpop.permute.xlu0 %234
        %v236 = vlaneseq
        %v237 = vand.u32 %v236, 127
        %vm238 = vcmp.lt.s32.totalorder %v237, 17
        %v239 = vsel %vm238, %v233, %v235
        %v240 = vsel %vm238, %v235, %v233
        %v241 = vld [vmem:[#allocation5] sm:$0xff]
        %v242 = vld [vmem:[#allocation5 + $0x8] sm:$0xff]
        %v243 = vmul.f32 %v240, %v241
        %v244 = vmul.f32 %v239, %v242
        %245 = vst [vmem:[#allocation2] sm:$0xff] %v243
        %246 = vst [vmem:[#allocation2 + $0x8] sm:$0xff] %v244
        %247 = vrot.lane.b32.xlu0 %v230, 16
        %v248 = vpop.permute.xlu0 %247
        %249 = vrot.lane.b32.xlu0 %v231, 16
        %v250 = vpop.permute.xlu0 %249
        %vm251 = vcmp.lt.s32.totalorder %v237, 16
        %v252 = vsel %vm251, %v248, %v250
        %v253 = vsel %vm251, %v250, %v248
        %s254 = scalar_lea.vmem [#allocation5], 32
        %v255 = vld [vmem:[%s254] sm:$0xff]
        %v256 = vld [vmem:[%s254 + $0x8] sm:$0xff]
        %v257 = vmul.f32 %v253, %v255
        %v258 = vmul.f32 %v252, %v256
        %259 = vst [vmem:[#allocation2 + $0x10] sm:$0xff] %v257
        %260 = vst [vmem:[#allocation2 + $0x18] sm:$0xff] %v258
        %261 = vrot.lane.b32.xlu0 %v230, 15
        %v262 = vpop.permute.xlu0 %261
        %263 = vrot.lane.b32.xlu0 %v231, 15
        %v264 = vpop.permute.xlu0 %263
        %vm265 = vcmp.lt.s32.totalorder %v237, 15
        %v266 = vsel %vm265, %v262, %v264
        %v267 = vsel %vm265, %v264, %v262
        %s268 = scalar_lea.vmem [#allocation5], 64
        %v269 = vld [vmem:[%s268] sm:$0xff]
        %v270 = vld [vmem:[%s268 + $0x8] sm:$0xff]
        %v271 = vmul.f32 %v267, %v269
        %v272 = vmul.f32 %v266, %v270
        %273 = vst [vmem:[#allocation2 + $0x20] sm:$0xff] %v271
        %274 = vst [vmem:[#allocation2 + $0x28] sm:$0xff] %v272
        %275 = vrot.lane.b32.xlu0 %v230, 1
        %v276 = vpop.permute.xlu0 %275
        %277 = vrot.lane.b32.xlu0 %v231, 1
        %v278 = vpop.permute.xlu0 %277
        %vm279 = vcmp.lt.s32.totalorder %v237, 1
        %v280 = vsel %vm279, %v276, %v278
        %v281 = vsel %vm279, %v278, %v276
        %s282 = scalar_lea.vmem [#allocation5], 96
        %v283 = vld [vmem:[%s282] sm:$0xff]
        %v284 = vld [vmem:[%s282 + $0x8] sm:$0xff]
        %v285 = vmul.f32 %v281, %v283
        %v286 = vmul.f32 %v280, %v284
        %287 = vst [vmem:[#allocation2 + $0x30] sm:$0xff] %v285
        %288 = vst [vmem:[#allocation2 + $0x38] sm:$0xff] %v286
        %289 = vst [vmem:[#allocation2 + $0x40] sm:$0xff] %v230
        %290 = vst [vmem:[#allocation2 + $0x48] sm:$0xff] %v231
        %291 = vrot.lane.b32.xlu0 %v230, 127
        %v292 = vpop.permute.xlu0 %291
        %293 = vrot.lane.b32.xlu0 %v231, 127
        %v294 = vpop.permute.xlu0 %293
        %vm295 = vcmp.lt.s32.totalorder %v237, 127
        %v296 = vsel %vm295, %v292, %v294
        %v297 = vsel %vm295, %v294, %v292
        %s298 = scalar_lea.vmem [#allocation5], 128
        %v299 = vld [vmem:[%s298] sm:$0xff]
        %v300 = vld [vmem:[%s298 + $0x8] sm:$0xff]
        %v301 = vmul.f32 %v296, %v299
        %v302 = vmul.f32 %v297, %v300
        %303 = vst [vmem:[#allocation2 + $0x50] sm:$0xff] %v301
        %304 = vst [vmem:[#allocation2 + $0x58] sm:$0xff] %v302
        %305 = vrot.lane.b32.xlu0 %v230, 113
        %v306 = vpop.permute.xlu0 %305
        %307 = vrot.lane.b32.xlu0 %v231, 113
        %v308 = vpop.permute.xlu0 %307
        %vm309 = vcmp.lt.s32.totalorder %v237, 113
        %v310 = vsel %vm309, %v306, %v308
        %v311 = vsel %vm309, %v308, %v306
        %s312 = scalar_lea.vmem [#allocation5], 160
        %v313 = vld [vmem:[%s312] sm:$0xff]
        %v314 = vld [vmem:[%s312 + $0x8] sm:$0xff]
        %v315 = vmul.f32 %v310, %v313
        %v316 = vmul.f32 %v311, %v314
        %317 = vst [vmem:[#allocation2 + $0x60] sm:$0xff] %v315
        %318 = vst [vmem:[#allocation2 + $0x68] sm:$0xff] %v316
        %319 = vrot.lane.b32.xlu0 %v230, 112
        %v320 = vpop.permute.xlu0 %319
        %321 = vrot.lane.b32.xlu0 %v231, 112
        %v322 = vpop.permute.xlu0 %321
        %vm323 = vcmp.lt.s32.totalorder %v237, 112
        %v324 = vsel %vm323, %v320, %v322
        %v325 = vsel %vm323, %v322, %v320
        %s326 = scalar_lea.vmem [#allocation5], 192
        %v327 = vld [vmem:[%s326] sm:$0xff]
        %v328 = vld [vmem:[%s326 + $0x8] sm:$0xff]
        %v329 = vmul.f32 %v324, %v327
        %v330 = vmul.f32 %v325, %v328
        %331 = vst [vmem:[#allocation2 + $0x70] sm:$0xff] %v329
        %332 = vst [vmem:[#allocation2 + $0x78] sm:$0xff] %v330
        %333 = vrot.lane.b32.xlu0 %v230, 111
        %v334 = vpop.permute.xlu0 %333
        %335 = vrot.lane.b32.xlu0 %v231, 111
        %v336 = vpop.permute.xlu0 %335
        %vm337 = vcmp.lt.s32.totalorder %v237, 111
        %v338 = vsel %vm337, %v334, %v336
        %v339 = vsel %vm337, %v336, %v334
        %s340 = scalar_lea.vmem [#allocation5], 224
        %v341 = vld [vmem:[%s340] sm:$0xff]
        %v342 = vld [vmem:[%s340 + $0x8] sm:$0xff]
        %v343 = vmul.f32 %v338, %v341
        %v344 = vmul.f32 %v339, %v342
        %345 = vst [vmem:[#allocation2 + $0x80] sm:$0xff] %v343
        %346 = vst [vmem:[#allocation2 + $0x88] sm:$0xff] %v344
        %v347 = vld [vmem:[#allocation3] sm:$0xff]
        %v348 = vld [vmem:[#allocation3 + $0x10] sm:$0xff]
        %v349 = vld [vmem:[#allocation2] sm:$0xff]
        %v350 = vld [vmem:[#allocation2 + $0x8] sm:$0xff]
        %v351 = vld [vmem:[#allocation2 + $0x10] sm:$0xff]
        %v352 = vld [vmem:[#allocation2 + $0x18] sm:$0xff]
        %v353 = vld [vmem:[#allocation2 + $0x20] sm:$0xff]
        %v354 = vld [vmem:[#allocation2 + $0x28] sm:$0xff]
        %v355 = vld [vmem:[#allocation2 + $0x30] sm:$0xff]
        %v356 = vld [vmem:[#allocation2 + $0x38] sm:$0xff]
        %v357 = vld [vmem:[#allocation2 + $0x40] sm:$0xff]
        %v358 = vld [vmem:[#allocation2 + $0x48] sm:$0xff]
        %v359 = vld [vmem:[#allocation2 + $0x50] sm:$0xff]
        %v360 = vld [vmem:[#allocation2 + $0x58] sm:$0xff]
        %v361 = vld [vmem:[#allocation2 + $0x60] sm:$0xff]
        %v362 = vld [vmem:[#allocation2 + $0x68] sm:$0xff]
        %v363 = vld [vmem:[#allocation2 + $0x70] sm:$0xff]
        %v364 = vld [vmem:[#allocation2 + $0x78] sm:$0xff]
        %v365 = vld [vmem:[#allocation2 + $0x80] sm:$0xff]
        %v366 = vld [vmem:[#allocation2 + $0x88] sm:$0xff]
        %v367 = vld [vmem:[%s2] sm:$0xff]
        %v368 = vld [vmem:[%s2 + $0x8] sm:$0xff]
        %370 = vset.pattern.permute.xlu0 0
        %371 = vperm.xlu0 %370, %v367
        %v372 = vpop.permute.xlu0 %371
        %375 = vset.pattern.permute.xlu0 0
        %376 = vperm.xlu0 %375, %v368
        %v377 = vpop.permute.xlu0 %376
        %vm379 = vcmask 588800
        %v381 = vsel %vm379, %v347, 0
        %v384 = vsel %vm379, %v348, 0
        %386 = vmatpush.msra.mxu0 0.0
        %387 = vmatpush.msra.mxu0 0.0
        %388 = vmatpush.msra.mxu0 0.0
        %389 = vmatpush.msra.mxu0 0.0
        %390 = vmatpush.msra.mxu0 0.0
        %391 = vmatpush.msra.mxu0 0.0
        %392 = vmatpush.msra.mxu0 0.0
        %v393 = vand.u32 %v365, 4294901760
        %394 = vmatpush.msra.mxu0 %v393
        %v395 = vand.u32 %v363, 4294901760
        %396 = vmatpush.msra.mxu0 %v395
        %v397 = vand.u32 %v361, 4294901760
        %398 = vmatpush.msra.mxu0 %v397
        %v399 = vand.u32 %v359, 4294901760
        %400 = vmatpush.msra.mxu0 %v399
        %v401 = vand.u32 %v357, 4294901760
        %402 = vmatpush.msra.mxu0 %v401
        %v403 = vand.u32 %v355, 4294901760
        %404 = vmatpush.msra.mxu0 %v403
        %v405 = vand.u32 %v353, 4294901760
        %406 = vmatpush.msra.mxu0 %v405
        %v407 = vand.u32 %v351, 4294901760
        %408 = vmatpush.msra.mxu0 %v407
        %v409 = vand.u32 %v349, 4294901760
        %410 = vmatpush.msra.mxu0 %v409
        %v411 = vand.u32 %v381, 4294901760
        %v412 = vsub.f32 %v381, %v411
        %v413 = vand.u32 %v412, 4294901760
        %v414 = vsub.f32 %v412, %v413
        %v415 = vand.u32 %v414, 4294901760
        %416 = vmatmul.f32.gmra.mxu0 %v415
        %v417 = vpop.f32.mrf.mxu0
        %v418 = vadd.f32 %v372, %v417
        %v419 = vand.u32 %v384, 4294901760
        %v420 = vsub.f32 %v384, %v419
        %v421 = vand.u32 %v420, 4294901760
        %v422 = vsub.f32 %v420, %v421
        %v423 = vand.u32 %v422, 4294901760
        %424 = vmatmul.f32.gmra.mxu0 %v423
        %v425 = vpop.f32.mrf.mxu0
        %v426 = vadd.f32 %v377, %v425
        %427 = vdwg.mxu0
        %428 = vmatpush.msra.mxu0 0.0
        %429 = vmatpush.msra.mxu0 0.0
        %430 = vmatpush.msra.mxu0 0.0
        %431 = vmatpush.msra.mxu0 0.0
        %432 = vmatpush.msra.mxu0 0.0
        %433 = vmatpush.msra.mxu0 0.0
        %434 = vmatpush.msra.mxu0 0.0
        %v435 = vand.u32 %v365, 4294901760
        %v436 = vsub.f32 %v365, %v435
        %v437 = vand.u32 %v436, 4294901760
        %v438 = vsub.f32 %v436, %v437
        %v439 = vand.u32 %v438, 4294901760
        %440 = vmatpush.msra.mxu0 %v439
        %v441 = vand.u32 %v363, 4294901760
        %v442 = vsub.f32 %v363, %v441
        %v443 = vand.u32 %v442, 4294901760
        %v444 = vsub.f32 %v442, %v443
        %v445 = vand.u32 %v444, 4294901760
        %446 = vmatpush.msra.mxu0 %v445
        %v447 = vand.u32 %v361, 4294901760
        %v448 = vsub.f32 %v361, %v447
        %v449 = vand.u32 %v448, 4294901760
        %v450 = vsub.f32 %v448, %v449
        %v451 = vand.u32 %v450, 4294901760
        %452 = vmatpush.msra.mxu0 %v451
        %v453 = vand.u32 %v359, 4294901760
        %v454 = vsub.f32 %v359, %v453
        %v455 = vand.u32 %v454, 4294901760
        %v456 = vsub.f32 %v454, %v455
        %v457 = vand.u32 %v456, 4294901760
        %458 = vmatpush.msra.mxu0 %v457
        %v459 = vand.u32 %v357, 4294901760
        %v460 = vsub.f32 %v357, %v459
        %v461 = vand.u32 %v460, 4294901760
        %v462 = vsub.f32 %v460, %v461
        %v463 = vand.u32 %v462, 4294901760
        %464 = vmatpush.msra.mxu0 %v463
        %v465 = vand.u32 %v355, 4294901760
        %v466 = vsub.f32 %v355, %v465
        %v467 = vand.u32 %v466, 4294901760
        %v468 = vsub.f32 %v466, %v467
        %v469 = vand.u32 %v468, 4294901760
        %470 = vmatpush.msra.mxu0 %v469
        %v471 = vand.u32 %v353, 4294901760
        %v472 = vsub.f32 %v353, %v471
        %v473 = vand.u32 %v472, 4294901760
        %v474 = vsub.f32 %v472, %v473
        %v475 = vand.u32 %v474, 4294901760
        %476 = vmatpush.msra.mxu0 %v475
        %v477 = vand.u32 %v351, 4294901760
        %v478 = vsub.f32 %v351, %v477
        %v479 = vand.u32 %v478, 4294901760
        %v480 = vsub.f32 %v478, %v479
        %v481 = vand.u32 %v480, 4294901760
        %482 = vmatpush.msra.mxu0 %v481
        %v483 = vand.u32 %v349, 4294901760
        %v484 = vsub.f32 %v349, %v483
        %v485 = vand.u32 %v484, 4294901760
        %v486 = vsub.f32 %v484, %v485
        %v487 = vand.u32 %v486, 4294901760
        %488 = vmatpush.msra.mxu0 %v487
        %v489 = vand.u32 %v381, 4294901760
        %490 = vmatmul.f32.gmra.mxu0 %v489
        %v491 = vpop.f32.mrf.mxu0
        %v492 = vadd.f32 %v418, %v491
        %v493 = vand.u32 %v384, 4294901760
        %494 = vmatmul.f32.gmra.mxu0 %v493
        %v495 = vpop.f32.mrf.mxu0
        %v496 = vadd.f32 %v426, %v495
        %497 = vdwg.mxu0
        %498 = vmatpush.msra.mxu0 0.0
        %499 = vmatpush.msra.mxu0 0.0
        %500 = vmatpush.msra.mxu0 0.0
        %501 = vmatpush.msra.mxu0 0.0
        %502 = vmatpush.msra.mxu0 0.0
        %503 = vmatpush.msra.mxu0 0.0
        %504 = vmatpush.msra.mxu0 0.0
        %v505 = vand.u32 %v365, 4294901760
        %v506 = vsub.f32 %v365, %v505
        %507 = vmatpush.msra.mxu0 %v506
        %v508 = vand.u32 %v363, 4294901760
        %v509 = vsub.f32 %v363, %v508
        %510 = vmatpush.msra.mxu0 %v509
        %v511 = vand.u32 %v361, 4294901760
        %v512 = vsub.f32 %v361, %v511
        %513 = vmatpush.msra.mxu0 %v512
        %v514 = vand.u32 %v359, 4294901760
        %v515 = vsub.f32 %v359, %v514
        %516 = vmatpush.msra.mxu0 %v515
        %v517 = vand.u32 %v357, 4294901760
        %v518 = vsub.f32 %v357, %v517
        %519 = vmatpush.msra.mxu0 %v518
        %v520 = vand.u32 %v355, 4294901760
        %v521 = vsub.f32 %v355, %v520
        %522 = vmatpush.msra.mxu0 %v521
        %v523 = vand.u32 %v353, 4294901760
        %v524 = vsub.f32 %v353, %v523
        %525 = vmatpush.msra.mxu0 %v524
        %v526 = vand.u32 %v351, 4294901760
        %v527 = vsub.f32 %v351, %v526
        %528 = vmatpush.msra.mxu0 %v527
        %v529 = vand.u32 %v349, 4294901760
        %v530 = vsub.f32 %v349, %v529
        %531 = vmatpush.msra.mxu0 %v530
        %v532 = vand.u32 %v381, 4294901760
        %v533 = vsub.f32 %v381, %v532
        %534 = vmatmul.f32.gmra.mxu0 %v533
        %v535 = vpop.f32.mrf.mxu0
        %v536 = vadd.f32 %v492, %v535
        %v537 = vand.u32 %v384, 4294901760
        %v538 = vsub.f32 %v384, %v537
        %539 = vmatmul.f32.gmra.mxu0 %v538
        %v540 = vpop.f32.mrf.mxu0
        %v541 = vadd.f32 %v496, %v540
        %542 = vdwg.mxu0
        %543 = vmatpush.msra.mxu0 0.0
        %544 = vmatpush.msra.mxu0 0.0
        %545 = vmatpush.msra.mxu0 0.0
        %546 = vmatpush.msra.mxu0 0.0
        %547 = vmatpush.msra.mxu0 0.0
        %548 = vmatpush.msra.mxu0 0.0
        %549 = vmatpush.msra.mxu0 0.0
        %v550 = vand.u32 %v365, 4294901760
        %551 = vmatpush.msra.mxu0 %v550
        %v552 = vand.u32 %v363, 4294901760
        %553 = vmatpush.msra.mxu0 %v552
        %v554 = vand.u32 %v361, 4294901760
        %555 = vmatpush.msra.mxu0 %v554
        %v556 = vand.u32 %v359, 4294901760
        %557 = vmatpush.msra.mxu0 %v556
        %v558 = vand.u32 %v357, 4294901760
        %559 = vmatpush.msra.mxu0 %v558
        %v560 = vand.u32 %v355, 4294901760
        %561 = vmatpush.msra.mxu0 %v560
        %v562 = vand.u32 %v353, 4294901760
        %563 = vmatpush.msra.mxu0 %v562
        %v564 = vand.u32 %v351, 4294901760
        %565 = vmatpush.msra.mxu0 %v564
        %v566 = vand.u32 %v349, 4294901760
        %567 = vmatpush.msra.mxu0 %v566
        %v568 = vand.u32 %v381, 4294901760
        %v569 = vsub.f32 %v381, %v568
        %v570 = vand.u32 %v569, 4294901760
        %571 = vmatmul.f32.gmra.mxu0 %v570
        %v572 = vpop.f32.mrf.mxu0
        %v573 = vadd.f32 %v536, %v572
        %v574 = vand.u32 %v384, 4294901760
        %v575 = vsub.f32 %v384, %v574
        %v576 = vand.u32 %v575, 4294901760
        %577 = vmatmul.f32.gmra.mxu0 %v576
        %v578 = vpop.f32.mrf.mxu0
        %v579 = vadd.f32 %v541, %v578
        %580 = vdwg.mxu0
        %581 = vmatpush.msra.mxu0 0.0
        %582 = vmatpush.msra.mxu0 0.0
        %583 = vmatpush.msra.mxu0 0.0
        %584 = vmatpush.msra.mxu0 0.0
        %585 = vmatpush.msra.mxu0 0.0
        %586 = vmatpush.msra.mxu0 0.0
        %587 = vmatpush.msra.mxu0 0.0
        %v588 = vand.u32 %v365, 4294901760
        %v589 = vsub.f32 %v365, %v588
        %v590 = vand.u32 %v589, 4294901760
        %591 = vmatpush.msra.mxu0 %v590
        %v592 = vand.u32 %v363, 4294901760
        %v593 = vsub.f32 %v363, %v592
        %v594 = vand.u32 %v593, 4294901760
        %595 = vmatpush.msra.mxu0 %v594
        %v596 = vand.u32 %v361, 4294901760
        %v597 = vsub.f32 %v361, %v596
        %v598 = vand.u32 %v597, 4294901760
        %599 = vmatpush.msra.mxu0 %v598
        %v600 = vand.u32 %v359, 4294901760
        %v601 = vsub.f32 %v359, %v600
        %v602 = vand.u32 %v601, 4294901760
        %603 = vmatpush.msra.mxu0 %v602
        %v604 = vand.u32 %v357, 4294901760
        %v605 = vsub.f32 %v357, %v604
        %v606 = vand.u32 %v605, 4294901760
        %607 = vmatpush.msra.mxu0 %v606
        %v608 = vand.u32 %v355, 4294901760
        %v609 = vsub.f32 %v355, %v608
        %v610 = vand.u32 %v609, 4294901760
        %611 = vmatpush.msra.mxu0 %v610
        %v612 = vand.u32 %v353, 4294901760
        %v613 = vsub.f32 %v353, %v612
        %v614 = vand.u32 %v613, 4294901760
        %615 = vmatpush.msra.mxu0 %v614
        %v616 = vand.u32 %v351, 4294901760
        %v617 = vsub.f32 %v351, %v616
        %v618 = vand.u32 %v617, 4294901760
        %619 = vmatpush.msra.mxu0 %v618
        %v620 = vand.u32 %v349, 4294901760
        %v621 = vsub.f32 %v349, %v620
        %v622 = vand.u32 %v621, 4294901760
        %623 = vmatpush.msra.mxu0 %v622
        %v624 = vand.u32 %v381, 4294901760
        %625 = vmatmul.f32.gmra.mxu0 %v624
        %v626 = vpop.f32.mrf.mxu0
        %v627 = vadd.f32 %v573, %v626
        %v628 = vand.u32 %v384, 4294901760
        %629 = vmatmul.f32.gmra.mxu0 %v628
        %v630 = vpop.f32.mrf.mxu0
        %v631 = vadd.f32 %v579, %v630
        %632 = vdwg.mxu0
        %633 = vmatpush.msra.mxu0 0.0
        %634 = vmatpush.msra.mxu0 0.0
        %635 = vmatpush.msra.mxu0 0.0
        %636 = vmatpush.msra.mxu0 0.0
        %637 = vmatpush.msra.mxu0 0.0
        %638 = vmatpush.msra.mxu0 0.0
        %639 = vmatpush.msra.mxu0 0.0
        %v640 = vand.u32 %v365, 4294901760
        %641 = vmatpush.msra.mxu0 %v640
        %v642 = vand.u32 %v363, 4294901760
        %643 = vmatpush.msra.mxu0 %v642
        %v644 = vand.u32 %v361, 4294901760
        %645 = vmatpush.msra.mxu0 %v644
        %v646 = vand.u32 %v359, 4294901760
        %647 = vmatpush.msra.mxu0 %v646
        %v648 = vand.u32 %v357, 4294901760
        %649 = vmatpush.msra.mxu0 %v648
        %v650 = vand.u32 %v355, 4294901760
        %651 = vmatpush.msra.mxu0 %v650
        %v652 = vand.u32 %v353, 4294901760
        %653 = vmatpush.msra.mxu0 %v652
        %v654 = vand.u32 %v351, 4294901760
        %655 = vmatpush.msra.mxu0 %v654
        %v656 = vand.u32 %v349, 4294901760
        %657 = vmatpush.msra.mxu0 %v656
        %v658 = vand.u32 %v381, 4294901760
        %659 = vmatmul.f32.gmra.mxu0 %v658
        %v660 = vpop.f32.mrf.mxu0
        %v661 = vadd.f32 %v627, %v660
        %v662 = vand.u32 %v384, 4294901760
        %663 = vmatmul.f32.gmra.mxu0 %v662
        %v664 = vpop.f32.mrf.mxu0
        %v665 = vadd.f32 %v631, %v664
        %666 = vdwg.mxu0
        %667 = vmatpush.msra.mxu0 0.0
        %668 = vmatpush.msra.mxu0 0.0
        %669 = vmatpush.msra.mxu0 0.0
        %670 = vmatpush.msra.mxu0 0.0
        %671 = vmatpush.msra.mxu0 0.0
        %672 = vmatpush.msra.mxu0 0.0
        %673 = vmatpush.msra.mxu0 0.0
        %v674 = vand.u32 %v366, 4294901760
        %675 = vmatpush.msra.mxu0 %v674
        %v676 = vand.u32 %v364, 4294901760
        %677 = vmatpush.msra.mxu0 %v676
        %v678 = vand.u32 %v362, 4294901760
        %679 = vmatpush.msra.mxu0 %v678
        %v680 = vand.u32 %v360, 4294901760
        %681 = vmatpush.msra.mxu0 %v680
        %v682 = vand.u32 %v358, 4294901760
        %683 = vmatpush.msra.mxu0 %v682
        %v684 = vand.u32 %v356, 4294901760
        %685 = vmatpush.msra.mxu0 %v684
        %v686 = vand.u32 %v354, 4294901760
        %687 = vmatpush.msra.mxu0 %v686
        %v688 = vand.u32 %v352, 4294901760
        %689 = vmatpush.msra.mxu0 %v688
        %v690 = vand.u32 %v350, 4294901760
        %691 = vmatpush.msra.mxu0 %v690
        %v692 = vand.u32 %v381, 4294901760
        %v693 = vsub.f32 %v381, %v692
        %v694 = vand.u32 %v693, 4294901760
        %v695 = vsub.f32 %v693, %v694
        %v696 = vand.u32 %v695, 4294901760
        %697 = vmatmul.f32.gmra.mxu0 %v696
        %v698 = vpop.f32.mrf.mxu0
        %v699 = vadd.f32 %v372, %v698
        %v700 = vand.u32 %v384, 4294901760
        %v701 = vsub.f32 %v384, %v700
        %v702 = vand.u32 %v701, 4294901760
        %v703 = vsub.f32 %v701, %v702
        %v704 = vand.u32 %v703, 4294901760
        %705 = vmatmul.f32.gmra.mxu0 %v704
        %v706 = vpop.f32.mrf.mxu0
        %v707 = vadd.f32 %v377, %v706
        %708 = vdwg.mxu0
        %709 = vmatpush.msra.mxu0 0.0
        %710 = vmatpush.msra.mxu0 0.0
        %711 = vmatpush.msra.mxu0 0.0
        %712 = vmatpush.msra.mxu0 0.0
        %713 = vmatpush.msra.mxu0 0.0
        %714 = vmatpush.msra.mxu0 0.0
        %715 = vmatpush.msra.mxu0 0.0
        %v716 = vand.u32 %v366, 4294901760
        %v717 = vsub.f32 %v366, %v716
        %v718 = vand.u32 %v717, 4294901760
        %v719 = vsub.f32 %v717, %v718
        %v720 = vand.u32 %v719, 4294901760
        %721 = vmatpush.msra.mxu0 %v720
        %v722 = vand.u32 %v364, 4294901760
        %v723 = vsub.f32 %v364, %v722
        %v724 = vand.u32 %v723, 4294901760
        %v725 = vsub.f32 %v723, %v724
        %v726 = vand.u32 %v725, 4294901760
        %727 = vmatpush.msra.mxu0 %v726
        %v728 = vand.u32 %v362, 4294901760
        %v729 = vsub.f32 %v362, %v728
        %v730 = vand.u32 %v729, 4294901760
        %v731 = vsub.f32 %v729, %v730
        %v732 = vand.u32 %v731, 4294901760
        %733 = vmatpush.msra.mxu0 %v732
        %v734 = vand.u32 %v360, 4294901760
        %v735 = vsub.f32 %v360, %v734
        %v736 = vand.u32 %v735, 4294901760
        %v737 = vsub.f32 %v735, %v736
        %v738 = vand.u32 %v737, 4294901760
        %739 = vmatpush.msra.mxu0 %v738
        %v740 = vand.u32 %v358, 4294901760
        %v741 = vsub.f32 %v358, %v740
        %v742 = vand.u32 %v741, 4294901760
        %v743 = vsub.f32 %v741, %v742
        %v744 = vand.u32 %v743, 4294901760
        %745 = vmatpush.msra.mxu0 %v744
        %v746 = vand.u32 %v356, 4294901760
        %v747 = vsub.f32 %v356, %v746
        %v748 = vand.u32 %v747, 4294901760
        %v749 = vsub.f32 %v747, %v748
        %v750 = vand.u32 %v749, 4294901760
        %751 = vmatpush.msra.mxu0 %v750
        %v752 = vand.u32 %v354, 4294901760
        %v753 = vsub.f32 %v354, %v752
        %v754 = vand.u32 %v753, 4294901760
        %v755 = vsub.f32 %v753, %v754
        %v756 = vand.u32 %v755, 4294901760
        %757 = vmatpush.msra.mxu0 %v756
        %v758 = vand.u32 %v352, 4294901760
        %v759 = vsub.f32 %v352, %v758
        %v760 = vand.u32 %v759, 4294901760
        %v761 = vsub.f32 %v759, %v760
        %v762 = vand.u32 %v761, 4294901760
        %763 = vmatpush.msra.mxu0 %v762
        %v764 = vand.u32 %v350, 4294901760
        %v765 = vsub.f32 %v350, %v764
        %v766 = vand.u32 %v765, 4294901760
        %v767 = vsub.f32 %v765, %v766
        %v768 = vand.u32 %v767, 4294901760
        %769 = vmatpush.msra.mxu0 %v768
        %v770 = vand.u32 %v381, 4294901760
        %771 = vmatmul.f32.gmra.mxu0 %v770
        %v772 = vpop.f32.mrf.mxu0
        %v773 = vadd.f32 %v699, %v772
        %v774 = vand.u32 %v384, 4294901760
        %775 = vmatmul.f32.gmra.mxu0 %v774
        %v776 = vpop.f32.mrf.mxu0
        %v777 = vadd.f32 %v707, %v776
        %778 = vdwg.mxu0
        %779 = vmatpush.msra.mxu0 0.0
        %780 = vmatpush.msra.mxu0 0.0
        %781 = vmatpush.msra.mxu0 0.0
        %782 = vmatpush.msra.mxu0 0.0
        %783 = vmatpush.msra.mxu0 0.0
        %784 = vmatpush.msra.mxu0 0.0
        %785 = vmatpush.msra.mxu0 0.0
        %v786 = vand.u32 %v366, 4294901760
        %v787 = vsub.f32 %v366, %v786
        %788 = vmatpush.msra.mxu0 %v787
        %v789 = vand.u32 %v364, 4294901760
        %v790 = vsub.f32 %v364, %v789
        %791 = vmatpush.msra.mxu0 %v790
        %v792 = vand.u32 %v362, 4294901760
        %v793 = vsub.f32 %v362, %v792
        %794 = vmatpush.msra.mxu0 %v793
        %v795 = vand.u32 %v360, 4294901760
        %v796 = vsub.f32 %v360, %v795
        %797 = vmatpush.msra.mxu0 %v796
        %v798 = vand.u32 %v358, 4294901760
        %v799 = vsub.f32 %v358, %v798
        %800 = vmatpush.msra.mxu0 %v799
        %v801 = vand.u32 %v356, 4294901760
        %v802 = vsub.f32 %v356, %v801
        %803 = vmatpush.msra.mxu0 %v802
        %v804 = vand.u32 %v354, 4294901760
        %v805 = vsub.f32 %v354, %v804
        %806 = vmatpush.msra.mxu0 %v805
        %v807 = vand.u32 %v352, 4294901760
        %v808 = vsub.f32 %v352, %v807
        %809 = vmatpush.msra.mxu0 %v808
        %v810 = vand.u32 %v350, 4294901760
        %v811 = vsub.f32 %v350, %v810
        %812 = vmatpush.msra.mxu0 %v811
        %v813 = vand.u32 %v381, 4294901760
        %v814 = vsub.f32 %v381, %v813
        %815 = vmatmul.f32.gmra.mxu0 %v814
        %v816 = vpop.f32.mrf.mxu0
        %v817 = vadd.f32 %v773, %v816
        %v818 = vand.u32 %v384, 4294901760
        %v819 = vsub.f32 %v384, %v818
        %820 = vmatmul.f32.gmra.mxu0 %v819
        %v821 = vpop.f32.mrf.mxu0
        %v822 = vadd.f32 %v777, %v821
        %823 = vdwg.mxu0
        %824 = vmatpush.msra.mxu0 0.0
        %825 = vmatpush.msra.mxu0 0.0
        %826 = vmatpush.msra.mxu0 0.0
        %827 = vmatpush.msra.mxu0 0.0
        %828 = vmatpush.msra.mxu0 0.0
        %829 = vmatpush.msra.mxu0 0.0
        %830 = vmatpush.msra.mxu0 0.0
        %v831 = vand.u32 %v366, 4294901760
        %832 = vmatpush.msra.mxu0 %v831
        %v833 = vand.u32 %v364, 4294901760
        %834 = vmatpush.msra.mxu0 %v833
        %v835 = vand.u32 %v362, 4294901760
        %836 = vmatpush.msra.mxu0 %v835
        %v837 = vand.u32 %v360, 4294901760
        %838 = vmatpush.msra.mxu0 %v837
        %v839 = vand.u32 %v358, 4294901760
        %840 = vmatpush.msra.mxu0 %v839
        %v841 = vand.u32 %v356, 4294901760
        %842 = vmatpush.msra.mxu0 %v841
        %v843 = vand.u32 %v354, 4294901760
        %844 = vmatpush.msra.mxu0 %v843
        %v845 = vand.u32 %v352, 4294901760
        %846 = vmatpush.msra.mxu0 %v845
        %v847 = vand.u32 %v350, 4294901760
        %848 = vmatpush.msra.mxu0 %v847
        %v849 = vand.u32 %v381, 4294901760
        %v850 = vsub.f32 %v381, %v849
        %v851 = vand.u32 %v850, 4294901760
        %852 = vmatmul.f32.gmra.mxu0 %v851
        %v853 = vpop.f32.mrf.mxu0
        %v854 = vadd.f32 %v817, %v853
        %v855 = vand.u32 %v384, 4294901760
        %v856 = vsub.f32 %v384, %v855
        %v857 = vand.u32 %v856, 4294901760
        %858 = vmatmul.f32.gmra.mxu0 %v857
        %v859 = vpop.f32.mrf.mxu0
        %v860 = vadd.f32 %v822, %v859
        %861 = vdwg.mxu0
        %862 = vmatpush.msra.mxu0 0.0
        %863 = vmatpush.msra.mxu0 0.0
        %864 = vmatpush.msra.mxu0 0.0
        %865 = vmatpush.msra.mxu0 0.0
        %866 = vmatpush.msra.mxu0 0.0
        %867 = vmatpush.msra.mxu0 0.0
        %868 = vmatpush.msra.mxu0 0.0
        %v869 = vand.u32 %v366, 4294901760
        %v870 = vsub.f32 %v366, %v869
        %v871 = vand.u32 %v870, 4294901760
        %872 = vmatpush.msra.mxu0 %v871
        %v873 = vand.u32 %v364, 4294901760
        %v874 = vsub.f32 %v364, %v873
        %v875 = vand.u32 %v874, 4294901760
        %876 = vmatpush.msra.mxu0 %v875
        %v877 = vand.u32 %v362, 4294901760
        %v878 = vsub.f32 %v362, %v877
        %v879 = vand.u32 %v878, 4294901760
        %880 = vmatpush.msra.mxu0 %v879
        %v881 = vand.u32 %v360, 4294901760
        %v882 = vsub.f32 %v360, %v881
        %v883 = vand.u32 %v882, 4294901760
        %884 = vmatpush.msra.mxu0 %v883
        %v885 = vand.u32 %v358, 4294901760
        %v886 = vsub.f32 %v358, %v885
        %v887 = vand.u32 %v886, 4294901760
        %888 = vmatpush.msra.mxu0 %v887
        %v889 = vand.u32 %v356, 4294901760
        %v890 = vsub.f32 %v356, %v889
        %v891 = vand.u32 %v890, 4294901760
        %892 = vmatpush.msra.mxu0 %v891
        %v893 = vand.u32 %v354, 4294901760
        %v894 = vsub.f32 %v354, %v893
        %v895 = vand.u32 %v894, 4294901760
        %896 = vmatpush.msra.mxu0 %v895
        %v897 = vand.u32 %v352, 4294901760
        %v898 = vsub.f32 %v352, %v897
        %v899 = vand.u32 %v898, 4294901760
        %900 = vmatpush.msra.mxu0 %v899
        %v901 = vand.u32 %v350, 4294901760
        %v902 = vsub.f32 %v350, %v901
        %v903 = vand.u32 %v902, 4294901760
        %904 = vmatpush.msra.mxu0 %v903
        %v905 = vand.u32 %v381, 4294901760
        %906 = vmatmul.f32.gmra.mxu0 %v905
        %v907 = vpop.f32.mrf.mxu0
        %v908 = vadd.f32 %v854, %v907
        %v909 = vand.u32 %v384, 4294901760
        %910 = vmatmul.f32.gmra.mxu0 %v909
        %v911 = vpop.f32.mrf.mxu0
        %v912 = vadd.f32 %v860, %v911
        %913 = vdwg.mxu0
        %914 = vmatpush.msra.mxu0 0.0
        %915 = vmatpush.msra.mxu0 0.0
        %916 = vmatpush.msra.mxu0 0.0
        %917 = vmatpush.msra.mxu0 0.0
        %918 = vmatpush.msra.mxu0 0.0
        %919 = vmatpush.msra.mxu0 0.0
        %920 = vmatpush.msra.mxu0 0.0
        %v921 = vand.u32 %v366, 4294901760
        %922 = vmatpush.msra.mxu0 %v921
        %v923 = vand.u32 %v364, 4294901760
        %924 = vmatpush.msra.mxu0 %v923
        %v925 = vand.u32 %v362, 4294901760
        %926 = vmatpush.msra.mxu0 %v925
        %v927 = vand.u32 %v360, 4294901760
        %928 = vmatpush.msra.mxu0 %v927
        %v929 = vand.u32 %v358, 4294901760
        %930 = vmatpush.msra.mxu0 %v929
        %v931 = vand.u32 %v356, 4294901760
        %932 = vmatpush.msra.mxu0 %v931
        %v933 = vand.u32 %v354, 4294901760
        %934 = vmatpush.msra.mxu0 %v933
        %v935 = vand.u32 %v352, 4294901760
        %936 = vmatpush.msra.mxu0 %v935
        %v937 = vand.u32 %v350, 4294901760
        %938 = vmatpush.msra.mxu0 %v937
        %v939 = vand.u32 %v381, 4294901760
        %940 = vmatmul.f32.gmra.mxu0 %v939
        %v941 = vpop.f32.mrf.mxu0
        %v942 = vadd.f32 %v908, %v941
        %v943 = vand.u32 %v384, 4294901760
        %944 = vmatmul.f32.gmra.mxu0 %v943
        %v945 = vpop.f32.mrf.mxu0
        %v946 = vadd.f32 %v912, %v945
        %947 = vdwg.mxu0
        %vm948 = vcmp.ge.f32.partialorder %v661, 0.0
        %vm949 = vcmp.ge.f32.partialorder %v942, 0.0
        %vm950 = vcmp.ge.f32.partialorder %v665, 0.0
        %vm951 = vcmp.ge.f32.partialorder %v946, 0.0
        %v952 = vmul.f32 %v661, 0.01
        %v953 = vmul.f32 %v942, 0.01
        %v954 = vmul.f32 %v665, 0.01
        %v955 = vmul.f32 %v946, 0.01
        %v956 = vsel %vm948, %v661, %v952
        %v957 = vsel %vm949, %v942, %v953
        %v958 = vsel %vm950, %v665, %v954
        %v959 = vsel %vm951, %v946, %v955
        %960 = vrot.lane.b32.xlu0 %v956, 17
        %v961 = vpop.permute.xlu0 %960
        %962 = vrot.lane.b32.xlu0 %v958, 17
        %v963 = vpop.permute.xlu0 %962
        %964 = vrot.lane.b32.xlu0 %v957, 17
        %v965 = vpop.permute.xlu0 %964
        %966 = vrot.lane.b32.xlu0 %v959, 17
        %v967 = vpop.permute.xlu0 %966
        %v968 = vsel %vm238, %v961, %v965
        %v969 = vsel %vm238, %v963, %v967
        %v970 = vsel %vm238, %v965, %v961
        %v971 = vsel %vm238, %v967, %v963
        %v972 = vld [vmem:[#allocation5] sm:$0xff]
        %v973 = vld [vmem:[#allocation5 + $0x8] sm:$0xff]
        %v974 = vld [vmem:[#allocation5 + $0x10] sm:$0xff]
        %v975 = vld [vmem:[#allocation5 + $0x18] sm:$0xff]
        %v976 = vmul.f32 %v970, %v972
        %v977 = vmul.f32 %v968, %v973
        %v978 = vmul.f32 %v971, %v974
        %v979 = vmul.f32 %v969, %v975
        %980 = vst [vmem:[#allocation2] sm:$0xff] %v976
        %981 = vst [vmem:[#allocation2 + $0x8] sm:$0xff] %v977
        %982 = vst [vmem:[#allocation2 + $0x10] sm:$0xff] %v978
        %983 = vst [vmem:[#allocation2 + $0x18] sm:$0xff] %v979
        %984 = vrot.lane.b32.xlu0 %v956, 16
        %v985 = vpop.permute.xlu0 %984
        %986 = vrot.lane.b32.xlu0 %v958, 16
        %v987 = vpop.permute.xlu0 %986
        %988 = vrot.lane.b32.xlu0 %v957, 16
        %v989 = vpop.permute.xlu0 %988
        %990 = vrot.lane.b32.xlu0 %v959, 16
        %v991 = vpop.permute.xlu0 %990
        %v992 = vsel %vm251, %v985, %v989
        %v993 = vsel %vm251, %v987, %v991
        %v994 = vsel %vm251, %v989, %v985
        %v995 = vsel %vm251, %v991, %v987
        %v996 = vld [vmem:[%s254] sm:$0xff]
        %v997 = vld [vmem:[%s254 + $0x8] sm:$0xff]
        %v998 = vld [vmem:[%s254 + $0x10] sm:$0xff]
        %v999 = vld [vmem:[%s254 + $0x18] sm:$0xff]
        %v1000 = vmul.f32 %v994, %v996
        %v1001 = vmul.f32 %v992, %v997
        %v1002 = vmul.f32 %v995, %v998
        %v1003 = vmul.f32 %v993, %v999
        %1004 = vst [vmem:[#allocation2 + $0x20] sm:$0xff] %v1000
        %1005 = vst [vmem:[#allocation2 + $0x28] sm:$0xff] %v1001
        %1006 = vst [vmem:[#allocation2 + $0x30] sm:$0xff] %v1002
        %1007 = vst [vmem:[#allocation2 + $0x38] sm:$0xff] %v1003
        %1008 = vrot.lane.b32.xlu0 %v956, 15
        %v1009 = vpop.permute.xlu0 %1008
        %1010 = vrot.lane.b32.xlu0 %v958, 15
        %v1011 = vpop.permute.xlu0 %1010
        %1012 = vrot.lane.b32.xlu0 %v957, 15
        %v1013 = vpop.permute.xlu0 %1012
        %1014 = vrot.lane.b32.xlu0 %v959, 15
        %v1015 = vpop.permute.xlu0 %1014
        %v1016 = vsel %vm265, %v1009, %v1013
        %v1017 = vsel %vm265, %v1011, %v1015
        %v1018 = vsel %vm265, %v1013, %v1009
        %v1019 = vsel %vm265, %v1015, %v1011
        %v1020 = vld [vmem:[%s268] sm:$0xff]
        %v1021 = vld [vmem:[%s268 + $0x8] sm:$0xff]
        %v1022 = vld [vmem:[%s268 + $0x10] sm:$0xff]
        %v1023 = vld [vmem:[%s268 + $0x18] sm:$0xff]
        %v1024 = vmul.f32 %v1018, %v1020
        %v1025 = vmul.f32 %v1016, %v1021
        %v1026 = vmul.f32 %v1019, %v1022
        %v1027 = vmul.f32 %v1017, %v1023
        %1028 = vst [vmem:[#allocation2 + $0x40] sm:$0xff] %v1024
        %1029 = vst [vmem:[#allocation2 + $0x48] sm:$0xff] %v1025
        %1030 = vst [vmem:[#allocation2 + $0x50] sm:$0xff] %v1026
        %1031 = vst [vmem:[#allocation2 + $0x58] sm:$0xff] %v1027
        %1032 = vrot.lane.b32.xlu0 %v956, 1
        %v1033 = vpop.permute.xlu0 %1032
        %1034 = vrot.lane.b32.xlu0 %v958, 1
        %v1035 = vpop.permute.xlu0 %1034
        %1036 = vrot.lane.b32.xlu0 %v957, 1
        %v1037 = vpop.permute.xlu0 %1036
        %1038 = vrot.lane.b32.xlu0 %v959, 1
        %v1039 = vpop.permute.xlu0 %1038
        %v1040 = vsel %vm279, %v1033, %v1037
        %v1041 = vsel %vm279, %v1035, %v1039
        %v1042 = vsel %vm279, %v1037, %v1033
        %v1043 = vsel %vm279, %v1039, %v1035
        %v1044 = vld [vmem:[%s282] sm:$0xff]
        %v1045 = vld [vmem:[%s282 + $0x8] sm:$0xff]
        %v1046 = vld [vmem:[%s282 + $0x10] sm:$0xff]
        %v1047 = vld [vmem:[%s282 + $0x18] sm:$0xff]
        %v1048 = vmul.f32 %v1042, %v1044
        %v1049 = vmul.f32 %v1040, %v1045
        %v1050 = vmul.f32 %v1043, %v1046
        %v1051 = vmul.f32 %v1041, %v1047
        %1052 = vst [vmem:[#allocation2 + $0x60] sm:$0xff] %v1048
        %1053 = vst [vmem:[#allocation2 + $0x68] sm:$0xff] %v1049
        %1054 = vst [vmem:[#allocation2 + $0x70] sm:$0xff] %v1050
        %1055 = vst [vmem:[#allocation2 + $0x78] sm:$0xff] %v1051
        %1056 = vst [vmem:[#allocation2 + $0x80] sm:$0xff] %v956
        %1057 = vst [vmem:[#allocation2 + $0x88] sm:$0xff] %v957
        %1058 = vst [vmem:[#allocation2 + $0x90] sm:$0xff] %v958
        %1059 = vst [vmem:[#allocation2 + $0x98] sm:$0xff] %v959
        %1060 = vrot.lane.b32.xlu0 %v956, 127
        %v1061 = vpop.permute.xlu0 %1060
        %1062 = vrot.lane.b32.xlu0 %v958, 127
        %v1063 = vpop.permute.xlu0 %1062
        %1064 = vrot.lane.b32.xlu0 %v957, 127
        %v1065 = vpop.permute.xlu0 %1064
        %1066 = vrot.lane.b32.xlu0 %v959, 127
        %v1067 = vpop.permute.xlu0 %1066
        %v1068 = vsel %vm295, %v1061, %v1065
        %v1069 = vsel %vm295, %v1063, %v1067
        %v1070 = vsel %vm295, %v1065, %v1061
        %v1071 = vsel %vm295, %v1067, %v1063
        %v1072 = vld [vmem:[%s298] sm:$0xff]
        %v1073 = vld [vmem:[%s298 + $0x8] sm:$0xff]
        %v1074 = vld [vmem:[%s298 + $0x10] sm:$0xff]
        %v1075 = vld [vmem:[%s298 + $0x18] sm:$0xff]
        %v1076 = vmul.f32 %v1068, %v1072
        %v1077 = vmul.f32 %v1070, %v1073
        %v1078 = vmul.f32 %v1069, %v1074
        %v1079 = vmul.f32 %v1071, %v1075
        %1080 = vst [vmem:[#allocation2 + $0xa0] sm:$0xff] %v1076
        %1081 = vst [vmem:[#allocation2 + $0xa8] sm:$0xff] %v1077
        %1082 = vst [vmem:[#allocation2 + $0xb0] sm:$0xff] %v1078
        %1083 = vst [vmem:[#allocation2 + $0xb8] sm:$0xff] %v1079
        %1084 = vrot.lane.b32.xlu0 %v956, 113
        %v1085 = vpop.permute.xlu0 %1084
        %1086 = vrot.lane.b32.xlu0 %v958, 113
        %v1087 = vpop.permute.xlu0 %1086
        %1088 = vrot.lane.b32.xlu0 %v957, 113
        %v1089 = vpop.permute.xlu0 %1088
        %1090 = vrot.lane.b32.xlu0 %v959, 113
        %v1091 = vpop.permute.xlu0 %1090
        %v1092 = vsel %vm309, %v1085, %v1089
        %v1093 = vsel %vm309, %v1087, %v1091
        %v1094 = vsel %vm309, %v1089, %v1085
        %v1095 = vsel %vm309, %v1091, %v1087
        %v1096 = vld [vmem:[%s312] sm:$0xff]
        %v1097 = vld [vmem:[%s312 + $0x8] sm:$0xff]
        %v1098 = vld [vmem:[%s312 + $0x10] sm:$0xff]
        %v1099 = vld [vmem:[%s312 + $0x18] sm:$0xff]
        %v1100 = vmul.f32 %v1092, %v1096
        %v1101 = vmul.f32 %v1094, %v1097
        %v1102 = vmul.f32 %v1093, %v1098
        %v1103 = vmul.f32 %v1095, %v1099
        %1104 = vst [vmem:[#allocation2 + $0xc0] sm:$0xff] %v1100
        %1105 = vst [vmem:[#allocation2 + $0xc8] sm:$0xff] %v1101
        %1106 = vst [vmem:[#allocation2 + $0xd0] sm:$0xff] %v1102
        %1107 = vst [vmem:[#allocation2 + $0xd8] sm:$0xff] %v1103
        %1108 = vrot.lane.b32.xlu0 %v956, 112
        %v1109 = vpop.permute.xlu0 %1108
        %1110 = vrot.lane.b32.xlu0 %v958, 112
        %v1111 = vpop.permute.xlu0 %1110
        %1112 = vrot.lane.b32.xlu0 %v957, 112
        %v1113 = vpop.permute.xlu0 %1112
        %1114 = vrot.lane.b32.xlu0 %v959, 112
        %v1115 = vpop.permute.xlu0 %1114
        %v1116 = vsel %vm323, %v1109, %v1113
        %v1117 = vsel %vm323, %v1111, %v1115
        %v1118 = vsel %vm323, %v1113, %v1109
        %v1119 = vsel %vm323, %v1115, %v1111
        %v1120 = vld [vmem:[%s326] sm:$0xff]
        %v1121 = vld [vmem:[%s326 + $0x8] sm:$0xff]
        %v1122 = vld [vmem:[%s326 + $0x10] sm:$0xff]
        %v1123 = vld [vmem:[%s326 + $0x18] sm:$0xff]
        %v1124 = vmul.f32 %v1116, %v1120
        %v1125 = vmul.f32 %v1118, %v1121
        %v1126 = vmul.f32 %v1117, %v1122
        %v1127 = vmul.f32 %v1119, %v1123
        %1128 = vst [vmem:[#allocation2 + $0xe0] sm:$0xff] %v1124
        %1129 = vst [vmem:[#allocation2 + $0xe8] sm:$0xff] %v1125
        %1130 = vst [vmem:[#allocation2 + $0xf0] sm:$0xff] %v1126
        %1131 = vst [vmem:[#allocation2 + $0xf8] sm:$0xff] %v1127
        %1132 = vrot.lane.b32.xlu0 %v956, 111
        %v1133 = vpop.permute.xlu0 %1132
        %1134 = vrot.lane.b32.xlu0 %v958, 111
        %v1135 = vpop.permute.xlu0 %1134
        %1136 = vrot.lane.b32.xlu0 %v957, 111
        %v1137 = vpop.permute.xlu0 %1136
        %1138 = vrot.lane.b32.xlu0 %v959, 111
        %v1139 = vpop.permute.xlu0 %1138
        %v1140 = vsel %vm337, %v1133, %v1137
        %v1141 = vsel %vm337, %v1135, %v1139
        %v1142 = vsel %vm337, %v1137, %v1133
        %v1143 = vsel %vm337, %v1139, %v1135
        %v1144 = vld [vmem:[%s340] sm:$0xff]
        %v1145 = vld [vmem:[%s340 + $0x8] sm:$0xff]
        %v1146 = vld [vmem:[%s340 + $0x10] sm:$0xff]
        %v1147 = vld [vmem:[%s340 + $0x18] sm:$0xff]
        %v1148 = vmul.f32 %v1140, %v1144
        %v1149 = vmul.f32 %v1142, %v1145
        %v1150 = vmul.f32 %v1141, %v1146
        %v1151 = vmul.f32 %v1143, %v1147
        %1152 = vst [vmem:[#allocation2 + $0x100] sm:$0xff] %v1148
        %1153 = vst [vmem:[#allocation2 + $0x108] sm:$0xff] %v1149
        %1154 = vst [vmem:[#allocation2 + $0x110] sm:$0xff] %v1150
        %1155 = vst [vmem:[#allocation2 + $0x118] sm:$0xff] %v1151
        %s1156 = scalar_lea.vmem [#allocation3], 32
        %v1157 = vld [vmem:[%s1156] sm:$0xff]
        %v1158 = vld [vmem:[%s1156 + $0x8] sm:$0xff]
        %v1159 = vld [vmem:[%s1156 + $0x10] sm:$0xff]
        %v1160 = vld [vmem:[%s1156 + $0x18] sm:$0xff]
        %v1161 = vld [vmem:[#allocation2] sm:$0xff]
        %v1162 = vld [vmem:[#allocation2 + $0x8] sm:$0xff]
        %v1163 = vld [vmem:[#allocation2 + $0x10] sm:$0xff]
        %v1164 = vld [vmem:[#allocation2 + $0x18] sm:$0xff]
        %v1165 = vld [vmem:[#allocation2 + $0x20] sm:$0xff]
        %v1166 = vld [vmem:[#allocation2 + $0x28] sm:$0xff]
        %v1167 = vld [vmem:[#allocation2 + $0x30] sm:$0xff]
        %v1168 = vld [vmem:[#allocation2 + $0x38] sm:$0xff]
        %v1169 = vld [vmem:[#allocation2 + $0x40] sm:$0xff]
        %v1170 = vld [vmem:[#allocation2 + $0x48] sm:$0xff]
        %v1171 = vld [vmem:[#allocation2 + $0x50] sm:$0xff]
        %v1172 = vld [vmem:[#allocation2 + $0x58] sm:$0xff]
        %v1173 = vld [vmem:[#allocation2 + $0x60] sm:$0xff]
        %v1174 = vld [vmem:[#allocation2 + $0x68] sm:$0xff]
        %v1175 = vld [vmem:[#allocation2 + $0x70] sm:$0xff]
        %v1176 = vld [vmem:[#allocation2 + $0x78] sm:$0xff]
        %v1177 = vld [vmem:[#allocation2 + $0x80] sm:$0xff]
        %v1178 = vld [vmem:[#allocation2 + $0x88] sm:$0xff]
        %v1179 = vld [vmem:[#allocation2 + $0x90] sm:$0xff]
        %v1180 = vld [vmem:[#allocation2 + $0x98] sm:$0xff]
        %v1181 = vld [vmem:[#allocation2 + $0xa0] sm:$0xff]
        %v1182 = vld [vmem:[#allocation2 + $0xa8] sm:$0xff]
        %v1183 = vld [vmem:[#allocation2 + $0xb0] sm:$0xff]
        %v1184 = vld [vmem:[#allocation2 + $0xb8] sm:$0xff]
        %v1185 = vld [vmem:[#allocation2 + $0xc0] sm:$0xff]
        %v1186 = vld [vmem:[#allocation2 + $0xc8] sm:$0xff]
        %v1187 = vld [vmem:[#allocation2 + $0xd0] sm:$0xff]
        %v1188 = vld [vmem:[#allocation2 + $0xd8] sm:$0xff]
        %v1189 = vld [vmem:[#allocation2 + $0xe0] sm:$0xff]
        %v1190 = vld [vmem:[#allocation2 + $0xe8] sm:$0xff]
        %v1191 = vld [vmem:[#allocation2 + $0xf0] sm:$0xff]
        %v1192 = vld [vmem:[#allocation2 + $0xf8] sm:$0xff]
        %v1193 = vld [vmem:[#allocation2 + $0x100] sm:$0xff]
        %v1194 = vld [vmem:[#allocation2 + $0x108] sm:$0xff]
        %v1195 = vld [vmem:[#allocation2 + $0x110] sm:$0xff]
        %v1196 = vld [vmem:[#allocation2 + $0x118] sm:$0xff]
        %s1197 = scalar_lea.vmem %s2, 16
        %v1198 = vld [vmem:[%s1197] sm:$0xff]
        %v1199 = vld [vmem:[%s1197 + $0x8] sm:$0xff]
        %1201 = vset.pattern.permute.xlu0 0
        %1202 = vperm.xlu0 %1201, %v1198
        %v1203 = vpop.permute.xlu0 %1202
        %1206 = vset.pattern.permute.xlu0 0
        %1207 = vperm.xlu0 %1206, %v1199
        %v1208 = vpop.permute.xlu0 %1207
        %vm1210 = vcmask 130048
        %v1212 = vsel %vm1210, %v1158, 0
        %v1215 = vsel %vm1210, %v1160, 0
        %v1217 = vand.u32 %v1191, 4294901760
        %1218 = vmatpush.msra.mxu0 %v1217
        %v1219 = vand.u32 %v1189, 4294901760
        %1220 = vmatpush.msra.mxu0 %v1219
        %v1221 = vand.u32 %v1187, 4294901760
        %1222 = vmatpush.msra.mxu0 %v1221
        %v1223 = vand.u32 %v1185, 4294901760
        %1224 = vmatpush.msra.mxu0 %v1223
        %v1225 = vand.u32 %v1183, 4294901760
        %1226 = vmatpush.msra.mxu0 %v1225
        %v1227 = vand.u32 %v1181, 4294901760
        %1228 = vmatpush.msra.mxu0 %v1227
        %v1229 = vand.u32 %v1179, 4294901760
        %1230 = vmatpush.msra.mxu0 %v1229
        %v1231 = vand.u32 %v1177, 4294901760
        %1232 = vmatpush.msra.mxu0 %v1231
        %v1233 = vand.u32 %v1175, 4294901760
        %1234 = vmatpush.msra.mxu0 %v1233
        %v1235 = vand.u32 %v1173, 4294901760
        %1236 = vmatpush.msra.mxu0 %v1235
        %v1237 = vand.u32 %v1171, 4294901760
        %1238 = vmatpush.msra.mxu0 %v1237
        %v1239 = vand.u32 %v1169, 4294901760
        %1240 = vmatpush.msra.mxu0 %v1239
        %v1241 = vand.u32 %v1167, 4294901760
        %1242 = vmatpush.msra.mxu0 %v1241
        %v1243 = vand.u32 %v1165, 4294901760
        %1244 = vmatpush.msra.mxu0 %v1243
        %v1245 = vand.u32 %v1163, 4294901760
        %1246 = vmatpush.msra.mxu0 %v1245
        %v1247 = vand.u32 %v1161, 4294901760
        %1248 = vmatpush.msra.mxu0 %v1247
        %v1249 = vand.u32 %v1157, 4294901760
        %v1250 = vsub.f32 %v1157, %v1249
        %v1251 = vand.u32 %v1250, 4294901760
        %v1252 = vsub.f32 %v1250, %v1251
        %v1253 = vand.u32 %v1252, 4294901760
        %1254 = vmatmul.f32.gmra.mxu0 %v1253
        %v1255 = vpop.f32.mrf.mxu0
        %v1256 = vadd.f32 %v1203, %v1255
        %v1257 = vand.u32 %v1159, 4294901760
        %v1258 = vsub.f32 %v1159, %v1257
        %v1259 = vand.u32 %v1258, 4294901760
        %v1260 = vsub.f32 %v1258, %v1259
        %v1261 = vand.u32 %v1260, 4294901760
        %1262 = vmatmul.f32.gmra.mxu0 %v1261
        %v1263 = vpop.f32.mrf.mxu0
        %v1264 = vadd.f32 %v1208, %v1263
        %1265 = vdwg.mxu0
        %v1266 = vand.u32 %v1191, 4294901760
        %v1267 = vsub.f32 %v1191, %v1266
        %v1268 = vand.u32 %v1267, 4294901760
        %v1269 = vsub.f32 %v1267, %v1268
        %v1270 = vand.u32 %v1269, 4294901760
        %1271 = vmatpush.msra.mxu0 %v1270
        %v1272 = vand.u32 %v1189, 4294901760
        %v1273 = vsub.f32 %v1189, %v1272
        %v1274 = vand.u32 %v1273, 4294901760
        %v1275 = vsub.f32 %v1273, %v1274
        %v1276 = vand.u32 %v1275, 4294901760
        %1277 = vmatpush.msra.mxu0 %v1276
        %v1278 = vand.u32 %v1187, 4294901760
        %v1279 = vsub.f32 %v1187, %v1278
        %v1280 = vand.u32 %v1279, 4294901760
        %v1281 = vsub.f32 %v1279, %v1280
        %v1282 = vand.u32 %v1281, 4294901760
        %1283 = vmatpush.msra.mxu0 %v1282
        %v1284 = vand.u32 %v1185, 4294901760
        %v1285 = vsub.f32 %v1185, %v1284
        %v1286 = vand.u32 %v1285, 4294901760
        %v1287 = vsub.f32 %v1285, %v1286
        %v1288 = vand.u32 %v1287, 4294901760
        %1289 = vmatpush.msra.mxu0 %v1288
        %v1290 = vand.u32 %v1183, 4294901760
        %v1291 = vsub.f32 %v1183, %v1290
        %v1292 = vand.u32 %v1291, 4294901760
        %v1293 = vsub.f32 %v1291, %v1292
        %v1294 = vand.u32 %v1293, 4294901760
        %1295 = vmatpush.msra.mxu0 %v1294
        %v1296 = vand.u32 %v1181, 4294901760
        %v1297 = vsub.f32 %v1181, %v1296
        %v1298 = vand.u32 %v1297, 4294901760
        %v1299 = vsub.f32 %v1297, %v1298
        %v1300 = vand.u32 %v1299, 4294901760
        %1301 = vmatpush.msra.mxu0 %v1300
        %v1302 = vand.u32 %v1179, 4294901760
        %v1303 = vsub.f32 %v1179, %v1302
        %v1304 = vand.u32 %v1303, 4294901760
        %v1305 = vsub.f32 %v1303, %v1304
        %v1306 = vand.u32 %v1305, 4294901760
        %1307 = vmatpush.msra.mxu0 %v1306
        %v1308 = vand.u32 %v1177, 4294901760
        %v1309 = vsub.f32 %v1177, %v1308
        %v1310 = vand.u32 %v1309, 4294901760
        %v1311 = vsub.f32 %v1309, %v1310
        %v1312 = vand.u32 %v1311, 4294901760
        %1313 = vmatpush.msra.mxu0 %v1312
        %v1314 = vand.u32 %v1175, 4294901760
        %v1315 = vsub.f32 %v1175, %v1314
        %v1316 = vand.u32 %v1315, 4294901760
        %v1317 = vsub.f32 %v1315, %v1316
        %v1318 = vand.u32 %v1317, 4294901760
        %1319 = vmatpush.msra.mxu0 %v1318
        %v1320 = vand.u32 %v1173, 4294901760
        %v1321 = vsub.f32 %v1173, %v1320
        %v1322 = vand.u32 %v1321, 4294901760
        %v1323 = vsub.f32 %v1321, %v1322
        %v1324 = vand.u32 %v1323, 4294901760
        %1325 = vmatpush.msra.mxu0 %v1324
        %v1326 = vand.u32 %v1171, 4294901760
        %v1327 = vsub.f32 %v1171, %v1326
        %v1328 = vand.u32 %v1327, 4294901760
        %v1329 = vsub.f32 %v1327, %v1328
        %v1330 = vand.u32 %v1329, 4294901760
        %1331 = vmatpush.msra.mxu0 %v1330
        %v1332 = vand.u32 %v1169, 4294901760
        %v1333 = vsub.f32 %v1169, %v1332
        %v1334 = vand.u32 %v1333, 4294901760
        %v1335 = vsub.f32 %v1333, %v1334
        %v1336 = vand.u32 %v1335, 4294901760
        %1337 = vmatpush.msra.mxu0 %v1336
        %v1338 = vand.u32 %v1167, 4294901760
        %v1339 = vsub.f32 %v1167, %v1338
        %v1340 = vand.u32 %v1339, 4294901760
        %v1341 = vsub.f32 %v1339, %v1340
        %v1342 = vand.u32 %v1341, 4294901760
        %1343 = vmatpush.msra.mxu0 %v1342
        %v1344 = vand.u32 %v1165, 4294901760
        %v1345 = vsub.f32 %v1165, %v1344
        %v1346 = vand.u32 %v1345, 4294901760
        %v1347 = vsub.f32 %v1345, %v1346
        %v1348 = vand.u32 %v1347, 4294901760
        %1349 = vmatpush.msra.mxu0 %v1348
        %v1350 = vand.u32 %v1163, 4294901760
        %v1351 = vsub.f32 %v1163, %v1350
        %v1352 = vand.u32 %v1351, 4294901760
        %v1353 = vsub.f32 %v1351, %v1352
        %v1354 = vand.u32 %v1353, 4294901760
        %1355 = vmatpush.msra.mxu0 %v1354
        %v1356 = vand.u32 %v1161, 4294901760
        %v1357 = vsub.f32 %v1161, %v1356
        %v1358 = vand.u32 %v1357, 4294901760
        %v1359 = vsub.f32 %v1357, %v1358
        %v1360 = vand.u32 %v1359, 4294901760
        %1361 = vmatpush.msra.mxu0 %v1360
        %v1362 = vand.u32 %v1157, 4294901760
        %1363 = vmatmul.f32.gmra.mxu0 %v1362
        %v1364 = vpop.f32.mrf.mxu0
        %v1365 = vadd.f32 %v1256, %v1364
        %v1366 = vand.u32 %v1159, 4294901760
        %1367 = vmatmul.f32.gmra.mxu0 %v1366
        %v1368 = vpop.f32.mrf.mxu0
        %v1369 = vadd.f32 %v1264, %v1368
        %1370 = vdwg.mxu0
        %v1371 = vand.u32 %v1191, 4294901760
        %v1372 = vsub.f32 %v1191, %v1371
        %1373 = vmatpush.msra.mxu0 %v1372
        %v1374 = vand.u32 %v1189, 4294901760
        %v1375 = vsub.f32 %v1189, %v1374
        %1376 = vmatpush.msra.mxu0 %v1375
        %v1377 = vand.u32 %v1187, 4294901760
        %v1378 = vsub.f32 %v1187, %v1377
        %1379 = vmatpush.msra.mxu0 %v1378
        %v1380 = vand.u32 %v1185, 4294901760
        %v1381 = vsub.f32 %v1185, %v1380
        %1382 = vmatpush.msra.mxu0 %v1381
        %v1383 = vand.u32 %v1183, 4294901760
        %v1384 = vsub.f32 %v1183, %v1383
        %1385 = vmatpush.msra.mxu0 %v1384
        %v1386 = vand.u32 %v1181, 4294901760
        %v1387 = vsub.f32 %v1181, %v1386
        %1388 = vmatpush.msra.mxu0 %v1387
        %v1389 = vand.u32 %v1179, 4294901760
        %v1390 = vsub.f32 %v1179, %v1389
        %1391 = vmatpush.msra.mxu0 %v1390
        %v1392 = vand.u32 %v1177, 4294901760
        %v1393 = vsub.f32 %v1177, %v1392
        %1394 = vmatpush.msra.mxu0 %v1393
        %v1395 = vand.u32 %v1175, 4294901760
        %v1396 = vsub.f32 %v1175, %v1395
        %1397 = vmatpush.msra.mxu0 %v1396
        %v1398 = vand.u32 %v1173, 4294901760
        %v1399 = vsub.f32 %v1173, %v1398
        %1400 = vmatpush.msra.mxu0 %v1399
        %v1401 = vand.u32 %v1171, 4294901760
        %v1402 = vsub.f32 %v1171, %v1401
        %1403 = vmatpush.msra.mxu0 %v1402
        %v1404 = vand.u32 %v1169, 4294901760
        %v1405 = vsub.f32 %v1169, %v1404
        %1406 = vmatpush.msra.mxu0 %v1405
        %v1407 = vand.u32 %v1167, 4294901760
        %v1408 = vsub.f32 %v1167, %v1407
        %1409 = vmatpush.msra.mxu0 %v1408
        %v1410 = vand.u32 %v1165, 4294901760
        %v1411 = vsub.f32 %v1165, %v1410
        %1412 = vmatpush.msra.mxu0 %v1411
        %v1413 = vand.u32 %v1163, 4294901760
        %v1414 = vsub.f32 %v1163, %v1413
        %1415 = vmatpush.msra.mxu0 %v1414
        %v1416 = vand.u32 %v1161, 4294901760
        %v1417 = vsub.f32 %v1161, %v1416
        %1418 = vmatpush.msra.mxu0 %v1417
        %v1419 = vand.u32 %v1157, 4294901760
        %v1420 = vsub.f32 %v1157, %v1419
        %1421 = vmatmul.f32.gmra.mxu0 %v1420
        %v1422 = vpop.f32.mrf.mxu0
        %v1423 = vadd.f32 %v1365, %v1422
        %v1424 = vand.u32 %v1159, 4294901760
        %v1425 = vsub.f32 %v1159, %v1424
        %1426 = vmatmul.f32.gmra.mxu0 %v1425
        %v1427 = vpop.f32.mrf.mxu0
        %v1428 = vadd.f32 %v1369, %v1427
        %1429 = vdwg.mxu0
        %v1430 = vand.u32 %v1191, 4294901760
        %1431 = vmatpush.msra.mxu0 %v1430
        %v1432 = vand.u32 %v1189, 4294901760
        %1433 = vmatpush.msra.mxu0 %v1432
        %v1434 = vand.u32 %v1187, 4294901760
        %1435 = vmatpush.msra.mxu0 %v1434
        %v1436 = vand.u32 %v1185, 4294901760
        %1437 = vmatpush.msra.mxu0 %v1436
        %v1438 = vand.u32 %v1183, 4294901760
        %1439 = vmatpush.msra.mxu0 %v1438
        %v1440 = vand.u32 %v1181, 4294901760
        %1441 = vmatpush.msra.mxu0 %v1440
        %v1442 = vand.u32 %v1179, 4294901760
        %1443 = vmatpush.msra.mxu0 %v1442
        %v1444 = vand.u32 %v1177, 4294901760
        %1445 = vmatpush.msra.mxu0 %v1444
        %v1446 = vand.u32 %v1175, 4294901760
        %1447 = vmatpush.msra.mxu0 %v1446
        %v1448 = vand.u32 %v1173, 4294901760
        %1449 = vmatpush.msra.mxu0 %v1448
        %v1450 = vand.u32 %v1171, 4294901760
        %1451 = vmatpush.msra.mxu0 %v1450
        %v1452 = vand.u32 %v1169, 4294901760
        %1453 = vmatpush.msra.mxu0 %v1452
        %v1454 = vand.u32 %v1167, 4294901760
        %1455 = vmatpush.msra.mxu0 %v1454
        %v1456 = vand.u32 %v1165, 4294901760
        %1457 = vmatpush.msra.mxu0 %v1456
        %v1458 = vand.u32 %v1163, 4294901760
        %1459 = vmatpush.msra.mxu0 %v1458
        %v1460 = vand.u32 %v1161, 4294901760
        %1461 = vmatpush.msra.mxu0 %v1460
        %v1462 = vand.u32 %v1157, 4294901760
        %v1463 = vsub.f32 %v1157, %v1462
        %v1464 = vand.u32 %v1463, 4294901760
        %1465 = vmatmul.f32.gmra.mxu0 %v1464
        %v1466 = vpop.f32.mrf.mxu0
        %v1467 = vadd.f32 %v1423, %v1466
        %v1468 = vand.u32 %v1159, 4294901760
        %v1469 = vsub.f32 %v1159, %v1468
        %v1470 = vand.u32 %v1469, 4294901760
        %1471 = vmatmul.f32.gmra.mxu0 %v1470
        %v1472 = vpop.f32.mrf.mxu0
        %v1473 = vadd.f32 %v1428, %v1472
        %1474 = vdwg.mxu0
        %v1475 = vand.u32 %v1191, 4294901760
        %v1476 = vsub.f32 %v1191, %v1475
        %v1477 = vand.u32 %v1476, 4294901760
        %1478 = vmatpush.msra.mxu0 %v1477
        %v1479 = vand.u32 %v1189, 4294901760
        %v1480 = vsub.f32 %v1189, %v1479
        %v1481 = vand.u32 %v1480, 4294901760
        %1482 = vmatpush.msra.mxu0 %v1481
        %v1483 = vand.u32 %v1187, 4294901760
        %v1484 = vsub.f32 %v1187, %v1483
        %v1485 = vand.u32 %v1484, 4294901760
        %1486 = vmatpush.msra.mxu0 %v1485
        %v1487 = vand.u32 %v1185, 4294901760
        %v1488 = vsub.f32 %v1185, %v1487
        %v1489 = vand.u32 %v1488, 4294901760
        %1490 = vmatpush.msra.mxu0 %v1489
        %v1491 = vand.u32 %v1183, 4294901760
        %v1492 = vsub.f32 %v1183, %v1491
        %v1493 = vand.u32 %v1492, 4294901760
        %1494 = vmatpush.msra.mxu0 %v1493
        %v1495 = vand.u32 %v1181, 4294901760
        %v1496 = vsub.f32 %v1181, %v1495
        %v1497 = vand.u32 %v1496, 4294901760
        %1498 = vmatpush.msra.mxu0 %v1497
        %v1499 = vand.u32 %v1179, 4294901760
        %v1500 = vsub.f32 %v1179, %v1499
        %v1501 = vand.u32 %v1500, 4294901760
        %1502 = vmatpush.msra.mxu0 %v1501
        %v1503 = vand.u32 %v1177, 4294901760
        %v1504 = vsub.f32 %v1177, %v1503
        %v1505 = vand.u32 %v1504, 4294901760
        %1506 = vmatpush.msra.mxu0 %v1505
        %v1507 = vand.u32 %v1175, 4294901760
        %v1508 = vsub.f32 %v1175, %v1507
        %v1509 = vand.u32 %v1508, 4294901760
        %1510 = vmatpush.msra.mxu0 %v1509
        %v1511 = vand.u32 %v1173, 4294901760
        %v1512 = vsub.f32 %v1173, %v1511
        %v1513 = vand.u32 %v1512, 4294901760
        %1514 = vmatpush.msra.mxu0 %v1513
        %v1515 = vand.u32 %v1171, 4294901760
        %v1516 = vsub.f32 %v1171, %v1515
        %v1517 = vand.u32 %v1516, 4294901760
        %1518 = vmatpush.msra.mxu0 %v1517
        %v1519 = vand.u32 %v1169, 4294901760
        %v1520 = vsub.f32 %v1169, %v1519
        %v1521 = vand.u32 %v1520, 4294901760
        %1522 = vmatpush.msra.mxu0 %v1521
        %v1523 = vand.u32 %v1167, 4294901760
        %v1524 = vsub.f32 %v1167, %v1523
        %v1525 = vand.u32 %v1524, 4294901760
        %1526 = vmatpush.msra.mxu0 %v1525
        %v1527 = vand.u32 %v1165, 4294901760
        %v1528 = vsub.f32 %v1165, %v1527
        %v1529 = vand.u32 %v1528, 4294901760
        %1530 = vmatpush.msra.mxu0 %v1529
        %v1531 = vand.u32 %v1163, 4294901760
        %v1532 = vsub.f32 %v1163, %v1531
        %v1533 = vand.u32 %v1532, 4294901760
        %1534 = vmatpush.msra.mxu0 %v1533
        %v1535 = vand.u32 %v1161, 4294901760
        %v1536 = vsub.f32 %v1161, %v1535
        %v1537 = vand.u32 %v1536, 4294901760
        %1538 = vmatpush.msra.mxu0 %v1537
        %v1539 = vand.u32 %v1157, 4294901760
        %1540 = vmatmul.f32.gmra.mxu0 %v1539
        %v1541 = vpop.f32.mrf.mxu0
        %v1542 = vadd.f32 %v1467, %v1541
        %v1543 = vand.u32 %v1159, 4294901760
        %1544 = vmatmul.f32.gmra.mxu0 %v1543
        %v1545 = vpop.f32.mrf.mxu0
        %v1546 = vadd.f32 %v1473, %v1545
        %1547 = vdwg.mxu0
        %v1548 = vand.u32 %v1191, 4294901760
        %1549 = vmatpush.msra.mxu0 %v1548
        %v1550 = vand.u32 %v1189, 4294901760
        %1551 = vmatpush.msra.mxu0 %v1550
        %v1552 = vand.u32 %v1187, 4294901760
        %1553 = vmatpush.msra.mxu0 %v1552
        %v1554 = vand.u32 %v1185, 4294901760
        %1555 = vmatpush.msra.mxu0 %v1554
        %v1556 = vand.u32 %v1183, 4294901760
        %1557 = vmatpush.msra.mxu0 %v1556
        %v1558 = vand.u32 %v1181, 4294901760
        %1559 = vmatpush.msra.mxu0 %v1558
        %v1560 = vand.u32 %v1179, 4294901760
        %1561 = vmatpush.msra.mxu0 %v1560
        %v1562 = vand.u32 %v1177, 4294901760
        %1563 = vmatpush.msra.mxu0 %v1562
        %v1564 = vand.u32 %v1175, 4294901760
        %1565 = vmatpush.msra.mxu0 %v1564
        %v1566 = vand.u32 %v1173, 4294901760
        %1567 = vmatpush.msra.mxu0 %v1566
        %v1568 = vand.u32 %v1171, 4294901760
        %1569 = vmatpush.msra.mxu0 %v1568
        %v1570 = vand.u32 %v1169, 4294901760
        %1571 = vmatpush.msra.mxu0 %v1570
        %v1572 = vand.u32 %v1167, 4294901760
        %1573 = vmatpush.msra.mxu0 %v1572
        %v1574 = vand.u32 %v1165, 4294901760
        %1575 = vmatpush.msra.mxu0 %v1574
        %v1576 = vand.u32 %v1163, 4294901760
        %1577 = vmatpush.msra.mxu0 %v1576
        %v1578 = vand.u32 %v1161, 4294901760
        %1579 = vmatpush.msra.mxu0 %v1578
        %v1580 = vand.u32 %v1157, 4294901760
        %1581 = vmatmul.f32.gmra.mxu0 %v1580
        %v1582 = vpop.f32.mrf.mxu0
        %v1583 = vadd.f32 %v1542, %v1582
        %v1584 = vand.u32 %v1159, 4294901760
        %1585 = vmatmul.f32.gmra.mxu0 %v1584
        %v1586 = vpop.f32.mrf.mxu0
        %v1587 = vadd.f32 %v1546, %v1586
        %1588 = vdwg.mxu0
        %1589 = vmatpush.msra.mxu0 0.0
        %1590 = vmatpush.msra.mxu0 0.0
        %1591 = vmatpush.msra.mxu0 0.0
        %1592 = vmatpush.msra.mxu0 0.0
        %1593 = vmatpush.msra.mxu0 0.0
        %1594 = vmatpush.msra.mxu0 0.0
        %1595 = vmatpush.msra.mxu0 0.0
        %1596 = vmatpush.msra.mxu0 0.0
        %1597 = vmatpush.msra.mxu0 0.0
        %1598 = vmatpush.msra.mxu0 0.0
        %1599 = vmatpush.msra.mxu0 0.0
        %1600 = vmatpush.msra.mxu0 0.0
        %1601 = vmatpush.msra.mxu0 0.0
        %1602 = vmatpush.msra.mxu0 0.0
        %v1603 = vand.u32 %v1195, 4294901760
        %1604 = vmatpush.msra.mxu0 %v1603
        %v1605 = vand.u32 %v1193, 4294901760
        %1606 = vmatpush.msra.mxu0 %v1605
        %v1607 = vand.u32 %v1212, 4294901760
        %v1608 = vsub.f32 %v1212, %v1607
        %v1609 = vand.u32 %v1608, 4294901760
        %v1610 = vsub.f32 %v1608, %v1609
        %v1611 = vand.u32 %v1610, 4294901760
        %1612 = vmatmul.f32.gmra.mxu0 %v1611
        %v1613 = vpop.f32.mrf.mxu0
        %v1614 = vadd.f32 %v1583, %v1613
        %v1615 = vand.u32 %v1215, 4294901760
        %v1616 = vsub.f32 %v1215, %v1615
        %v1617 = vand.u32 %v1616, 4294901760
        %v1618 = vsub.f32 %v1616, %v1617
        %v1619 = vand.u32 %v1618, 4294901760
        %1620 = vmatmul.f32.gmra.mxu0 %v1619
        %v1621 = vpop.f32.mrf.mxu0
        %v1622 = vadd.f32 %v1587, %v1621
        %1623 = vdwg.mxu0
        %1624 = vmatpush.msra.mxu0 0.0
        %1625 = vmatpush.msra.mxu0 0.0
        %1626 = vmatpush.msra.mxu0 0.0
        %1627 = vmatpush.msra.mxu0 0.0
        %1628 = vmatpush.msra.mxu0 0.0
        %1629 = vmatpush.msra.mxu0 0.0
        %1630 = vmatpush.msra.mxu0 0.0
        %1631 = vmatpush.msra.mxu0 0.0
        %1632 = vmatpush.msra.mxu0 0.0
        %1633 = vmatpush.msra.mxu0 0.0
        %1634 = vmatpush.msra.mxu0 0.0
        %1635 = vmatpush.msra.mxu0 0.0
        %1636 = vmatpush.msra.mxu0 0.0
        %1637 = vmatpush.msra.mxu0 0.0
        %v1638 = vand.u32 %v1195, 4294901760
        %v1639 = vsub.f32 %v1195, %v1638
        %v1640 = vand.u32 %v1639, 4294901760
        %v1641 = vsub.f32 %v1639, %v1640
        %v1642 = vand.u32 %v1641, 4294901760
        %1643 = vmatpush.msra.mxu0 %v1642
        %v1644 = vand.u32 %v1193, 4294901760
        %v1645 = vsub.f32 %v1193, %v1644
        %v1646 = vand.u32 %v1645, 4294901760
        %v1647 = vsub.f32 %v1645, %v1646
        %v1648 = vand.u32 %v1647, 4294901760
        %1649 = vmatpush.msra.mxu0 %v1648
        %v1650 = vand.u32 %v1212, 4294901760
        %1651 = vmatmul.f32.gmra.mxu0 %v1650
        %v1652 = vpop.f32.mrf.mxu0
        %v1653 = vadd.f32 %v1614, %v1652
        %v1654 = vand.u32 %v1215, 4294901760
        %1655 = vmatmul.f32.gmra.mxu0 %v1654
        %v1656 = vpop.f32.mrf.mxu0
        %v1657 = vadd.f32 %v1622, %v1656
        %1658 = vdwg.mxu0
        %1659 = vmatpush.msra.mxu0 0.0
        %1660 = vmatpush.msra.mxu0 0.0
        %1661 = vmatpush.msra.mxu0 0.0
        %1662 = vmatpush.msra.mxu0 0.0
        %1663 = vmatpush.msra.mxu0 0.0
        %1664 = vmatpush.msra.mxu0 0.0
        %1665 = vmatpush.msra.mxu0 0.0
        %1666 = vmatpush.msra.mxu0 0.0
        %1667 = vmatpush.msra.mxu0 0.0
        %1668 = vmatpush.msra.mxu0 0.0
        %1669 = vmatpush.msra.mxu0 0.0
        %1670 = vmatpush.msra.mxu0 0.0
        %1671 = vmatpush.msra.mxu0 0.0
        %1672 = vmatpush.msra.mxu0 0.0
        %v1673 = vand.u32 %v1195, 4294901760
        %v1674 = vsub.f32 %v1195, %v1673
        %1675 = vmatpush.msra.mxu0 %v1674
        %v1676 = vand.u32 %v1193, 4294901760
        %v1677 = vsub.f32 %v1193, %v1676
        %1678 = vmatpush.msra.mxu0 %v1677
        %v1679 = vand.u32 %v1212, 4294901760
        %v1680 = vsub.f32 %v1212, %v1679
        %1681 = vmatmul.f32.gmra.mxu0 %v1680
        %v1682 = vpop.f32.mrf.mxu0
        %v1683 = vadd.f32 %v1653, %v1682
        %v1684 = vand.u32 %v1215, 4294901760
        %v1685 = vsub.f32 %v1215, %v1684
        %1686 = vmatmul.f32.gmra.mxu0 %v1685
        %v1687 = vpop.f32.mrf.mxu0
        %v1688 = vadd.f32 %v1657, %v1687
        %1689 = vdwg.mxu0
        %1690 = vmatpush.msra.mxu0 0.0
        %1691 = vmatpush.msra.mxu0 0.0
        %1692 = vmatpush.msra.mxu0 0.0
        %1693 = vmatpush.msra.mxu0 0.0
        %1694 = vmatpush.msra.mxu0 0.0
        %1695 = vmatpush.msra.mxu0 0.0
        %1696 = vmatpush.msra.mxu0 0.0
        %1697 = vmatpush.msra.mxu0 0.0
        %1698 = vmatpush.msra.mxu0 0.0
        %1699 = vmatpush.msra.mxu0 0.0
        %1700 = vmatpush.msra.mxu0 0.0
        %1701 = vmatpush.msra.mxu0 0.0
        %1702 = vmatpush.msra.mxu0 0.0
        %1703 = vmatpush.msra.mxu0 0.0
        %v1704 = vand.u32 %v1195, 4294901760
        %1705 = vmatpush.msra.mxu0 %v1704
        %v1706 = vand.u32 %v1193, 4294901760
        %1707 = vmatpush.msra.mxu0 %v1706
        %v1708 = vand.u32 %v1212, 4294901760
        %v1709 = vsub.f32 %v1212, %v1708
        %v1710 = vand.u32 %v1709, 4294901760
        %1711 = vmatmul.f32.gmra.mxu0 %v1710
        %v1712 = vpop.f32.mrf.mxu0
        %v1713 = vadd.f32 %v1683, %v1712
        %v1714 = vand.u32 %v1215, 4294901760
        %v1715 = vsub.f32 %v1215, %v1714
        %v1716 = vand.u32 %v1715, 4294901760
        %1717 = vmatmul.f32.gmra.mxu0 %v1716
        %v1718 = vpop.f32.mrf.mxu0
        %v1719 = vadd.f32 %v1688, %v1718
        %1720 = vdwg.mxu0
        %1721 = vmatpush.msra.mxu0 0.0
        %1722 = vmatpush.msra.mxu0 0.0
        %1723 = vmatpush.msra.mxu0 0.0
        %1724 = vmatpush.msra.mxu0 0.0
        %1725 = vmatpush.msra.mxu0 0.0
        %1726 = vmatpush.msra.mxu0 0.0
        %1727 = vmatpush.msra.mxu0 0.0
        %1728 = vmatpush.msra.mxu0 0.0
        %1729 = vmatpush.msra.mxu0 0.0
        %1730 = vmatpush.msra.mxu0 0.0
        %1731 = vmatpush.msra.mxu0 0.0
        %1732 = vmatpush.msra.mxu0 0.0
        %1733 = vmatpush.msra.mxu0 0.0
        %1734 = vmatpush.msra.mxu0 0.0
        %v1735 = vand.u32 %v1195, 4294901760
        %v1736 = vsub.f32 %v1195, %v1735
        %v1737 = vand.u32 %v1736, 4294901760
        %1738 = vmatpush.msra.mxu0 %v1737
        %v1739 = vand.u32 %v1193, 4294901760
        %v1740 = vsub.f32 %v1193, %v1739
        %v1741 = vand.u32 %v1740, 4294901760
        %1742 = vmatpush.msra.mxu0 %v1741
        %v1743 = vand.u32 %v1212, 4294901760
        %1744 = vmatmul.f32.gmra.mxu0 %v1743
        %v1745 = vpop.f32.mrf.mxu0
        %v1746 = vadd.f32 %v1713, %v1745
        %v1747 = vand.u32 %v1215, 4294901760
        %1748 = vmatmul.f32.gmra.mxu0 %v1747
        %v1749 = vpop.f32.mrf.mxu0
        %v1750 = vadd.f32 %v1719, %v1749
        %1751 = vdwg.mxu0
        %1752 = vmatpush.msra.mxu0 0.0
        %1753 = vmatpush.msra.mxu0 0.0
        %1754 = vmatpush.msra.mxu0 0.0
        %1755 = vmatpush.msra.mxu0 0.0
        %1756 = vmatpush.msra.mxu0 0.0
        %1757 = vmatpush.msra.mxu0 0.0
        %1758 = vmatpush.msra.mxu0 0.0
        %1759 = vmatpush.msra.mxu0 0.0
        %1760 = vmatpush.msra.mxu0 0.0
        %1761 = vmatpush.msra.mxu0 0.0
        %1762 = vmatpush.msra.mxu0 0.0
        %1763 = vmatpush.msra.mxu0 0.0
        %1764 = vmatpush.msra.mxu0 0.0
        %1765 = vmatpush.msra.mxu0 0.0
        %v1766 = vand.u32 %v1195, 4294901760
        %1767 = vmatpush.msra.mxu0 %v1766
        %v1768 = vand.u32 %v1193, 4294901760
        %1769 = vmatpush.msra.mxu0 %v1768
        %v1770 = vand.u32 %v1212, 4294901760
        %1771 = vmatmul.f32.gmra.mxu0 %v1770
        %v1772 = vpop.f32.mrf.mxu0
        %v1773 = vadd.f32 %v1746, %v1772
        %v1774 = vand.u32 %v1215, 4294901760
        %1775 = vmatmul.f32.gmra.mxu0 %v1774
        %v1776 = vpop.f32.mrf.mxu0
        %v1777 = vadd.f32 %v1750, %v1776
        %1778 = vdwg.mxu0
        %v1779 = vand.u32 %v1192, 4294901760
        %1780 = vmatpush.msra.mxu0 %v1779
        %v1781 = vand.u32 %v1190, 4294901760
        %1782 = vmatpush.msra.mxu0 %v1781
        %v1783 = vand.u32 %v1188, 4294901760
        %1784 = vmatpush.msra.mxu0 %v1783
        %v1785 = vand.u32 %v1186, 4294901760
        %1786 = vmatpush.msra.mxu0 %v1785
        %v1787 = vand.u32 %v1184, 4294901760
        %1788 = vmatpush.msra.mxu0 %v1787
        %v1789 = vand.u32 %v1182, 4294901760
        %1790 = vmatpush.msra.mxu0 %v1789
        %v1791 = vand.u32 %v1180, 4294901760
        %1792 = vmatpush.msra.mxu0 %v1791
        %v1793 = vand.u32 %v1178, 4294901760
        %1794 = vmatpush.msra.mxu0 %v1793
        %v1795 = vand.u32 %v1176, 4294901760
        %1796 = vmatpush.msra.mxu0 %v1795
        %v1797 = vand.u32 %v1174, 4294901760
        %1798 = vmatpush.msra.mxu0 %v1797
        %v1799 = vand.u32 %v1172, 4294901760
        %1800 = vmatpush.msra.mxu0 %v1799
        %v1801 = vand.u32 %v1170, 4294901760
        %1802 = vmatpush.msra.mxu0 %v1801
        %v1803 = vand.u32 %v1168, 4294901760
        %1804 = vmatpush.msra.mxu0 %v1803
        %v1805 = vand.u32 %v1166, 4294901760
        %1806 = vmatpush.msra.mxu0 %v1805
        %v1807 = vand.u32 %v1164, 4294901760
        %1808 = vmatpush.msra.mxu0 %v1807
        %v1809 = vand.u32 %v1162, 4294901760
        %1810 = vmatpush.msra.mxu0 %v1809
        %v1811 = vand.u32 %v1157, 4294901760
        %v1812 = vsub.f32 %v1157, %v1811
        %v1813 = vand.u32 %v1812, 4294901760
        %v1814 = vsub.f32 %v1812, %v1813
        %v1815 = vand.u32 %v1814, 4294901760
        %1816 = vmatmul.f32.gmra.mxu0 %v1815
        %v1817 = vpop.f32.mrf.mxu0
        %v1818 = vadd.f32 %v1203, %v1817
        %v1819 = vand.u32 %v1159, 4294901760
        %v1820 = vsub.f32 %v1159, %v1819
        %v1821 = vand.u32 %v1820, 4294901760
        %v1822 = vsub.f32 %v1820, %v1821
        %v1823 = vand.u32 %v1822, 4294901760
        %1824 = vmatmul.f32.gmra.mxu0 %v1823
        %v1825 = vpop.f32.mrf.mxu0
        %v1826 = vadd.f32 %v1208, %v1825
        %1827 = vdwg.mxu0
        %v1828 = vand.u32 %v1192, 4294901760
        %v1829 = vsub.f32 %v1192, %v1828
        %v1830 = vand.u32 %v1829, 4294901760
        %v1831 = vsub.f32 %v1829, %v1830
        %v1832 = vand.u32 %v1831, 4294901760
        %1833 = vmatpush.msra.mxu0 %v1832
        %v1834 = vand.u32 %v1190, 4294901760
        %v1835 = vsub.f32 %v1190, %v1834
        %v1836 = vand.u32 %v1835, 4294901760
        %v1837 = vsub.f32 %v1835, %v1836
        %v1838 = vand.u32 %v1837, 4294901760
        %1839 = vmatpush.msra.mxu0 %v1838
        %v1840 = vand.u32 %v1188, 4294901760
        %v1841 = vsub.f32 %v1188, %v1840
        %v1842 = vand.u32 %v1841, 4294901760
        %v1843 = vsub.f32 %v1841, %v1842
        %v1844 = vand.u32 %v1843, 4294901760
        %1845 = vmatpush.msra.mxu0 %v1844
        %v1846 = vand.u32 %v1186, 4294901760
        %v1847 = vsub.f32 %v1186, %v1846
        %v1848 = vand.u32 %v1847, 4294901760
        %v1849 = vsub.f32 %v1847, %v1848
        %v1850 = vand.u32 %v1849, 4294901760
        %1851 = vmatpush.msra.mxu0 %v1850
        %v1852 = vand.u32 %v1184, 4294901760
        %v1853 = vsub.f32 %v1184, %v1852
        %v1854 = vand.u32 %v1853, 4294901760
        %v1855 = vsub.f32 %v1853, %v1854
        %v1856 = vand.u32 %v1855, 4294901760
        %1857 = vmatpush.msra.mxu0 %v1856
        %v1858 = vand.u32 %v1182, 4294901760
        %v1859 = vsub.f32 %v1182, %v1858
        %v1860 = vand.u32 %v1859, 4294901760
        %v1861 = vsub.f32 %v1859, %v1860
        %v1862 = vand.u32 %v1861, 4294901760
        %1863 = vmatpush.msra.mxu0 %v1862
        %v1864 = vand.u32 %v1180, 4294901760
        %v1865 = vsub.f32 %v1180, %v1864
        %v1866 = vand.u32 %v1865, 4294901760
        %v1867 = vsub.f32 %v1865, %v1866
        %v1868 = vand.u32 %v1867, 4294901760
        %1869 = vmatpush.msra.mxu0 %v1868
        %v1870 = vand.u32 %v1178, 4294901760
        %v1871 = vsub.f32 %v1178, %v1870
        %v1872 = vand.u32 %v1871, 4294901760
        %v1873 = vsub.f32 %v1871, %v1872
        %v1874 = vand.u32 %v1873, 4294901760
        %1875 = vmatpush.msra.mxu0 %v1874
        %v1876 = vand.u32 %v1176, 4294901760
        %v1877 = vsub.f32 %v1176, %v1876
        %v1878 = vand.u32 %v1877, 4294901760
        %v1879 = vsub.f32 %v1877, %v1878
        %v1880 = vand.u32 %v1879, 4294901760
        %1881 = vmatpush.msra.mxu0 %v1880
        %v1882 = vand.u32 %v1174, 4294901760
        %v1883 = vsub.f32 %v1174, %v1882
        %v1884 = vand.u32 %v1883, 4294901760
        %v1885 = vsub.f32 %v1883, %v1884
        %v1886 = vand.u32 %v1885, 4294901760
        %1887 = vmatpush.msra.mxu0 %v1886
        %v1888 = vand.u32 %v1172, 4294901760
        %v1889 = vsub.f32 %v1172, %v1888
        %v1890 = vand.u32 %v1889, 4294901760
        %v1891 = vsub.f32 %v1889, %v1890
        %v1892 = vand.u32 %v1891, 4294901760
        %1893 = vmatpush.msra.mxu0 %v1892
        %v1894 = vand.u32 %v1170, 4294901760
        %v1895 = vsub.f32 %v1170, %v1894
        %v1896 = vand.u32 %v1895, 4294901760
        %v1897 = vsub.f32 %v1895, %v1896
        %v1898 = vand.u32 %v1897, 4294901760
        %1899 = vmatpush.msra.mxu0 %v1898
        %v1900 = vand.u32 %v1168, 4294901760
        %v1901 = vsub.f32 %v1168, %v1900
        %v1902 = vand.u32 %v1901, 4294901760
        %v1903 = vsub.f32 %v1901, %v1902
        %v1904 = vand.u32 %v1903, 4294901760
        %1905 = vmatpush.msra.mxu0 %v1904
        %v1906 = vand.u32 %v1166, 4294901760
        %v1907 = vsub.f32 %v1166, %v1906
        %v1908 = vand.u32 %v1907, 4294901760
        %v1909 = vsub.f32 %v1907, %v1908
        %v1910 = vand.u32 %v1909, 4294901760
        %1911 = vmatpush.msra.mxu0 %v1910
        %v1912 = vand.u32 %v1164, 4294901760
        %v1913 = vsub.f32 %v1164, %v1912
        %v1914 = vand.u32 %v1913, 4294901760
        %v1915 = vsub.f32 %v1913, %v1914
        %v1916 = vand.u32 %v1915, 4294901760
        %1917 = vmatpush.msra.mxu0 %v1916
        %v1918 = vand.u32 %v1162, 4294901760
        %v1919 = vsub.f32 %v1162, %v1918
        %v1920 = vand.u32 %v1919, 4294901760
        %v1921 = vsub.f32 %v1919, %v1920
        %v1922 = vand.u32 %v1921, 4294901760
        %1923 = vmatpush.msra.mxu0 %v1922
        %v1924 = vand.u32 %v1157, 4294901760
        %1925 = vmatmul.f32.gmra.mxu0 %v1924
        %v1926 = vpop.f32.mrf.mxu0
        %v1927 = vadd.f32 %v1818, %v1926
        %v1928 = vand.u32 %v1159, 4294901760
        %1929 = vmatmul.f32.gmra.mxu0 %v1928
        %v1930 = vpop.f32.mrf.mxu0
        %v1931 = vadd.f32 %v1826, %v1930
        %1932 = vdwg.mxu0
        %v1933 = vand.u32 %v1192, 4294901760
        %v1934 = vsub.f32 %v1192, %v1933
        %1935 = vmatpush.msra.mxu0 %v1934
        %v1936 = vand.u32 %v1190, 4294901760
        %v1937 = vsub.f32 %v1190, %v1936
        %1938 = vmatpush.msra.mxu0 %v1937
        %v1939 = vand.u32 %v1188, 4294901760
        %v1940 = vsub.f32 %v1188, %v1939
        %1941 = vmatpush.msra.mxu0 %v1940
        %v1942 = vand.u32 %v1186, 4294901760
        %v1943 = vsub.f32 %v1186, %v1942
        %1944 = vmatpush.msra.mxu0 %v1943
        %v1945 = vand.u32 %v1184, 4294901760
        %v1946 = vsub.f32 %v1184, %v1945
        %1947 = vmatpush.msra.mxu0 %v1946
        %v1948 = vand.u32 %v1182, 4294901760
        %v1949 = vsub.f32 %v1182, %v1948
        %1950 = vmatpush.msra.mxu0 %v1949
        %v1951 = vand.u32 %v1180, 4294901760
        %v1952 = vsub.f32 %v1180, %v1951
        %1953 = vmatpush.msra.mxu0 %v1952
        %v1954 = vand.u32 %v1178, 4294901760
        %v1955 = vsub.f32 %v1178, %v1954
        %1956 = vmatpush.msra.mxu0 %v1955
        %v1957 = vand.u32 %v1176, 4294901760
        %v1958 = vsub.f32 %v1176, %v1957
        %1959 = vmatpush.msra.mxu0 %v1958
        %v1960 = vand.u32 %v1174, 4294901760
        %v1961 = vsub.f32 %v1174, %v1960
        %1962 = vmatpush.msra.mxu0 %v1961
        %v1963 = vand.u32 %v1172, 4294901760
        %v1964 = vsub.f32 %v1172, %v1963
        %1965 = vmatpush.msra.mxu0 %v1964
        %v1966 = vand.u32 %v1170, 4294901760
        %v1967 = vsub.f32 %v1170, %v1966
        %1968 = vmatpush.msra.mxu0 %v1967
        %v1969 = vand.u32 %v1168, 4294901760
        %v1970 = vsub.f32 %v1168, %v1969
        %1971 = vmatpush.msra.mxu0 %v1970
        %v1972 = vand.u32 %v1166, 4294901760
        %v1973 = vsub.f32 %v1166, %v1972
        %1974 = vmatpush.msra.mxu0 %v1973
        %v1975 = vand.u32 %v1164, 4294901760
        %v1976 = vsub.f32 %v1164, %v1975
        %1977 = vmatpush.msra.mxu0 %v1976
        %v1978 = vand.u32 %v1162, 4294901760
        %v1979 = vsub.f32 %v1162, %v1978
        %1980 = vmatpush.msra.mxu0 %v1979
        %v1981 = vand.u32 %v1157, 4294901760
        %v1982 = vsub.f32 %v1157, %v1981
        %1983 = vmatmul.f32.gmra.mxu0 %v1982
        %v1984 = vpop.f32.mrf.mxu0
        %v1985 = vadd.f32 %v1927, %v1984
        %v1986 = vand.u32 %v1159, 4294901760
        %v1987 = vsub.f32 %v1159, %v1986
        %1988 = vmatmul.f32.gmra.mxu0 %v1987
        %v1989 = vpop.f32.mrf.mxu0
        %v1990 = vadd.f32 %v1931, %v1989
        %1991 = vdwg.mxu0
        %v1992 = vand.u32 %v1192, 4294901760
        %1993 = vmatpush.msra.mxu0 %v1992
        %v1994 = vand.u32 %v1190, 4294901760
        %1995 = vmatpush.msra.mxu0 %v1994
        %v1996 = vand.u32 %v1188, 4294901760
        %1997 = vmatpush.msra.mxu0 %v1996
        %v1998 = vand.u32 %v1186, 4294901760
        %1999 = vmatpush.msra.mxu0 %v1998
        %v2000 = vand.u32 %v1184, 4294901760
        %2001 = vmatpush.msra.mxu0 %v2000
        %v2002 = vand.u32 %v1182, 4294901760
        %2003 = vmatpush.msra.mxu0 %v2002
        %v2004 = vand.u32 %v1180, 4294901760
        %2005 = vmatpush.msra.mxu0 %v2004
        %v2006 = vand.u32 %v1178, 4294901760
        %2007 = vmatpush.msra.mxu0 %v2006
        %v2008 = vand.u32 %v1176, 4294901760
        %2009 = vmatpush.msra.mxu0 %v2008
        %v2010 = vand.u32 %v1174, 4294901760
        %2011 = vmatpush.msra.mxu0 %v2010
        %v2012 = vand.u32 %v1172, 4294901760
        %2013 = vmatpush.msra.mxu0 %v2012
        %v2014 = vand.u32 %v1170, 4294901760
        %2015 = vmatpush.msra.mxu0 %v2014
        %v2016 = vand.u32 %v1168, 4294901760
        %2017 = vmatpush.msra.mxu0 %v2016
        %v2018 = vand.u32 %v1166, 4294901760
        %2019 = vmatpush.msra.mxu0 %v2018
        %v2020 = vand.u32 %v1164, 4294901760
        %2021 = vmatpush.msra.mxu0 %v2020
        %v2022 = vand.u32 %v1162, 4294901760
        %2023 = vmatpush.msra.mxu0 %v2022
        %v2024 = vand.u32 %v1157, 4294901760
        %v2025 = vsub.f32 %v1157, %v2024
        %v2026 = vand.u32 %v2025, 4294901760
        %2027 = vmatmul.f32.gmra.mxu0 %v2026
        %v2028 = vpop.f32.mrf.mxu0
        %v2029 = vadd.f32 %v1985, %v2028
        %v2030 = vand.u32 %v1159, 4294901760
        %v2031 = vsub.f32 %v1159, %v2030
        %v2032 = vand.u32 %v2031, 4294901760
        %2033 = vmatmul.f32.gmra.mxu0 %v2032
        %v2034 = vpop.f32.mrf.mxu0
        %v2035 = vadd.f32 %v1990, %v2034
        %2036 = vdwg.mxu0
        %v2037 = vand.u32 %v1192, 4294901760
        %v2038 = vsub.f32 %v1192, %v2037
        %v2039 = vand.u32 %v2038, 4294901760
        %2040 = vmatpush.msra.mxu0 %v2039
        %v2041 = vand.u32 %v1190, 4294901760
        %v2042 = vsub.f32 %v1190, %v2041
        %v2043 = vand.u32 %v2042, 4294901760
        %2044 = vmatpush.msra.mxu0 %v2043
        %v2045 = vand.u32 %v1188, 4294901760
        %v2046 = vsub.f32 %v1188, %v2045
        %v2047 = vand.u32 %v2046, 4294901760
        %2048 = vmatpush.msra.mxu0 %v2047
        %v2049 = vand.u32 %v1186, 4294901760
        %v2050 = vsub.f32 %v1186, %v2049
        %v2051 = vand.u32 %v2050, 4294901760
        %2052 = vmatpush.msra.mxu0 %v2051
        %v2053 = vand.u32 %v1184, 4294901760
        %v2054 = vsub.f32 %v1184, %v2053
        %v2055 = vand.u32 %v2054, 4294901760
        %2056 = vmatpush.msra.mxu0 %v2055
        %v2057 = vand.u32 %v1182, 4294901760
        %v2058 = vsub.f32 %v1182, %v2057
        %v2059 = vand.u32 %v2058, 4294901760
        %2060 = vmatpush.msra.mxu0 %v2059
        %v2061 = vand.u32 %v1180, 4294901760
        %v2062 = vsub.f32 %v1180, %v2061
        %v2063 = vand.u32 %v2062, 4294901760
        %2064 = vmatpush.msra.mxu0 %v2063
        %v2065 = vand.u32 %v1178, 4294901760
        %v2066 = vsub.f32 %v1178, %v2065
        %v2067 = vand.u32 %v2066, 4294901760
        %2068 = vmatpush.msra.mxu0 %v2067
        %v2069 = vand.u32 %v1176, 4294901760
        %v2070 = vsub.f32 %v1176, %v2069
        %v2071 = vand.u32 %v2070, 4294901760
        %2072 = vmatpush.msra.mxu0 %v2071
        %v2073 = vand.u32 %v1174, 4294901760
        %v2074 = vsub.f32 %v1174, %v2073
        %v2075 = vand.u32 %v2074, 4294901760
        %2076 = vmatpush.msra.mxu0 %v2075
        %v2077 = vand.u32 %v1172, 4294901760
        %v2078 = vsub.f32 %v1172, %v2077
        %v2079 = vand.u32 %v2078, 4294901760
        %2080 = vmatpush.msra.mxu0 %v2079
        %v2081 = vand.u32 %v1170, 4294901760
        %v2082 = vsub.f32 %v1170, %v2081
        %v2083 = vand.u32 %v2082, 4294901760
        %2084 = vmatpush.msra.mxu0 %v2083
        %v2085 = vand.u32 %v1168, 4294901760
        %v2086 = vsub.f32 %v1168, %v2085
        %v2087 = vand.u32 %v2086, 4294901760
        %2088 = vmatpush.msra.mxu0 %v2087
        %v2089 = vand.u32 %v1166, 4294901760
        %v2090 = vsub.f32 %v1166, %v2089
        %v2091 = vand.u32 %v2090, 4294901760
        %2092 = vmatpush.msra.mxu0 %v2091
        %v2093 = vand.u32 %v1164, 4294901760
        %v2094 = vsub.f32 %v1164, %v2093
        %v2095 = vand.u32 %v2094, 4294901760
        %2096 = vmatpush.msra.mxu0 %v2095
        %v2097 = vand.u32 %v1162, 4294901760
        %v2098 = vsub.f32 %v1162, %v2097
        %v2099 = vand.u32 %v2098, 4294901760
        %2100 = vmatpush.msra.mxu0 %v2099
        %v2101 = vand.u32 %v1157, 4294901760
        %2102 = vmatmul.f32.gmra.mxu0 %v2101
        %v2103 = vpop.f32.mrf.mxu0
        %v2104 = vadd.f32 %v2029, %v2103
        %v2105 = vand.u32 %v1159, 4294901760
        %2106 = vmatmul.f32.gmra.mxu0 %v2105
        %v2107 = vpop.f32.mrf.mxu0
        %v2108 = vadd.f32 %v2035, %v2107
        %2109 = vdwg.mxu0
        %v2110 = vand.u32 %v1192, 4294901760
        %2111 = vmatpush.msra.mxu0 %v2110
        %v2112 = vand.u32 %v1190, 4294901760
        %2113 = vmatpush.msra.mxu0 %v2112
        %v2114 = vand.u32 %v1188, 4294901760
        %2115 = vmatpush.msra.mxu0 %v2114
        %v2116 = vand.u32 %v1186, 4294901760
        %2117 = vmatpush.msra.mxu0 %v2116
        %v2118 = vand.u32 %v1184, 4294901760
        %2119 = vmatpush.msra.mxu0 %v2118
        %v2120 = vand.u32 %v1182, 4294901760
        %2121 = vmatpush.msra.mxu0 %v2120
        %v2122 = vand.u32 %v1180, 4294901760
        %2123 = vmatpush.msra.mxu0 %v2122
        %v2124 = vand.u32 %v1178, 4294901760
        %2125 = vmatpush.msra.mxu0 %v2124
        %v2126 = vand.u32 %v1176, 4294901760
        %2127 = vmatpush.msra.mxu0 %v2126
        %v2128 = vand.u32 %v1174, 4294901760
        %2129 = vmatpush.msra.mxu0 %v2128
        %v2130 = vand.u32 %v1172, 4294901760
        %2131 = vmatpush.msra.mxu0 %v2130
        %v2132 = vand.u32 %v1170, 4294901760
        %2133 = vmatpush.msra.mxu0 %v2132
        %v2134 = vand.u32 %v1168, 4294901760
        %2135 = vmatpush.msra.mxu0 %v2134
        %v2136 = vand.u32 %v1166, 4294901760
        %2137 = vmatpush.msra.mxu0 %v2136
        %v2138 = vand.u32 %v1164, 4294901760
        %2139 = vmatpush.msra.mxu0 %v2138
        %v2140 = vand.u32 %v1162, 4294901760
        %2141 = vmatpush.msra.mxu0 %v2140
        %v2142 = vand.u32 %v1157, 4294901760
        %2143 = vmatmul.f32.gmra.mxu0 %v2142
        %v2144 = vpop.f32.mrf.mxu0
        %v2145 = vadd.f32 %v2104, %v2144
        %v2146 = vand.u32 %v1159, 4294901760
        %2147 = vmatmul.f32.gmra.mxu0 %v2146
        %v2148 = vpop.f32.mrf.mxu0
        %v2149 = vadd.f32 %v2108, %v2148
        %2150 = vdwg.mxu0
        %2151 = vmatpush.msra.mxu0 0.0
        %2152 = vmatpush.msra.mxu0 0.0
        %2153 = vmatpush.msra.mxu0 0.0
        %2154 = vmatpush.msra.mxu0 0.0
        %2155 = vmatpush.msra.mxu0 0.0
        %2156 = vmatpush.msra.mxu0 0.0
        %2157 = vmatpush.msra.mxu0 0.0
        %2158 = vmatpush.msra.mxu0 0.0
        %2159 = vmatpush.msra.mxu0 0.0
        %2160 = vmatpush.msra.mxu0 0.0
        %2161 = vmatpush.msra.mxu0 0.0
        %2162 = vmatpush.msra.mxu0 0.0
        %2163 = vmatpush.msra.mxu0 0.0
        %2164 = vmatpush.msra.mxu0 0.0
        %v2165 = vand.u32 %v1196, 4294901760
        %2166 = vmatpush.msra.mxu0 %v2165
        %v2167 = vand.u32 %v1194, 4294901760
        %2168 = vmatpush.msra.mxu0 %v2167
        %v2169 = vand.u32 %v1212, 4294901760
        %v2170 = vsub.f32 %v1212, %v2169
        %v2171 = vand.u32 %v2170, 4294901760
        %v2172 = vsub.f32 %v2170, %v2171
        %v2173 = vand.u32 %v2172, 4294901760
        %2174 = vmatmul.f32.gmra.mxu0 %v2173
        %v2175 = vpop.f32.mrf.mxu0
        %v2176 = vadd.f32 %v2145, %v2175
        %v2177 = vand.u32 %v1215, 4294901760
        %v2178 = vsub.f32 %v1215, %v2177
        %v2179 = vand.u32 %v2178, 4294901760
        %v2180 = vsub.f32 %v2178, %v2179
        %v2181 = vand.u32 %v2180, 4294901760
        %2182 = vmatmul.f32.gmra.mxu0 %v2181
        %v2183 = vpop.f32.mrf.mxu0
        %v2184 = vadd.f32 %v2149, %v2183
        %2185 = vdwg.mxu0
        %2186 = vmatpush.msra.mxu0 0.0
        %2187 = vmatpush.msra.mxu0 0.0
        %2188 = vmatpush.msra.mxu0 0.0
        %2189 = vmatpush.msra.mxu0 0.0
        %2190 = vmatpush.msra.mxu0 0.0
        %2191 = vmatpush.msra.mxu0 0.0
        %2192 = vmatpush.msra.mxu0 0.0
        %2193 = vmatpush.msra.mxu0 0.0
        %2194 = vmatpush.msra.mxu0 0.0
        %2195 = vmatpush.msra.mxu0 0.0
        %2196 = vmatpush.msra.mxu0 0.0
        %2197 = vmatpush.msra.mxu0 0.0
        %2198 = vmatpush.msra.mxu0 0.0
        %2199 = vmatpush.msra.mxu0 0.0
        %v2200 = vand.u32 %v1196, 4294901760
        %v2201 = vsub.f32 %v1196, %v2200
        %v2202 = vand.u32 %v2201, 4294901760
        %v2203 = vsub.f32 %v2201, %v2202
        %v2204 = vand.u32 %v2203, 4294901760
        %2205 = vmatpush.msra.mxu0 %v2204
        %v2206 = vand.u32 %v1194, 4294901760
        %v2207 = vsub.f32 %v1194, %v2206
        %v2208 = vand.u32 %v2207, 4294901760
        %v2209 = vsub.f32 %v2207, %v2208
        %v2210 = vand.u32 %v2209, 4294901760
        %2211 = vmatpush.msra.mxu0 %v2210
        %v2212 = vand.u32 %v1212, 4294901760
        %2213 = vmatmul.f32.gmra.mxu0 %v2212
        %v2214 = vpop.f32.mrf.mxu0
        %v2215 = vadd.f32 %v2176, %v2214
        %v2216 = vand.u32 %v1215, 4294901760
        %2217 = vmatmul.f32.gmra.mxu0 %v2216
        %v2218 = vpop.f32.mrf.mxu0
        %v2219 = vadd.f32 %v2184, %v2218
        %2220 = vdwg.mxu0
        %2221 = vmatpush.msra.mxu0 0.0
        %2222 = vmatpush.msra.mxu0 0.0
        %2223 = vmatpush.msra.mxu0 0.0
        %2224 = vmatpush.msra.mxu0 0.0
        %2225 = vmatpush.msra.mxu0 0.0
        %2226 = vmatpush.msra.mxu0 0.0
        %2227 = vmatpush.msra.mxu0 0.0
        %2228 = vmatpush.msra.mxu0 0.0
        %2229 = vmatpush.msra.mxu0 0.0
        %2230 = vmatpush.msra.mxu0 0.0
        %2231 = vmatpush.msra.mxu0 0.0
        %2232 = vmatpush.msra.mxu0 0.0
        %2233 = vmatpush.msra.mxu0 0.0
        %2234 = vmatpush.msra.mxu0 0.0
        %v2235 = vand.u32 %v1196, 4294901760
        %v2236 = vsub.f32 %v1196, %v2235
        %2237 = vmatpush.msra.mxu0 %v2236
        %v2238 = vand.u32 %v1194, 4294901760
        %v2239 = vsub.f32 %v1194, %v2238
        %2240 = vmatpush.msra.mxu0 %v2239
        %v2241 = vand.u32 %v1212, 4294901760
        %v2242 = vsub.f32 %v1212, %v2241
        %2243 = vmatmul.f32.gmra.mxu0 %v2242
        %v2244 = vpop.f32.mrf.mxu0
        %v2245 = vadd.f32 %v2215, %v2244
        %v2246 = vand.u32 %v1215, 4294901760
        %v2247 = vsub.f32 %v1215, %v2246
        %2248 = vmatmul.f32.gmra.mxu0 %v2247
        %v2249 = vpop.f32.mrf.mxu0
        %v2250 = vadd.f32 %v2219, %v2249
        %2251 = vdwg.mxu0
        %2252 = vmatpush.msra.mxu0 0.0
        %2253 = vmatpush.msra.mxu0 0.0
        %2254 = vmatpush.msra.mxu0 0.0
        %2255 = vmatpush.msra.mxu0 0.0
        %2256 = vmatpush.msra.mxu0 0.0
        %2257 = vmatpush.msra.mxu0 0.0
        %2258 = vmatpush.msra.mxu0 0.0
        %2259 = vmatpush.msra.mxu0 0.0
        %2260 = vmatpush.msra.mxu0 0.0
        %2261 = vmatpush.msra.mxu0 0.0
        %2262 = vmatpush.msra.mxu0 0.0
        %2263 = vmatpush.msra.mxu0 0.0
        %2264 = vmatpush.msra.mxu0 0.0
        %2265 = vmatpush.msra.mxu0 0.0
        %v2266 = vand.u32 %v1196, 4294901760
        %2267 = vmatpush.msra.mxu0 %v2266
        %v2268 = vand.u32 %v1194, 4294901760
        %2269 = vmatpush.msra.mxu0 %v2268
        %v2270 = vand.u32 %v1212, 4294901760
        %v2271 = vsub.f32 %v1212, %v2270
        %v2272 = vand.u32 %v2271, 4294901760
        %2273 = vmatmul.f32.gmra.mxu0 %v2272
        %v2274 = vpop.f32.mrf.mxu0
        %v2275 = vadd.f32 %v2245, %v2274
        %v2276 = vand.u32 %v1215, 4294901760
        %v2277 = vsub.f32 %v1215, %v2276
        %v2278 = vand.u32 %v2277, 4294901760
        %2279 = vmatmul.f32.gmra.mxu0 %v2278
        %v2280 = vpop.f32.mrf.mxu0
        %v2281 = vadd.f32 %v2250, %v2280
        %2282 = vdwg.mxu0
        %2283 = vmatpush.msra.mxu0 0.0
        %2284 = vmatpush.msra.mxu0 0.0
        %2285 = vmatpush.msra.mxu0 0.0
        %2286 = vmatpush.msra.mxu0 0.0
        %2287 = vmatpush.msra.mxu0 0.0
        %2288 = vmatpush.msra.mxu0 0.0
        %2289 = vmatpush.msra.mxu0 0.0
        %2290 = vmatpush.msra.mxu0 0.0
        %2291 = vmatpush.msra.mxu0 0.0
        %2292 = vmatpush.msra.mxu0 0.0
        %2293 = vmatpush.msra.mxu0 0.0
        %2294 = vmatpush.msra.mxu0 0.0
        %2295 = vmatpush.msra.mxu0 0.0
        %2296 = vmatpush.msra.mxu0 0.0
        %v2297 = vand.u32 %v1196, 4294901760
        %v2298 = vsub.f32 %v1196, %v2297
        %v2299 = vand.u32 %v2298, 4294901760
        %2300 = vmatpush.msra.mxu0 %v2299
        %v2301 = vand.u32 %v1194, 4294901760
        %v2302 = vsub.f32 %v1194, %v2301
        %v2303 = vand.u32 %v2302, 4294901760
        %2304 = vmatpush.msra.mxu0 %v2303
        %v2305 = vand.u32 %v1212, 4294901760
        %2306 = vmatmul.f32.gmra.mxu0 %v2305
        %v2307 = vpop.f32.mrf.mxu0
        %v2308 = vadd.f32 %v2275, %v2307
        %v2309 = vand.u32 %v1215, 4294901760
        %2310 = vmatmul.f32.gmra.mxu0 %v2309
        %v2311 = vpop.f32.mrf.mxu0
        %v2312 = vadd.f32 %v2281, %v2311
        %2313 = vdwg.mxu0
        %2314 = vmatpush.msra.mxu0 0.0
        %2315 = vmatpush.msra.mxu0 0.0
        %2316 = vmatpush.msra.mxu0 0.0
        %2317 = vmatpush.msra.mxu0 0.0
        %2318 = vmatpush.msra.mxu0 0.0
        %2319 = vmatpush.msra.mxu0 0.0
        %2320 = vmatpush.msra.mxu0 0.0
        %2321 = vmatpush.msra.mxu0 0.0
        %2322 = vmatpush.msra.mxu0 0.0
        %2323 = vmatpush.msra.mxu0 0.0
        %2324 = vmatpush.msra.mxu0 0.0
        %2325 = vmatpush.msra.mxu0 0.0
        %2326 = vmatpush.msra.mxu0 0.0
        %2327 = vmatpush.msra.mxu0 0.0
        %v2328 = vand.u32 %v1196, 4294901760
        %2329 = vmatpush.msra.mxu0 %v2328
        %v2330 = vand.u32 %v1194, 4294901760
        %2331 = vmatpush.msra.mxu0 %v2330
        %v2332 = vand.u32 %v1212, 4294901760
        %2333 = vmatmul.f32.gmra.mxu0 %v2332
        %v2334 = vpop.f32.mrf.mxu0
        %v2335 = vadd.f32 %v2308, %v2334
        %v2336 = vand.u32 %v1215, 4294901760
        %2337 = vmatmul.f32.gmra.mxu0 %v2336
        %v2338 = vpop.f32.mrf.mxu0
        %v2339 = vadd.f32 %v2312, %v2338
        %2340 = vdwg.mxu0
        %v2341 = vadd.f32 %v1773, %v956
        %v2342 = vadd.f32 %v2335, %v957
        %v2343 = vadd.f32 %v1777, %v958
        %v2344 = vadd.f32 %v2339, %v959
        %vm2345 = vcmp.ge.f32.partialorder %v2341, 0.0
        %vm2346 = vcmp.ge.f32.partialorder %v2342, 0.0
        %vm2347 = vcmp.ge.f32.partialorder %v2343, 0.0
        %vm2348 = vcmp.ge.f32.partialorder %v2344, 0.0
        %v2349 = vmul.f32 %v2341, 0.01
        %v2350 = vmul.f32 %v2342, 0.01
        %v2351 = vmul.f32 %v2343, 0.01
        %v2352 = vmul.f32 %v2344, 0.01
        %v2353 = vsel %vm2345, %v2341, %v2349
        %v2354 = vsel %vm2346, %v2342, %v2350
        %v2355 = vsel %vm2347, %v2343, %v2351
        %v2356 = vsel %vm2348, %v2344, %v2352
        %2357 = vrot.lane.b32.xlu0 %v2353, 17
        %v2358 = vpop.permute.xlu0 %2357
        %2359 = vrot.lane.b32.xlu0 %v2355, 17
        %v2360 = vpop.permute.xlu0 %2359
        %2361 = vrot.lane.b32.xlu0 %v2354, 17
        %v2362 = vpop.permute.xlu0 %2361
        %2363 = vrot.lane.b32.xlu0 %v2356, 17
        %v2364 = vpop.permute.xlu0 %2363
        %v2365 = vsel %vm238, %v2358, %v2362
        %v2366 = vsel %vm238, %v2360, %v2364
        %v2367 = vsel %vm238, %v2362, %v2358
        %v2368 = vsel %vm238, %v2364, %v2360
        %v2369 = vld [vmem:[#allocation5] sm:$0xff]
        %v2370 = vld [vmem:[#allocation5 + $0x8] sm:$0xff]
        %v2371 = vld [vmem:[#allocation5 + $0x10] sm:$0xff]
        %v2372 = vld [vmem:[#allocation5 + $0x18] sm:$0xff]
        %v2373 = vmul.f32 %v2367, %v2369
        %v2374 = vmul.f32 %v2365, %v2370
        %v2375 = vmul.f32 %v2368, %v2371
        %v2376 = vmul.f32 %v2366, %v2372
        %2377 = vst [vmem:[#allocation2] sm:$0xff] %v2373
        %2378 = vst [vmem:[#allocation2 + $0x8] sm:$0xff] %v2374
        %2379 = vst [vmem:[#allocation2 + $0x10] sm:$0xff] %v2375
        %2380 = vst [vmem:[#allocation2 + $0x18] sm:$0xff] %v2376
        %2381 = vrot.lane.b32.xlu0 %v2353, 16
        %v2382 = vpop.permute.xlu0 %2381
        %2383 = vrot.lane.b32.xlu0 %v2355, 16
        %v2384 = vpop.permute.xlu0 %2383
        %2385 = vrot.lane.b32.xlu0 %v2354, 16
        %v2386 = vpop.permute.xlu0 %2385
        %2387 = vrot.lane.b32.xlu0 %v2356, 16
        %v2388 = vpop.permute.xlu0 %2387
        %v2389 = vsel %vm251, %v2382, %v2386
        %v2390 = vsel %vm251, %v2384, %v2388
        %v2391 = vsel %vm251, %v2386, %v2382
        %v2392 = vsel %vm251, %v2388, %v2384
        %v2393 = vld [vmem:[%s254] sm:$0xff]
        %v2394 = vld [vmem:[%s254 + $0x8] sm:$0xff]
        %v2395 = vld [vmem:[%s254 + $0x10] sm:$0xff]
        %v2396 = vld [vmem:[%s254 + $0x18] sm:$0xff]
        %v2397 = vmul.f32 %v2391, %v2393
        %v2398 = vmul.f32 %v2389, %v2394
        %v2399 = vmul.f32 %v2392, %v2395
        %v2400 = vmul.f32 %v2390, %v2396
        %2401 = vst [vmem:[#allocation2 + $0x20] sm:$0xff] %v2397
        %2402 = vst [vmem:[#allocation2 + $0x28] sm:$0xff] %v2398
        %2403 = vst [vmem:[#allocation2 + $0x30] sm:$0xff] %v2399
        %2404 = vst [vmem:[#allocation2 + $0x38] sm:$0xff] %v2400
        %2405 = vrot.lane.b32.xlu0 %v2353, 15
        %v2406 = vpop.permute.xlu0 %2405
        %2407 = vrot.lane.b32.xlu0 %v2355, 15
        %v2408 = vpop.permute.xlu0 %2407
        %2409 = vrot.lane.b32.xlu0 %v2354, 15
        %v2410 = vpop.permute.xlu0 %2409
        %2411 = vrot.lane.b32.xlu0 %v2356, 15
        %v2412 = vpop.permute.xlu0 %2411
        %v2413 = vsel %vm265, %v2406, %v2410
        %v2414 = vsel %vm265, %v2408, %v2412
        %v2415 = vsel %vm265, %v2410, %v2406
        %v2416 = vsel %vm265, %v2412, %v2408
        %v2417 = vld [vmem:[%s268] sm:$0xff]
        %v2418 = vld [vmem:[%s268 + $0x8] sm:$0xff]
        %v2419 = vld [vmem:[%s268 + $0x10] sm:$0xff]
        %v2420 = vld [vmem:[%s268 + $0x18] sm:$0xff]
        %v2421 = vmul.f32 %v2415, %v2417
        %v2422 = vmul.f32 %v2413, %v2418
        %v2423 = vmul.f32 %v2416, %v2419
        %v2424 = vmul.f32 %v2414, %v2420
        %2425 = vst [vmem:[#allocation2 + $0x40] sm:$0xff] %v2421
        %2426 = vst [vmem:[#allocation2 + $0x48] sm:$0xff] %v2422
        %2427 = vst [vmem:[#allocation2 + $0x50] sm:$0xff] %v2423
        %2428 = vst [vmem:[#allocation2 + $0x58] sm:$0xff] %v2424
        %2429 = vrot.lane.b32.xlu0 %v2353, 1
        %v2430 = vpop.permute.xlu0 %2429
        %2431 = vrot.lane.b32.xlu0 %v2355, 1
        %v2432 = vpop.permute.xlu0 %2431
        %2433 = vrot.lane.b32.xlu0 %v2354, 1
        %v2434 = vpop.permute.xlu0 %2433
        %2435 = vrot.lane.b32.xlu0 %v2356, 1
        %v2436 = vpop.permute.xlu0 %2435
        %v2437 = vsel %vm279, %v2430, %v2434
        %v2438 = vsel %vm279, %v2432, %v2436
        %v2439 = vsel %vm279, %v2434, %v2430
        %v2440 = vsel %vm279, %v2436, %v2432
        %v2441 = vld [vmem:[%s282] sm:$0xff]
        %v2442 = vld [vmem:[%s282 + $0x8] sm:$0xff]
        %v2443 = vld [vmem:[%s282 + $0x10] sm:$0xff]
        %v2444 = vld [vmem:[%s282 + $0x18] sm:$0xff]
        %v2445 = vmul.f32 %v2439, %v2441
        %v2446 = vmul.f32 %v2437, %v2442
        %v2447 = vmul.f32 %v2440, %v2443
        %v2448 = vmul.f32 %v2438, %v2444
        %2449 = vst [vmem:[#allocation2 + $0x60] sm:$0xff] %v2445
        %2450 = vst [vmem:[#allocation2 + $0x68] sm:$0xff] %v2446
        %2451 = vst [vmem:[#allocation2 + $0x70] sm:$0xff] %v2447
        %2452 = vst [vmem:[#allocation2 + $0x78] sm:$0xff] %v2448
        %2453 = vst [vmem:[#allocation2 + $0x80] sm:$0xff] %v2353
        %2454 = vst [vmem:[#allocation2 + $0x88] sm:$0xff] %v2354
        %2455 = vst [vmem:[#allocation2 + $0x90] sm:$0xff] %v2355
        %2456 = vst [vmem:[#allocation2 + $0x98] sm:$0xff] %v2356
        %2457 = vrot.lane.b32.xlu0 %v2353, 127
        %v2458 = vpop.permute.xlu0 %2457
        %2459 = vrot.lane.b32.xlu0 %v2355, 127
        %v2460 = vpop.permute.xlu0 %2459
        %2461 = vrot.lane.b32.xlu0 %v2354, 127
        %v2462 = vpop.permute.xlu0 %2461
        %2463 = vrot.lane.b32.xlu0 %v2356, 127
        %v2464 = vpop.permute.xlu0 %2463
        %v2465 = vsel %vm295, %v2458, %v2462
        %v2466 = vsel %vm295, %v2460, %v2464
        %v2467 = vsel %vm295, %v2462, %v2458
        %v2468 = vsel %vm295, %v2464, %v2460
        %v2469 = vld [vmem:[%s298] sm:$0xff]
        %v2470 = vld [vmem:[%s298 + $0x8] sm:$0xff]
        %v2471 = vld [vmem:[%s298 + $0x10] sm:$0xff]
        %v2472 = vld [vmem:[%s298 + $0x18] sm:$0xff]
        %v2473 = vmul.f32 %v2465, %v2469
        %v2474 = vmul.f32 %v2467, %v2470
        %v2475 = vmul.f32 %v2466, %v2471
        %v2476 = vmul.f32 %v2468, %v2472
        %2477 = vst [vmem:[#allocation2 + $0xa0] sm:$0xff] %v2473
        %2478 = vst [vmem:[#allocation2 + $0xa8] sm:$0xff] %v2474
        %2479 = vst [vmem:[#allocation2 + $0xb0] sm:$0xff] %v2475
        %2480 = vst [vmem:[#allocation2 + $0xb8] sm:$0xff] %v2476
        %2481 = vrot.lane.b32.xlu0 %v2353, 113
        %v2482 = vpop.permute.xlu0 %2481
        %2483 = vrot.lane.b32.xlu0 %v2355, 113
        %v2484 = vpop.permute.xlu0 %2483
        %2485 = vrot.lane.b32.xlu0 %v2354, 113
        %v2486 = vpop.permute.xlu0 %2485
        %2487 = vrot.lane.b32.xlu0 %v2356, 113
        %v2488 = vpop.permute.xlu0 %2487
        %v2489 = vsel %vm309, %v2482, %v2486
        %v2490 = vsel %vm309, %v2484, %v2488
        %v2491 = vsel %vm309, %v2486, %v2482
        %v2492 = vsel %vm309, %v2488, %v2484
        %v2493 = vld [vmem:[%s312] sm:$0xff]
        %v2494 = vld [vmem:[%s312 + $0x8] sm:$0xff]
        %v2495 = vld [vmem:[%s312 + $0x10] sm:$0xff]
        %v2496 = vld [vmem:[%s312 + $0x18] sm:$0xff]
        %v2497 = vmul.f32 %v2489, %v2493
        %v2498 = vmul.f32 %v2491, %v2494
        %v2499 = vmul.f32 %v2490, %v2495
        %v2500 = vmul.f32 %v2492, %v2496
        %2501 = vst [vmem:[#allocation2 + $0xc0] sm:$0xff] %v2497
        %2502 = vst [vmem:[#allocation2 + $0xc8] sm:$0xff] %v2498
        %2503 = vst [vmem:[#allocation2 + $0xd0] sm:$0xff] %v2499
        %2504 = vst [vmem:[#allocation2 + $0xd8] sm:$0xff] %v2500
        %2505 = vrot.lane.b32.xlu0 %v2353, 112
        %v2506 = vpop.permute.xlu0 %2505
        %2507 = vrot.lane.b32.xlu0 %v2355, 112
        %v2508 = vpop.permute.xlu0 %2507
        %2509 = vrot.lane.b32.xlu0 %v2354, 112
        %v2510 = vpop.permute.xlu0 %2509
        %2511 = vrot.lane.b32.xlu0 %v2356, 112
        %v2512 = vpop.permute.xlu0 %2511
        %v2513 = vsel %vm323, %v2506, %v2510
        %v2514 = vsel %vm323, %v2508, %v2512
        %v2515 = vsel %vm323, %v2510, %v2506
        %v2516 = vsel %vm323, %v2512, %v2508
        %v2517 = vld [vmem:[%s326] sm:$0xff]
        %v2518 = vld [vmem:[%s326 + $0x8] sm:$0xff]
        %v2519 = vld [vmem:[%s326 + $0x10] sm:$0xff]
        %v2520 = vld [vmem:[%s326 + $0x18] sm:$0xff]
        %v2521 = vmul.f32 %v2513, %v2517
        %v2522 = vmul.f32 %v2515, %v2518
        %v2523 = vmul.f32 %v2514, %v2519
        %v2524 = vmul.f32 %v2516, %v2520
        %2525 = vst [vmem:[#allocation2 + $0xe0] sm:$0xff] %v2521
        %2526 = vst [vmem:[#allocation2 + $0xe8] sm:$0xff] %v2522
        %2527 = vst [vmem:[#allocation2 + $0xf0] sm:$0xff] %v2523
        %2528 = vst [vmem:[#allocation2 + $0xf8] sm:$0xff] %v2524
        %2529 = vrot.lane.b32.xlu0 %v2353, 111
        %v2530 = vpop.permute.xlu0 %2529
        %2531 = vrot.lane.b32.xlu0 %v2355, 111
        %v2532 = vpop.permute.xlu0 %2531
        %2533 = vrot.lane.b32.xlu0 %v2354, 111
        %v2534 = vpop.permute.xlu0 %2533
        %2535 = vrot.lane.b32.xlu0 %v2356, 111
        %v2536 = vpop.permute.xlu0 %2535
        %v2537 = vsel %vm337, %v2530, %v2534
        %v2538 = vsel %vm337, %v2532, %v2536
        %v2539 = vsel %vm337, %v2534, %v2530
        %v2540 = vsel %vm337, %v2536, %v2532
        %v2541 = vld [vmem:[%s340] sm:$0xff]
        %v2542 = vld [vmem:[%s340 + $0x8] sm:$0xff]
        %v2543 = vld [vmem:[%s340 + $0x10] sm:$0xff]
        %v2544 = vld [vmem:[%s340 + $0x18] sm:$0xff]
        %v2545 = vmul.f32 %v2537, %v2541
        %v2546 = vmul.f32 %v2539, %v2542
        %v2547 = vmul.f32 %v2538, %v2543
        %v2548 = vmul.f32 %v2540, %v2544
        %2549 = vst [vmem:[#allocation2 + $0x100] sm:$0xff] %v2545
        %2550 = vst [vmem:[#allocation2 + $0x108] sm:$0xff] %v2546
        %2551 = vst [vmem:[#allocation2 + $0x110] sm:$0xff] %v2547
        %2552 = vst [vmem:[#allocation2 + $0x118] sm:$0xff] %v2548
        %s2553 = scalar_lea.vmem [#allocation3], 64
        %v2554 = vld [vmem:[%s2553] sm:$0xff]
        %v2555 = vld [vmem:[%s2553 + $0x8] sm:$0xff]
        %v2556 = vld [vmem:[#allocation2] sm:$0xff]
        %v2557 = vld [vmem:[#allocation2 + $0x8] sm:$0xff]
        %v2558 = vld [vmem:[#allocation2 + $0x10] sm:$0xff]
        %v2559 = vld [vmem:[#allocation2 + $0x18] sm:$0xff]
        %v2560 = vld [vmem:[#allocation2 + $0x20] sm:$0xff]
        %v2561 = vld [vmem:[#allocation2 + $0x28] sm:$0xff]
        %v2562 = vld [vmem:[#allocation2 + $0x30] sm:$0xff]
        %v2563 = vld [vmem:[#allocation2 + $0x38] sm:$0xff]
        %v2564 = vld [vmem:[#allocation2 + $0x40] sm:$0xff]
        %v2565 = vld [vmem:[#allocation2 + $0x48] sm:$0xff]
        %v2566 = vld [vmem:[#allocation2 + $0x50] sm:$0xff]
        %v2567 = vld [vmem:[#allocation2 + $0x58] sm:$0xff]
        %v2568 = vld [vmem:[#allocation2 + $0x60] sm:$0xff]
        %v2569 = vld [vmem:[#allocation2 + $0x68] sm:$0xff]
        %v2570 = vld [vmem:[#allocation2 + $0x70] sm:$0xff]
        %v2571 = vld [vmem:[#allocation2 + $0x78] sm:$0xff]
        %v2572 = vld [vmem:[#allocation2 + $0x80] sm:$0xff]
        %v2573 = vld [vmem:[#allocation2 + $0x88] sm:$0xff]
        %v2574 = vld [vmem:[#allocation2 + $0x90] sm:$0xff]
        %v2575 = vld [vmem:[#allocation2 + $0x98] sm:$0xff]
        %v2576 = vld [vmem:[#allocation2 + $0xa0] sm:$0xff]
        %v2577 = vld [vmem:[#allocation2 + $0xa8] sm:$0xff]
        %v2578 = vld [vmem:[#allocation2 + $0xb0] sm:$0xff]
        %v2579 = vld [vmem:[#allocation2 + $0xb8] sm:$0xff]
        %v2580 = vld [vmem:[#allocation2 + $0xc0] sm:$0xff]
        %v2581 = vld [vmem:[#allocation2 + $0xc8] sm:$0xff]
        %v2582 = vld [vmem:[#allocation2 + $0xd0] sm:$0xff]
        %v2583 = vld [vmem:[#allocation2 + $0xd8] sm:$0xff]
        %v2584 = vld [vmem:[#allocation2 + $0xe0] sm:$0xff]
        %v2585 = vld [vmem:[#allocation2 + $0xe8] sm:$0xff]
        %v2586 = vld [vmem:[#allocation2 + $0xf0] sm:$0xff]
        %v2587 = vld [vmem:[#allocation2 + $0xf8] sm:$0xff]
        %v2588 = vld [vmem:[#allocation2 + $0x100] sm:$0xff]
        %v2589 = vld [vmem:[#allocation2 + $0x108] sm:$0xff]
        %v2590 = vld [vmem:[#allocation2 + $0x110] sm:$0xff]
        %v2591 = vld [vmem:[#allocation2 + $0x118] sm:$0xff]
        %s2592 = scalar_lea.vmem %s2, 32
        %v2593 = vld [vmem:[%s2592] sm:$0xff]
        %2595 = vset.pattern.permute.xlu0 0
        %2596 = vperm.xlu0 %2595, %v2593
        %v2597 = vpop.permute.xlu0 %2596
        %v2600 = vsel %vm1210, %v2555, 0
        %v2602 = vand.u32 %v2586, 4294901760
        %2603 = vmatpush.msra.mxu0 %v2602
        %v2604 = vand.u32 %v2584, 4294901760
        %2605 = vmatpush.msra.mxu0 %v2604
        %v2606 = vand.u32 %v2582, 4294901760
        %2607 = vmatpush.msra.mxu0 %v2606
        %v2608 = vand.u32 %v2580, 4294901760
        %2609 = vmatpush.msra.mxu0 %v2608
        %v2610 = vand.u32 %v2578, 4294901760
        %2611 = vmatpush.msra.mxu0 %v2610
        %v2612 = vand.u32 %v2576, 4294901760
        %2613 = vmatpush.msra.mxu0 %v2612
        %v2614 = vand.u32 %v2574, 4294901760
        %2615 = vmatpush.msra.mxu0 %v2614
        %v2616 = vand.u32 %v2572, 4294901760
        %2617 = vmatpush.msra.mxu0 %v2616
        %v2618 = vand.u32 %v2570, 4294901760
        %2619 = vmatpush.msra.mxu0 %v2618
        %v2620 = vand.u32 %v2568, 4294901760
        %2621 = vmatpush.msra.mxu0 %v2620
        %v2622 = vand.u32 %v2566, 4294901760
        %2623 = vmatpush.msra.mxu0 %v2622
        %v2624 = vand.u32 %v2564, 4294901760
        %2625 = vmatpush.msra.mxu0 %v2624
        %v2626 = vand.u32 %v2562, 4294901760
        %2627 = vmatpush.msra.mxu0 %v2626
        %v2628 = vand.u32 %v2560, 4294901760
        %2629 = vmatpush.msra.mxu0 %v2628
        %v2630 = vand.u32 %v2558, 4294901760
        %2631 = vmatpush.msra.mxu0 %v2630
        %v2632 = vand.u32 %v2556, 4294901760
        %2633 = vmatpush.msra.mxu0 %v2632
        %v2634 = vand.u32 %v2554, 4294901760
        %v2635 = vsub.f32 %v2554, %v2634
        %v2636 = vand.u32 %v2635, 4294901760
        %v2637 = vsub.f32 %v2635, %v2636
        %v2638 = vand.u32 %v2637, 4294901760
        %2639 = vmatmul.f32.gmra.mxu0 %v2638
        %v2640 = vpop.f32.mrf.mxu0
        %v2641 = vadd.f32 %v2597, %v2640
        %2642 = vdwg.mxu0
        %v2643 = vand.u32 %v2586, 4294901760
        %v2644 = vsub.f32 %v2586, %v2643
        %v2645 = vand.u32 %v2644, 4294901760
        %v2646 = vsub.f32 %v2644, %v2645
        %v2647 = vand.u32 %v2646, 4294901760
        %2648 = vmatpush.msra.mxu0 %v2647
        %v2649 = vand.u32 %v2584, 4294901760
        %v2650 = vsub.f32 %v2584, %v2649
        %v2651 = vand.u32 %v2650, 4294901760
        %v2652 = vsub.f32 %v2650, %v2651
        %v2653 = vand.u32 %v2652, 4294901760
        %2654 = vmatpush.msra.mxu0 %v2653
        %v2655 = vand.u32 %v2582, 4294901760
        %v2656 = vsub.f32 %v2582, %v2655
        %v2657 = vand.u32 %v2656, 4294901760
        %v2658 = vsub.f32 %v2656, %v2657
        %v2659 = vand.u32 %v2658, 4294901760
        %2660 = vmatpush.msra.mxu0 %v2659
        %v2661 = vand.u32 %v2580, 4294901760
        %v2662 = vsub.f32 %v2580, %v2661
        %v2663 = vand.u32 %v2662, 4294901760
        %v2664 = vsub.f32 %v2662, %v2663
        %v2665 = vand.u32 %v2664, 4294901760
        %2666 = vmatpush.msra.mxu0 %v2665
        %v2667 = vand.u32 %v2578, 4294901760
        %v2668 = vsub.f32 %v2578, %v2667
        %v2669 = vand.u32 %v2668, 4294901760
        %v2670 = vsub.f32 %v2668, %v2669
        %v2671 = vand.u32 %v2670, 4294901760
        %2672 = vmatpush.msra.mxu0 %v2671
        %v2673 = vand.u32 %v2576, 4294901760
        %v2674 = vsub.f32 %v2576, %v2673
        %v2675 = vand.u32 %v2674, 4294901760
        %v2676 = vsub.f32 %v2674, %v2675
        %v2677 = vand.u32 %v2676, 4294901760
        %2678 = vmatpush.msra.mxu0 %v2677
        %v2679 = vand.u32 %v2574, 4294901760
        %v2680 = vsub.f32 %v2574, %v2679
        %v2681 = vand.u32 %v2680, 4294901760
        %v2682 = vsub.f32 %v2680, %v2681
        %v2683 = vand.u32 %v2682, 4294901760
        %2684 = vmatpush.msra.mxu0 %v2683
        %v2685 = vand.u32 %v2572, 4294901760
        %v2686 = vsub.f32 %v2572, %v2685
        %v2687 = vand.u32 %v2686, 4294901760
        %v2688 = vsub.f32 %v2686, %v2687
        %v2689 = vand.u32 %v2688, 4294901760
        %2690 = vmatpush.msra.mxu0 %v2689
        %v2691 = vand.u32 %v2570, 4294901760
        %v2692 = vsub.f32 %v2570, %v2691
        %v2693 = vand.u32 %v2692, 4294901760
        %v2694 = vsub.f32 %v2692, %v2693
        %v2695 = vand.u32 %v2694, 4294901760
        %2696 = vmatpush.msra.mxu0 %v2695
        %v2697 = vand.u32 %v2568, 4294901760
        %v2698 = vsub.f32 %v2568, %v2697
        %v2699 = vand.u32 %v2698, 4294901760
        %v2700 = vsub.f32 %v2698, %v2699
        %v2701 = vand.u32 %v2700, 4294901760
        %2702 = vmatpush.msra.mxu0 %v2701
        %v2703 = vand.u32 %v2566, 4294901760
        %v2704 = vsub.f32 %v2566, %v2703
        %v2705 = vand.u32 %v2704, 4294901760
        %v2706 = vsub.f32 %v2704, %v2705
        %v2707 = vand.u32 %v2706, 4294901760
        %2708 = vmatpush.msra.mxu0 %v2707
        %v2709 = vand.u32 %v2564, 4294901760
        %v2710 = vsub.f32 %v2564, %v2709
        %v2711 = vand.u32 %v2710, 4294901760
        %v2712 = vsub.f32 %v2710, %v2711
        %v2713 = vand.u32 %v2712, 4294901760
        %2714 = vmatpush.msra.mxu0 %v2713
        %v2715 = vand.u32 %v2562, 4294901760
        %v2716 = vsub.f32 %v2562, %v2715
        %v2717 = vand.u32 %v2716, 4294901760
        %v2718 = vsub.f32 %v2716, %v2717
        %v2719 = vand.u32 %v2718, 4294901760
        %2720 = vmatpush.msra.mxu0 %v2719
        %v2721 = vand.u32 %v2560, 4294901760
        %v2722 = vsub.f32 %v2560, %v2721
        %v2723 = vand.u32 %v2722, 4294901760
        %v2724 = vsub.f32 %v2722, %v2723
        %v2725 = vand.u32 %v2724, 4294901760
        %2726 = vmatpush.msra.mxu0 %v2725
        %v2727 = vand.u32 %v2558, 4294901760
        %v2728 = vsub.f32 %v2558, %v2727
        %v2729 = vand.u32 %v2728, 4294901760
        %v2730 = vsub.f32 %v2728, %v2729
        %v2731 = vand.u32 %v2730, 4294901760
        %2732 = vmatpush.msra.mxu0 %v2731
        %v2733 = vand.u32 %v2556, 4294901760
        %v2734 = vsub.f32 %v2556, %v2733
        %v2735 = vand.u32 %v2734, 4294901760
        %v2736 = vsub.f32 %v2734, %v2735
        %v2737 = vand.u32 %v2736, 4294901760
        %2738 = vmatpush.msra.mxu0 %v2737
        %v2739 = vand.u32 %v2554, 4294901760
        %2740 = vmatmul.f32.gmra.mxu0 %v2739
        %v2741 = vpop.f32.mrf.mxu0
        %v2742 = vadd.f32 %v2641, %v2741
        %2743 = vdwg.mxu0
        %v2744 = vand.u32 %v2586, 4294901760
        %v2745 = vsub.f32 %v2586, %v2744
        %2746 = vmatpush.msra.mxu0 %v2745
        %v2747 = vand.u32 %v2584, 4294901760
        %v2748 = vsub.f32 %v2584, %v2747
        %2749 = vmatpush.msra.mxu0 %v2748
        %v2750 = vand.u32 %v2582, 4294901760
        %v2751 = vsub.f32 %v2582, %v2750
        %2752 = vmatpush.msra.mxu0 %v2751
        %v2753 = vand.u32 %v2580, 4294901760
        %v2754 = vsub.f32 %v2580, %v2753
        %2755 = vmatpush.msra.mxu0 %v2754
        %v2756 = vand.u32 %v2578, 4294901760
        %v2757 = vsub.f32 %v2578, %v2756
        %2758 = vmatpush.msra.mxu0 %v2757
        %v2759 = vand.u32 %v2576, 4294901760
        %v2760 = vsub.f32 %v2576, %v2759
        %2761 = vmatpush.msra.mxu0 %v2760
        %v2762 = vand.u32 %v2574, 4294901760
        %v2763 = vsub.f32 %v2574, %v2762
        %2764 = vmatpush.msra.mxu0 %v2763
        %v2765 = vand.u32 %v2572, 4294901760
        %v2766 = vsub.f32 %v2572, %v2765
        %2767 = vmatpush.msra.mxu0 %v2766
        %v2768 = vand.u32 %v2570, 4294901760
        %v2769 = vsub.f32 %v2570, %v2768
        %2770 = vmatpush.msra.mxu0 %v2769
        %v2771 = vand.u32 %v2568, 4294901760
        %v2772 = vsub.f32 %v2568, %v2771
        %2773 = vmatpush.msra.mxu0 %v2772
        %v2774 = vand.u32 %v2566, 4294901760
        %v2775 = vsub.f32 %v2566, %v2774
        %2776 = vmatpush.msra.mxu0 %v2775
        %v2777 = vand.u32 %v2564, 4294901760
        %v2778 = vsub.f32 %v2564, %v2777
        %2779 = vmatpush.msra.mxu0 %v2778
        %v2780 = vand.u32 %v2562, 4294901760
        %v2781 = vsub.f32 %v2562, %v2780
        %2782 = vmatpush.msra.mxu0 %v2781
        %v2783 = vand.u32 %v2560, 4294901760
        %v2784 = vsub.f32 %v2560, %v2783
        %2785 = vmatpush.msra.mxu0 %v2784
        %v2786 = vand.u32 %v2558, 4294901760
        %v2787 = vsub.f32 %v2558, %v2786
        %2788 = vmatpush.msra.mxu0 %v2787
        %v2789 = vand.u32 %v2556, 4294901760
        %v2790 = vsub.f32 %v2556, %v2789
        %2791 = vmatpush.msra.mxu0 %v2790
        %v2792 = vand.u32 %v2554, 4294901760
        %v2793 = vsub.f32 %v2554, %v2792
        %2794 = vmatmul.f32.gmra.mxu0 %v2793
        %v2795 = vpop.f32.mrf.mxu0
        %v2796 = vadd.f32 %v2742, %v2795
        %2797 = vdwg.mxu0
        %v2798 = vand.u32 %v2586, 4294901760
        %2799 = vmatpush.msra.mxu0 %v2798
        %v2800 = vand.u32 %v2584, 4294901760
        %2801 = vmatpush.msra.mxu0 %v2800
        %v2802 = vand.u32 %v2582, 4294901760
        %2803 = vmatpush.msra.mxu0 %v2802
        %v2804 = vand.u32 %v2580, 4294901760
        %2805 = vmatpush.msra.mxu0 %v2804
        %v2806 = vand.u32 %v2578, 4294901760
        %2807 = vmatpush.msra.mxu0 %v2806
        %v2808 = vand.u32 %v2576, 4294901760
        %2809 = vmatpush.msra.mxu0 %v2808
        %v2810 = vand.u32 %v2574, 4294901760
        %2811 = vmatpush.msra.mxu0 %v2810
        %v2812 = vand.u32 %v2572, 4294901760
        %2813 = vmatpush.msra.mxu0 %v2812
        %v2814 = vand.u32 %v2570, 4294901760
        %2815 = vmatpush.msra.mxu0 %v2814
        %v2816 = vand.u32 %v2568, 4294901760
        %2817 = vmatpush.msra.mxu0 %v2816
        %v2818 = vand.u32 %v2566, 4294901760
        %2819 = vmatpush.msra.mxu0 %v2818
        %v2820 = vand.u32 %v2564, 4294901760
        %2821 = vmatpush.msra.mxu0 %v2820
        %v2822 = vand.u32 %v2562, 4294901760
        %2823 = vmatpush.msra.mxu0 %v2822
        %v2824 = vand.u32 %v2560, 4294901760
        %2825 = vmatpush.msra.mxu0 %v2824
        %v2826 = vand.u32 %v2558, 4294901760
        %2827 = vmatpush.msra.mxu0 %v2826
        %v2828 = vand.u32 %v2556, 4294901760
        %2829 = vmatpush.msra.mxu0 %v2828
        %v2830 = vand.u32 %v2554, 4294901760
        %v2831 = vsub.f32 %v2554, %v2830
        %v2832 = vand.u32 %v2831, 4294901760
        %2833 = vmatmul.f32.gmra.mxu0 %v2832
        %v2834 = vpop.f32.mrf.mxu0
        %v2835 = vadd.f32 %v2796, %v2834
        %2836 = vdwg.mxu0
        %v2837 = vand.u32 %v2586, 4294901760
        %v2838 = vsub.f32 %v2586, %v2837
        %v2839 = vand.u32 %v2838, 4294901760
        %2840 = vmatpush.msra.mxu0 %v2839
        %v2841 = vand.u32 %v2584, 4294901760
        %v2842 = vsub.f32 %v2584, %v2841
        %v2843 = vand.u32 %v2842, 4294901760
        %2844 = vmatpush.msra.mxu0 %v2843
        %v2845 = vand.u32 %v2582, 4294901760
        %v2846 = vsub.f32 %v2582, %v2845
        %v2847 = vand.u32 %v2846, 4294901760
        %2848 = vmatpush.msra.mxu0 %v2847
        %v2849 = vand.u32 %v2580, 4294901760
        %v2850 = vsub.f32 %v2580, %v2849
        %v2851 = vand.u32 %v2850, 4294901760
        %2852 = vmatpush.msra.mxu0 %v2851
        %v2853 = vand.u32 %v2578, 4294901760
        %v2854 = vsub.f32 %v2578, %v2853
        %v2855 = vand.u32 %v2854, 4294901760
        %2856 = vmatpush.msra.mxu0 %v2855
        %v2857 = vand.u32 %v2576, 4294901760
        %v2858 = vsub.f32 %v2576, %v2857
        %v2859 = vand.u32 %v2858, 4294901760
        %2860 = vmatpush.msra.mxu0 %v2859
        %v2861 = vand.u32 %v2574, 4294901760
        %v2862 = vsub.f32 %v2574, %v2861
        %v2863 = vand.u32 %v2862, 4294901760
        %2864 = vmatpush.msra.mxu0 %v2863
        %v2865 = vand.u32 %v2572, 4294901760
        %v2866 = vsub.f32 %v2572, %v2865
        %v2867 = vand.u32 %v2866, 4294901760
        %2868 = vmatpush.msra.mxu0 %v2867
        %v2869 = vand.u32 %v2570, 4294901760
        %v2870 = vsub.f32 %v2570, %v2869
        %v2871 = vand.u32 %v2870, 4294901760
        %2872 = vmatpush.msra.mxu0 %v2871
        %v2873 = vand.u32 %v2568, 4294901760
        %v2874 = vsub.f32 %v2568, %v2873
        %v2875 = vand.u32 %v2874, 4294901760
        %2876 = vmatpush.msra.mxu0 %v2875
        %v2877 = vand.u32 %v2566, 4294901760
        %v2878 = vsub.f32 %v2566, %v2877
        %v2879 = vand.u32 %v2878, 4294901760
        %2880 = vmatpush.msra.mxu0 %v2879
        %v2881 = vand.u32 %v2564, 4294901760
        %v2882 = vsub.f32 %v2564, %v2881
        %v2883 = vand.u32 %v2882, 4294901760
        %2884 = vmatpush.msra.mxu0 %v2883
        %v2885 = vand.u32 %v2562, 4294901760
        %v2886 = vsub.f32 %v2562, %v2885
        %v2887 = vand.u32 %v2886, 4294901760
        %2888 = vmatpush.msra.mxu0 %v2887
        %v2889 = vand.u32 %v2560, 4294901760
        %v2890 = vsub.f32 %v2560, %v2889
        %v2891 = vand.u32 %v2890, 4294901760
        %2892 = vmatpush.msra.mxu0 %v2891
        %v2893 = vand.u32 %v2558, 4294901760
        %v2894 = vsub.f32 %v2558, %v2893
        %v2895 = vand.u32 %v2894, 4294901760
        %2896 = vmatpush.msra.mxu0 %v2895
        %v2897 = vand.u32 %v2556, 4294901760
        %v2898 = vsub.f32 %v2556, %v2897
        %v2899 = vand.u32 %v2898, 4294901760
        %2900 = vmatpush.msra.mxu0 %v2899
        %v2901 = vand.u32 %v2554, 4294901760
        %2902 = vmatmul.f32.gmra.mxu0 %v2901
        %v2903 = vpop.f32.mrf.mxu0
        %v2904 = vadd.f32 %v2835, %v2903
        %2905 = vdwg.mxu0
        %v2906 = vand.u32 %v2586, 4294901760
        %2907 = vmatpush.msra.mxu0 %v2906
        %v2908 = vand.u32 %v2584, 4294901760
        %2909 = vmatpush.msra.mxu0 %v2908
        %v2910 = vand.u32 %v2582, 4294901760
        %2911 = vmatpush.msra.mxu0 %v2910
        %v2912 = vand.u32 %v2580, 4294901760
        %2913 = vmatpush.msra.mxu0 %v2912
        %v2914 = vand.u32 %v2578, 4294901760
        %2915 = vmatpush.msra.mxu0 %v2914
        %v2916 = vand.u32 %v2576, 4294901760
        %2917 = vmatpush.msra.mxu0 %v2916
        %v2918 = vand.u32 %v2574, 4294901760
        %2919 = vmatpush.msra.mxu0 %v2918
        %v2920 = vand.u32 %v2572, 4294901760
        %2921 = vmatpush.msra.mxu0 %v2920
        %v2922 = vand.u32 %v2570, 4294901760
        %2923 = vmatpush.msra.mxu0 %v2922
        %v2924 = vand.u32 %v2568, 4294901760
        %2925 = vmatpush.msra.mxu0 %v2924
        %v2926 = vand.u32 %v2566, 4294901760
        %2927 = vmatpush.msra.mxu0 %v2926
        %v2928 = vand.u32 %v2564, 4294901760
        %2929 = vmatpush.msra.mxu0 %v2928
        %v2930 = vand.u32 %v2562, 4294901760
        %2931 = vmatpush.msra.mxu0 %v2930
        %v2932 = vand.u32 %v2560, 4294901760
        %2933 = vmatpush.msra.mxu0 %v2932
        %v2934 = vand.u32 %v2558, 4294901760
        %2935 = vmatpush.msra.mxu0 %v2934
        %v2936 = vand.u32 %v2556, 4294901760
        %2937 = vmatpush.msra.mxu0 %v2936
        %v2938 = vand.u32 %v2554, 4294901760
        %2939 = vmatmul.f32.gmra.mxu0 %v2938
        %v2940 = vpop.f32.mrf.mxu0
        %v2941 = vadd.f32 %v2904, %v2940
        %2942 = vdwg.mxu0
        %2943 = vmatpush.msra.mxu0 0.0
        %2944 = vmatpush.msra.mxu0 0.0
        %2945 = vmatpush.msra.mxu0 0.0
        %2946 = vmatpush.msra.mxu0 0.0
        %2947 = vmatpush.msra.mxu0 0.0
        %2948 = vmatpush.msra.mxu0 0.0
        %2949 = vmatpush.msra.mxu0 0.0
        %2950 = vmatpush.msra.mxu0 0.0
        %2951 = vmatpush.msra.mxu0 0.0
        %2952 = vmatpush.msra.mxu0 0.0
        %2953 = vmatpush.msra.mxu0 0.0
        %2954 = vmatpush.msra.mxu0 0.0
        %2955 = vmatpush.msra.mxu0 0.0
        %2956 = vmatpush.msra.mxu0 0.0
        %v2957 = vand.u32 %v2590, 4294901760
        %2958 = vmatpush.msra.mxu0 %v2957
        %v2959 = vand.u32 %v2588, 4294901760
        %2960 = vmatpush.msra.mxu0 %v2959
        %v2961 = vand.u32 %v2600, 4294901760
        %v2962 = vsub.f32 %v2600, %v2961
        %v2963 = vand.u32 %v2962, 4294901760
        %v2964 = vsub.f32 %v2962, %v2963
        %v2965 = vand.u32 %v2964, 4294901760
        %2966 = vmatmul.f32.gmra.mxu0 %v2965
        %v2967 = vpop.f32.mrf.mxu0
        %v2968 = vadd.f32 %v2941, %v2967
        %2969 = vdwg.mxu0
        %2970 = vmatpush.msra.mxu0 0.0
        %2971 = vmatpush.msra.mxu0 0.0
        %2972 = vmatpush.msra.mxu0 0.0
        %2973 = vmatpush.msra.mxu0 0.0
        %2974 = vmatpush.msra.mxu0 0.0
        %2975 = vmatpush.msra.mxu0 0.0
        %2976 = vmatpush.msra.mxu0 0.0
        %2977 = vmatpush.msra.mxu0 0.0
        %2978 = vmatpush.msra.mxu0 0.0
        %2979 = vmatpush.msra.mxu0 0.0
        %2980 = vmatpush.msra.mxu0 0.0
        %2981 = vmatpush.msra.mxu0 0.0
        %2982 = vmatpush.msra.mxu0 0.0
        %2983 = vmatpush.msra.mxu0 0.0
        %v2984 = vand.u32 %v2590, 4294901760
        %v2985 = vsub.f32 %v2590, %v2984
        %v2986 = vand.u32 %v2985, 4294901760
        %v2987 = vsub.f32 %v2985, %v2986
        %v2988 = vand.u32 %v2987, 4294901760
        %2989 = vmatpush.msra.mxu0 %v2988
        %v2990 = vand.u32 %v2588, 4294901760
        %v2991 = vsub.f32 %v2588, %v2990
        %v2992 = vand.u32 %v2991, 4294901760
        %v2993 = vsub.f32 %v2991, %v2992
        %v2994 = vand.u32 %v2993, 4294901760
        %2995 = vmatpush.msra.mxu0 %v2994
        %v2996 = vand.u32 %v2600, 4294901760
        %2997 = vmatmul.f32.gmra.mxu0 %v2996
        %v2998 = vpop.f32.mrf.mxu0
        %v2999 = vadd.f32 %v2968, %v2998
        %3000 = vdwg.mxu0
        %3001 = vmatpush.msra.mxu0 0.0
        %3002 = vmatpush.msra.mxu0 0.0
        %3003 = vmatpush.msra.mxu0 0.0
        %3004 = vmatpush.msra.mxu0 0.0
        %3005 = vmatpush.msra.mxu0 0.0
        %3006 = vmatpush.msra.mxu0 0.0
        %3007 = vmatpush.msra.mxu0 0.0
        %3008 = vmatpush.msra.mxu0 0.0
        %3009 = vmatpush.msra.mxu0 0.0
        %3010 = vmatpush.msra.mxu0 0.0
        %3011 = vmatpush.msra.mxu0 0.0
        %3012 = vmatpush.msra.mxu0 0.0
        %3013 = vmatpush.msra.mxu0 0.0
        %3014 = vmatpush.msra.mxu0 0.0
        %v3015 = vand.u32 %v2590, 4294901760
        %v3016 = vsub.f32 %v2590, %v3015
        %3017 = vmatpush.msra.mxu0 %v3016
        %v3018 = vand.u32 %v2588, 4294901760
        %v3019 = vsub.f32 %v2588, %v3018
        %3020 = vmatpush.msra.mxu0 %v3019
        %v3021 = vand.u32 %v2600, 4294901760
        %v3022 = vsub.f32 %v2600, %v3021
        %3023 = vmatmul.f32.gmra.mxu0 %v3022
        %v3024 = vpop.f32.mrf.mxu0
        %v3025 = vadd.f32 %v2999, %v3024
        %3026 = vdwg.mxu0
        %3027 = vmatpush.msra.mxu0 0.0
        %3028 = vmatpush.msra.mxu0 0.0
        %3029 = vmatpush.msra.mxu0 0.0
        %3030 = vmatpush.msra.mxu0 0.0
        %3031 = vmatpush.msra.mxu0 0.0
        %3032 = vmatpush.msra.mxu0 0.0
        %3033 = vmatpush.msra.mxu0 0.0
        %3034 = vmatpush.msra.mxu0 0.0
        %3035 = vmatpush.msra.mxu0 0.0
        %3036 = vmatpush.msra.mxu0 0.0
        %3037 = vmatpush.msra.mxu0 0.0
        %3038 = vmatpush.msra.mxu0 0.0
        %3039 = vmatpush.msra.mxu0 0.0
        %3040 = vmatpush.msra.mxu0 0.0
        %v3041 = vand.u32 %v2590, 4294901760
        %3042 = vmatpush.msra.mxu0 %v3041
        %v3043 = vand.u32 %v2588, 4294901760
        %3044 = vmatpush.msra.mxu0 %v3043
        %v3045 = vand.u32 %v2600, 4294901760
        %v3046 = vsub.f32 %v2600, %v3045
        %v3047 = vand.u32 %v3046, 4294901760
        %3048 = vmatmul.f32.gmra.mxu0 %v3047
        %v3049 = vpop.f32.mrf.mxu0
        %v3050 = vadd.f32 %v3025, %v3049
        %3051 = vdwg.mxu0
        %3052 = vmatpush.msra.mxu0 0.0
        %3053 = vmatpush.msra.mxu0 0.0
        %3054 = vmatpush.msra.mxu0 0.0
        %3055 = vmatpush.msra.mxu0 0.0
        %3056 = vmatpush.msra.mxu0 0.0
        %3057 = vmatpush.msra.mxu0 0.0
        %3058 = vmatpush.msra.mxu0 0.0
        %3059 = vmatpush.msra.mxu0 0.0
        %3060 = vmatpush.msra.mxu0 0.0
        %3061 = vmatpush.msra.mxu0 0.0
        %3062 = vmatpush.msra.mxu0 0.0
        %3063 = vmatpush.msra.mxu0 0.0
        %3064 = vmatpush.msra.mxu0 0.0
        %3065 = vmatpush.msra.mxu0 0.0
        %v3066 = vand.u32 %v2590, 4294901760
        %v3067 = vsub.f32 %v2590, %v3066
        %v3068 = vand.u32 %v3067, 4294901760
        %3069 = vmatpush.msra.mxu0 %v3068
        %v3070 = vand.u32 %v2588, 4294901760
        %v3071 = vsub.f32 %v2588, %v3070
        %v3072 = vand.u32 %v3071, 4294901760
        %3073 = vmatpush.msra.mxu0 %v3072
        %v3074 = vand.u32 %v2600, 4294901760
        %3075 = vmatmul.f32.gmra.mxu0 %v3074
        %v3076 = vpop.f32.mrf.mxu0
        %v3077 = vadd.f32 %v3050, %v3076
        %3078 = vdwg.mxu0
        %3079 = vmatpush.msra.mxu0 0.0
        %3080 = vmatpush.msra.mxu0 0.0
        %3081 = vmatpush.msra.mxu0 0.0
        %3082 = vmatpush.msra.mxu0 0.0
        %3083 = vmatpush.msra.mxu0 0.0
        %3084 = vmatpush.msra.mxu0 0.0
        %3085 = vmatpush.msra.mxu0 0.0
        %3086 = vmatpush.msra.mxu0 0.0
        %3087 = vmatpush.msra.mxu0 0.0
        %3088 = vmatpush.msra.mxu0 0.0
        %3089 = vmatpush.msra.mxu0 0.0
        %3090 = vmatpush.msra.mxu0 0.0
        %3091 = vmatpush.msra.mxu0 0.0
        %3092 = vmatpush.msra.mxu0 0.0
        %v3093 = vand.u32 %v2590, 4294901760
        %3094 = vmatpush.msra.mxu0 %v3093
        %v3095 = vand.u32 %v2588, 4294901760
        %3096 = vmatpush.msra.mxu0 %v3095
        %v3097 = vand.u32 %v2600, 4294901760
        %3098 = vmatmul.f32.gmra.mxu0 %v3097
        %v3099 = vpop.f32.mrf.mxu0
        %v3100 = vadd.f32 %v3077, %v3099
        %3101 = vdwg.mxu0
        %v3102 = vand.u32 %v2587, 4294901760
        %3103 = vmatpush.msra.mxu0 %v3102
        %v3104 = vand.u32 %v2585, 4294901760
        %3105 = vmatpush.msra.mxu0 %v3104
        %v3106 = vand.u32 %v2583, 4294901760
        %3107 = vmatpush.msra.mxu0 %v3106
        %v3108 = vand.u32 %v2581, 4294901760
        %3109 = vmatpush.msra.mxu0 %v3108
        %v3110 = vand.u32 %v2579, 4294901760
        %3111 = vmatpush.msra.mxu0 %v3110
        %v3112 = vand.u32 %v2577, 4294901760
        %3113 = vmatpush.msra.mxu0 %v3112
        %v3114 = vand.u32 %v2575, 4294901760
        %3115 = vmatpush.msra.mxu0 %v3114
        %v3116 = vand.u32 %v2573, 4294901760
        %3117 = vmatpush.msra.mxu0 %v3116
        %v3118 = vand.u32 %v2571, 4294901760
        %3119 = vmatpush.msra.mxu0 %v3118
        %v3120 = vand.u32 %v2569, 4294901760
        %3121 = vmatpush.msra.mxu0 %v3120
        %v3122 = vand.u32 %v2567, 4294901760
        %3123 = vmatpush.msra.mxu0 %v3122
        %v3124 = vand.u32 %v2565, 4294901760
        %3125 = vmatpush.msra.mxu0 %v3124
        %v3126 = vand.u32 %v2563, 4294901760
        %3127 = vmatpush.msra.mxu0 %v3126
        %v3128 = vand.u32 %v2561, 4294901760
        %3129 = vmatpush.msra.mxu0 %v3128
        %v3130 = vand.u32 %v2559, 4294901760
        %3131 = vmatpush.msra.mxu0 %v3130
        %v3132 = vand.u32 %v2557, 4294901760
        %3133 = vmatpush.msra.mxu0 %v3132
        %v3134 = vand.u32 %v2554, 4294901760
        %v3135 = vsub.f32 %v2554, %v3134
        %v3136 = vand.u32 %v3135, 4294901760
        %v3137 = vsub.f32 %v3135, %v3136
        %v3138 = vand.u32 %v3137, 4294901760
        %3139 = vmatmul.f32.gmra.mxu0 %v3138
        %v3140 = vpop.f32.mrf.mxu0
        %v3141 = vadd.f32 %v2597, %v3140
        %3142 = vdwg.mxu0
        %v3143 = vand.u32 %v2587, 4294901760
        %v3144 = vsub.f32 %v2587, %v3143
        %v3145 = vand.u32 %v3144, 4294901760
        %v3146 = vsub.f32 %v3144, %v3145
        %v3147 = vand.u32 %v3146, 4294901760
        %3148 = vmatpush.msra.mxu0 %v3147
        %v3149 = vand.u32 %v2585, 4294901760
        %v3150 = vsub.f32 %v2585, %v3149
        %v3151 = vand.u32 %v3150, 4294901760
        %v3152 = vsub.f32 %v3150, %v3151
        %v3153 = vand.u32 %v3152, 4294901760
        %3154 = vmatpush.msra.mxu0 %v3153
        %v3155 = vand.u32 %v2583, 4294901760
        %v3156 = vsub.f32 %v2583, %v3155
        %v3157 = vand.u32 %v3156, 4294901760
        %v3158 = vsub.f32 %v3156, %v3157
        %v3159 = vand.u32 %v3158, 4294901760
        %3160 = vmatpush.msra.mxu0 %v3159
        %v3161 = vand.u32 %v2581, 4294901760
        %v3162 = vsub.f32 %v2581, %v3161
        %v3163 = vand.u32 %v3162, 4294901760
        %v3164 = vsub.f32 %v3162, %v3163
        %v3165 = vand.u32 %v3164, 4294901760
        %3166 = vmatpush.msra.mxu0 %v3165
        %v3167 = vand.u32 %v2579, 4294901760
        %v3168 = vsub.f32 %v2579, %v3167
        %v3169 = vand.u32 %v3168, 4294901760
        %v3170 = vsub.f32 %v3168, %v3169
        %v3171 = vand.u32 %v3170, 4294901760
        %3172 = vmatpush.msra.mxu0 %v3171
        %v3173 = vand.u32 %v2577, 4294901760
        %v3174 = vsub.f32 %v2577, %v3173
        %v3175 = vand.u32 %v3174, 4294901760
        %v3176 = vsub.f32 %v3174, %v3175
        %v3177 = vand.u32 %v3176, 4294901760
        %3178 = vmatpush.msra.mxu0 %v3177
        %v3179 = vand.u32 %v2575, 4294901760
        %v3180 = vsub.f32 %v2575, %v3179
        %v3181 = vand.u32 %v3180, 4294901760
        %v3182 = vsub.f32 %v3180, %v3181
        %v3183 = vand.u32 %v3182, 4294901760
        %3184 = vmatpush.msra.mxu0 %v3183
        %v3185 = vand.u32 %v2573, 4294901760
        %v3186 = vsub.f32 %v2573, %v3185
        %v3187 = vand.u32 %v3186, 4294901760
        %v3188 = vsub.f32 %v3186, %v3187
        %v3189 = vand.u32 %v3188, 4294901760
        %3190 = vmatpush.msra.mxu0 %v3189
        %v3191 = vand.u32 %v2571, 4294901760
        %v3192 = vsub.f32 %v2571, %v3191
        %v3193 = vand.u32 %v3192, 4294901760
        %v3194 = vsub.f32 %v3192, %v3193
        %v3195 = vand.u32 %v3194, 4294901760
        %3196 = vmatpush.msra.mxu0 %v3195
        %v3197 = vand.u32 %v2569, 4294901760
        %v3198 = vsub.f32 %v2569, %v3197
        %v3199 = vand.u32 %v3198, 4294901760
        %v3200 = vsub.f32 %v3198, %v3199
        %v3201 = vand.u32 %v3200, 4294901760
        %3202 = vmatpush.msra.mxu0 %v3201
        %v3203 = vand.u32 %v2567, 4294901760
        %v3204 = vsub.f32 %v2567, %v3203
        %v3205 = vand.u32 %v3204, 4294901760
        %v3206 = vsub.f32 %v3204, %v3205
        %v3207 = vand.u32 %v3206, 4294901760
        %3208 = vmatpush.msra.mxu0 %v3207
        %v3209 = vand.u32 %v2565, 4294901760
        %v3210 = vsub.f32 %v2565, %v3209
        %v3211 = vand.u32 %v3210, 4294901760
        %v3212 = vsub.f32 %v3210, %v3211
        %v3213 = vand.u32 %v3212, 4294901760
        %3214 = vmatpush.msra.mxu0 %v3213
        %v3215 = vand.u32 %v2563, 4294901760
        %v3216 = vsub.f32 %v2563, %v3215
        %v3217 = vand.u32 %v3216, 4294901760
        %v3218 = vsub.f32 %v3216, %v3217
        %v3219 = vand.u32 %v3218, 4294901760
        %3220 = vmatpush.msra.mxu0 %v3219
        %v3221 = vand.u32 %v2561, 4294901760
        %v3222 = vsub.f32 %v2561, %v3221
        %v3223 = vand.u32 %v3222, 4294901760
        %v3224 = vsub.f32 %v3222, %v3223
        %v3225 = vand.u32 %v3224, 4294901760
        %3226 = vmatpush.msra.mxu0 %v3225
        %v3227 = vand.u32 %v2559, 4294901760
        %v3228 = vsub.f32 %v2559, %v3227
        %v3229 = vand.u32 %v3228, 4294901760
        %v3230 = vsub.f32 %v3228, %v3229
        %v3231 = vand.u32 %v3230, 4294901760
        %3232 = vmatpush.msra.mxu0 %v3231
        %v3233 = vand.u32 %v2557, 4294901760
        %v3234 = vsub.f32 %v2557, %v3233
        %v3235 = vand.u32 %v3234, 4294901760
        %v3236 = vsub.f32 %v3234, %v3235
        %v3237 = vand.u32 %v3236, 4294901760
        %3238 = vmatpush.msra.mxu0 %v3237
        %v3239 = vand.u32 %v2554, 4294901760
        %3240 = vmatmul.f32.gmra.mxu0 %v3239
        %v3241 = vpop.f32.mrf.mxu0
        %v3242 = vadd.f32 %v3141, %v3241
        %3243 = vdwg.mxu0
        %v3244 = vand.u32 %v2587, 4294901760
        %v3245 = vsub.f32 %v2587, %v3244
        %3246 = vmatpush.msra.mxu0 %v3245
        %v3247 = vand.u32 %v2585, 4294901760
        %v3248 = vsub.f32 %v2585, %v3247
        %3249 = vmatpush.msra.mxu0 %v3248
        %v3250 = vand.u32 %v2583, 4294901760
        %v3251 = vsub.f32 %v2583, %v3250
        %3252 = vmatpush.msra.mxu0 %v3251
        %v3253 = vand.u32 %v2581, 4294901760
        %v3254 = vsub.f32 %v2581, %v3253
        %3255 = vmatpush.msra.mxu0 %v3254
        %v3256 = vand.u32 %v2579, 4294901760
        %v3257 = vsub.f32 %v2579, %v3256
        %3258 = vmatpush.msra.mxu0 %v3257
        %v3259 = vand.u32 %v2577, 4294901760
        %v3260 = vsub.f32 %v2577, %v3259
        %3261 = vmatpush.msra.mxu0 %v3260
        %v3262 = vand.u32 %v2575, 4294901760
        %v3263 = vsub.f32 %v2575, %v3262
        %3264 = vmatpush.msra.mxu0 %v3263
        %v3265 = vand.u32 %v2573, 4294901760
        %v3266 = vsub.f32 %v2573, %v3265
        %3267 = vmatpush.msra.mxu0 %v3266
        %v3268 = vand.u32 %v2571, 4294901760
        %v3269 = vsub.f32 %v2571, %v3268
        %3270 = vmatpush.msra.mxu0 %v3269
        %v3271 = vand.u32 %v2569, 4294901760
        %v3272 = vsub.f32 %v2569, %v3271
        %3273 = vmatpush.msra.mxu0 %v3272
        %v3274 = vand.u32 %v2567, 4294901760
        %v3275 = vsub.f32 %v2567, %v3274
        %3276 = vmatpush.msra.mxu0 %v3275
        %v3277 = vand.u32 %v2565, 4294901760
        %v3278 = vsub.f32 %v2565, %v3277
        %3279 = vmatpush.msra.mxu0 %v3278
        %v3280 = vand.u32 %v2563, 4294901760
        %v3281 = vsub.f32 %v2563, %v3280
        %3282 = vmatpush.msra.mxu0 %v3281
        %v3283 = vand.u32 %v2561, 4294901760
        %v3284 = vsub.f32 %v2561, %v3283
        %3285 = vmatpush.msra.mxu0 %v3284
        %v3286 = vand.u32 %v2559, 4294901760
        %v3287 = vsub.f32 %v2559, %v3286
        %3288 = vmatpush.msra.mxu0 %v3287
        %v3289 = vand.u32 %v2557, 4294901760
        %v3290 = vsub.f32 %v2557, %v3289
        %3291 = vmatpush.msra.mxu0 %v3290
        %v3292 = vand.u32 %v2554, 4294901760
        %v3293 = vsub.f32 %v2554, %v3292
        %3294 = vmatmul.f32.gmra.mxu0 %v3293
        %v3295 = vpop.f32.mrf.mxu0
        %v3296 = vadd.f32 %v3242, %v3295
        %3297 = vdwg.mxu0
        %v3298 = vand.u32 %v2587, 4294901760
        %3299 = vmatpush.msra.mxu0 %v3298
        %v3300 = vand.u32 %v2585, 4294901760
        %3301 = vmatpush.msra.mxu0 %v3300
        %v3302 = vand.u32 %v2583, 4294901760
        %3303 = vmatpush.msra.mxu0 %v3302
        %v3304 = vand.u32 %v2581, 4294901760
        %3305 = vmatpush.msra.mxu0 %v3304
        %v3306 = vand.u32 %v2579, 4294901760
        %3307 = vmatpush.msra.mxu0 %v3306
        %v3308 = vand.u32 %v2577, 4294901760
        %3309 = vmatpush.msra.mxu0 %v3308
        %v3310 = vand.u32 %v2575, 4294901760
        %3311 = vmatpush.msra.mxu0 %v3310
        %v3312 = vand.u32 %v2573, 4294901760
        %3313 = vmatpush.msra.mxu0 %v3312
        %v3314 = vand.u32 %v2571, 4294901760
        %3315 = vmatpush.msra.mxu0 %v3314
        %v3316 = vand.u32 %v2569, 4294901760
        %3317 = vmatpush.msra.mxu0 %v3316
        %v3318 = vand.u32 %v2567, 4294901760
        %3319 = vmatpush.msra.mxu0 %v3318
        %v3320 = vand.u32 %v2565, 4294901760
        %3321 = vmatpush.msra.mxu0 %v3320
        %v3322 = vand.u32 %v2563, 4294901760
        %3323 = vmatpush.msra.mxu0 %v3322
        %v3324 = vand.u32 %v2561, 4294901760
        %3325 = vmatpush.msra.mxu0 %v3324
        %v3326 = vand.u32 %v2559, 4294901760
        %3327 = vmatpush.msra.mxu0 %v3326
        %v3328 = vand.u32 %v2557, 4294901760
        %3329 = vmatpush.msra.mxu0 %v3328
        %v3330 = vand.u32 %v2554, 4294901760
        %v3331 = vsub.f32 %v2554, %v3330
        %v3332 = vand.u32 %v3331, 4294901760
        %3333 = vmatmul.f32.gmra.mxu0 %v3332
        %v3334 = vpop.f32.mrf.mxu0
        %v3335 = vadd.f32 %v3296, %v3334
        %3336 = vdwg.mxu0
        %v3337 = vand.u32 %v2587, 4294901760
        %v3338 = vsub.f32 %v2587, %v3337
        %v3339 = vand.u32 %v3338, 4294901760
        %3340 = vmatpush.msra.mxu0 %v3339
        %v3341 = vand.u32 %v2585, 4294901760
        %v3342 = vsub.f32 %v2585, %v3341
        %v3343 = vand.u32 %v3342, 4294901760
        %3344 = vmatpush.msra.mxu0 %v3343
        %v3345 = vand.u32 %v2583, 4294901760
        %v3346 = vsub.f32 %v2583, %v3345
        %v3347 = vand.u32 %v3346, 4294901760
        %3348 = vmatpush.msra.mxu0 %v3347
        %v3349 = vand.u32 %v2581, 4294901760
        %v3350 = vsub.f32 %v2581, %v3349
        %v3351 = vand.u32 %v3350, 4294901760
        %3352 = vmatpush.msra.mxu0 %v3351
        %v3353 = vand.u32 %v2579, 4294901760
        %v3354 = vsub.f32 %v2579, %v3353
        %v3355 = vand.u32 %v3354, 4294901760
        %3356 = vmatpush.msra.mxu0 %v3355
        %v3357 = vand.u32 %v2577, 4294901760
        %v3358 = vsub.f32 %v2577, %v3357
        %v3359 = vand.u32 %v3358, 4294901760
        %3360 = vmatpush.msra.mxu0 %v3359
        %v3361 = vand.u32 %v2575, 4294901760
        %v3362 = vsub.f32 %v2575, %v3361
        %v3363 = vand.u32 %v3362, 4294901760
        %3364 = vmatpush.msra.mxu0 %v3363
        %v3365 = vand.u32 %v2573, 4294901760
        %v3366 = vsub.f32 %v2573, %v3365
        %v3367 = vand.u32 %v3366, 4294901760
        %3368 = vmatpush.msra.mxu0 %v3367
        %v3369 = vand.u32 %v2571, 4294901760
        %v3370 = vsub.f32 %v2571, %v3369
        %v3371 = vand.u32 %v3370, 4294901760
        %3372 = vmatpush.msra.mxu0 %v3371
        %v3373 = vand.u32 %v2569, 4294901760
        %v3374 = vsub.f32 %v2569, %v3373
        %v3375 = vand.u32 %v3374, 4294901760
        %3376 = vmatpush.msra.mxu0 %v3375
        %v3377 = vand.u32 %v2567, 4294901760
        %v3378 = vsub.f32 %v2567, %v3377
        %v3379 = vand.u32 %v3378, 4294901760
        %3380 = vmatpush.msra.mxu0 %v3379
        %v3381 = vand.u32 %v2565, 4294901760
        %v3382 = vsub.f32 %v2565, %v3381
        %v3383 = vand.u32 %v3382, 4294901760
        %3384 = vmatpush.msra.mxu0 %v3383
        %v3385 = vand.u32 %v2563, 4294901760
        %v3386 = vsub.f32 %v2563, %v3385
        %v3387 = vand.u32 %v3386, 4294901760
        %3388 = vmatpush.msra.mxu0 %v3387
        %v3389 = vand.u32 %v2561, 4294901760
        %v3390 = vsub.f32 %v2561, %v3389
        %v3391 = vand.u32 %v3390, 4294901760
        %3392 = vmatpush.msra.mxu0 %v3391
        %v3393 = vand.u32 %v2559, 4294901760
        %v3394 = vsub.f32 %v2559, %v3393
        %v3395 = vand.u32 %v3394, 4294901760
        %3396 = vmatpush.msra.mxu0 %v3395
        %v3397 = vand.u32 %v2557, 4294901760
        %v3398 = vsub.f32 %v2557, %v3397
        %v3399 = vand.u32 %v3398, 4294901760
        %3400 = vmatpush.msra.mxu0 %v3399
        %v3401 = vand.u32 %v2554, 4294901760
        %3402 = vmatmul.f32.gmra.mxu0 %v3401
        %v3403 = vpop.f32.mrf.mxu0
        %v3404 = vadd.f32 %v3335, %v3403
        %3405 = vdwg.mxu0
        %v3406 = vand.u32 %v2587, 4294901760
        %3407 = vmatpush.msra.mxu0 %v3406
        %v3408 = vand.u32 %v2585, 4294901760
        %3409 = vmatpush.msra.mxu0 %v3408
        %v3410 = vand.u32 %v2583, 4294901760
        %3411 = vmatpush.msra.mxu0 %v3410
        %v3412 = vand.u32 %v2581, 4294901760
        %3413 = vmatpush.msra.mxu0 %v3412
        %v3414 = vand.u32 %v2579, 4294901760
        %3415 = vmatpush.msra.mxu0 %v3414
        %v3416 = vand.u32 %v2577, 4294901760
        %3417 = vmatpush.msra.mxu0 %v3416
        %v3418 = vand.u32 %v2575, 4294901760
        %3419 = vmatpush.msra.mxu0 %v3418
        %v3420 = vand.u32 %v2573, 4294901760
        %3421 = vmatpush.msra.mxu0 %v3420
        %v3422 = vand.u32 %v2571, 4294901760
        %3423 = vmatpush.msra.mxu0 %v3422
        %v3424 = vand.u32 %v2569, 4294901760
        %3425 = vmatpush.msra.mxu0 %v3424
        %v3426 = vand.u32 %v2567, 4294901760
        %3427 = vmatpush.msra.mxu0 %v3426
        %v3428 = vand.u32 %v2565, 4294901760
        %3429 = vmatpush.msra.mxu0 %v3428
        %v3430 = vand.u32 %v2563, 4294901760
        %3431 = vmatpush.msra.mxu0 %v3430
        %v3432 = vand.u32 %v2561, 4294901760
        %3433 = vmatpush.msra.mxu0 %v3432
        %v3434 = vand.u32 %v2559, 4294901760
        %3435 = vmatpush.msra.mxu0 %v3434
        %v3436 = vand.u32 %v2557, 4294901760
        %3437 = vmatpush.msra.mxu0 %v3436
        %v3438 = vand.u32 %v2554, 4294901760
        %3439 = vmatmul.f32.gmra.mxu0 %v3438
        %v3440 = vpop.f32.mrf.mxu0
        %v3441 = vadd.f32 %v3404, %v3440
        %3442 = vdwg.mxu0
        %3443 = vmatpush.msra.mxu0 0.0
        %3444 = vmatpush.msra.mxu0 0.0
        %3445 = vmatpush.msra.mxu0 0.0
        %3446 = vmatpush.msra.mxu0 0.0
        %3447 = vmatpush.msra.mxu0 0.0
        %3448 = vmatpush.msra.mxu0 0.0
        %3449 = vmatpush.msra.mxu0 0.0
        %3450 = vmatpush.msra.mxu0 0.0
        %3451 = vmatpush.msra.mxu0 0.0
        %3452 = vmatpush.msra.mxu0 0.0
        %3453 = vmatpush.msra.mxu0 0.0
        %3454 = vmatpush.msra.mxu0 0.0
        %3455 = vmatpush.msra.mxu0 0.0
        %3456 = vmatpush.msra.mxu0 0.0
        %v3457 = vand.u32 %v2591, 4294901760
        %3458 = vmatpush.msra.mxu0 %v3457
        %v3459 = vand.u32 %v2589, 4294901760
        %3460 = vmatpush.msra.mxu0 %v3459
        %v3461 = vand.u32 %v2600, 4294901760
        %v3462 = vsub.f32 %v2600, %v3461
        %v3463 = vand.u32 %v3462, 4294901760
        %v3464 = vsub.f32 %v3462, %v3463
        %v3465 = vand.u32 %v3464, 4294901760
        %3466 = vmatmul.f32.gmra.mxu0 %v3465
        %v3467 = vpop.f32.mrf.mxu0
        %v3468 = vadd.f32 %v3441, %v3467
        %3469 = vdwg.mxu0
        %3470 = vmatpush.msra.mxu0 0.0
        %3471 = vmatpush.msra.mxu0 0.0
        %3472 = vmatpush.msra.mxu0 0.0
        %3473 = vmatpush.msra.mxu0 0.0
        %3474 = vmatpush.msra.mxu0 0.0
        %3475 = vmatpush.msra.mxu0 0.0
        %3476 = vmatpush.msra.mxu0 0.0
        %3477 = vmatpush.msra.mxu0 0.0
        %3478 = vmatpush.msra.mxu0 0.0
        %3479 = vmatpush.msra.mxu0 0.0
        %3480 = vmatpush.msra.mxu0 0.0
        %3481 = vmatpush.msra.mxu0 0.0
        %3482 = vmatpush.msra.mxu0 0.0
        %3483 = vmatpush.msra.mxu0 0.0
        %v3484 = vand.u32 %v2591, 4294901760
        %v3485 = vsub.f32 %v2591, %v3484
        %v3486 = vand.u32 %v3485, 4294901760
        %v3487 = vsub.f32 %v3485, %v3486
        %v3488 = vand.u32 %v3487, 4294901760
        %3489 = vmatpush.msra.mxu0 %v3488
        %v3490 = vand.u32 %v2589, 4294901760
        %v3491 = vsub.f32 %v2589, %v3490
        %v3492 = vand.u32 %v3491, 4294901760
        %v3493 = vsub.f32 %v3491, %v3492
        %v3494 = vand.u32 %v3493, 4294901760
        %3495 = vmatpush.msra.mxu0 %v3494
        %v3496 = vand.u32 %v2600, 4294901760
        %3497 = vmatmul.f32.gmra.mxu0 %v3496
        %v3498 = vpop.f32.mrf.mxu0
        %v3499 = vadd.f32 %v3468, %v3498
        %3500 = vdwg.mxu0
        %3501 = vmatpush.msra.mxu0 0.0
        %3502 = vmatpush.msra.mxu0 0.0
        %3503 = vmatpush.msra.mxu0 0.0
        %3504 = vmatpush.msra.mxu0 0.0
        %3505 = vmatpush.msra.mxu0 0.0
        %3506 = vmatpush.msra.mxu0 0.0
        %3507 = vmatpush.msra.mxu0 0.0
        %3508 = vmatpush.msra.mxu0 0.0
        %3509 = vmatpush.msra.mxu0 0.0
        %3510 = vmatpush.msra.mxu0 0.0
        %3511 = vmatpush.msra.mxu0 0.0
        %3512 = vmatpush.msra.mxu0 0.0
        %3513 = vmatpush.msra.mxu0 0.0
        %3514 = vmatpush.msra.mxu0 0.0
        %v3515 = vand.u32 %v2591, 4294901760
        %v3516 = vsub.f32 %v2591, %v3515
        %3517 = vmatpush.msra.mxu0 %v3516
        %v3518 = vand.u32 %v2589, 4294901760
        %v3519 = vsub.f32 %v2589, %v3518
        %3520 = vmatpush.msra.mxu0 %v3519
        %v3521 = vand.u32 %v2600, 4294901760
        %v3522 = vsub.f32 %v2600, %v3521
        %3523 = vmatmul.f32.gmra.mxu0 %v3522
        %v3524 = vpop.f32.mrf.mxu0
        %v3525 = vadd.f32 %v3499, %v3524
        %3526 = vdwg.mxu0
        %3527 = vmatpush.msra.mxu0 0.0
        %3528 = vmatpush.msra.mxu0 0.0
        %3529 = vmatpush.msra.mxu0 0.0
        %3530 = vmatpush.msra.mxu0 0.0
        %3531 = vmatpush.msra.mxu0 0.0
        %3532 = vmatpush.msra.mxu0 0.0
        %3533 = vmatpush.msra.mxu0 0.0
        %3534 = vmatpush.msra.mxu0 0.0
        %3535 = vmatpush.msra.mxu0 0.0
        %3536 = vmatpush.msra.mxu0 0.0
        %3537 = vmatpush.msra.mxu0 0.0
        %3538 = vmatpush.msra.mxu0 0.0
        %3539 = vmatpush.msra.mxu0 0.0
        %3540 = vmatpush.msra.mxu0 0.0
        %v3541 = vand.u32 %v2591, 4294901760
        %3542 = vmatpush.msra.mxu0 %v3541
        %v3543 = vand.u32 %v2589, 4294901760
        %3544 = vmatpush.msra.mxu0 %v3543
        %v3545 = vand.u32 %v2600, 4294901760
        %v3546 = vsub.f32 %v2600, %v3545
        %v3547 = vand.u32 %v3546, 4294901760
        %3548 = vmatmul.f32.gmra.mxu0 %v3547
        %v3549 = vpop.f32.mrf.mxu0
        %v3550 = vadd.f32 %v3525, %v3549
        %3551 = vdwg.mxu0
        %3552 = vmatpush.msra.mxu0 0.0
        %3553 = vmatpush.msra.mxu0 0.0
        %3554 = vmatpush.msra.mxu0 0.0
        %3555 = vmatpush.msra.mxu0 0.0
        %3556 = vmatpush.msra.mxu0 0.0
        %3557 = vmatpush.msra.mxu0 0.0
        %3558 = vmatpush.msra.mxu0 0.0
        %3559 = vmatpush.msra.mxu0 0.0
        %3560 = vmatpush.msra.mxu0 0.0
        %3561 = vmatpush.msra.mxu0 0.0
        %3562 = vmatpush.msra.mxu0 0.0
        %3563 = vmatpush.msra.mxu0 0.0
        %3564 = vmatpush.msra.mxu0 0.0
        %3565 = vmatpush.msra.mxu0 0.0
        %v3566 = vand.u32 %v2591, 4294901760
        %v3567 = vsub.f32 %v2591, %v3566
        %v3568 = vand.u32 %v3567, 4294901760
        %3569 = vmatpush.msra.mxu0 %v3568
        %v3570 = vand.u32 %v2589, 4294901760
        %v3571 = vsub.f32 %v2589, %v3570
        %v3572 = vand.u32 %v3571, 4294901760
        %3573 = vmatpush.msra.mxu0 %v3572
        %v3574 = vand.u32 %v2600, 4294901760
        %3575 = vmatmul.f32.gmra.mxu0 %v3574
        %v3576 = vpop.f32.mrf.mxu0
        %v3577 = vadd.f32 %v3550, %v3576
        %3578 = vdwg.mxu0
        %3579 = vmatpush.msra.mxu0 0.0
        %3580 = vmatpush.msra.mxu0 0.0
        %3581 = vmatpush.msra.mxu0 0.0
        %3582 = vmatpush.msra.mxu0 0.0
        %3583 = vmatpush.msra.mxu0 0.0
        %3584 = vmatpush.msra.mxu0 0.0
        %3585 = vmatpush.msra.mxu0 0.0
        %3586 = vmatpush.msra.mxu0 0.0
        %3587 = vmatpush.msra.mxu0 0.0
        %3588 = vmatpush.msra.mxu0 0.0
        %3589 = vmatpush.msra.mxu0 0.0
        %3590 = vmatpush.msra.mxu0 0.0
        %3591 = vmatpush.msra.mxu0 0.0
        %3592 = vmatpush.msra.mxu0 0.0
        %v3593 = vand.u32 %v2591, 4294901760
        %3594 = vmatpush.msra.mxu0 %v3593
        %v3595 = vand.u32 %v2589, 4294901760
        %3596 = vmatpush.msra.mxu0 %v3595
        %v3597 = vand.u32 %v2600, 4294901760
        %3598 = vmatmul.f32.gmra.mxu0 %v3597
        %v3599 = vpop.f32.mrf.mxu0
        %v3600 = vadd.f32 %v3577, %v3599
        %3601 = vdwg.mxu0
        %vm3602 = vcmp.ge.f32.partialorder %v3100, 0.0
        %vm3603 = vcmp.ge.f32.partialorder %v3600, 0.0
        %v3604 = vmul.f32 %v3100, 0.01
        %v3605 = vmul.f32 %v3600, 0.01
        %v3606 = vsel %vm3602, %v3100, %v3604
        %v3607 = vsel %vm3603, %v3600, %v3605
        %3608 = vrot.lane.b32.xlu0 %v3606, 17
        %v3609 = vpop.permute.xlu0 %3608
        %3610 = vrot.lane.b32.xlu0 %v3607, 17
        %v3611 = vpop.permute.xlu0 %3610
        %v3612 = vsel %vm238, %v3609, %v3611
        %v3613 = vsel %vm238, %v3611, %v3609
        %v3614 = vld [vmem:[#allocation5] sm:$0xff]
        %v3615 = vld [vmem:[#allocation5 + $0x8] sm:$0xff]
        %v3616 = vmul.f32 %v3613, %v3614
        %v3617 = vmul.f32 %v3612, %v3615
        %3618 = vst [vmem:[#allocation2] sm:$0xff] %v3616
        %3619 = vst [vmem:[#allocation2 + $0x8] sm:$0xff] %v3617
        %3620 = vrot.lane.b32.xlu0 %v3606, 16
        %v3621 = vpop.permute.xlu0 %3620
        %3622 = vrot.lane.b32.xlu0 %v3607, 16
        %v3623 = vpop.permute.xlu0 %3622
        %v3624 = vsel %vm251, %v3621, %v3623
        %v3625 = vsel %vm251, %v3623, %v3621
        %v3626 = vld [vmem:[%s254] sm:$0xff]
        %v3627 = vld [vmem:[%s254 + $0x8] sm:$0xff]
        %v3628 = vmul.f32 %v3625, %v3626
        %v3629 = vmul.f32 %v3624, %v3627
        %3630 = vst [vmem:[#allocation2 + $0x10] sm:$0xff] %v3628
        %3631 = vst [vmem:[#allocation2 + $0x18] sm:$0xff] %v3629
        %3632 = vrot.lane.b32.xlu0 %v3606, 15
        %v3633 = vpop.permute.xlu0 %3632
        %3634 = vrot.lane.b32.xlu0 %v3607, 15
        %v3635 = vpop.permute.xlu0 %3634
        %v3636 = vsel %vm265, %v3633, %v3635
        %v3637 = vsel %vm265, %v3635, %v3633
        %v3638 = vld [vmem:[%s268] sm:$0xff]
        %v3639 = vld [vmem:[%s268 + $0x8] sm:$0xff]
        %v3640 = vmul.f32 %v3637, %v3638
        %v3641 = vmul.f32 %v3636, %v3639
        %3642 = vst [vmem:[#allocation2 + $0x20] sm:$0xff] %v3640
        %3643 = vst [vmem:[#allocation2 + $0x28] sm:$0xff] %v3641
        %3644 = vrot.lane.b32.xlu0 %v3606, 1
        %v3645 = vpop.permute.xlu0 %3644
        %3646 = vrot.lane.b32.xlu0 %v3607, 1
        %v3647 = vpop.permute.xlu0 %3646
        %v3648 = vsel %vm279, %v3645, %v3647
        %v3649 = vsel %vm279, %v3647, %v3645
        %v3650 = vld [vmem:[%s282] sm:$0xff]
        %v3651 = vld [vmem:[%s282 + $0x8] sm:$0xff]
        %v3652 = vmul.f32 %v3649, %v3650
        %v3653 = vmul.f32 %v3648, %v3651
        %3654 = vst [vmem:[#allocation2 + $0x30] sm:$0xff] %v3652
        %3655 = vst [vmem:[#allocation2 + $0x38] sm:$0xff] %v3653
        %3656 = vst [vmem:[#allocation2 + $0x40] sm:$0xff] %v3606
        %3657 = vst [vmem:[#allocation2 + $0x48] sm:$0xff] %v3607
        %3658 = vrot.lane.b32.xlu0 %v3606, 127
        %v3659 = vpop.permute.xlu0 %3658
        %3660 = vrot.lane.b32.xlu0 %v3607, 127
        %v3661 = vpop.permute.xlu0 %3660
        %v3662 = vsel %vm295, %v3659, %v3661
        %v3663 = vsel %vm295, %v3661, %v3659
        %v3664 = vld [vmem:[%s298] sm:$0xff]
        %v3665 = vld [vmem:[%s298 + $0x8] sm:$0xff]
        %v3666 = vmul.f32 %v3662, %v3664
        %v3667 = vmul.f32 %v3663, %v3665
        %3668 = vst [vmem:[#allocation2 + $0x50] sm:$0xff] %v3666
        %3669 = vst [vmem:[#allocation2 + $0x58] sm:$0xff] %v3667
        %3670 = vrot.lane.b32.xlu0 %v3606, 113
        %v3671 = vpop.permute.xlu0 %3670
        %3672 = vrot.lane.b32.xlu0 %v3607, 113
        %v3673 = vpop.permute.xlu0 %3672
        %v3674 = vsel %vm309, %v3671, %v3673
        %v3675 = vsel %vm309, %v3673, %v3671
        %v3676 = vld [vmem:[%s312] sm:$0xff]
        %v3677 = vld [vmem:[%s312 + $0x8] sm:$0xff]
        %v3678 = vmul.f32 %v3674, %v3676
        %v3679 = vmul.f32 %v3675, %v3677
        %3680 = vst [vmem:[#allocation2 + $0x60] sm:$0xff] %v3678
        %3681 = vst [vmem:[#allocation2 + $0x68] sm:$0xff] %v3679
        %3682 = vrot.lane.b32.xlu0 %v3606, 112
        %v3683 = vpop.permute.xlu0 %3682
        %3684 = vrot.lane.b32.xlu0 %v3607, 112
        %v3685 = vpop.permute.xlu0 %3684
        %v3686 = vsel %vm323, %v3683, %v3685
        %v3687 = vsel %vm323, %v3685, %v3683
        %v3688 = vld [vmem:[%s326] sm:$0xff]
        %v3689 = vld [vmem:[%s326 + $0x8] sm:$0xff]
        %v3690 = vmul.f32 %v3686, %v3688
        %v3691 = vmul.f32 %v3687, %v3689
        %3692 = vst [vmem:[#allocation2 + $0x70] sm:$0xff] %v3690
        %3693 = vst [vmem:[#allocation2 + $0x78] sm:$0xff] %v3691
        %3694 = vrot.lane.b32.xlu0 %v3606, 111
        %v3695 = vpop.permute.xlu0 %3694
        %3696 = vrot.lane.b32.xlu0 %v3607, 111
        %v3697 = vpop.permute.xlu0 %3696
        %v3698 = vsel %vm337, %v3695, %v3697
        %v3699 = vsel %vm337, %v3697, %v3695
        %v3700 = vld [vmem:[%s340] sm:$0xff]
        %v3701 = vld [vmem:[%s340 + $0x8] sm:$0xff]
        %v3702 = vmul.f32 %v3698, %v3700
        %v3703 = vmul.f32 %v3699, %v3701
        %3704 = vst [vmem:[#allocation2 + $0x80] sm:$0xff] %v3702
        %3705 = vst [vmem:[#allocation2 + $0x88] sm:$0xff] %v3703
        %s3706 = scalar_lea.vmem [#allocation3], 96
        %v3707 = vld [vmem:[%s3706] sm:$0xff]
        %v3708 = vld [vmem:[#allocation2] sm:$0xff]
        %v3709 = vld [vmem:[#allocation2 + $0x8] sm:$0xff]
        %v3710 = vld [vmem:[#allocation2 + $0x10] sm:$0xff]
        %v3711 = vld [vmem:[#allocation2 + $0x18] sm:$0xff]
        %v3712 = vld [vmem:[#allocation2 + $0x20] sm:$0xff]
        %v3713 = vld [vmem:[#allocation2 + $0x28] sm:$0xff]
        %v3714 = vld [vmem:[#allocation2 + $0x30] sm:$0xff]
        %v3715 = vld [vmem:[#allocation2 + $0x38] sm:$0xff]
        %v3716 = vld [vmem:[#allocation2 + $0x40] sm:$0xff]
        %v3717 = vld [vmem:[#allocation2 + $0x48] sm:$0xff]
        %v3718 = vld [vmem:[#allocation2 + $0x50] sm:$0xff]
        %v3719 = vld [vmem:[#allocation2 + $0x58] sm:$0xff]
        %v3720 = vld [vmem:[#allocation2 + $0x60] sm:$0xff]
        %v3721 = vld [vmem:[#allocation2 + $0x68] sm:$0xff]
        %v3722 = vld [vmem:[#allocation2 + $0x70] sm:$0xff]
        %v3723 = vld [vmem:[#allocation2 + $0x78] sm:$0xff]
        %v3724 = vld [vmem:[#allocation2 + $0x80] sm:$0xff]
        %v3725 = vld [vmem:[#allocation2 + $0x88] sm:$0xff]
        %s3726 = scalar_lea.vmem %s2, 48
        %v3727 = vld [vmem:[%s3726] sm:$0xff]
        %3729 = vset.pattern.permute.xlu0 0
        %3730 = vperm.xlu0 %3729, %v3727
        %v3731 = vpop.permute.xlu0 %3730
        %v3734 = vsel %vm379, %v3707, 0
        %3736 = vmatpush.msra.mxu0 0.0
        %3737 = vmatpush.msra.mxu0 0.0
        %3738 = vmatpush.msra.mxu0 0.0
        %3739 = vmatpush.msra.mxu0 0.0
        %3740 = vmatpush.msra.mxu0 0.0
        %3741 = vmatpush.msra.mxu0 0.0
        %3742 = vmatpush.msra.mxu0 0.0
        %v3743 = vand.u32 %v3724, 4294901760
        %3744 = vmatpush.msra.mxu0 %v3743
        %v3745 = vand.u32 %v3722, 4294901760
        %3746 = vmatpush.msra.mxu0 %v3745
        %v3747 = vand.u32 %v3720, 4294901760
        %3748 = vmatpush.msra.mxu0 %v3747
        %v3749 = vand.u32 %v3718, 4294901760
        %3750 = vmatpush.msra.mxu0 %v3749
        %v3751 = vand.u32 %v3716, 4294901760
        %3752 = vmatpush.msra.mxu0 %v3751
        %v3753 = vand.u32 %v3714, 4294901760
        %3754 = vmatpush.msra.mxu0 %v3753
        %v3755 = vand.u32 %v3712, 4294901760
        %3756 = vmatpush.msra.mxu0 %v3755
        %v3757 = vand.u32 %v3710, 4294901760
        %3758 = vmatpush.msra.mxu0 %v3757
        %v3759 = vand.u32 %v3708, 4294901760
        %3760 = vmatpush.msra.mxu0 %v3759
        %v3761 = vand.u32 %v3734, 4294901760
        %v3762 = vsub.f32 %v3734, %v3761
        %v3763 = vand.u32 %v3762, 4294901760
        %v3764 = vsub.f32 %v3762, %v3763
        %v3765 = vand.u32 %v3764, 4294901760
        %3766 = vmatmul.f32.gmra.mxu0 %v3765
        %v3767 = vpop.f32.mrf.mxu0
        %v3768 = vadd.f32 %v3731, %v3767
        %3769 = vdwg.mxu0
        %3770 = vmatpush.msra.mxu0 0.0
        %3771 = vmatpush.msra.mxu0 0.0
        %3772 = vmatpush.msra.mxu0 0.0
        %3773 = vmatpush.msra.mxu0 0.0
        %3774 = vmatpush.msra.mxu0 0.0
        %3775 = vmatpush.msra.mxu0 0.0
        %3776 = vmatpush.msra.mxu0 0.0
        %v3777 = vand.u32 %v3724, 4294901760
        %v3778 = vsub.f32 %v3724, %v3777
        %v3779 = vand.u32 %v3778, 4294901760
        %v3780 = vsub.f32 %v3778, %v3779
        %v3781 = vand.u32 %v3780, 4294901760
        %3782 = vmatpush.msra.mxu0 %v3781
        %v3783 = vand.u32 %v3722, 4294901760
        %v3784 = vsub.f32 %v3722, %v3783
        %v3785 = vand.u32 %v3784, 4294901760
        %v3786 = vsub.f32 %v3784, %v3785
        %v3787 = vand.u32 %v3786, 4294901760
        %3788 = vmatpush.msra.mxu0 %v3787
        %v3789 = vand.u32 %v3720, 4294901760
        %v3790 = vsub.f32 %v3720, %v3789
        %v3791 = vand.u32 %v3790, 4294901760
        %v3792 = vsub.f32 %v3790, %v3791
        %v3793 = vand.u32 %v3792, 4294901760
        %3794 = vmatpush.msra.mxu0 %v3793
        %v3795 = vand.u32 %v3718, 4294901760
        %v3796 = vsub.f32 %v3718, %v3795
        %v3797 = vand.u32 %v3796, 4294901760
        %v3798 = vsub.f32 %v3796, %v3797
        %v3799 = vand.u32 %v3798, 4294901760
        %3800 = vmatpush.msra.mxu0 %v3799
        %v3801 = vand.u32 %v3716, 4294901760
        %v3802 = vsub.f32 %v3716, %v3801
        %v3803 = vand.u32 %v3802, 4294901760
        %v3804 = vsub.f32 %v3802, %v3803
        %v3805 = vand.u32 %v3804, 4294901760
        %3806 = vmatpush.msra.mxu0 %v3805
        %v3807 = vand.u32 %v3714, 4294901760
        %v3808 = vsub.f32 %v3714, %v3807
        %v3809 = vand.u32 %v3808, 4294901760
        %v3810 = vsub.f32 %v3808, %v3809
        %v3811 = vand.u32 %v3810, 4294901760
        %3812 = vmatpush.msra.mxu0 %v3811
        %v3813 = vand.u32 %v3712, 4294901760
        %v3814 = vsub.f32 %v3712, %v3813
        %v3815 = vand.u32 %v3814, 4294901760
        %v3816 = vsub.f32 %v3814, %v3815
        %v3817 = vand.u32 %v3816, 4294901760
        %3818 = vmatpush.msra.mxu0 %v3817
        %v3819 = vand.u32 %v3710, 4294901760
        %v3820 = vsub.f32 %v3710, %v3819
        %v3821 = vand.u32 %v3820, 4294901760
        %v3822 = vsub.f32 %v3820, %v3821
        %v3823 = vand.u32 %v3822, 4294901760
        %3824 = vmatpush.msra.mxu0 %v3823
        %v3825 = vand.u32 %v3708, 4294901760
        %v3826 = vsub.f32 %v3708, %v3825
        %v3827 = vand.u32 %v3826, 4294901760
        %v3828 = vsub.f32 %v3826, %v3827
        %v3829 = vand.u32 %v3828, 4294901760
        %3830 = vmatpush.msra.mxu0 %v3829
        %v3831 = vand.u32 %v3734, 4294901760
        %3832 = vmatmul.f32.gmra.mxu0 %v3831
        %v3833 = vpop.f32.mrf.mxu0
        %v3834 = vadd.f32 %v3768, %v3833
        %3835 = vdwg.mxu0
        %3836 = vmatpush.msra.mxu0 0.0
        %3837 = vmatpush.msra.mxu0 0.0
        %3838 = vmatpush.msra.mxu0 0.0
        %3839 = vmatpush.msra.mxu0 0.0
        %3840 = vmatpush.msra.mxu0 0.0
        %3841 = vmatpush.msra.mxu0 0.0
        %3842 = vmatpush.msra.mxu0 0.0
        %v3843 = vand.u32 %v3724, 4294901760
        %v3844 = vsub.f32 %v3724, %v3843
        %3845 = vmatpush.msra.mxu0 %v3844
        %v3846 = vand.u32 %v3722, 4294901760
        %v3847 = vsub.f32 %v3722, %v3846
        %3848 = vmatpush.msra.mxu0 %v3847
        %v3849 = vand.u32 %v3720, 4294901760
        %v3850 = vsub.f32 %v3720, %v3849
        %3851 = vmatpush.msra.mxu0 %v3850
        %v3852 = vand.u32 %v3718, 4294901760
        %v3853 = vsub.f32 %v3718, %v3852
        %3854 = vmatpush.msra.mxu0 %v3853
        %v3855 = vand.u32 %v3716, 4294901760
        %v3856 = vsub.f32 %v3716, %v3855
        %3857 = vmatpush.msra.mxu0 %v3856
        %v3858 = vand.u32 %v3714, 4294901760
        %v3859 = vsub.f32 %v3714, %v3858
        %3860 = vmatpush.msra.mxu0 %v3859
        %v3861 = vand.u32 %v3712, 4294901760
        %v3862 = vsub.f32 %v3712, %v3861
        %3863 = vmatpush.msra.mxu0 %v3862
        %v3864 = vand.u32 %v3710, 4294901760
        %v3865 = vsub.f32 %v3710, %v3864
        %3866 = vmatpush.msra.mxu0 %v3865
        %v3867 = vand.u32 %v3708, 4294901760
        %v3868 = vsub.f32 %v3708, %v3867
        %3869 = vmatpush.msra.mxu0 %v3868
        %v3870 = vand.u32 %v3734, 4294901760
        %v3871 = vsub.f32 %v3734, %v3870
        %3872 = vmatmul.f32.gmra.mxu0 %v3871
        %v3873 = vpop.f32.mrf.mxu0
        %v3874 = vadd.f32 %v3834, %v3873
        %3875 = vdwg.mxu0
        %3876 = vmatpush.msra.mxu0 0.0
        %3877 = vmatpush.msra.mxu0 0.0
        %3878 = vmatpush.msra.mxu0 0.0
        %3879 = vmatpush.msra.mxu0 0.0
        %3880 = vmatpush.msra.mxu0 0.0
        %3881 = vmatpush.msra.mxu0 0.0
        %3882 = vmatpush.msra.mxu0 0.0
        %v3883 = vand.u32 %v3724, 4294901760
        %3884 = vmatpush.msra.mxu0 %v3883
        %v3885 = vand.u32 %v3722, 4294901760
        %3886 = vmatpush.msra.mxu0 %v3885
        %v3887 = vand.u32 %v3720, 4294901760
        %3888 = vmatpush.msra.mxu0 %v3887
        %v3889 = vand.u32 %v3718, 4294901760
        %3890 = vmatpush.msra.mxu0 %v3889
        %v3891 = vand.u32 %v3716, 4294901760
        %3892 = vmatpush.msra.mxu0 %v3891
        %v3893 = vand.u32 %v3714, 4294901760
        %3894 = vmatpush.msra.mxu0 %v3893
        %v3895 = vand.u32 %v3712, 4294901760
        %3896 = vmatpush.msra.mxu0 %v3895
        %v3897 = vand.u32 %v3710, 4294901760
        %3898 = vmatpush.msra.mxu0 %v3897
        %v3899 = vand.u32 %v3708, 4294901760
        %3900 = vmatpush.msra.mxu0 %v3899
        %v3901 = vand.u32 %v3734, 4294901760
        %v3902 = vsub.f32 %v3734, %v3901
        %v3903 = vand.u32 %v3902, 4294901760
        %3904 = vmatmul.f32.gmra.mxu0 %v3903
        %v3905 = vpop.f32.mrf.mxu0
        %v3906 = vadd.f32 %v3874, %v3905
        %3907 = vdwg.mxu0
        %3908 = vmatpush.msra.mxu0 0.0
        %3909 = vmatpush.msra.mxu0 0.0
        %3910 = vmatpush.msra.mxu0 0.0
        %3911 = vmatpush.msra.mxu0 0.0
        %3912 = vmatpush.msra.mxu0 0.0
        %3913 = vmatpush.msra.mxu0 0.0
        %3914 = vmatpush.msra.mxu0 0.0
        %v3915 = vand.u32 %v3724, 4294901760
        %v3916 = vsub.f32 %v3724, %v3915
        %v3917 = vand.u32 %v3916, 4294901760
        %3918 = vmatpush.msra.mxu0 %v3917
        %v3919 = vand.u32 %v3722, 4294901760
        %v3920 = vsub.f32 %v3722, %v3919
        %v3921 = vand.u32 %v3920, 4294901760
        %3922 = vmatpush.msra.mxu0 %v3921
        %v3923 = vand.u32 %v3720, 4294901760
        %v3924 = vsub.f32 %v3720, %v3923
        %v3925 = vand.u32 %v3924, 4294901760
        %3926 = vmatpush.msra.mxu0 %v3925
        %v3927 = vand.u32 %v3718, 4294901760
        %v3928 = vsub.f32 %v3718, %v3927
        %v3929 = vand.u32 %v3928, 4294901760
        %3930 = vmatpush.msra.mxu0 %v3929
        %v3931 = vand.u32 %v3716, 4294901760
        %v3932 = vsub.f32 %v3716, %v3931
        %v3933 = vand.u32 %v3932, 4294901760
        %3934 = vmatpush.msra.mxu0 %v3933
        %v3935 = vand.u32 %v3714, 4294901760
        %v3936 = vsub.f32 %v3714, %v3935
        %v3937 = vand.u32 %v3936, 4294901760
        %3938 = vmatpush.msra.mxu0 %v3937
        %v3939 = vand.u32 %v3712, 4294901760
        %v3940 = vsub.f32 %v3712, %v3939
        %v3941 = vand.u32 %v3940, 4294901760
        %3942 = vmatpush.msra.mxu0 %v3941
        %v3943 = vand.u32 %v3710, 4294901760
        %v3944 = vsub.f32 %v3710, %v3943
        %v3945 = vand.u32 %v3944, 4294901760
        %3946 = vmatpush.msra.mxu0 %v3945
        %v3947 = vand.u32 %v3708, 4294901760
        %v3948 = vsub.f32 %v3708, %v3947
        %v3949 = vand.u32 %v3948, 4294901760
        %3950 = vmatpush.msra.mxu0 %v3949
        %v3951 = vand.u32 %v3734, 4294901760
        %3952 = vmatmul.f32.gmra.mxu0 %v3951
        %v3953 = vpop.f32.mrf.mxu0
        %v3954 = vadd.f32 %v3906, %v3953
        %3955 = vdwg.mxu0
        %3956 = vmatpush.msra.mxu0 0.0
        %3957 = vmatpush.msra.mxu0 0.0
        %3958 = vmatpush.msra.mxu0 0.0
        %3959 = vmatpush.msra.mxu0 0.0
        %3960 = vmatpush.msra.mxu0 0.0
        %3961 = vmatpush.msra.mxu0 0.0
        %3962 = vmatpush.msra.mxu0 0.0
        %v3963 = vand.u32 %v3724, 4294901760
        %3964 = vmatpush.msra.mxu0 %v3963
        %v3965 = vand.u32 %v3722, 4294901760
        %3966 = vmatpush.msra.mxu0 %v3965
        %v3967 = vand.u32 %v3720, 4294901760
        %3968 = vmatpush.msra.mxu0 %v3967
        %v3969 = vand.u32 %v3718, 4294901760
        %3970 = vmatpush.msra.mxu0 %v3969
        %v3971 = vand.u32 %v3716, 4294901760
        %3972 = vmatpush.msra.mxu0 %v3971
        %v3973 = vand.u32 %v3714, 4294901760
        %3974 = vmatpush.msra.mxu0 %v3973
        %v3975 = vand.u32 %v3712, 4294901760
        %3976 = vmatpush.msra.mxu0 %v3975
        %v3977 = vand.u32 %v3710, 4294901760
        %3978 = vmatpush.msra.mxu0 %v3977
        %v3979 = vand.u32 %v3708, 4294901760
        %3980 = vmatpush.msra.mxu0 %v3979
        %v3981 = vand.u32 %v3734, 4294901760
        %3982 = vmatmul.f32.gmra.mxu0 %v3981
        %v3983 = vpop.f32.mrf.mxu0
        %v3984 = vadd.f32 %v3954, %v3983
        %3985 = vdwg.mxu0
        %3986 = vmatpush.msra.mxu0 0.0
        %3987 = vmatpush.msra.mxu0 0.0
        %3988 = vmatpush.msra.mxu0 0.0
        %3989 = vmatpush.msra.mxu0 0.0
        %3990 = vmatpush.msra.mxu0 0.0
        %3991 = vmatpush.msra.mxu0 0.0
        %3992 = vmatpush.msra.mxu0 0.0
        %v3993 = vand.u32 %v3725, 4294901760
        %3994 = vmatpush.msra.mxu0 %v3993
        %v3995 = vand.u32 %v3723, 4294901760
        %3996 = vmatpush.msra.mxu0 %v3995
        %v3997 = vand.u32 %v3721, 4294901760
        %3998 = vmatpush.msra.mxu0 %v3997
        %v3999 = vand.u32 %v3719, 4294901760
        %4000 = vmatpush.msra.mxu0 %v3999
        %v4001 = vand.u32 %v3717, 4294901760
        %4002 = vmatpush.msra.mxu0 %v4001
        %v4003 = vand.u32 %v3715, 4294901760
        %4004 = vmatpush.msra.mxu0 %v4003
        %v4005 = vand.u32 %v3713, 4294901760
        %4006 = vmatpush.msra.mxu0 %v4005
        %v4007 = vand.u32 %v3711, 4294901760
        %4008 = vmatpush.msra.mxu0 %v4007
        %v4009 = vand.u32 %v3709, 4294901760
        %4010 = vmatpush.msra.mxu0 %v4009
        %v4011 = vand.u32 %v3734, 4294901760
        %v4012 = vsub.f32 %v3734, %v4011
        %v4013 = vand.u32 %v4012, 4294901760
        %v4014 = vsub.f32 %v4012, %v4013
        %v4015 = vand.u32 %v4014, 4294901760
        %4016 = vmatmul.f32.gmra.mxu0 %v4015
        %v4017 = vpop.f32.mrf.mxu0
        %v4018 = vadd.f32 %v3731, %v4017
        %4019 = vdwg.mxu0
        %4020 = vmatpush.msra.mxu0 0.0
        %4021 = vmatpush.msra.mxu0 0.0
        %4022 = vmatpush.msra.mxu0 0.0
        %4023 = vmatpush.msra.mxu0 0.0
        %4024 = vmatpush.msra.mxu0 0.0
        %4025 = vmatpush.msra.mxu0 0.0
        %4026 = vmatpush.msra.mxu0 0.0
        %v4027 = vand.u32 %v3725, 4294901760
        %v4028 = vsub.f32 %v3725, %v4027
        %v4029 = vand.u32 %v4028, 4294901760
        %v4030 = vsub.f32 %v4028, %v4029
        %v4031 = vand.u32 %v4030, 4294901760
        %4032 = vmatpush.msra.mxu0 %v4031
        %v4033 = vand.u32 %v3723, 4294901760
        %v4034 = vsub.f32 %v3723, %v4033
        %v4035 = vand.u32 %v4034, 4294901760
        %v4036 = vsub.f32 %v4034, %v4035
        %v4037 = vand.u32 %v4036, 4294901760
        %4038 = vmatpush.msra.mxu0 %v4037
        %v4039 = vand.u32 %v3721, 4294901760
        %v4040 = vsub.f32 %v3721, %v4039
        %v4041 = vand.u32 %v4040, 4294901760
        %v4042 = vsub.f32 %v4040, %v4041
        %v4043 = vand.u32 %v4042, 4294901760
        %4044 = vmatpush.msra.mxu0 %v4043
        %v4045 = vand.u32 %v3719, 4294901760
        %v4046 = vsub.f32 %v3719, %v4045
        %v4047 = vand.u32 %v4046, 4294901760
        %v4048 = vsub.f32 %v4046, %v4047
        %v4049 = vand.u32 %v4048, 4294901760
        %4050 = vmatpush.msra.mxu0 %v4049
        %v4051 = vand.u32 %v3717, 4294901760
        %v4052 = vsub.f32 %v3717, %v4051
        %v4053 = vand.u32 %v4052, 4294901760
        %v4054 = vsub.f32 %v4052, %v4053
        %v4055 = vand.u32 %v4054, 4294901760
        %4056 = vmatpush.msra.mxu0 %v4055
        %v4057 = vand.u32 %v3715, 4294901760
        %v4058 = vsub.f32 %v3715, %v4057
        %v4059 = vand.u32 %v4058, 4294901760
        %v4060 = vsub.f32 %v4058, %v4059
        %v4061 = vand.u32 %v4060, 4294901760
        %4062 = vmatpush.msra.mxu0 %v4061
        %v4063 = vand.u32 %v3713, 4294901760
        %v4064 = vsub.f32 %v3713, %v4063
        %v4065 = vand.u32 %v4064, 4294901760
        %v4066 = vsub.f32 %v4064, %v4065
        %v4067 = vand.u32 %v4066, 4294901760
        %4068 = vmatpush.msra.mxu0 %v4067
        %v4069 = vand.u32 %v3711, 4294901760
        %v4070 = vsub.f32 %v3711, %v4069
        %v4071 = vand.u32 %v4070, 4294901760
        %v4072 = vsub.f32 %v4070, %v4071
        %v4073 = vand.u32 %v4072, 4294901760
        %4074 = vmatpush.msra.mxu0 %v4073
        %v4075 = vand.u32 %v3709, 4294901760
        %v4076 = vsub.f32 %v3709, %v4075
        %v4077 = vand.u32 %v4076, 4294901760
        %v4078 = vsub.f32 %v4076, %v4077
        %v4079 = vand.u32 %v4078, 4294901760
        %4080 = vmatpush.msra.mxu0 %v4079
        %v4081 = vand.u32 %v3734, 4294901760
        %4082 = vmatmul.f32.gmra.mxu0 %v4081
        %v4083 = vpop.f32.mrf.mxu0
        %v4084 = vadd.f32 %v4018, %v4083
        %4085 = vdwg.mxu0
        %4086 = vmatpush.msra.mxu0 0.0
        %4087 = vmatpush.msra.mxu0 0.0
        %4088 = vmatpush.msra.mxu0 0.0
        %4089 = vmatpush.msra.mxu0 0.0
        %4090 = vmatpush.msra.mxu0 0.0
        %4091 = vmatpush.msra.mxu0 0.0
        %4092 = vmatpush.msra.mxu0 0.0
        %v4093 = vand.u32 %v3725, 4294901760
        %v4094 = vsub.f32 %v3725, %v4093
        %4095 = vmatpush.msra.mxu0 %v4094
        %v4096 = vand.u32 %v3723, 4294901760
        %v4097 = vsub.f32 %v3723, %v4096
        %4098 = vmatpush.msra.mxu0 %v4097
        %v4099 = vand.u32 %v3721, 4294901760
        %v4100 = vsub.f32 %v3721, %v4099
        %4101 = vmatpush.msra.mxu0 %v4100
        %v4102 = vand.u32 %v3719, 4294901760
        %v4103 = vsub.f32 %v3719, %v4102
        %4104 = vmatpush.msra.mxu0 %v4103
        %v4105 = vand.u32 %v3717, 4294901760
        %v4106 = vsub.f32 %v3717, %v4105
        %4107 = vmatpush.msra.mxu0 %v4106
        %v4108 = vand.u32 %v3715, 4294901760
        %v4109 = vsub.f32 %v3715, %v4108
        %4110 = vmatpush.msra.mxu0 %v4109
        %v4111 = vand.u32 %v3713, 4294901760
        %v4112 = vsub.f32 %v3713, %v4111
        %4113 = vmatpush.msra.mxu0 %v4112
        %v4114 = vand.u32 %v3711, 4294901760
        %v4115 = vsub.f32 %v3711, %v4114
        %4116 = vmatpush.msra.mxu0 %v4115
        %v4117 = vand.u32 %v3709, 4294901760
        %v4118 = vsub.f32 %v3709, %v4117
        %4119 = vmatpush.msra.mxu0 %v4118
        %v4120 = vand.u32 %v3734, 4294901760
        %v4121 = vsub.f32 %v3734, %v4120
        %4122 = vmatmul.f32.gmra.mxu0 %v4121
        %v4123 = vpop.f32.mrf.mxu0
        %v4124 = vadd.f32 %v4084, %v4123
        %4125 = vdwg.mxu0
        %4126 = vmatpush.msra.mxu0 0.0
        %4127 = vmatpush.msra.mxu0 0.0
        %4128 = vmatpush.msra.mxu0 0.0
        %4129 = vmatpush.msra.mxu0 0.0
        %4130 = vmatpush.msra.mxu0 0.0
        %4131 = vmatpush.msra.mxu0 0.0
        %4132 = vmatpush.msra.mxu0 0.0
        %v4133 = vand.u32 %v3725, 4294901760
        %4134 = vmatpush.msra.mxu0 %v4133
        %v4135 = vand.u32 %v3723, 4294901760
        %4136 = vmatpush.msra.mxu0 %v4135
        %v4137 = vand.u32 %v3721, 4294901760
        %4138 = vmatpush.msra.mxu0 %v4137
        %v4139 = vand.u32 %v3719, 4294901760
        %4140 = vmatpush.msra.mxu0 %v4139
        %v4141 = vand.u32 %v3717, 4294901760
        %4142 = vmatpush.msra.mxu0 %v4141
        %v4143 = vand.u32 %v3715, 4294901760
        %4144 = vmatpush.msra.mxu0 %v4143
        %v4145 = vand.u32 %v3713, 4294901760
        %4146 = vmatpush.msra.mxu0 %v4145
        %v4147 = vand.u32 %v3711, 4294901760
        %4148 = vmatpush.msra.mxu0 %v4147
        %v4149 = vand.u32 %v3709, 4294901760
        %4150 = vmatpush.msra.mxu0 %v4149
        %v4151 = vand.u32 %v3734, 4294901760
        %v4152 = vsub.f32 %v3734, %v4151
        %v4153 = vand.u32 %v4152, 4294901760
        %4154 = vmatmul.f32.gmra.mxu0 %v4153
        %v4155 = vpop.f32.mrf.mxu0
        %v4156 = vadd.f32 %v4124, %v4155
        %4157 = vdwg.mxu0
        %4158 = vmatpush.msra.mxu0 0.0
        %4159 = vmatpush.msra.mxu0 0.0
        %4160 = vmatpush.msra.mxu0 0.0
        %4161 = vmatpush.msra.mxu0 0.0
        %4162 = vmatpush.msra.mxu0 0.0
        %4163 = vmatpush.msra.mxu0 0.0
        %4164 = vmatpush.msra.mxu0 0.0
        %v4165 = vand.u32 %v3725, 4294901760
        %v4166 = vsub.f32 %v3725, %v4165
        %v4167 = vand.u32 %v4166, 4294901760
        %4168 = vmatpush.msra.mxu0 %v4167
        %v4169 = vand.u32 %v3723, 4294901760
        %v4170 = vsub.f32 %v3723, %v4169
        %v4171 = vand.u32 %v4170, 4294901760
        %4172 = vmatpush.msra.mxu0 %v4171
        %v4173 = vand.u32 %v3721, 4294901760
        %v4174 = vsub.f32 %v3721, %v4173
        %v4175 = vand.u32 %v4174, 4294901760
        %4176 = vmatpush.msra.mxu0 %v4175
        %v4177 = vand.u32 %v3719, 4294901760
        %v4178 = vsub.f32 %v3719, %v4177
        %v4179 = vand.u32 %v4178, 4294901760
        %4180 = vmatpush.msra.mxu0 %v4179
        %v4181 = vand.u32 %v3717, 4294901760
        %v4182 = vsub.f32 %v3717, %v4181
        %v4183 = vand.u32 %v4182, 4294901760
        %4184 = vmatpush.msra.mxu0 %v4183
        %v4185 = vand.u32 %v3715, 4294901760
        %v4186 = vsub.f32 %v3715, %v4185
        %v4187 = vand.u32 %v4186, 4294901760
        %4188 = vmatpush.msra.mxu0 %v4187
        %v4189 = vand.u32 %v3713, 4294901760
        %v4190 = vsub.f32 %v3713, %v4189
        %v4191 = vand.u32 %v4190, 4294901760
        %4192 = vmatpush.msra.mxu0 %v4191
        %v4193 = vand.u32 %v3711, 4294901760
        %v4194 = vsub.f32 %v3711, %v4193
        %v4195 = vand.u32 %v4194, 4294901760
        %4196 = vmatpush.msra.mxu0 %v4195
        %v4197 = vand.u32 %v3709, 4294901760
        %v4198 = vsub.f32 %v3709, %v4197
        %v4199 = vand.u32 %v4198, 4294901760
        %4200 = vmatpush.msra.mxu0 %v4199
        %v4201 = vand.u32 %v3734, 4294901760
        %4202 = vmatmul.f32.gmra.mxu0 %v4201
        %v4203 = vpop.f32.mrf.mxu0
        %v4204 = vadd.f32 %v4156, %v4203
        %4205 = vdwg.mxu0
        %4206 = vmatpush.msra.mxu0 0.0
        %4207 = vmatpush.msra.mxu0 0.0
        %4208 = vmatpush.msra.mxu0 0.0
        %4209 = vmatpush.msra.mxu0 0.0
        %4210 = vmatpush.msra.mxu0 0.0
        %4211 = vmatpush.msra.mxu0 0.0
        %4212 = vmatpush.msra.mxu0 0.0
        %v4213 = vand.u32 %v3725, 4294901760
        %4214 = vmatpush.msra.mxu0 %v4213
        %v4215 = vand.u32 %v3723, 4294901760
        %4216 = vmatpush.msra.mxu0 %v4215
        %v4217 = vand.u32 %v3721, 4294901760
        %4218 = vmatpush.msra.mxu0 %v4217
        %v4219 = vand.u32 %v3719, 4294901760
        %4220 = vmatpush.msra.mxu0 %v4219
        %v4221 = vand.u32 %v3717, 4294901760
        %4222 = vmatpush.msra.mxu0 %v4221
        %v4223 = vand.u32 %v3715, 4294901760
        %4224 = vmatpush.msra.mxu0 %v4223
        %v4225 = vand.u32 %v3713, 4294901760
        %4226 = vmatpush.msra.mxu0 %v4225
        %v4227 = vand.u32 %v3711, 4294901760
        %4228 = vmatpush.msra.mxu0 %v4227
        %v4229 = vand.u32 %v3709, 4294901760
        %4230 = vmatpush.msra.mxu0 %v4229
        %v4231 = vand.u32 %v3734, 4294901760
        %4232 = vmatmul.f32.gmra.mxu0 %v4231
        %v4233 = vpop.f32.mrf.mxu0
        %v4234 = vadd.f32 %v4204, %v4233
        %4235 = vdwg.mxu0
        %vm4236 = vcmp.ge.f32.partialorder %v3984, 0.0
        %vm4237 = vcmp.ge.f32.partialorder %v4234, 0.0
        %v4238 = vmul.f32 %v3984, 0.01
        %v4239 = vmul.f32 %v4234, 0.01
        %v4240 = vsel %vm4236, %v3984, %v4238
        %v4241 = vsel %vm4237, %v4234, %v4239
        %v4242 = vadd.f32 %v4240, %v3606
        %v4243 = vadd.f32 %v4241, %v3607
        %4244 = vrot.lane.b32.xlu0 %v4242, 17
        %v4245 = vpop.permute.xlu0 %4244
        %4246 = vrot.lane.b32.xlu0 %v4243, 17
        %v4247 = vpop.permute.xlu0 %4246
        %v4248 = vsel %vm238, %v4245, %v4247
        %v4249 = vsel %vm238, %v4247, %v4245
        %v4250 = vld [vmem:[#allocation5] sm:$0xff]
        %v4251 = vld [vmem:[#allocation5 + $0x8] sm:$0xff]
        %v4252 = vmul.f32 %v4249, %v4250
        %v4253 = vmul.f32 %v4248, %v4251
        %4254 = vst [vmem:[#allocation2] sm:$0xff] %v4252
        %4255 = vst [vmem:[#allocation2 + $0x8] sm:$0xff] %v4253
        %4256 = vrot.lane.b32.xlu0 %v4242, 16
        %v4257 = vpop.permute.xlu0 %4256
        %4258 = vrot.lane.b32.xlu0 %v4243, 16
        %v4259 = vpop.permute.xlu0 %4258
        %v4260 = vsel %vm251, %v4257, %v4259
        %v4261 = vsel %vm251, %v4259, %v4257
        %v4262 = vld [vmem:[%s254] sm:$0xff]
        %v4263 = vld [vmem:[%s254 + $0x8] sm:$0xff]
        %v4264 = vmul.f32 %v4261, %v4262
        %v4265 = vmul.f32 %v4260, %v4263
        %4266 = vst [vmem:[#allocation2 + $0x10] sm:$0xff] %v4264
        %4267 = vst [vmem:[#allocation2 + $0x18] sm:$0xff] %v4265
        %4268 = vrot.lane.b32.xlu0 %v4242, 15
        %v4269 = vpop.permute.xlu0 %4268
        %4270 = vrot.lane.b32.xlu0 %v4243, 15
        %v4271 = vpop.permute.xlu0 %4270
        %v4272 = vsel %vm265, %v4269, %v4271
        %v4273 = vsel %vm265, %v4271, %v4269
        %v4274 = vld [vmem:[%s268] sm:$0xff]
        %v4275 = vld [vmem:[%s268 + $0x8] sm:$0xff]
        %v4276 = vmul.f32 %v4273, %v4274
        %v4277 = vmul.f32 %v4272, %v4275
        %4278 = vst [vmem:[#allocation2 + $0x20] sm:$0xff] %v4276
        %4279 = vst [vmem:[#allocation2 + $0x28] sm:$0xff] %v4277
        %4280 = vrot.lane.b32.xlu0 %v4242, 1
        %v4281 = vpop.permute.xlu0 %4280
        %4282 = vrot.lane.b32.xlu0 %v4243, 1
        %v4283 = vpop.permute.xlu0 %4282
        %v4284 = vsel %vm279, %v4281, %v4283
        %v4285 = vsel %vm279, %v4283, %v4281
        %v4286 = vld [vmem:[%s282] sm:$0xff]
        %v4287 = vld [vmem:[%s282 + $0x8] sm:$0xff]
        %v4288 = vmul.f32 %v4285, %v4286
        %v4289 = vmul.f32 %v4284, %v4287
        %4290 = vst [vmem:[#allocation2 + $0x30] sm:$0xff] %v4288
        %4291 = vst [vmem:[#allocation2 + $0x38] sm:$0xff] %v4289
        %4292 = vst [vmem:[#allocation2 + $0x40] sm:$0xff] %v4242
        %4293 = vst [vmem:[#allocation2 + $0x48] sm:$0xff] %v4243
        %4294 = vrot.lane.b32.xlu0 %v4242, 127
        %v4295 = vpop.permute.xlu0 %4294
        %4296 = vrot.lane.b32.xlu0 %v4243, 127
        %v4297 = vpop.permute.xlu0 %4296
        %v4298 = vsel %vm295, %v4295, %v4297
        %v4299 = vsel %vm295, %v4297, %v4295
        %v4300 = vld [vmem:[%s298] sm:$0xff]
        %v4301 = vld [vmem:[%s298 + $0x8] sm:$0xff]
        %v4302 = vmul.f32 %v4298, %v4300
        %v4303 = vmul.f32 %v4299, %v4301
        %4304 = vst [vmem:[#allocation2 + $0x50] sm:$0xff] %v4302
        %4305 = vst [vmem:[#allocation2 + $0x58] sm:$0xff] %v4303
        %4306 = vrot.lane.b32.xlu0 %v4242, 113
        %v4307 = vpop.permute.xlu0 %4306
        %4308 = vrot.lane.b32.xlu0 %v4243, 113
        %v4309 = vpop.permute.xlu0 %4308
        %v4310 = vsel %vm309, %v4307, %v4309
        %v4311 = vsel %vm309, %v4309, %v4307
        %v4312 = vld [vmem:[%s312] sm:$0xff]
        %v4313 = vld [vmem:[%s312 + $0x8] sm:$0xff]
        %v4314 = vmul.f32 %v4310, %v4312
        %v4315 = vmul.f32 %v4311, %v4313
        %4316 = vst [vmem:[#allocation2 + $0x60] sm:$0xff] %v4314
        %4317 = vst [vmem:[#allocation2 + $0x68] sm:$0xff] %v4315
        %4318 = vrot.lane.b32.xlu0 %v4242, 112
        %v4319 = vpop.permute.xlu0 %4318
        %4320 = vrot.lane.b32.xlu0 %v4243, 112
        %v4321 = vpop.permute.xlu0 %4320
        %v4322 = vsel %vm323, %v4319, %v4321
        %v4323 = vsel %vm323, %v4321, %v4319
        %v4324 = vld [vmem:[%s326] sm:$0xff]
        %v4325 = vld [vmem:[%s326 + $0x8] sm:$0xff]
        %v4326 = vmul.f32 %v4322, %v4324
        %v4327 = vmul.f32 %v4323, %v4325
        %4328 = vst [vmem:[#allocation2 + $0x70] sm:$0xff] %v4326
        %4329 = vst [vmem:[#allocation2 + $0x78] sm:$0xff] %v4327
        %4330 = vrot.lane.b32.xlu0 %v4242, 111
        %v4331 = vpop.permute.xlu0 %4330
        %4332 = vrot.lane.b32.xlu0 %v4243, 111
        %v4333 = vpop.permute.xlu0 %4332
        %v4334 = vsel %vm337, %v4331, %v4333
        %v4335 = vsel %vm337, %v4333, %v4331
        %v4336 = vld [vmem:[%s340] sm:$0xff]
        %v4337 = vld [vmem:[%s340 + $0x8] sm:$0xff]
        %v4338 = vmul.f32 %v4334, %v4336
        %v4339 = vmul.f32 %v4335, %v4337
        %4340 = vst [vmem:[#allocation2 + $0x80] sm:$0xff] %v4338
        %4341 = vst [vmem:[#allocation2 + $0x88] sm:$0xff] %v4339
        %s4342 = scalar_lea.vmem [#allocation3], 128
        %v4343 = vld [vmem:[%s4342] sm:$0xff]
        %v4344 = vld [vmem:[#allocation2] sm:$0xff]
        %v4345 = vld [vmem:[#allocation2 + $0x8] sm:$0xff]
        %v4346 = vld [vmem:[#allocation2 + $0x10] sm:$0xff]
        %v4347 = vld [vmem:[#allocation2 + $0x18] sm:$0xff]
        %v4348 = vld [vmem:[#allocation2 + $0x20] sm:$0xff]
        %v4349 = vld [vmem:[#allocation2 + $0x28] sm:$0xff]
        %v4350 = vld [vmem:[#allocation2 + $0x30] sm:$0xff]
        %v4351 = vld [vmem:[#allocation2 + $0x38] sm:$0xff]
        %v4352 = vld [vmem:[#allocation2 + $0x40] sm:$0xff]
        %v4353 = vld [vmem:[#allocation2 + $0x48] sm:$0xff]
        %v4354 = vld [vmem:[#allocation2 + $0x50] sm:$0xff]
        %v4355 = vld [vmem:[#allocation2 + $0x58] sm:$0xff]
        %v4356 = vld [vmem:[#allocation2 + $0x60] sm:$0xff]
        %v4357 = vld [vmem:[#allocation2 + $0x68] sm:$0xff]
        %v4358 = vld [vmem:[#allocation2 + $0x70] sm:$0xff]
        %v4359 = vld [vmem:[#allocation2 + $0x78] sm:$0xff]
        %v4360 = vld [vmem:[#allocation2 + $0x80] sm:$0xff]
        %v4361 = vld [vmem:[#allocation2 + $0x88] sm:$0xff]
        %s4362 = scalar_lea.vmem %s2, 64
        %v4363 = vld [vmem:[%s4362] sm:$0xff]
        %4365 = vset.pattern.permute.xlu0 0
        %4366 = vperm.xlu0 %4365, %v4363
        %v4367 = vpop.permute.xlu0 %4366
        %v4370 = vsel %vm379, %v4343, 0
        %4372 = vmatpush.msra.mxu0 0.0
        %4373 = vmatpush.msra.mxu0 0.0
        %4374 = vmatpush.msra.mxu0 0.0
        %4375 = vmatpush.msra.mxu0 0.0
        %4376 = vmatpush.msra.mxu0 0.0
        %4377 = vmatpush.msra.mxu0 0.0
        %4378 = vmatpush.msra.mxu0 0.0
        %v4379 = vand.u32 %v4360, 4294901760
        %4380 = vmatpush.msra.mxu0 %v4379
        %v4381 = vand.u32 %v4358, 4294901760
        %4382 = vmatpush.msra.mxu0 %v4381
        %v4383 = vand.u32 %v4356, 4294901760
        %4384 = vmatpush.msra.mxu0 %v4383
        %v4385 = vand.u32 %v4354, 4294901760
        %4386 = vmatpush.msra.mxu0 %v4385
        %v4387 = vand.u32 %v4352, 4294901760
        %4388 = vmatpush.msra.mxu0 %v4387
        %v4389 = vand.u32 %v4350, 4294901760
        %4390 = vmatpush.msra.mxu0 %v4389
        %v4391 = vand.u32 %v4348, 4294901760
        %4392 = vmatpush.msra.mxu0 %v4391
        %v4393 = vand.u32 %v4346, 4294901760
        %4394 = vmatpush.msra.mxu0 %v4393
        %v4395 = vand.u32 %v4344, 4294901760
        %4396 = vmatpush.msra.mxu0 %v4395
        %v4397 = vand.u32 %v4370, 4294901760
        %v4398 = vsub.f32 %v4370, %v4397
        %v4399 = vand.u32 %v4398, 4294901760
        %v4400 = vsub.f32 %v4398, %v4399
        %v4401 = vand.u32 %v4400, 4294901760
        %4402 = vmatmul.f32.gmra.mxu0 %v4401
        %v4403 = vpop.f32.mrf.mxu0
        %v4404 = vadd.f32 %v4367, %v4403
        %4405 = vdwg.mxu0
        %4406 = vmatpush.msra.mxu0 0.0
        %4407 = vmatpush.msra.mxu0 0.0
        %4408 = vmatpush.msra.mxu0 0.0
        %4409 = vmatpush.msra.mxu0 0.0
        %4410 = vmatpush.msra.mxu0 0.0
        %4411 = vmatpush.msra.mxu0 0.0
        %4412 = vmatpush.msra.mxu0 0.0
        %v4413 = vand.u32 %v4360, 4294901760
        %v4414 = vsub.f32 %v4360, %v4413
        %v4415 = vand.u32 %v4414, 4294901760
        %v4416 = vsub.f32 %v4414, %v4415
        %v4417 = vand.u32 %v4416, 4294901760
        %4418 = vmatpush.msra.mxu0 %v4417
        %v4419 = vand.u32 %v4358, 4294901760
        %v4420 = vsub.f32 %v4358, %v4419
        %v4421 = vand.u32 %v4420, 4294901760
        %v4422 = vsub.f32 %v4420, %v4421
        %v4423 = vand.u32 %v4422, 4294901760
        %4424 = vmatpush.msra.mxu0 %v4423
        %v4425 = vand.u32 %v4356, 4294901760
        %v4426 = vsub.f32 %v4356, %v4425
        %v4427 = vand.u32 %v4426, 4294901760
        %v4428 = vsub.f32 %v4426, %v4427
        %v4429 = vand.u32 %v4428, 4294901760
        %4430 = vmatpush.msra.mxu0 %v4429
        %v4431 = vand.u32 %v4354, 4294901760
        %v4432 = vsub.f32 %v4354, %v4431
        %v4433 = vand.u32 %v4432, 4294901760
        %v4434 = vsub.f32 %v4432, %v4433
        %v4435 = vand.u32 %v4434, 4294901760
        %4436 = vmatpush.msra.mxu0 %v4435
        %v4437 = vand.u32 %v4352, 4294901760
        %v4438 = vsub.f32 %v4352, %v4437
        %v4439 = vand.u32 %v4438, 4294901760
        %v4440 = vsub.f32 %v4438, %v4439
        %v4441 = vand.u32 %v4440, 4294901760
        %4442 = vmatpush.msra.mxu0 %v4441
        %v4443 = vand.u32 %v4350, 4294901760
        %v4444 = vsub.f32 %v4350, %v4443
        %v4445 = vand.u32 %v4444, 4294901760
        %v4446 = vsub.f32 %v4444, %v4445
        %v4447 = vand.u32 %v4446, 4294901760
        %4448 = vmatpush.msra.mxu0 %v4447
        %v4449 = vand.u32 %v4348, 4294901760
        %v4450 = vsub.f32 %v4348, %v4449
        %v4451 = vand.u32 %v4450, 4294901760
        %v4452 = vsub.f32 %v4450, %v4451
        %v4453 = vand.u32 %v4452, 4294901760
        %4454 = vmatpush.msra.mxu0 %v4453
        %v4455 = vand.u32 %v4346, 4294901760
        %v4456 = vsub.f32 %v4346, %v4455
        %v4457 = vand.u32 %v4456, 4294901760
        %v4458 = vsub.f32 %v4456, %v4457
        %v4459 = vand.u32 %v4458, 4294901760
        %4460 = vmatpush.msra.mxu0 %v4459
        %v4461 = vand.u32 %v4344, 4294901760
        %v4462 = vsub.f32 %v4344, %v4461
        %v4463 = vand.u32 %v4462, 4294901760
        %v4464 = vsub.f32 %v4462, %v4463
        %v4465 = vand.u32 %v4464, 4294901760
        %4466 = vmatpush.msra.mxu0 %v4465
        %v4467 = vand.u32 %v4370, 4294901760
        %4468 = vmatmul.f32.gmra.mxu0 %v4467
        %v4469 = vpop.f32.mrf.mxu0
        %v4470 = vadd.f32 %v4404, %v4469
        %4471 = vdwg.mxu0
        %4472 = vmatpush.msra.mxu0 0.0
        %4473 = vmatpush.msra.mxu0 0.0
        %4474 = vmatpush.msra.mxu0 0.0
        %4475 = vmatpush.msra.mxu0 0.0
        %4476 = vmatpush.msra.mxu0 0.0
        %4477 = vmatpush.msra.mxu0 0.0
        %4478 = vmatpush.msra.mxu0 0.0
        %v4479 = vand.u32 %v4360, 4294901760
        %v4480 = vsub.f32 %v4360, %v4479
        %4481 = vmatpush.msra.mxu0 %v4480
        %v4482 = vand.u32 %v4358, 4294901760
        %v4483 = vsub.f32 %v4358, %v4482
        %4484 = vmatpush.msra.mxu0 %v4483
        %v4485 = vand.u32 %v4356, 4294901760
        %v4486 = vsub.f32 %v4356, %v4485
        %4487 = vmatpush.msra.mxu0 %v4486
        %v4488 = vand.u32 %v4354, 4294901760
        %v4489 = vsub.f32 %v4354, %v4488
        %4490 = vmatpush.msra.mxu0 %v4489
        %v4491 = vand.u32 %v4352, 4294901760
        %v4492 = vsub.f32 %v4352, %v4491
        %4493 = vmatpush.msra.mxu0 %v4492
        %v4494 = vand.u32 %v4350, 4294901760
        %v4495 = vsub.f32 %v4350, %v4494
        %4496 = vmatpush.msra.mxu0 %v4495
        %v4497 = vand.u32 %v4348, 4294901760
        %v4498 = vsub.f32 %v4348, %v4497
        %4499 = vmatpush.msra.mxu0 %v4498
        %v4500 = vand.u32 %v4346, 4294901760
        %v4501 = vsub.f32 %v4346, %v4500
        %4502 = vmatpush.msra.mxu0 %v4501
        %v4503 = vand.u32 %v4344, 4294901760
        %v4504 = vsub.f32 %v4344, %v4503
        %4505 = vmatpush.msra.mxu0 %v4504
        %v4506 = vand.u32 %v4370, 4294901760
        %v4507 = vsub.f32 %v4370, %v4506
        %4508 = vmatmul.f32.gmra.mxu0 %v4507
        %v4509 = vpop.f32.mrf.mxu0
        %v4510 = vadd.f32 %v4470, %v4509
        %4511 = vdwg.mxu0
        %4512 = vmatpush.msra.mxu0 0.0
        %4513 = vmatpush.msra.mxu0 0.0
        %4514 = vmatpush.msra.mxu0 0.0
        %4515 = vmatpush.msra.mxu0 0.0
        %4516 = vmatpush.msra.mxu0 0.0
        %4517 = vmatpush.msra.mxu0 0.0
        %4518 = vmatpush.msra.mxu0 0.0
        %v4519 = vand.u32 %v4360, 4294901760
        %4520 = vmatpush.msra.mxu0 %v4519
        %v4521 = vand.u32 %v4358, 4294901760
        %4522 = vmatpush.msra.mxu0 %v4521
        %v4523 = vand.u32 %v4356, 4294901760
        %4524 = vmatpush.msra.mxu0 %v4523
        %v4525 = vand.u32 %v4354, 4294901760
        %4526 = vmatpush.msra.mxu0 %v4525
        %v4527 = vand.u32 %v4352, 4294901760
        %4528 = vmatpush.msra.mxu0 %v4527
        %v4529 = vand.u32 %v4350, 4294901760
        %4530 = vmatpush.msra.mxu0 %v4529
        %v4531 = vand.u32 %v4348, 4294901760
        %4532 = vmatpush.msra.mxu0 %v4531
        %v4533 = vand.u32 %v4346, 4294901760
        %4534 = vmatpush.msra.mxu0 %v4533
        %v4535 = vand.u32 %v4344, 4294901760
        %4536 = vmatpush.msra.mxu0 %v4535
        %v4537 = vand.u32 %v4370, 4294901760
        %v4538 = vsub.f32 %v4370, %v4537
        %v4539 = vand.u32 %v4538, 4294901760
        %4540 = vmatmul.f32.gmra.mxu0 %v4539
        %v4541 = vpop.f32.mrf.mxu0
        %v4542 = vadd.f32 %v4510, %v4541
        %4543 = vdwg.mxu0
        %4544 = vmatpush.msra.mxu0 0.0
        %4545 = vmatpush.msra.mxu0 0.0
        %4546 = vmatpush.msra.mxu0 0.0
        %4547 = vmatpush.msra.mxu0 0.0
        %4548 = vmatpush.msra.mxu0 0.0
        %4549 = vmatpush.msra.mxu0 0.0
        %4550 = vmatpush.msra.mxu0 0.0
        %v4551 = vand.u32 %v4360, 4294901760
        %v4552 = vsub.f32 %v4360, %v4551
        %v4553 = vand.u32 %v4552, 4294901760
        %4554 = vmatpush.msra.mxu0 %v4553
        %v4555 = vand.u32 %v4358, 4294901760
        %v4556 = vsub.f32 %v4358, %v4555
        %v4557 = vand.u32 %v4556, 4294901760
        %4558 = vmatpush.msra.mxu0 %v4557
        %v4559 = vand.u32 %v4356, 4294901760
        %v4560 = vsub.f32 %v4356, %v4559
        %v4561 = vand.u32 %v4560, 4294901760
        %4562 = vmatpush.msra.mxu0 %v4561
        %v4563 = vand.u32 %v4354, 4294901760
        %v4564 = vsub.f32 %v4354, %v4563
        %v4565 = vand.u32 %v4564, 4294901760
        %4566 = vmatpush.msra.mxu0 %v4565
        %v4567 = vand.u32 %v4352, 4294901760
        %v4568 = vsub.f32 %v4352, %v4567
        %v4569 = vand.u32 %v4568, 4294901760
        %4570 = vmatpush.msra.mxu0 %v4569
        %v4571 = vand.u32 %v4350, 4294901760
        %v4572 = vsub.f32 %v4350, %v4571
        %v4573 = vand.u32 %v4572, 4294901760
        %4574 = vmatpush.msra.mxu0 %v4573
        %v4575 = vand.u32 %v4348, 4294901760
        %v4576 = vsub.f32 %v4348, %v4575
        %v4577 = vand.u32 %v4576, 4294901760
        %4578 = vmatpush.msra.mxu0 %v4577
        %v4579 = vand.u32 %v4346, 4294901760
        %v4580 = vsub.f32 %v4346, %v4579
        %v4581 = vand.u32 %v4580, 4294901760
        %4582 = vmatpush.msra.mxu0 %v4581
        %v4583 = vand.u32 %v4344, 4294901760
        %v4584 = vsub.f32 %v4344, %v4583
        %v4585 = vand.u32 %v4584, 4294901760
        %4586 = vmatpush.msra.mxu0 %v4585
        %v4587 = vand.u32 %v4370, 4294901760
        %4588 = vmatmul.f32.gmra.mxu0 %v4587
        %v4589 = vpop.f32.mrf.mxu0
        %v4590 = vadd.f32 %v4542, %v4589
        %4591 = vdwg.mxu0
        %4592 = vmatpush.msra.mxu0 0.0
        %4593 = vmatpush.msra.mxu0 0.0
        %4594 = vmatpush.msra.mxu0 0.0
        %4595 = vmatpush.msra.mxu0 0.0
        %4596 = vmatpush.msra.mxu0 0.0
        %4597 = vmatpush.msra.mxu0 0.0
        %4598 = vmatpush.msra.mxu0 0.0
        %v4599 = vand.u32 %v4360, 4294901760
        %4600 = vmatpush.msra.mxu0 %v4599
        %v4601 = vand.u32 %v4358, 4294901760
        %4602 = vmatpush.msra.mxu0 %v4601
        %v4603 = vand.u32 %v4356, 4294901760
        %4604 = vmatpush.msra.mxu0 %v4603
        %v4605 = vand.u32 %v4354, 4294901760
        %4606 = vmatpush.msra.mxu0 %v4605
        %v4607 = vand.u32 %v4352, 4294901760
        %4608 = vmatpush.msra.mxu0 %v4607
        %v4609 = vand.u32 %v4350, 4294901760
        %4610 = vmatpush.msra.mxu0 %v4609
        %v4611 = vand.u32 %v4348, 4294901760
        %4612 = vmatpush.msra.mxu0 %v4611
        %v4613 = vand.u32 %v4346, 4294901760
        %4614 = vmatpush.msra.mxu0 %v4613
        %v4615 = vand.u32 %v4344, 4294901760
        %4616 = vmatpush.msra.mxu0 %v4615
        %v4617 = vand.u32 %v4370, 4294901760
        %4618 = vmatmul.f32.gmra.mxu0 %v4617
        %v4619 = vpop.f32.mrf.mxu0
        %v4620 = vadd.f32 %v4590, %v4619
        %4621 = vdwg.mxu0
        %4622 = vmatpush.msra.mxu0 0.0
        %4623 = vmatpush.msra.mxu0 0.0
        %4624 = vmatpush.msra.mxu0 0.0
        %4625 = vmatpush.msra.mxu0 0.0
        %4626 = vmatpush.msra.mxu0 0.0
        %4627 = vmatpush.msra.mxu0 0.0
        %4628 = vmatpush.msra.mxu0 0.0
        %v4629 = vand.u32 %v4361, 4294901760
        %4630 = vmatpush.msra.mxu0 %v4629
        %v4631 = vand.u32 %v4359, 4294901760
        %4632 = vmatpush.msra.mxu0 %v4631
        %v4633 = vand.u32 %v4357, 4294901760
        %4634 = vmatpush.msra.mxu0 %v4633
        %v4635 = vand.u32 %v4355, 4294901760
        %4636 = vmatpush.msra.mxu0 %v4635
        %v4637 = vand.u32 %v4353, 4294901760
        %4638 = vmatpush.msra.mxu0 %v4637
        %v4639 = vand.u32 %v4351, 4294901760
        %4640 = vmatpush.msra.mxu0 %v4639
        %v4641 = vand.u32 %v4349, 4294901760
        %4642 = vmatpush.msra.mxu0 %v4641
        %v4643 = vand.u32 %v4347, 4294901760
        %4644 = vmatpush.msra.mxu0 %v4643
        %v4645 = vand.u32 %v4345, 4294901760
        %4646 = vmatpush.msra.mxu0 %v4645
        %v4647 = vand.u32 %v4370, 4294901760
        %v4648 = vsub.f32 %v4370, %v4647
        %v4649 = vand.u32 %v4648, 4294901760
        %v4650 = vsub.f32 %v4648, %v4649
        %v4651 = vand.u32 %v4650, 4294901760
        %4652 = vmatmul.f32.gmra.mxu0 %v4651
        %v4653 = vpop.f32.mrf.mxu0
        %v4654 = vadd.f32 %v4367, %v4653
        %4655 = vdwg.mxu0
        %4656 = vmatpush.msra.mxu0 0.0
        %4657 = vmatpush.msra.mxu0 0.0
        %4658 = vmatpush.msra.mxu0 0.0
        %4659 = vmatpush.msra.mxu0 0.0
        %4660 = vmatpush.msra.mxu0 0.0
        %4661 = vmatpush.msra.mxu0 0.0
        %4662 = vmatpush.msra.mxu0 0.0
        %v4663 = vand.u32 %v4361, 4294901760
        %v4664 = vsub.f32 %v4361, %v4663
        %v4665 = vand.u32 %v4664, 4294901760
        %v4666 = vsub.f32 %v4664, %v4665
        %v4667 = vand.u32 %v4666, 4294901760
        %4668 = vmatpush.msra.mxu0 %v4667
        %v4669 = vand.u32 %v4359, 4294901760
        %v4670 = vsub.f32 %v4359, %v4669
        %v4671 = vand.u32 %v4670, 4294901760
        %v4672 = vsub.f32 %v4670, %v4671
        %v4673 = vand.u32 %v4672, 4294901760
        %4674 = vmatpush.msra.mxu0 %v4673
        %v4675 = vand.u32 %v4357, 4294901760
        %v4676 = vsub.f32 %v4357, %v4675
        %v4677 = vand.u32 %v4676, 4294901760
        %v4678 = vsub.f32 %v4676, %v4677
        %v4679 = vand.u32 %v4678, 4294901760
        %4680 = vmatpush.msra.mxu0 %v4679
        %v4681 = vand.u32 %v4355, 4294901760
        %v4682 = vsub.f32 %v4355, %v4681
        %v4683 = vand.u32 %v4682, 4294901760
        %v4684 = vsub.f32 %v4682, %v4683
        %v4685 = vand.u32 %v4684, 4294901760
        %4686 = vmatpush.msra.mxu0 %v4685
        %v4687 = vand.u32 %v4353, 4294901760
        %v4688 = vsub.f32 %v4353, %v4687
        %v4689 = vand.u32 %v4688, 4294901760
        %v4690 = vsub.f32 %v4688, %v4689
        %v4691 = vand.u32 %v4690, 4294901760
        %4692 = vmatpush.msra.mxu0 %v4691
        %v4693 = vand.u32 %v4351, 4294901760
        %v4694 = vsub.f32 %v4351, %v4693
        %v4695 = vand.u32 %v4694, 4294901760
        %v4696 = vsub.f32 %v4694, %v4695
        %v4697 = vand.u32 %v4696, 4294901760
        %4698 = vmatpush.msra.mxu0 %v4697
        %v4699 = vand.u32 %v4349, 4294901760
        %v4700 = vsub.f32 %v4349, %v4699
        %v4701 = vand.u32 %v4700, 4294901760
        %v4702 = vsub.f32 %v4700, %v4701
        %v4703 = vand.u32 %v4702, 4294901760
        %4704 = vmatpush.msra.mxu0 %v4703
        %v4705 = vand.u32 %v4347, 4294901760
        %v4706 = vsub.f32 %v4347, %v4705
        %v4707 = vand.u32 %v4706, 4294901760
        %v4708 = vsub.f32 %v4706, %v4707
        %v4709 = vand.u32 %v4708, 4294901760
        %4710 = vmatpush.msra.mxu0 %v4709
        %v4711 = vand.u32 %v4345, 4294901760
        %v4712 = vsub.f32 %v4345, %v4711
        %v4713 = vand.u32 %v4712, 4294901760
        %v4714 = vsub.f32 %v4712, %v4713
        %v4715 = vand.u32 %v4714, 4294901760
        %4716 = vmatpush.msra.mxu0 %v4715
        %v4717 = vand.u32 %v4370, 4294901760
        %4718 = vmatmul.f32.gmra.mxu0 %v4717
        %v4719 = vpop.f32.mrf.mxu0
        %v4720 = vadd.f32 %v4654, %v4719
        %4721 = vdwg.mxu0
        %4722 = vmatpush.msra.mxu0 0.0
        %4723 = vmatpush.msra.mxu0 0.0
        %4724 = vmatpush.msra.mxu0 0.0
        %4725 = vmatpush.msra.mxu0 0.0
        %4726 = vmatpush.msra.mxu0 0.0
        %4727 = vmatpush.msra.mxu0 0.0
        %4728 = vmatpush.msra.mxu0 0.0
        %v4729 = vand.u32 %v4361, 4294901760
        %v4730 = vsub.f32 %v4361, %v4729
        %4731 = vmatpush.msra.mxu0 %v4730
        %v4732 = vand.u32 %v4359, 4294901760
        %v4733 = vsub.f32 %v4359, %v4732
        %4734 = vmatpush.msra.mxu0 %v4733
        %v4735 = vand.u32 %v4357, 4294901760
        %v4736 = vsub.f32 %v4357, %v4735
        %4737 = vmatpush.msra.mxu0 %v4736
        %v4738 = vand.u32 %v4355, 4294901760
        %v4739 = vsub.f32 %v4355, %v4738
        %4740 = vmatpush.msra.mxu0 %v4739
        %v4741 = vand.u32 %v4353, 4294901760
        %v4742 = vsub.f32 %v4353, %v4741
        %4743 = vmatpush.msra.mxu0 %v4742
        %v4744 = vand.u32 %v4351, 4294901760
        %v4745 = vsub.f32 %v4351, %v4744
        %4746 = vmatpush.msra.mxu0 %v4745
        %v4747 = vand.u32 %v4349, 4294901760
        %v4748 = vsub.f32 %v4349, %v4747
        %4749 = vmatpush.msra.mxu0 %v4748
        %v4750 = vand.u32 %v4347, 4294901760
        %v4751 = vsub.f32 %v4347, %v4750
        %4752 = vmatpush.msra.mxu0 %v4751
        %v4753 = vand.u32 %v4345, 4294901760
        %v4754 = vsub.f32 %v4345, %v4753
        %4755 = vmatpush.msra.mxu0 %v4754
        %v4756 = vand.u32 %v4370, 4294901760
        %v4757 = vsub.f32 %v4370, %v4756
        %4758 = vmatmul.f32.gmra.mxu0 %v4757
        %v4759 = vpop.f32.mrf.mxu0
        %v4760 = vadd.f32 %v4720, %v4759
        %4761 = vdwg.mxu0
        %4762 = vmatpush.msra.mxu0 0.0
        %4763 = vmatpush.msra.mxu0 0.0
        %4764 = vmatpush.msra.mxu0 0.0
        %4765 = vmatpush.msra.mxu0 0.0
        %4766 = vmatpush.msra.mxu0 0.0
        %4767 = vmatpush.msra.mxu0 0.0
        %4768 = vmatpush.msra.mxu0 0.0
        %v4769 = vand.u32 %v4361, 4294901760
        %4770 = vmatpush.msra.mxu0 %v4769
        %v4771 = vand.u32 %v4359, 4294901760
        %4772 = vmatpush.msra.mxu0 %v4771
        %v4773 = vand.u32 %v4357, 4294901760
        %4774 = vmatpush.msra.mxu0 %v4773
        %v4775 = vand.u32 %v4355, 4294901760
        %4776 = vmatpush.msra.mxu0 %v4775
        %v4777 = vand.u32 %v4353, 4294901760
        %4778 = vmatpush.msra.mxu0 %v4777
        %v4779 = vand.u32 %v4351, 4294901760
        %4780 = vmatpush.msra.mxu0 %v4779
        %v4781 = vand.u32 %v4349, 4294901760
        %4782 = vmatpush.msra.mxu0 %v4781
        %v4783 = vand.u32 %v4347, 4294901760
        %4784 = vmatpush.msra.mxu0 %v4783
        %v4785 = vand.u32 %v4345, 4294901760
        %4786 = vmatpush.msra.mxu0 %v4785
        %v4787 = vand.u32 %v4370, 4294901760
        %v4788 = vsub.f32 %v4370, %v4787
        %v4789 = vand.u32 %v4788, 4294901760
        %4790 = vmatmul.f32.gmra.mxu0 %v4789
        %v4791 = vpop.f32.mrf.mxu0
        %v4792 = vadd.f32 %v4760, %v4791
        %4793 = vdwg.mxu0
        %4794 = vmatpush.msra.mxu0 0.0
        %4795 = vmatpush.msra.mxu0 0.0
        %4796 = vmatpush.msra.mxu0 0.0
        %4797 = vmatpush.msra.mxu0 0.0
        %4798 = vmatpush.msra.mxu0 0.0
        %4799 = vmatpush.msra.mxu0 0.0
        %4800 = vmatpush.msra.mxu0 0.0
        %v4801 = vand.u32 %v4361, 4294901760
        %v4802 = vsub.f32 %v4361, %v4801
        %v4803 = vand.u32 %v4802, 4294901760
        %4804 = vmatpush.msra.mxu0 %v4803
        %v4805 = vand.u32 %v4359, 4294901760
        %v4806 = vsub.f32 %v4359, %v4805
        %v4807 = vand.u32 %v4806, 4294901760
        %4808 = vmatpush.msra.mxu0 %v4807
        %v4809 = vand.u32 %v4357, 4294901760
        %v4810 = vsub.f32 %v4357, %v4809
        %v4811 = vand.u32 %v4810, 4294901760
        %4812 = vmatpush.msra.mxu0 %v4811
        %v4813 = vand.u32 %v4355, 4294901760
        %v4814 = vsub.f32 %v4355, %v4813
        %v4815 = vand.u32 %v4814, 4294901760
        %4816 = vmatpush.msra.mxu0 %v4815
        %v4817 = vand.u32 %v4353, 4294901760
        %v4818 = vsub.f32 %v4353, %v4817
        %v4819 = vand.u32 %v4818, 4294901760
        %4820 = vmatpush.msra.mxu0 %v4819
        %v4821 = vand.u32 %v4351, 4294901760
        %v4822 = vsub.f32 %v4351, %v4821
        %v4823 = vand.u32 %v4822, 4294901760
        %4824 = vmatpush.msra.mxu0 %v4823
        %v4825 = vand.u32 %v4349, 4294901760
        %v4826 = vsub.f32 %v4349, %v4825
        %v4827 = vand.u32 %v4826, 4294901760
        %4828 = vmatpush.msra.mxu0 %v4827
        %v4829 = vand.u32 %v4347, 4294901760
        %v4830 = vsub.f32 %v4347, %v4829
        %v4831 = vand.u32 %v4830, 4294901760
        %4832 = vmatpush.msra.mxu0 %v4831
        %v4833 = vand.u32 %v4345, 4294901760
        %v4834 = vsub.f32 %v4345, %v4833
        %v4835 = vand.u32 %v4834, 4294901760
        %4836 = vmatpush.msra.mxu0 %v4835
        %v4837 = vand.u32 %v4370, 4294901760
        %4838 = vmatmul.f32.gmra.mxu0 %v4837
        %v4839 = vpop.f32.mrf.mxu0
        %v4840 = vadd.f32 %v4792, %v4839
        %4841 = vdwg.mxu0
        %4842 = vmatpush.msra.mxu0 0.0
        %4843 = vmatpush.msra.mxu0 0.0
        %4844 = vmatpush.msra.mxu0 0.0
        %4845 = vmatpush.msra.mxu0 0.0
        %4846 = vmatpush.msra.mxu0 0.0
        %4847 = vmatpush.msra.mxu0 0.0
        %4848 = vmatpush.msra.mxu0 0.0
        %v4849 = vand.u32 %v4361, 4294901760
        %4850 = vmatpush.msra.mxu0 %v4849
        %v4851 = vand.u32 %v4359, 4294901760
        %4852 = vmatpush.msra.mxu0 %v4851
        %v4853 = vand.u32 %v4357, 4294901760
        %4854 = vmatpush.msra.mxu0 %v4853
        %v4855 = vand.u32 %v4355, 4294901760
        %4856 = vmatpush.msra.mxu0 %v4855
        %v4857 = vand.u32 %v4353, 4294901760
        %4858 = vmatpush.msra.mxu0 %v4857
        %v4859 = vand.u32 %v4351, 4294901760
        %4860 = vmatpush.msra.mxu0 %v4859
        %v4861 = vand.u32 %v4349, 4294901760
        %4862 = vmatpush.msra.mxu0 %v4861
        %v4863 = vand.u32 %v4347, 4294901760
        %4864 = vmatpush.msra.mxu0 %v4863
        %v4865 = vand.u32 %v4345, 4294901760
        %4866 = vmatpush.msra.mxu0 %v4865
        %v4867 = vand.u32 %v4370, 4294901760
        %4868 = vmatmul.f32.gmra.mxu0 %v4867
        %v4869 = vpop.f32.mrf.mxu0
        %v4870 = vadd.f32 %v4840, %v4869
        %4871 = vdwg.mxu0
        %vm4872 = vcmp.ge.f32.partialorder %v4620, 0.0
        %vm4873 = vcmp.ge.f32.partialorder %v4870, 0.0
        %v4874 = vmul.f32 %v4620, 0.01
        %v4875 = vmul.f32 %v4870, 0.01
        %v4876 = vsel %vm4872, %v4620, %v4874
        %v4877 = vsel %vm4873, %v4870, %v4875
        %4878 = vrot.lane.b32.xlu0 %v4876, 17
        %v4879 = vpop.permute.xlu0 %4878
        %4880 = vrot.lane.b32.xlu0 %v4877, 17
        %v4881 = vpop.permute.xlu0 %4880
        %v4882 = vsel %vm238, %v4879, %v4881
        %v4883 = vsel %vm238, %v4881, %v4879
        %v4884 = vld [vmem:[#allocation5] sm:$0xff]
        %v4885 = vld [vmem:[#allocation5 + $0x8] sm:$0xff]
        %v4886 = vmul.f32 %v4883, %v4884
        %v4887 = vmul.f32 %v4882, %v4885
        %4888 = vst [vmem:[#allocation2] sm:$0xff] %v4886
        %4889 = vst [vmem:[#allocation2 + $0x8] sm:$0xff] %v4887
        %4890 = vrot.lane.b32.xlu0 %v4876, 16
        %v4891 = vpop.permute.xlu0 %4890
        %4892 = vrot.lane.b32.xlu0 %v4877, 16
        %v4893 = vpop.permute.xlu0 %4892
        %v4894 = vsel %vm251, %v4891, %v4893
        %v4895 = vsel %vm251, %v4893, %v4891
        %v4896 = vld [vmem:[%s254] sm:$0xff]
        %v4897 = vld [vmem:[%s254 + $0x8] sm:$0xff]
        %v4898 = vmul.f32 %v4895, %v4896
        %v4899 = vmul.f32 %v4894, %v4897
        %4900 = vst [vmem:[#allocation2 + $0x10] sm:$0xff] %v4898
        %4901 = vst [vmem:[#allocation2 + $0x18] sm:$0xff] %v4899
        %4902 = vrot.lane.b32.xlu0 %v4876, 15
        %v4903 = vpop.permute.xlu0 %4902
        %4904 = vrot.lane.b32.xlu0 %v4877, 15
        %v4905 = vpop.permute.xlu0 %4904
        %v4906 = vsel %vm265, %v4903, %v4905
        %v4907 = vsel %vm265, %v4905, %v4903
        %v4908 = vld [vmem:[%s268] sm:$0xff]
        %v4909 = vld [vmem:[%s268 + $0x8] sm:$0xff]
        %v4910 = vmul.f32 %v4907, %v4908
        %v4911 = vmul.f32 %v4906, %v4909
        %4912 = vst [vmem:[#allocation2 + $0x20] sm:$0xff] %v4910
        %4913 = vst [vmem:[#allocation2 + $0x28] sm:$0xff] %v4911
        %4914 = vrot.lane.b32.xlu0 %v4876, 1
        %v4915 = vpop.permute.xlu0 %4914
        %4916 = vrot.lane.b32.xlu0 %v4877, 1
        %v4917 = vpop.permute.xlu0 %4916
        %v4918 = vsel %vm279, %v4915, %v4917
        %v4919 = vsel %vm279, %v4917, %v4915
        %v4920 = vld [vmem:[%s282] sm:$0xff]
        %v4921 = vld [vmem:[%s282 + $0x8] sm:$0xff]
        %v4922 = vmul.f32 %v4919, %v4920
        %v4923 = vmul.f32 %v4918, %v4921
        %4924 = vst [vmem:[#allocation2 + $0x30] sm:$0xff] %v4922
        %4925 = vst [vmem:[#allocation2 + $0x38] sm:$0xff] %v4923
        %4926 = vst [vmem:[#allocation2 + $0x40] sm:$0xff] %v4876
        %4927 = vst [vmem:[#allocation2 + $0x48] sm:$0xff] %v4877
        %4928 = vrot.lane.b32.xlu0 %v4876, 127
        %v4929 = vpop.permute.xlu0 %4928
        %4930 = vrot.lane.b32.xlu0 %v4877, 127
        %v4931 = vpop.permute.xlu0 %4930
        %v4932 = vsel %vm295, %v4929, %v4931
        %v4933 = vsel %vm295, %v4931, %v4929
        %v4934 = vld [vmem:[%s298] sm:$0xff]
        %v4935 = vld [vmem:[%s298 + $0x8] sm:$0xff]
        %v4936 = vmul.f32 %v4932, %v4934
        %v4937 = vmul.f32 %v4933, %v4935
        %4938 = vst [vmem:[#allocation2 + $0x50] sm:$0xff] %v4936
        %4939 = vst [vmem:[#allocation2 + $0x58] sm:$0xff] %v4937
        %4940 = vrot.lane.b32.xlu0 %v4876, 113
        %v4941 = vpop.permute.xlu0 %4940
        %4942 = vrot.lane.b32.xlu0 %v4877, 113
        %v4943 = vpop.permute.xlu0 %4942
        %v4944 = vsel %vm309, %v4941, %v4943
        %v4945 = vsel %vm309, %v4943, %v4941
        %v4946 = vld [vmem:[%s312] sm:$0xff]
        %v4947 = vld [vmem:[%s312 + $0x8] sm:$0xff]
        %v4948 = vmul.f32 %v4944, %v4946
        %v4949 = vmul.f32 %v4945, %v4947
        %4950 = vst [vmem:[#allocation2 + $0x60] sm:$0xff] %v4948
        %4951 = vst [vmem:[#allocation2 + $0x68] sm:$0xff] %v4949
        %4952 = vrot.lane.b32.xlu0 %v4876, 112
        %v4953 = vpop.permute.xlu0 %4952
        %4954 = vrot.lane.b32.xlu0 %v4877, 112
        %v4955 = vpop.permute.xlu0 %4954
        %v4956 = vsel %vm323, %v4953, %v4955
        %v4957 = vsel %vm323, %v4955, %v4953
        %v4958 = vld [vmem:[%s326] sm:$0xff]
        %v4959 = vld [vmem:[%s326 + $0x8] sm:$0xff]
        %v4960 = vmul.f32 %v4956, %v4958
        %v4961 = vmul.f32 %v4957, %v4959
        %4962 = vst [vmem:[#allocation2 + $0x70] sm:$0xff] %v4960
        %4963 = vst [vmem:[#allocation2 + $0x78] sm:$0xff] %v4961
        %4964 = vrot.lane.b32.xlu0 %v4876, 111
        %v4965 = vpop.permute.xlu0 %4964
        %4966 = vrot.lane.b32.xlu0 %v4877, 111
        %v4967 = vpop.permute.xlu0 %4966
        %v4968 = vsel %vm337, %v4965, %v4967
        %v4969 = vsel %vm337, %v4967, %v4965
        %v4970 = vld [vmem:[%s340] sm:$0xff]
        %v4971 = vld [vmem:[%s340 + $0x8] sm:$0xff]
        %v4972 = vmul.f32 %v4968, %v4970
        %v4973 = vmul.f32 %v4969, %v4971
        %4974 = vst [vmem:[#allocation2 + $0x80] sm:$0xff] %v4972
        %4975 = vst [vmem:[#allocation2 + $0x88] sm:$0xff] %v4973
        %s4976 = scalar_lea.vmem [#allocation3], 160
        %v4977 = vld [vmem:[%s4976] sm:$0xff]
        %v4978 = vld [vmem:[#allocation2] sm:$0xff]
        %v4979 = vld [vmem:[#allocation2 + $0x8] sm:$0xff]
        %v4980 = vld [vmem:[#allocation2 + $0x10] sm:$0xff]
        %v4981 = vld [vmem:[#allocation2 + $0x18] sm:$0xff]
        %v4982 = vld [vmem:[#allocation2 + $0x20] sm:$0xff]
        %v4983 = vld [vmem:[#allocation2 + $0x28] sm:$0xff]
        %v4984 = vld [vmem:[#allocation2 + $0x30] sm:$0xff]
        %v4985 = vld [vmem:[#allocation2 + $0x38] sm:$0xff]
        %v4986 = vld [vmem:[#allocation2 + $0x40] sm:$0xff]
        %v4987 = vld [vmem:[#allocation2 + $0x48] sm:$0xff]
        %v4988 = vld [vmem:[#allocation2 + $0x50] sm:$0xff]
        %v4989 = vld [vmem:[#allocation2 + $0x58] sm:$0xff]
        %v4990 = vld [vmem:[#allocation2 + $0x60] sm:$0xff]
        %v4991 = vld [vmem:[#allocation2 + $0x68] sm:$0xff]
        %v4992 = vld [vmem:[#allocation2 + $0x70] sm:$0xff]
        %v4993 = vld [vmem:[#allocation2 + $0x78] sm:$0xff]
        %v4994 = vld [vmem:[#allocation2 + $0x80] sm:$0xff]
        %v4995 = vld [vmem:[#allocation2 + $0x88] sm:$0xff]
        %s4996 = scalar_lea.vmem %s2, 80
        %v4997 = vld [vmem:[%s4996] sm:$0xff]
        %4999 = vset.pattern.permute.xlu0 0
        %5000 = vperm.xlu0 %4999, %v4997
        %v5001 = vpop.permute.xlu0 %5000
        %v5004 = vsel %vm379, %v4977, 0
        %5006 = vmatpush.msra.mxu0 0.0
        %5007 = vmatpush.msra.mxu0 0.0
        %5008 = vmatpush.msra.mxu0 0.0
        %5009 = vmatpush.msra.mxu0 0.0
        %5010 = vmatpush.msra.mxu0 0.0
        %5011 = vmatpush.msra.mxu0 0.0
        %5012 = vmatpush.msra.mxu0 0.0
        %v5013 = vand.u32 %v4994, 4294901760
        %5014 = vmatpush.msra.mxu0 %v5013
        %v5015 = vand.u32 %v4992, 4294901760
        %5016 = vmatpush.msra.mxu0 %v5015
        %v5017 = vand.u32 %v4990, 4294901760
        %5018 = vmatpush.msra.mxu0 %v5017
        %v5019 = vand.u32 %v4988, 4294901760
        %5020 = vmatpush.msra.mxu0 %v5019
        %v5021 = vand.u32 %v4986, 4294901760
        %5022 = vmatpush.msra.mxu0 %v5021
        %v5023 = vand.u32 %v4984, 4294901760
        %5024 = vmatpush.msra.mxu0 %v5023
        %v5025 = vand.u32 %v4982, 4294901760
        %5026 = vmatpush.msra.mxu0 %v5025
        %v5027 = vand.u32 %v4980, 4294901760
        %5028 = vmatpush.msra.mxu0 %v5027
        %v5029 = vand.u32 %v4978, 4294901760
        %5030 = vmatpush.msra.mxu0 %v5029
        %v5031 = vand.u32 %v5004, 4294901760
        %v5032 = vsub.f32 %v5004, %v5031
        %v5033 = vand.u32 %v5032, 4294901760
        %v5034 = vsub.f32 %v5032, %v5033
        %v5035 = vand.u32 %v5034, 4294901760
        %5036 = vmatmul.f32.gmra.mxu0 %v5035
        %v5037 = vpop.f32.mrf.mxu0
        %v5038 = vadd.f32 %v5001, %v5037
        %5039 = vdwg.mxu0
        %5040 = vmatpush.msra.mxu0 0.0
        %5041 = vmatpush.msra.mxu0 0.0
        %5042 = vmatpush.msra.mxu0 0.0
        %5043 = vmatpush.msra.mxu0 0.0
        %5044 = vmatpush.msra.mxu0 0.0
        %5045 = vmatpush.msra.mxu0 0.0
        %5046 = vmatpush.msra.mxu0 0.0
        %v5047 = vand.u32 %v4994, 4294901760
        %v5048 = vsub.f32 %v4994, %v5047
        %v5049 = vand.u32 %v5048, 4294901760
        %v5050 = vsub.f32 %v5048, %v5049
        %v5051 = vand.u32 %v5050, 4294901760
        %5052 = vmatpush.msra.mxu0 %v5051
        %v5053 = vand.u32 %v4992, 4294901760
        %v5054 = vsub.f32 %v4992, %v5053
        %v5055 = vand.u32 %v5054, 4294901760
        %v5056 = vsub.f32 %v5054, %v5055
        %v5057 = vand.u32 %v5056, 4294901760
        %5058 = vmatpush.msra.mxu0 %v5057
        %v5059 = vand.u32 %v4990, 4294901760
        %v5060 = vsub.f32 %v4990, %v5059
        %v5061 = vand.u32 %v5060, 4294901760
        %v5062 = vsub.f32 %v5060, %v5061
        %v5063 = vand.u32 %v5062, 4294901760
        %5064 = vmatpush.msra.mxu0 %v5063
        %v5065 = vand.u32 %v4988, 4294901760
        %v5066 = vsub.f32 %v4988, %v5065
        %v5067 = vand.u32 %v5066, 4294901760
        %v5068 = vsub.f32 %v5066, %v5067
        %v5069 = vand.u32 %v5068, 4294901760
        %5070 = vmatpush.msra.mxu0 %v5069
        %v5071 = vand.u32 %v4986, 4294901760
        %v5072 = vsub.f32 %v4986, %v5071
        %v5073 = vand.u32 %v5072, 4294901760
        %v5074 = vsub.f32 %v5072, %v5073
        %v5075 = vand.u32 %v5074, 4294901760
        %5076 = vmatpush.msra.mxu0 %v5075
        %v5077 = vand.u32 %v4984, 4294901760
        %v5078 = vsub.f32 %v4984, %v5077
        %v5079 = vand.u32 %v5078, 4294901760
        %v5080 = vsub.f32 %v5078, %v5079
        %v5081 = vand.u32 %v5080, 4294901760
        %5082 = vmatpush.msra.mxu0 %v5081
        %v5083 = vand.u32 %v4982, 4294901760
        %v5084 = vsub.f32 %v4982, %v5083
        %v5085 = vand.u32 %v5084, 4294901760
        %v5086 = vsub.f32 %v5084, %v5085
        %v5087 = vand.u32 %v5086, 4294901760
        %5088 = vmatpush.msra.mxu0 %v5087
        %v5089 = vand.u32 %v4980, 4294901760
        %v5090 = vsub.f32 %v4980, %v5089
        %v5091 = vand.u32 %v5090, 4294901760
        %v5092 = vsub.f32 %v5090, %v5091
        %v5093 = vand.u32 %v5092, 4294901760
        %5094 = vmatpush.msra.mxu0 %v5093
        %v5095 = vand.u32 %v4978, 4294901760
        %v5096 = vsub.f32 %v4978, %v5095
        %v5097 = vand.u32 %v5096, 4294901760
        %v5098 = vsub.f32 %v5096, %v5097
        %v5099 = vand.u32 %v5098, 4294901760
        %5100 = vmatpush.msra.mxu0 %v5099
        %v5101 = vand.u32 %v5004, 4294901760
        %5102 = vmatmul.f32.gmra.mxu0 %v5101
        %v5103 = vpop.f32.mrf.mxu0
        %v5104 = vadd.f32 %v5038, %v5103
        %5105 = vdwg.mxu0
        %5106 = vmatpush.msra.mxu0 0.0
        %5107 = vmatpush.msra.mxu0 0.0
        %5108 = vmatpush.msra.mxu0 0.0
        %5109 = vmatpush.msra.mxu0 0.0
        %5110 = vmatpush.msra.mxu0 0.0
        %5111 = vmatpush.msra.mxu0 0.0
        %5112 = vmatpush.msra.mxu0 0.0
        %v5113 = vand.u32 %v4994, 4294901760
        %v5114 = vsub.f32 %v4994, %v5113
        %5115 = vmatpush.msra.mxu0 %v5114
        %v5116 = vand.u32 %v4992, 4294901760
        %v5117 = vsub.f32 %v4992, %v5116
        %5118 = vmatpush.msra.mxu0 %v5117
        %v5119 = vand.u32 %v4990, 4294901760
        %v5120 = vsub.f32 %v4990, %v5119
        %5121 = vmatpush.msra.mxu0 %v5120
        %v5122 = vand.u32 %v4988, 4294901760
        %v5123 = vsub.f32 %v4988, %v5122
        %5124 = vmatpush.msra.mxu0 %v5123
        %v5125 = vand.u32 %v4986, 4294901760
        %v5126 = vsub.f32 %v4986, %v5125
        %5127 = vmatpush.msra.mxu0 %v5126
        %v5128 = vand.u32 %v4984, 4294901760
        %v5129 = vsub.f32 %v4984, %v5128
        %5130 = vmatpush.msra.mxu0 %v5129
        %v5131 = vand.u32 %v4982, 4294901760
        %v5132 = vsub.f32 %v4982, %v5131
        %5133 = vmatpush.msra.mxu0 %v5132
        %v5134 = vand.u32 %v4980, 4294901760
        %v5135 = vsub.f32 %v4980, %v5134
        %5136 = vmatpush.msra.mxu0 %v5135
        %v5137 = vand.u32 %v4978, 4294901760
        %v5138 = vsub.f32 %v4978, %v5137
        %5139 = vmatpush.msra.mxu0 %v5138
        %v5140 = vand.u32 %v5004, 4294901760
        %v5141 = vsub.f32 %v5004, %v5140
        %5142 = vmatmul.f32.gmra.mxu0 %v5141
        %v5143 = vpop.f32.mrf.mxu0
        %v5144 = vadd.f32 %v5104, %v5143
        %5145 = vdwg.mxu0
        %5146 = vmatpush.msra.mxu0 0.0
        %5147 = vmatpush.msra.mxu0 0.0
        %5148 = vmatpush.msra.mxu0 0.0
        %5149 = vmatpush.msra.mxu0 0.0
        %5150 = vmatpush.msra.mxu0 0.0
        %5151 = vmatpush.msra.mxu0 0.0
        %5152 = vmatpush.msra.mxu0 0.0
        %v5153 = vand.u32 %v4994, 4294901760
        %5154 = vmatpush.msra.mxu0 %v5153
        %v5155 = vand.u32 %v4992, 4294901760
        %5156 = vmatpush.msra.mxu0 %v5155
        %v5157 = vand.u32 %v4990, 4294901760
        %5158 = vmatpush.msra.mxu0 %v5157
        %v5159 = vand.u32 %v4988, 4294901760
        %5160 = vmatpush.msra.mxu0 %v5159
        %v5161 = vand.u32 %v4986, 4294901760
        %5162 = vmatpush.msra.mxu0 %v5161
        %v5163 = vand.u32 %v4984, 4294901760
        %5164 = vmatpush.msra.mxu0 %v5163
        %v5165 = vand.u32 %v4982, 4294901760
        %5166 = vmatpush.msra.mxu0 %v5165
        %v5167 = vand.u32 %v4980, 4294901760
        %5168 = vmatpush.msra.mxu0 %v5167
        %v5169 = vand.u32 %v4978, 4294901760
        %5170 = vmatpush.msra.mxu0 %v5169
        %v5171 = vand.u32 %v5004, 4294901760
        %v5172 = vsub.f32 %v5004, %v5171
        %v5173 = vand.u32 %v5172, 4294901760
        %5174 = vmatmul.f32.gmra.mxu0 %v5173
        %v5175 = vpop.f32.mrf.mxu0
        %v5176 = vadd.f32 %v5144, %v5175
        %5177 = vdwg.mxu0
        %5178 = vmatpush.msra.mxu0 0.0
        %5179 = vmatpush.msra.mxu0 0.0
        %5180 = vmatpush.msra.mxu0 0.0
        %5181 = vmatpush.msra.mxu0 0.0
        %5182 = vmatpush.msra.mxu0 0.0
        %5183 = vmatpush.msra.mxu0 0.0
        %5184 = vmatpush.msra.mxu0 0.0
        %v5185 = vand.u32 %v4994, 4294901760
        %v5186 = vsub.f32 %v4994, %v5185
        %v5187 = vand.u32 %v5186, 4294901760
        %5188 = vmatpush.msra.mxu0 %v5187
        %v5189 = vand.u32 %v4992, 4294901760
        %v5190 = vsub.f32 %v4992, %v5189
        %v5191 = vand.u32 %v5190, 4294901760
        %5192 = vmatpush.msra.mxu0 %v5191
        %v5193 = vand.u32 %v4990, 4294901760
        %v5194 = vsub.f32 %v4990, %v5193
        %v5195 = vand.u32 %v5194, 4294901760
        %5196 = vmatpush.msra.mxu0 %v5195
        %v5197 = vand.u32 %v4988, 4294901760
        %v5198 = vsub.f32 %v4988, %v5197
        %v5199 = vand.u32 %v5198, 4294901760
        %5200 = vmatpush.msra.mxu0 %v5199
        %v5201 = vand.u32 %v4986, 4294901760
        %v5202 = vsub.f32 %v4986, %v5201
        %v5203 = vand.u32 %v5202, 4294901760
        %5204 = vmatpush.msra.mxu0 %v5203
        %v5205 = vand.u32 %v4984, 4294901760
        %v5206 = vsub.f32 %v4984, %v5205
        %v5207 = vand.u32 %v5206, 4294901760
        %5208 = vmatpush.msra.mxu0 %v5207
        %v5209 = vand.u32 %v4982, 4294901760
        %v5210 = vsub.f32 %v4982, %v5209
        %v5211 = vand.u32 %v5210, 4294901760
        %5212 = vmatpush.msra.mxu0 %v5211
        %v5213 = vand.u32 %v4980, 4294901760
        %v5214 = vsub.f32 %v4980, %v5213
        %v5215 = vand.u32 %v5214, 4294901760
        %5216 = vmatpush.msra.mxu0 %v5215
        %v5217 = vand.u32 %v4978, 4294901760
        %v5218 = vsub.f32 %v4978, %v5217
        %v5219 = vand.u32 %v5218, 4294901760
        %5220 = vmatpush.msra.mxu0 %v5219
        %v5221 = vand.u32 %v5004, 4294901760
        %5222 = vmatmul.f32.gmra.mxu0 %v5221
        %v5223 = vpop.f32.mrf.mxu0
        %v5224 = vadd.f32 %v5176, %v5223
        %5225 = vdwg.mxu0
        %5226 = vmatpush.msra.mxu0 0.0
        %5227 = vmatpush.msra.mxu0 0.0
        %5228 = vmatpush.msra.mxu0 0.0
        %5229 = vmatpush.msra.mxu0 0.0
        %5230 = vmatpush.msra.mxu0 0.0
        %5231 = vmatpush.msra.mxu0 0.0
        %5232 = vmatpush.msra.mxu0 0.0
        %v5233 = vand.u32 %v4994, 4294901760
        %5234 = vmatpush.msra.mxu0 %v5233
        %v5235 = vand.u32 %v4992, 4294901760
        %5236 = vmatpush.msra.mxu0 %v5235
        %v5237 = vand.u32 %v4990, 4294901760
        %5238 = vmatpush.msra.mxu0 %v5237
        %v5239 = vand.u32 %v4988, 4294901760
        %5240 = vmatpush.msra.mxu0 %v5239
        %v5241 = vand.u32 %v4986, 4294901760
        %5242 = vmatpush.msra.mxu0 %v5241
        %v5243 = vand.u32 %v4984, 4294901760
        %5244 = vmatpush.msra.mxu0 %v5243
        %v5245 = vand.u32 %v4982, 4294901760
        %5246 = vmatpush.msra.mxu0 %v5245
        %v5247 = vand.u32 %v4980, 4294901760
        %5248 = vmatpush.msra.mxu0 %v5247
        %v5249 = vand.u32 %v4978, 4294901760
        %5250 = vmatpush.msra.mxu0 %v5249
        %v5251 = vand.u32 %v5004, 4294901760
        %5252 = vmatmul.f32.gmra.mxu0 %v5251
        %v5253 = vpop.f32.mrf.mxu0
        %v5254 = vadd.f32 %v5224, %v5253
        %5255 = vdwg.mxu0
        %5256 = vmatpush.msra.mxu0 0.0
        %5257 = vmatpush.msra.mxu0 0.0
        %5258 = vmatpush.msra.mxu0 0.0
        %5259 = vmatpush.msra.mxu0 0.0
        %5260 = vmatpush.msra.mxu0 0.0
        %5261 = vmatpush.msra.mxu0 0.0
        %5262 = vmatpush.msra.mxu0 0.0
        %v5263 = vand.u32 %v4995, 4294901760
        %5264 = vmatpush.msra.mxu0 %v5263
        %v5265 = vand.u32 %v4993, 4294901760
        %5266 = vmatpush.msra.mxu0 %v5265
        %v5267 = vand.u32 %v4991, 4294901760
        %5268 = vmatpush.msra.mxu0 %v5267
        %v5269 = vand.u32 %v4989, 4294901760
        %5270 = vmatpush.msra.mxu0 %v5269
        %v5271 = vand.u32 %v4987, 4294901760
        %5272 = vmatpush.msra.mxu0 %v5271
        %v5273 = vand.u32 %v4985, 4294901760
        %5274 = vmatpush.msra.mxu0 %v5273
        %v5275 = vand.u32 %v4983, 4294901760
        %5276 = vmatpush.msra.mxu0 %v5275
        %v5277 = vand.u32 %v4981, 4294901760
        %5278 = vmatpush.msra.mxu0 %v5277
        %v5279 = vand.u32 %v4979, 4294901760
        %5280 = vmatpush.msra.mxu0 %v5279
        %v5281 = vand.u32 %v5004, 4294901760
        %v5282 = vsub.f32 %v5004, %v5281
        %v5283 = vand.u32 %v5282, 4294901760
        %v5284 = vsub.f32 %v5282, %v5283
        %v5285 = vand.u32 %v5284, 4294901760
        %5286 = vmatmul.f32.gmra.mxu0 %v5285
        %v5287 = vpop.f32.mrf.mxu0
        %v5288 = vadd.f32 %v5001, %v5287
        %5289 = vdwg.mxu0
        %5290 = vmatpush.msra.mxu0 0.0
        %5291 = vmatpush.msra.mxu0 0.0
        %5292 = vmatpush.msra.mxu0 0.0
        %5293 = vmatpush.msra.mxu0 0.0
        %5294 = vmatpush.msra.mxu0 0.0
        %5295 = vmatpush.msra.mxu0 0.0
        %5296 = vmatpush.msra.mxu0 0.0
        %v5297 = vand.u32 %v4995, 4294901760
        %v5298 = vsub.f32 %v4995, %v5297
        %v5299 = vand.u32 %v5298, 4294901760
        %v5300 = vsub.f32 %v5298, %v5299
        %v5301 = vand.u32 %v5300, 4294901760
        %5302 = vmatpush.msra.mxu0 %v5301
        %v5303 = vand.u32 %v4993, 4294901760
        %v5304 = vsub.f32 %v4993, %v5303
        %v5305 = vand.u32 %v5304, 4294901760
        %v5306 = vsub.f32 %v5304, %v5305
        %v5307 = vand.u32 %v5306, 4294901760
        %5308 = vmatpush.msra.mxu0 %v5307
        %v5309 = vand.u32 %v4991, 4294901760
        %v5310 = vsub.f32 %v4991, %v5309
        %v5311 = vand.u32 %v5310, 4294901760
        %v5312 = vsub.f32 %v5310, %v5311
        %v5313 = vand.u32 %v5312, 4294901760
        %5314 = vmatpush.msra.mxu0 %v5313
        %v5315 = vand.u32 %v4989, 4294901760
        %v5316 = vsub.f32 %v4989, %v5315
        %v5317 = vand.u32 %v5316, 4294901760
        %v5318 = vsub.f32 %v5316, %v5317
        %v5319 = vand.u32 %v5318, 4294901760
        %5320 = vmatpush.msra.mxu0 %v5319
        %v5321 = vand.u32 %v4987, 4294901760
        %v5322 = vsub.f32 %v4987, %v5321
        %v5323 = vand.u32 %v5322, 4294901760
        %v5324 = vsub.f32 %v5322, %v5323
        %v5325 = vand.u32 %v5324, 4294901760
        %5326 = vmatpush.msra.mxu0 %v5325
        %v5327 = vand.u32 %v4985, 4294901760
        %v5328 = vsub.f32 %v4985, %v5327
        %v5329 = vand.u32 %v5328, 4294901760
        %v5330 = vsub.f32 %v5328, %v5329
        %v5331 = vand.u32 %v5330, 4294901760
        %5332 = vmatpush.msra.mxu0 %v5331
        %v5333 = vand.u32 %v4983, 4294901760
        %v5334 = vsub.f32 %v4983, %v5333
        %v5335 = vand.u32 %v5334, 4294901760
        %v5336 = vsub.f32 %v5334, %v5335
        %v5337 = vand.u32 %v5336, 4294901760
        %5338 = vmatpush.msra.mxu0 %v5337
        %v5339 = vand.u32 %v4981, 4294901760
        %v5340 = vsub.f32 %v4981, %v5339
        %v5341 = vand.u32 %v5340, 4294901760
        %v5342 = vsub.f32 %v5340, %v5341
        %v5343 = vand.u32 %v5342, 4294901760
        %5344 = vmatpush.msra.mxu0 %v5343
        %v5345 = vand.u32 %v4979, 4294901760
        %v5346 = vsub.f32 %v4979, %v5345
        %v5347 = vand.u32 %v5346, 4294901760
        %v5348 = vsub.f32 %v5346, %v5347
        %v5349 = vand.u32 %v5348, 4294901760
        %5350 = vmatpush.msra.mxu0 %v5349
        %v5351 = vand.u32 %v5004, 4294901760
        %5352 = vmatmul.f32.gmra.mxu0 %v5351
        %v5353 = vpop.f32.mrf.mxu0
        %v5354 = vadd.f32 %v5288, %v5353
        %5355 = vdwg.mxu0
        %5356 = vmatpush.msra.mxu0 0.0
        %5357 = vmatpush.msra.mxu0 0.0
        %5358 = vmatpush.msra.mxu0 0.0
        %5359 = vmatpush.msra.mxu0 0.0
        %5360 = vmatpush.msra.mxu0 0.0
        %5361 = vmatpush.msra.mxu0 0.0
        %5362 = vmatpush.msra.mxu0 0.0
        %v5363 = vand.u32 %v4995, 4294901760
        %v5364 = vsub.f32 %v4995, %v5363
        %5365 = vmatpush.msra.mxu0 %v5364
        %v5366 = vand.u32 %v4993, 4294901760
        %v5367 = vsub.f32 %v4993, %v5366
        %5368 = vmatpush.msra.mxu0 %v5367
        %v5369 = vand.u32 %v4991, 4294901760
        %v5370 = vsub.f32 %v4991, %v5369
        %5371 = vmatpush.msra.mxu0 %v5370
        %v5372 = vand.u32 %v4989, 4294901760
        %v5373 = vsub.f32 %v4989, %v5372
        %5374 = vmatpush.msra.mxu0 %v5373
        %v5375 = vand.u32 %v4987, 4294901760
        %v5376 = vsub.f32 %v4987, %v5375
        %5377 = vmatpush.msra.mxu0 %v5376
        %v5378 = vand.u32 %v4985, 4294901760
        %v5379 = vsub.f32 %v4985, %v5378
        %5380 = vmatpush.msra.mxu0 %v5379
        %v5381 = vand.u32 %v4983, 4294901760
        %v5382 = vsub.f32 %v4983, %v5381
        %5383 = vmatpush.msra.mxu0 %v5382
        %v5384 = vand.u32 %v4981, 4294901760
        %v5385 = vsub.f32 %v4981, %v5384
        %5386 = vmatpush.msra.mxu0 %v5385
        %v5387 = vand.u32 %v4979, 4294901760
        %v5388 = vsub.f32 %v4979, %v5387
        %5389 = vmatpush.msra.mxu0 %v5388
        %v5390 = vand.u32 %v5004, 4294901760
        %v5391 = vsub.f32 %v5004, %v5390
        %5392 = vmatmul.f32.gmra.mxu0 %v5391
        %v5393 = vpop.f32.mrf.mxu0
        %v5394 = vadd.f32 %v5354, %v5393
        %5395 = vdwg.mxu0
        %5396 = vmatpush.msra.mxu0 0.0
        %5397 = vmatpush.msra.mxu0 0.0
        %5398 = vmatpush.msra.mxu0 0.0
        %5399 = vmatpush.msra.mxu0 0.0
        %5400 = vmatpush.msra.mxu0 0.0
        %5401 = vmatpush.msra.mxu0 0.0
        %5402 = vmatpush.msra.mxu0 0.0
        %v5403 = vand.u32 %v4995, 4294901760
        %5404 = vmatpush.msra.mxu0 %v5403
        %v5405 = vand.u32 %v4993, 4294901760
        %5406 = vmatpush.msra.mxu0 %v5405
        %v5407 = vand.u32 %v4991, 4294901760
        %5408 = vmatpush.msra.mxu0 %v5407
        %v5409 = vand.u32 %v4989, 4294901760
        %5410 = vmatpush.msra.mxu0 %v5409
        %v5411 = vand.u32 %v4987, 4294901760
        %5412 = vmatpush.msra.mxu0 %v5411
        %v5413 = vand.u32 %v4985, 4294901760
        %5414 = vmatpush.msra.mxu0 %v5413
        %v5415 = vand.u32 %v4983, 4294901760
        %5416 = vmatpush.msra.mxu0 %v5415
        %v5417 = vand.u32 %v4981, 4294901760
        %5418 = vmatpush.msra.mxu0 %v5417
        %v5419 = vand.u32 %v4979, 4294901760
        %5420 = vmatpush.msra.mxu0 %v5419
        %v5421 = vand.u32 %v5004, 4294901760
        %v5422 = vsub.f32 %v5004, %v5421
        %v5423 = vand.u32 %v5422, 4294901760
        %5424 = vmatmul.f32.gmra.mxu0 %v5423
        %v5425 = vpop.f32.mrf.mxu0
        %v5426 = vadd.f32 %v5394, %v5425
        %5427 = vdwg.mxu0
        %5428 = vmatpush.msra.mxu0 0.0
        %5429 = vmatpush.msra.mxu0 0.0
        %5430 = vmatpush.msra.mxu0 0.0
        %5431 = vmatpush.msra.mxu0 0.0
        %5432 = vmatpush.msra.mxu0 0.0
        %5433 = vmatpush.msra.mxu0 0.0
        %5434 = vmatpush.msra.mxu0 0.0
        %v5435 = vand.u32 %v4995, 4294901760
        %v5436 = vsub.f32 %v4995, %v5435
        %v5437 = vand.u32 %v5436, 4294901760
        %5438 = vmatpush.msra.mxu0 %v5437
        %v5439 = vand.u32 %v4993, 4294901760
        %v5440 = vsub.f32 %v4993, %v5439
        %v5441 = vand.u32 %v5440, 4294901760
        %5442 = vmatpush.msra.mxu0 %v5441
        %v5443 = vand.u32 %v4991, 4294901760
        %v5444 = vsub.f32 %v4991, %v5443
        %v5445 = vand.u32 %v5444, 4294901760
        %5446 = vmatpush.msra.mxu0 %v5445
        %v5447 = vand.u32 %v4989, 4294901760
        %v5448 = vsub.f32 %v4989, %v5447
        %v5449 = vand.u32 %v5448, 4294901760
        %5450 = vmatpush.msra.mxu0 %v5449
        %v5451 = vand.u32 %v4987, 4294901760
        %v5452 = vsub.f32 %v4987, %v5451
        %v5453 = vand.u32 %v5452, 4294901760
        %5454 = vmatpush.msra.mxu0 %v5453
        %v5455 = vand.u32 %v4985, 4294901760
        %v5456 = vsub.f32 %v4985, %v5455
        %v5457 = vand.u32 %v5456, 4294901760
        %5458 = vmatpush.msra.mxu0 %v5457
        %v5459 = vand.u32 %v4983, 4294901760
        %v5460 = vsub.f32 %v4983, %v5459
        %v5461 = vand.u32 %v5460, 4294901760
        %5462 = vmatpush.msra.mxu0 %v5461
        %v5463 = vand.u32 %v4981, 4294901760
        %v5464 = vsub.f32 %v4981, %v5463
        %v5465 = vand.u32 %v5464, 4294901760
        %5466 = vmatpush.msra.mxu0 %v5465
        %v5467 = vand.u32 %v4979, 4294901760
        %v5468 = vsub.f32 %v4979, %v5467
        %v5469 = vand.u32 %v5468, 4294901760
        %5470 = vmatpush.msra.mxu0 %v5469
        %v5471 = vand.u32 %v5004, 4294901760
        %5472 = vmatmul.f32.gmra.mxu0 %v5471
        %v5473 = vpop.f32.mrf.mxu0
        %v5474 = vadd.f32 %v5426, %v5473
        %5475 = vdwg.mxu0
        %5476 = vmatpush.msra.mxu0 0.0
        %5477 = vmatpush.msra.mxu0 0.0
        %5478 = vmatpush.msra.mxu0 0.0
        %5479 = vmatpush.msra.mxu0 0.0
        %5480 = vmatpush.msra.mxu0 0.0
        %5481 = vmatpush.msra.mxu0 0.0
        %5482 = vmatpush.msra.mxu0 0.0
        %v5483 = vand.u32 %v4995, 4294901760
        %5484 = vmatpush.msra.mxu0 %v5483
        %v5485 = vand.u32 %v4993, 4294901760
        %5486 = vmatpush.msra.mxu0 %v5485
        %v5487 = vand.u32 %v4991, 4294901760
        %5488 = vmatpush.msra.mxu0 %v5487
        %v5489 = vand.u32 %v4989, 4294901760
        %5490 = vmatpush.msra.mxu0 %v5489
        %v5491 = vand.u32 %v4987, 4294901760
        %5492 = vmatpush.msra.mxu0 %v5491
        %v5493 = vand.u32 %v4985, 4294901760
        %5494 = vmatpush.msra.mxu0 %v5493
        %v5495 = vand.u32 %v4983, 4294901760
        %5496 = vmatpush.msra.mxu0 %v5495
        %v5497 = vand.u32 %v4981, 4294901760
        %5498 = vmatpush.msra.mxu0 %v5497
        %v5499 = vand.u32 %v4979, 4294901760
        %5500 = vmatpush.msra.mxu0 %v5499
        %v5501 = vand.u32 %v5004, 4294901760
        %5502 = vmatmul.f32.gmra.mxu0 %v5501
        %v5503 = vpop.f32.mrf.mxu0
        %v5504 = vadd.f32 %v5474, %v5503
        %5505 = vdwg.mxu0
        %v5506 = vadd.f32 %v5254, %v4876
        %v5507 = vadd.f32 %v5504, %v4877
        %vm5508 = vcmp.ge.f32.partialorder %v5506, 0.0
        %vm5509 = vcmp.ge.f32.partialorder %v5507, 0.0
        %v5510 = vmul.f32 %v5506, 0.01
        %v5511 = vmul.f32 %v5507, 0.01
        %v5512 = vsel %vm5508, %v5506, %v5510
        %v5513 = vsel %vm5509, %v5507, %v5511
        %5514 = vrot.lane.b32.xlu0 %v5512, 17
        %v5515 = vpop.permute.xlu0 %5514
        %5516 = vrot.lane.b32.xlu0 %v5513, 17
        %v5517 = vpop.permute.xlu0 %5516
        %v5518 = vsel %vm238, %v5515, %v5517
        %v5519 = vsel %vm238, %v5517, %v5515
        %v5520 = vld [vmem:[#allocation5] sm:$0xff]
        %v5521 = vld [vmem:[#allocation5 + $0x8] sm:$0xff]
        %v5522 = vmul.f32 %v5519, %v5520
        %v5523 = vmul.f32 %v5518, %v5521
        %5524 = vst [vmem:[#allocation2] sm:$0xff] %v5522
        %5525 = vst [vmem:[#allocation2 + $0x8] sm:$0xff] %v5523
        %5526 = vrot.lane.b32.xlu0 %v5512, 16
        %v5527 = vpop.permute.xlu0 %5526
        %5528 = vrot.lane.b32.xlu0 %v5513, 16
        %v5529 = vpop.permute.xlu0 %5528
        %v5530 = vsel %vm251, %v5527, %v5529
        %v5531 = vsel %vm251, %v5529, %v5527
        %v5532 = vld [vmem:[%s254] sm:$0xff]
        %v5533 = vld [vmem:[%s254 + $0x8] sm:$0xff]
        %v5534 = vmul.f32 %v5531, %v5532
        %v5535 = vmul.f32 %v5530, %v5533
        %5536 = vst [vmem:[#allocation2 + $0x10] sm:$0xff] %v5534
        %5537 = vst [vmem:[#allocation2 + $0x18] sm:$0xff] %v5535
        %5538 = vrot.lane.b32.xlu0 %v5512, 15
        %v5539 = vpop.permute.xlu0 %5538
        %5540 = vrot.lane.b32.xlu0 %v5513, 15
        %v5541 = vpop.permute.xlu0 %5540
        %v5542 = vsel %vm265, %v5539, %v5541
        %v5543 = vsel %vm265, %v5541, %v5539
        %v5544 = vld [vmem:[%s268] sm:$0xff]
        %v5545 = vld [vmem:[%s268 + $0x8] sm:$0xff]
        %v5546 = vmul.f32 %v5543, %v5544
        %v5547 = vmul.f32 %v5542, %v5545
        %5548 = vst [vmem:[#allocation2 + $0x20] sm:$0xff] %v5546
        %5549 = vst [vmem:[#allocation2 + $0x28] sm:$0xff] %v5547
        %5550 = vrot.lane.b32.xlu0 %v5512, 1
        %v5551 = vpop.permute.xlu0 %5550
        %5552 = vrot.lane.b32.xlu0 %v5513, 1
        %v5553 = vpop.permute.xlu0 %5552
        %v5554 = vsel %vm279, %v5551, %v5553
        %v5555 = vsel %vm279, %v5553, %v5551
        %v5556 = vld [vmem:[%s282] sm:$0xff]
        %v5557 = vld [vmem:[%s282 + $0x8] sm:$0xff]
        %v5558 = vmul.f32 %v5555, %v5556
        %v5559 = vmul.f32 %v5554, %v5557
        %5560 = vst [vmem:[#allocation2 + $0x30] sm:$0xff] %v5558
        %5561 = vst [vmem:[#allocation2 + $0x38] sm:$0xff] %v5559
        %5562 = vst [vmem:[#allocation2 + $0x40] sm:$0xff] %v5512
        %5563 = vst [vmem:[#allocation2 + $0x48] sm:$0xff] %v5513
        %5564 = vrot.lane.b32.xlu0 %v5512, 127
        %v5565 = vpop.permute.xlu0 %5564
        %5566 = vrot.lane.b32.xlu0 %v5513, 127
        %v5567 = vpop.permute.xlu0 %5566
        %v5568 = vsel %vm295, %v5565, %v5567
        %v5569 = vsel %vm295, %v5567, %v5565
        %v5570 = vld [vmem:[%s298] sm:$0xff]
        %v5571 = vld [vmem:[%s298 + $0x8] sm:$0xff]
        %v5572 = vmul.f32 %v5568, %v5570
        %v5573 = vmul.f32 %v5569, %v5571
        %5574 = vst [vmem:[#allocation2 + $0x50] sm:$0xff] %v5572
        %5575 = vst [vmem:[#allocation2 + $0x58] sm:$0xff] %v5573
        %5576 = vrot.lane.b32.xlu0 %v5512, 113
        %v5577 = vpop.permute.xlu0 %5576
        %5578 = vrot.lane.b32.xlu0 %v5513, 113
        %v5579 = vpop.permute.xlu0 %5578
        %v5580 = vsel %vm309, %v5577, %v5579
        %v5581 = vsel %vm309, %v5579, %v5577
        %v5582 = vld [vmem:[%s312] sm:$0xff]
        %v5583 = vld [vmem:[%s312 + $0x8] sm:$0xff]
        %v5584 = vmul.f32 %v5580, %v5582
        %v5585 = vmul.f32 %v5581, %v5583
        %5586 = vst [vmem:[#allocation2 + $0x60] sm:$0xff] %v5584
        %5587 = vst [vmem:[#allocation2 + $0x68] sm:$0xff] %v5585
        %5588 = vrot.lane.b32.xlu0 %v5512, 112
        %v5589 = vpop.permute.xlu0 %5588
        %5590 = vrot.lane.b32.xlu0 %v5513, 112
        %v5591 = vpop.permute.xlu0 %5590
        %v5592 = vsel %vm323, %v5589, %v5591
        %v5593 = vsel %vm323, %v5591, %v5589
        %v5594 = vld [vmem:[%s326] sm:$0xff]
        %v5595 = vld [vmem:[%s326 + $0x8] sm:$0xff]
        %v5596 = vmul.f32 %v5592, %v5594
        %v5597 = vmul.f32 %v5593, %v5595
        %5598 = vst [vmem:[#allocation2 + $0x70] sm:$0xff] %v5596
        %5599 = vst [vmem:[#allocation2 + $0x78] sm:$0xff] %v5597
        %5600 = vrot.lane.b32.xlu0 %v5512, 111
        %v5601 = vpop.permute.xlu0 %5600
        %5602 = vrot.lane.b32.xlu0 %v5513, 111
        %v5603 = vpop.permute.xlu0 %5602
        %v5604 = vsel %vm337, %v5601, %v5603
        %v5605 = vsel %vm337, %v5603, %v5601
        %v5606 = vld [vmem:[%s340] sm:$0xff]
        %v5607 = vld [vmem:[%s340 + $0x8] sm:$0xff]
        %v5608 = vmul.f32 %v5604, %v5606
        %v5609 = vmul.f32 %v5605, %v5607
        %5610 = vst [vmem:[#allocation2 + $0x80] sm:$0xff] %v5608
        %5611 = vst [vmem:[#allocation2 + $0x88] sm:$0xff] %v5609
        %s5612 = scalar_lea.vmem [#allocation3], 192
        %v5613 = vld [vmem:[%s5612] sm:$0xff]
        %v5614 = vld [vmem:[#allocation2] sm:$0xff]
        %v5615 = vld [vmem:[#allocation2 + $0x8] sm:$0xff]
        %v5616 = vld [vmem:[#allocation2 + $0x10] sm:$0xff]
        %v5617 = vld [vmem:[#allocation2 + $0x18] sm:$0xff]
        %v5618 = vld [vmem:[#allocation2 + $0x20] sm:$0xff]
        %v5619 = vld [vmem:[#allocation2 + $0x28] sm:$0xff]
        %v5620 = vld [vmem:[#allocation2 + $0x30] sm:$0xff]
        %v5621 = vld [vmem:[#allocation2 + $0x38] sm:$0xff]
        %v5622 = vld [vmem:[#allocation2 + $0x40] sm:$0xff]
        %v5623 = vld [vmem:[#allocation2 + $0x48] sm:$0xff]
        %v5624 = vld [vmem:[#allocation2 + $0x50] sm:$0xff]
        %v5625 = vld [vmem:[#allocation2 + $0x58] sm:$0xff]
        %v5626 = vld [vmem:[#allocation2 + $0x60] sm:$0xff]
        %v5627 = vld [vmem:[#allocation2 + $0x68] sm:$0xff]
        %v5628 = vld [vmem:[#allocation2 + $0x70] sm:$0xff]
        %v5629 = vld [vmem:[#allocation2 + $0x78] sm:$0xff]
        %v5630 = vld [vmem:[#allocation2 + $0x80] sm:$0xff]
        %v5631 = vld [vmem:[#allocation2 + $0x88] sm:$0xff]
        %s5632 = scalar_lea.vmem %s2, 96
        %v5633 = vld [vmem:[%s5632] sm:$0xff]
        %5635 = vset.pattern.permute.xlu0 0
        %5636 = vperm.xlu0 %5635, %v5633
        %v5637 = vpop.permute.xlu0 %5636
        %v5640 = vsel %vm379, %v5613, 0
        %5642 = vmatpush.msra.mxu0 0.0
        %5643 = vmatpush.msra.mxu0 0.0
        %5644 = vmatpush.msra.mxu0 0.0
        %5645 = vmatpush.msra.mxu0 0.0
        %5646 = vmatpush.msra.mxu0 0.0
        %5647 = vmatpush.msra.mxu0 0.0
        %5648 = vmatpush.msra.mxu0 0.0
        %v5649 = vand.u32 %v5630, 4294901760
        %5650 = vmatpush.msra.mxu0 %v5649
        %v5651 = vand.u32 %v5628, 4294901760
        %5652 = vmatpush.msra.mxu0 %v5651
        %v5653 = vand.u32 %v5626, 4294901760
        %5654 = vmatpush.msra.mxu0 %v5653
        %v5655 = vand.u32 %v5624, 4294901760
        %5656 = vmatpush.msra.mxu0 %v5655
        %v5657 = vand.u32 %v5622, 4294901760
        %5658 = vmatpush.msra.mxu0 %v5657
        %v5659 = vand.u32 %v5620, 4294901760
        %5660 = vmatpush.msra.mxu0 %v5659
        %v5661 = vand.u32 %v5618, 4294901760
        %5662 = vmatpush.msra.mxu0 %v5661
        %v5663 = vand.u32 %v5616, 4294901760
        %5664 = vmatpush.msra.mxu0 %v5663
        %v5665 = vand.u32 %v5614, 4294901760
        %5666 = vmatpush.msra.mxu0 %v5665
        %v5667 = vand.u32 %v5640, 4294901760
        %v5668 = vsub.f32 %v5640, %v5667
        %v5669 = vand.u32 %v5668, 4294901760
        %v5670 = vsub.f32 %v5668, %v5669
        %v5671 = vand.u32 %v5670, 4294901760
        %5672 = vmatmul.f32.gmra.mxu0 %v5671
        %v5673 = vpop.f32.mrf.mxu0
        %v5674 = vadd.f32 %v5637, %v5673
        %5675 = vdwg.mxu0
        %5676 = vmatpush.msra.mxu0 0.0
        %5677 = vmatpush.msra.mxu0 0.0
        %5678 = vmatpush.msra.mxu0 0.0
        %5679 = vmatpush.msra.mxu0 0.0
        %5680 = vmatpush.msra.mxu0 0.0
        %5681 = vmatpush.msra.mxu0 0.0
        %5682 = vmatpush.msra.mxu0 0.0
        %v5683 = vand.u32 %v5630, 4294901760
        %v5684 = vsub.f32 %v5630, %v5683
        %v5685 = vand.u32 %v5684, 4294901760
        %v5686 = vsub.f32 %v5684, %v5685
        %v5687 = vand.u32 %v5686, 4294901760
        %5688 = vmatpush.msra.mxu0 %v5687
        %v5689 = vand.u32 %v5628, 4294901760
        %v5690 = vsub.f32 %v5628, %v5689
        %v5691 = vand.u32 %v5690, 4294901760
        %v5692 = vsub.f32 %v5690, %v5691
        %v5693 = vand.u32 %v5692, 4294901760
        %5694 = vmatpush.msra.mxu0 %v5693
        %v5695 = vand.u32 %v5626, 4294901760
        %v5696 = vsub.f32 %v5626, %v5695
        %v5697 = vand.u32 %v5696, 4294901760
        %v5698 = vsub.f32 %v5696, %v5697
        %v5699 = vand.u32 %v5698, 4294901760
        %5700 = vmatpush.msra.mxu0 %v5699
        %v5701 = vand.u32 %v5624, 4294901760
        %v5702 = vsub.f32 %v5624, %v5701
        %v5703 = vand.u32 %v5702, 4294901760
        %v5704 = vsub.f32 %v5702, %v5703
        %v5705 = vand.u32 %v5704, 4294901760
        %5706 = vmatpush.msra.mxu0 %v5705
        %v5707 = vand.u32 %v5622, 4294901760
        %v5708 = vsub.f32 %v5622, %v5707
        %v5709 = vand.u32 %v5708, 4294901760
        %v5710 = vsub.f32 %v5708, %v5709
        %v5711 = vand.u32 %v5710, 4294901760
        %5712 = vmatpush.msra.mxu0 %v5711
        %v5713 = vand.u32 %v5620, 4294901760
        %v5714 = vsub.f32 %v5620, %v5713
        %v5715 = vand.u32 %v5714, 4294901760
        %v5716 = vsub.f32 %v5714, %v5715
        %v5717 = vand.u32 %v5716, 4294901760
        %5718 = vmatpush.msra.mxu0 %v5717
        %v5719 = vand.u32 %v5618, 4294901760
        %v5720 = vsub.f32 %v5618, %v5719
        %v5721 = vand.u32 %v5720, 4294901760
        %v5722 = vsub.f32 %v5720, %v5721
        %v5723 = vand.u32 %v5722, 4294901760
        %5724 = vmatpush.msra.mxu0 %v5723
        %v5725 = vand.u32 %v5616, 4294901760
        %v5726 = vsub.f32 %v5616, %v5725
        %v5727 = vand.u32 %v5726, 4294901760
        %v5728 = vsub.f32 %v5726, %v5727
        %v5729 = vand.u32 %v5728, 4294901760
        %5730 = vmatpush.msra.mxu0 %v5729
        %v5731 = vand.u32 %v5614, 4294901760
        %v5732 = vsub.f32 %v5614, %v5731
        %v5733 = vand.u32 %v5732, 4294901760
        %v5734 = vsub.f32 %v5732, %v5733
        %v5735 = vand.u32 %v5734, 4294901760
        %5736 = vmatpush.msra.mxu0 %v5735
        %v5737 = vand.u32 %v5640, 4294901760
        %5738 = vmatmul.f32.gmra.mxu0 %v5737
        %v5739 = vpop.f32.mrf.mxu0
        %v5740 = vadd.f32 %v5674, %v5739
        %5741 = vdwg.mxu0
        %5742 = vmatpush.msra.mxu0 0.0
        %5743 = vmatpush.msra.mxu0 0.0
        %5744 = vmatpush.msra.mxu0 0.0
        %5745 = vmatpush.msra.mxu0 0.0
        %5746 = vmatpush.msra.mxu0 0.0
        %5747 = vmatpush.msra.mxu0 0.0
        %5748 = vmatpush.msra.mxu0 0.0
        %v5749 = vand.u32 %v5630, 4294901760
        %v5750 = vsub.f32 %v5630, %v5749
        %5751 = vmatpush.msra.mxu0 %v5750
        %v5752 = vand.u32 %v5628, 4294901760
        %v5753 = vsub.f32 %v5628, %v5752
        %5754 = vmatpush.msra.mxu0 %v5753
        %v5755 = vand.u32 %v5626, 4294901760
        %v5756 = vsub.f32 %v5626, %v5755
        %5757 = vmatpush.msra.mxu0 %v5756
        %v5758 = vand.u32 %v5624, 4294901760
        %v5759 = vsub.f32 %v5624, %v5758
        %5760 = vmatpush.msra.mxu0 %v5759
        %v5761 = vand.u32 %v5622, 4294901760
        %v5762 = vsub.f32 %v5622, %v5761
        %5763 = vmatpush.msra.mxu0 %v5762
        %v5764 = vand.u32 %v5620, 4294901760
        %v5765 = vsub.f32 %v5620, %v5764
        %5766 = vmatpush.msra.mxu0 %v5765
        %v5767 = vand.u32 %v5618, 4294901760
        %v5768 = vsub.f32 %v5618, %v5767
        %5769 = vmatpush.msra.mxu0 %v5768
        %v5770 = vand.u32 %v5616, 4294901760
        %v5771 = vsub.f32 %v5616, %v5770
        %5772 = vmatpush.msra.mxu0 %v5771
        %v5773 = vand.u32 %v5614, 4294901760
        %v5774 = vsub.f32 %v5614, %v5773
        %5775 = vmatpush.msra.mxu0 %v5774
        %v5776 = vand.u32 %v5640, 4294901760
        %v5777 = vsub.f32 %v5640, %v5776
        %5778 = vmatmul.f32.gmra.mxu0 %v5777
        %v5779 = vpop.f32.mrf.mxu0
        %v5780 = vadd.f32 %v5740, %v5779
        %5781 = vdwg.mxu0
        %5782 = vmatpush.msra.mxu0 0.0
        %5783 = vmatpush.msra.mxu0 0.0
        %5784 = vmatpush.msra.mxu0 0.0
        %5785 = vmatpush.msra.mxu0 0.0
        %5786 = vmatpush.msra.mxu0 0.0
        %5787 = vmatpush.msra.mxu0 0.0
        %5788 = vmatpush.msra.mxu0 0.0
        %v5789 = vand.u32 %v5630, 4294901760
        %5790 = vmatpush.msra.mxu0 %v5789
        %v5791 = vand.u32 %v5628, 4294901760
        %5792 = vmatpush.msra.mxu0 %v5791
        %v5793 = vand.u32 %v5626, 4294901760
        %5794 = vmatpush.msra.mxu0 %v5793
        %v5795 = vand.u32 %v5624, 4294901760
        %5796 = vmatpush.msra.mxu0 %v5795
        %v5797 = vand.u32 %v5622, 4294901760
        %5798 = vmatpush.msra.mxu0 %v5797
        %v5799 = vand.u32 %v5620, 4294901760
        %5800 = vmatpush.msra.mxu0 %v5799
        %v5801 = vand.u32 %v5618, 4294901760
        %5802 = vmatpush.msra.mxu0 %v5801
        %v5803 = vand.u32 %v5616, 4294901760
        %5804 = vmatpush.msra.mxu0 %v5803
        %v5805 = vand.u32 %v5614, 4294901760
        %5806 = vmatpush.msra.mxu0 %v5805
        %v5807 = vand.u32 %v5640, 4294901760
        %v5808 = vsub.f32 %v5640, %v5807
        %v5809 = vand.u32 %v5808, 4294901760
        %5810 = vmatmul.f32.gmra.mxu0 %v5809
        %v5811 = vpop.f32.mrf.mxu0
        %v5812 = vadd.f32 %v5780, %v5811
        %5813 = vdwg.mxu0
        %5814 = vmatpush.msra.mxu0 0.0
        %5815 = vmatpush.msra.mxu0 0.0
        %5816 = vmatpush.msra.mxu0 0.0
        %5817 = vmatpush.msra.mxu0 0.0
        %5818 = vmatpush.msra.mxu0 0.0
        %5819 = vmatpush.msra.mxu0 0.0
        %5820 = vmatpush.msra.mxu0 0.0
        %v5821 = vand.u32 %v5630, 4294901760
        %v5822 = vsub.f32 %v5630, %v5821
        %v5823 = vand.u32 %v5822, 4294901760
        %5824 = vmatpush.msra.mxu0 %v5823
        %v5825 = vand.u32 %v5628, 4294901760
        %v5826 = vsub.f32 %v5628, %v5825
        %v5827 = vand.u32 %v5826, 4294901760
        %5828 = vmatpush.msra.mxu0 %v5827
        %v5829 = vand.u32 %v5626, 4294901760
        %v5830 = vsub.f32 %v5626, %v5829
        %v5831 = vand.u32 %v5830, 4294901760
        %5832 = vmatpush.msra.mxu0 %v5831
        %v5833 = vand.u32 %v5624, 4294901760
        %v5834 = vsub.f32 %v5624, %v5833
        %v5835 = vand.u32 %v5834, 4294901760
        %5836 = vmatpush.msra.mxu0 %v5835
        %v5837 = vand.u32 %v5622, 4294901760
        %v5838 = vsub.f32 %v5622, %v5837
        %v5839 = vand.u32 %v5838, 4294901760
        %5840 = vmatpush.msra.mxu0 %v5839
        %v5841 = vand.u32 %v5620, 4294901760
        %v5842 = vsub.f32 %v5620, %v5841
        %v5843 = vand.u32 %v5842, 4294901760
        %5844 = vmatpush.msra.mxu0 %v5843
        %v5845 = vand.u32 %v5618, 4294901760
        %v5846 = vsub.f32 %v5618, %v5845
        %v5847 = vand.u32 %v5846, 4294901760
        %5848 = vmatpush.msra.mxu0 %v5847
        %v5849 = vand.u32 %v5616, 4294901760
        %v5850 = vsub.f32 %v5616, %v5849
        %v5851 = vand.u32 %v5850, 4294901760
        %5852 = vmatpush.msra.mxu0 %v5851
        %v5853 = vand.u32 %v5614, 4294901760
        %v5854 = vsub.f32 %v5614, %v5853
        %v5855 = vand.u32 %v5854, 4294901760
        %5856 = vmatpush.msra.mxu0 %v5855
        %v5857 = vand.u32 %v5640, 4294901760
        %5858 = vmatmul.f32.gmra.mxu0 %v5857
        %v5859 = vpop.f32.mrf.mxu0
        %v5860 = vadd.f32 %v5812, %v5859
        %5861 = vdwg.mxu0
        %5862 = vmatpush.msra.mxu0 0.0
        %5863 = vmatpush.msra.mxu0 0.0
        %5864 = vmatpush.msra.mxu0 0.0
        %5865 = vmatpush.msra.mxu0 0.0
        %5866 = vmatpush.msra.mxu0 0.0
        %5867 = vmatpush.msra.mxu0 0.0
        %5868 = vmatpush.msra.mxu0 0.0
        %v5869 = vand.u32 %v5630, 4294901760
        %5870 = vmatpush.msra.mxu0 %v5869
        %v5871 = vand.u32 %v5628, 4294901760
        %5872 = vmatpush.msra.mxu0 %v5871
        %v5873 = vand.u32 %v5626, 4294901760
        %5874 = vmatpush.msra.mxu0 %v5873
        %v5875 = vand.u32 %v5624, 4294901760
        %5876 = vmatpush.msra.mxu0 %v5875
        %v5877 = vand.u32 %v5622, 4294901760
        %5878 = vmatpush.msra.mxu0 %v5877
        %v5879 = vand.u32 %v5620, 4294901760
        %5880 = vmatpush.msra.mxu0 %v5879
        %v5881 = vand.u32 %v5618, 4294901760
        %5882 = vmatpush.msra.mxu0 %v5881
        %v5883 = vand.u32 %v5616, 4294901760
        %5884 = vmatpush.msra.mxu0 %v5883
        %v5885 = vand.u32 %v5614, 4294901760
        %5886 = vmatpush.msra.mxu0 %v5885
        %v5887 = vand.u32 %v5640, 4294901760
        %5888 = vmatmul.f32.gmra.mxu0 %v5887
        %v5889 = vpop.f32.mrf.mxu0
        %v5890 = vadd.f32 %v5860, %v5889
        %5891 = vdwg.mxu0
        %5892 = vmatpush.msra.mxu0 0.0
        %5893 = vmatpush.msra.mxu0 0.0
        %5894 = vmatpush.msra.mxu0 0.0
        %5895 = vmatpush.msra.mxu0 0.0
        %5896 = vmatpush.msra.mxu0 0.0
        %5897 = vmatpush.msra.mxu0 0.0
        %5898 = vmatpush.msra.mxu0 0.0
        %v5899 = vand.u32 %v5631, 4294901760
        %5900 = vmatpush.msra.mxu0 %v5899
        %v5901 = vand.u32 %v5629, 4294901760
        %5902 = vmatpush.msra.mxu0 %v5901
        %v5903 = vand.u32 %v5627, 4294901760
        %5904 = vmatpush.msra.mxu0 %v5903
        %v5905 = vand.u32 %v5625, 4294901760
        %5906 = vmatpush.msra.mxu0 %v5905
        %v5907 = vand.u32 %v5623, 4294901760
        %5908 = vmatpush.msra.mxu0 %v5907
        %v5909 = vand.u32 %v5621, 4294901760
        %5910 = vmatpush.msra.mxu0 %v5909
        %v5911 = vand.u32 %v5619, 4294901760
        %5912 = vmatpush.msra.mxu0 %v5911
        %v5913 = vand.u32 %v5617, 4294901760
        %5914 = vmatpush.msra.mxu0 %v5913
        %v5915 = vand.u32 %v5615, 4294901760
        %5916 = vmatpush.msra.mxu0 %v5915
        %v5917 = vand.u32 %v5640, 4294901760
        %v5918 = vsub.f32 %v5640, %v5917
        %v5919 = vand.u32 %v5918, 4294901760
        %v5920 = vsub.f32 %v5918, %v5919
        %v5921 = vand.u32 %v5920, 4294901760
        %5922 = vmatmul.f32.gmra.mxu0 %v5921
        %v5923 = vpop.f32.mrf.mxu0
        %v5924 = vadd.f32 %v5637, %v5923
        %5925 = vdwg.mxu0
        %5926 = vmatpush.msra.mxu0 0.0
        %5927 = vmatpush.msra.mxu0 0.0
        %5928 = vmatpush.msra.mxu0 0.0
        %5929 = vmatpush.msra.mxu0 0.0
        %5930 = vmatpush.msra.mxu0 0.0
        %5931 = vmatpush.msra.mxu0 0.0
        %5932 = vmatpush.msra.mxu0 0.0
        %v5933 = vand.u32 %v5631, 4294901760
        %v5934 = vsub.f32 %v5631, %v5933
        %v5935 = vand.u32 %v5934, 4294901760
        %v5936 = vsub.f32 %v5934, %v5935
        %v5937 = vand.u32 %v5936, 4294901760
        %5938 = vmatpush.msra.mxu0 %v5937
        %v5939 = vand.u32 %v5629, 4294901760
        %v5940 = vsub.f32 %v5629, %v5939
        %v5941 = vand.u32 %v5940, 4294901760
        %v5942 = vsub.f32 %v5940, %v5941
        %v5943 = vand.u32 %v5942, 4294901760
        %5944 = vmatpush.msra.mxu0 %v5943
        %v5945 = vand.u32 %v5627, 4294901760
        %v5946 = vsub.f32 %v5627, %v5945
        %v5947 = vand.u32 %v5946, 4294901760
        %v5948 = vsub.f32 %v5946, %v5947
        %v5949 = vand.u32 %v5948, 4294901760
        %5950 = vmatpush.msra.mxu0 %v5949
        %v5951 = vand.u32 %v5625, 4294901760
        %v5952 = vsub.f32 %v5625, %v5951
        %v5953 = vand.u32 %v5952, 4294901760
        %v5954 = vsub.f32 %v5952, %v5953
        %v5955 = vand.u32 %v5954, 4294901760
        %5956 = vmatpush.msra.mxu0 %v5955
        %v5957 = vand.u32 %v5623, 4294901760
        %v5958 = vsub.f32 %v5623, %v5957
        %v5959 = vand.u32 %v5958, 4294901760
        %v5960 = vsub.f32 %v5958, %v5959
        %v5961 = vand.u32 %v5960, 4294901760
        %5962 = vmatpush.msra.mxu0 %v5961
        %v5963 = vand.u32 %v5621, 4294901760
        %v5964 = vsub.f32 %v5621, %v5963
        %v5965 = vand.u32 %v5964, 4294901760
        %v5966 = vsub.f32 %v5964, %v5965
        %v5967 = vand.u32 %v5966, 4294901760
        %5968 = vmatpush.msra.mxu0 %v5967
        %v5969 = vand.u32 %v5619, 4294901760
        %v5970 = vsub.f32 %v5619, %v5969
        %v5971 = vand.u32 %v5970, 4294901760
        %v5972 = vsub.f32 %v5970, %v5971
        %v5973 = vand.u32 %v5972, 4294901760
        %5974 = vmatpush.msra.mxu0 %v5973
        %v5975 = vand.u32 %v5617, 4294901760
        %v5976 = vsub.f32 %v5617, %v5975
        %v5977 = vand.u32 %v5976, 4294901760
        %v5978 = vsub.f32 %v5976, %v5977
        %v5979 = vand.u32 %v5978, 4294901760
        %5980 = vmatpush.msra.mxu0 %v5979
        %v5981 = vand.u32 %v5615, 4294901760
        %v5982 = vsub.f32 %v5615, %v5981
        %v5983 = vand.u32 %v5982, 4294901760
        %v5984 = vsub.f32 %v5982, %v5983
        %v5985 = vand.u32 %v5984, 4294901760
        %5986 = vmatpush.msra.mxu0 %v5985
        %v5987 = vand.u32 %v5640, 4294901760
        %5988 = vmatmul.f32.gmra.mxu0 %v5987
        %v5989 = vpop.f32.mrf.mxu0
        %v5990 = vadd.f32 %v5924, %v5989
        %5991 = vdwg.mxu0
        %5992 = vmatpush.msra.mxu0 0.0
        %5993 = vmatpush.msra.mxu0 0.0
        %5994 = vmatpush.msra.mxu0 0.0
        %5995 = vmatpush.msra.mxu0 0.0
        %5996 = vmatpush.msra.mxu0 0.0
        %5997 = vmatpush.msra.mxu0 0.0
        %5998 = vmatpush.msra.mxu0 0.0
        %v5999 = vand.u32 %v5631, 4294901760
        %v6000 = vsub.f32 %v5631, %v5999
        %6001 = vmatpush.msra.mxu0 %v6000
        %v6002 = vand.u32 %v5629, 4294901760
        %v6003 = vsub.f32 %v5629, %v6002
        %6004 = vmatpush.msra.mxu0 %v6003
        %v6005 = vand.u32 %v5627, 4294901760
        %v6006 = vsub.f32 %v5627, %v6005
        %6007 = vmatpush.msra.mxu0 %v6006
        %v6008 = vand.u32 %v5625, 4294901760
        %v6009 = vsub.f32 %v5625, %v6008
        %6010 = vmatpush.msra.mxu0 %v6009
        %v6011 = vand.u32 %v5623, 4294901760
        %v6012 = vsub.f32 %v5623, %v6011
        %6013 = vmatpush.msra.mxu0 %v6012
        %v6014 = vand.u32 %v5621, 4294901760
        %v6015 = vsub.f32 %v5621, %v6014
        %6016 = vmatpush.msra.mxu0 %v6015
        %v6017 = vand.u32 %v5619, 4294901760
        %v6018 = vsub.f32 %v5619, %v6017
        %6019 = vmatpush.msra.mxu0 %v6018
        %v6020 = vand.u32 %v5617, 4294901760
        %v6021 = vsub.f32 %v5617, %v6020
        %6022 = vmatpush.msra.mxu0 %v6021
        %v6023 = vand.u32 %v5615, 4294901760
        %v6024 = vsub.f32 %v5615, %v6023
        %6025 = vmatpush.msra.mxu0 %v6024
        %v6026 = vand.u32 %v5640, 4294901760
        %v6027 = vsub.f32 %v5640, %v6026
        %6028 = vmatmul.f32.gmra.mxu0 %v6027
        %v6029 = vpop.f32.mrf.mxu0
        %v6030 = vadd.f32 %v5990, %v6029
        %6031 = vdwg.mxu0
        %6032 = vmatpush.msra.mxu0 0.0
        %6033 = vmatpush.msra.mxu0 0.0
        %6034 = vmatpush.msra.mxu0 0.0
        %6035 = vmatpush.msra.mxu0 0.0
        %6036 = vmatpush.msra.mxu0 0.0
        %6037 = vmatpush.msra.mxu0 0.0
        %6038 = vmatpush.msra.mxu0 0.0
        %v6039 = vand.u32 %v5631, 4294901760
        %6040 = vmatpush.msra.mxu0 %v6039
        %v6041 = vand.u32 %v5629, 4294901760
        %6042 = vmatpush.msra.mxu0 %v6041
        %v6043 = vand.u32 %v5627, 4294901760
        %6044 = vmatpush.msra.mxu0 %v6043
        %v6045 = vand.u32 %v5625, 4294901760
        %6046 = vmatpush.msra.mxu0 %v6045
        %v6047 = vand.u32 %v5623, 4294901760
        %6048 = vmatpush.msra.mxu0 %v6047
        %v6049 = vand.u32 %v5621, 4294901760
        %6050 = vmatpush.msra.mxu0 %v6049
        %v6051 = vand.u32 %v5619, 4294901760
        %6052 = vmatpush.msra.mxu0 %v6051
        %v6053 = vand.u32 %v5617, 4294901760
        %6054 = vmatpush.msra.mxu0 %v6053
        %v6055 = vand.u32 %v5615, 4294901760
        %6056 = vmatpush.msra.mxu0 %v6055
        %v6057 = vand.u32 %v5640, 4294901760
        %v6058 = vsub.f32 %v5640, %v6057
        %v6059 = vand.u32 %v6058, 4294901760
        %6060 = vmatmul.f32.gmra.mxu0 %v6059
        %v6061 = vpop.f32.mrf.mxu0
        %v6062 = vadd.f32 %v6030, %v6061
        %6063 = vdwg.mxu0
        %6064 = vmatpush.msra.mxu0 0.0
        %6065 = vmatpush.msra.mxu0 0.0
        %6066 = vmatpush.msra.mxu0 0.0
        %6067 = vmatpush.msra.mxu0 0.0
        %6068 = vmatpush.msra.mxu0 0.0
        %6069 = vmatpush.msra.mxu0 0.0
        %6070 = vmatpush.msra.mxu0 0.0
        %v6071 = vand.u32 %v5631, 4294901760
        %v6072 = vsub.f32 %v5631, %v6071
        %v6073 = vand.u32 %v6072, 4294901760
        %6074 = vmatpush.msra.mxu0 %v6073
        %v6075 = vand.u32 %v5629, 4294901760
        %v6076 = vsub.f32 %v5629, %v6075
        %v6077 = vand.u32 %v6076, 4294901760
        %6078 = vmatpush.msra.mxu0 %v6077
        %v6079 = vand.u32 %v5627, 4294901760
        %v6080 = vsub.f32 %v5627, %v6079
        %v6081 = vand.u32 %v6080, 4294901760
        %6082 = vmatpush.msra.mxu0 %v6081
        %v6083 = vand.u32 %v5625, 4294901760
        %v6084 = vsub.f32 %v5625, %v6083
        %v6085 = vand.u32 %v6084, 4294901760
        %6086 = vmatpush.msra.mxu0 %v6085
        %v6087 = vand.u32 %v5623, 4294901760
        %v6088 = vsub.f32 %v5623, %v6087
        %v6089 = vand.u32 %v6088, 4294901760
        %6090 = vmatpush.msra.mxu0 %v6089
        %v6091 = vand.u32 %v5621, 4294901760
        %v6092 = vsub.f32 %v5621, %v6091
        %v6093 = vand.u32 %v6092, 4294901760
        %6094 = vmatpush.msra.mxu0 %v6093
        %v6095 = vand.u32 %v5619, 4294901760
        %v6096 = vsub.f32 %v5619, %v6095
        %v6097 = vand.u32 %v6096, 4294901760
        %6098 = vmatpush.msra.mxu0 %v6097
        %v6099 = vand.u32 %v5617, 4294901760
        %v6100 = vsub.f32 %v5617, %v6099
        %v6101 = vand.u32 %v6100, 4294901760
        %6102 = vmatpush.msra.mxu0 %v6101
        %v6103 = vand.u32 %v5615, 4294901760
        %v6104 = vsub.f32 %v5615, %v6103
        %v6105 = vand.u32 %v6104, 4294901760
        %6106 = vmatpush.msra.mxu0 %v6105
        %v6107 = vand.u32 %v5640, 4294901760
        %6108 = vmatmul.f32.gmra.mxu0 %v6107
        %v6109 = vpop.f32.mrf.mxu0
        %v6110 = vadd.f32 %v6062, %v6109
        %6111 = vdwg.mxu0
        %6112 = vmatpush.msra.mxu0 0.0
        %6113 = vmatpush.msra.mxu0 0.0
        %6114 = vmatpush.msra.mxu0 0.0
        %6115 = vmatpush.msra.mxu0 0.0
        %6116 = vmatpush.msra.mxu0 0.0
        %6117 = vmatpush.msra.mxu0 0.0
        %6118 = vmatpush.msra.mxu0 0.0
        %v6119 = vand.u32 %v5631, 4294901760
        %6120 = vmatpush.msra.mxu0 %v6119
        %v6121 = vand.u32 %v5629, 4294901760
        %6122 = vmatpush.msra.mxu0 %v6121
        %v6123 = vand.u32 %v5627, 4294901760
        %6124 = vmatpush.msra.mxu0 %v6123
        %v6125 = vand.u32 %v5625, 4294901760
        %6126 = vmatpush.msra.mxu0 %v6125
        %v6127 = vand.u32 %v5623, 4294901760
        %6128 = vmatpush.msra.mxu0 %v6127
        %v6129 = vand.u32 %v5621, 4294901760
        %6130 = vmatpush.msra.mxu0 %v6129
        %v6131 = vand.u32 %v5619, 4294901760
        %6132 = vmatpush.msra.mxu0 %v6131
        %v6133 = vand.u32 %v5617, 4294901760
        %6134 = vmatpush.msra.mxu0 %v6133
        %v6135 = vand.u32 %v5615, 4294901760
        %6136 = vmatpush.msra.mxu0 %v6135
        %v6137 = vand.u32 %v5640, 4294901760
        %6138 = vmatmul.f32.gmra.mxu0 %v6137
        %v6139 = vpop.f32.mrf.mxu0
        %v6140 = vadd.f32 %v6110, %v6139
        %6141 = vdwg.mxu0
        %vm6142 = vcmp.ge.f32.partialorder %v5890, 0.0
        %vm6143 = vcmp.ge.f32.partialorder %v6140, 0.0
        %v6144 = vmul.f32 %v5890, 0.01
        %v6145 = vmul.f32 %v6140, 0.01
        %v6146 = vsel %vm6142, %v5890, %v6144
        %v6147 = vsel %vm6143, %v6140, %v6145
        %6148 = vrot.lane.b32.xlu0 %v6146, 17
        %v6149 = vpop.permute.xlu0 %6148
        %6150 = vrot.lane.b32.xlu0 %v6147, 17
        %v6151 = vpop.permute.xlu0 %6150
        %v6152 = vsel %vm238, %v6149, %v6151
        %v6153 = vsel %vm238, %v6151, %v6149
        %v6154 = vld [vmem:[#allocation5] sm:$0xff]
        %v6155 = vld [vmem:[#allocation5 + $0x8] sm:$0xff]
        %v6156 = vmul.f32 %v6153, %v6154
        %v6157 = vmul.f32 %v6152, %v6155
        %6158 = vst [vmem:[#allocation2] sm:$0xff] %v6156
        %6159 = vst [vmem:[#allocation2 + $0x8] sm:$0xff] %v6157
        %6160 = vrot.lane.b32.xlu0 %v6146, 16
        %v6161 = vpop.permute.xlu0 %6160
        %6162 = vrot.lane.b32.xlu0 %v6147, 16
        %v6163 = vpop.permute.xlu0 %6162
        %v6164 = vsel %vm251, %v6161, %v6163
        %v6165 = vsel %vm251, %v6163, %v6161
        %v6166 = vld [vmem:[%s254] sm:$0xff]
        %v6167 = vld [vmem:[%s254 + $0x8] sm:$0xff]
        %v6168 = vmul.f32 %v6165, %v6166
        %v6169 = vmul.f32 %v6164, %v6167
        %6170 = vst [vmem:[#allocation2 + $0x10] sm:$0xff] %v6168
        %6171 = vst [vmem:[#allocation2 + $0x18] sm:$0xff] %v6169
        %6172 = vrot.lane.b32.xlu0 %v6146, 15
        %v6173 = vpop.permute.xlu0 %6172
        %6174 = vrot.lane.b32.xlu0 %v6147, 15
        %v6175 = vpop.permute.xlu0 %6174
        %v6176 = vsel %vm265, %v6173, %v6175
        %v6177 = vsel %vm265, %v6175, %v6173
        %v6178 = vld [vmem:[%s268] sm:$0xff]
        %v6179 = vld [vmem:[%s268 + $0x8] sm:$0xff]
        %v6180 = vmul.f32 %v6177, %v6178
        %v6181 = vmul.f32 %v6176, %v6179
        %6182 = vst [vmem:[#allocation2 + $0x20] sm:$0xff] %v6180
        %6183 = vst [vmem:[#allocation2 + $0x28] sm:$0xff] %v6181
        %6184 = vrot.lane.b32.xlu0 %v6146, 1
        %v6185 = vpop.permute.xlu0 %6184
        %6186 = vrot.lane.b32.xlu0 %v6147, 1
        %v6187 = vpop.permute.xlu0 %6186
        %v6188 = vsel %vm279, %v6185, %v6187
        %v6189 = vsel %vm279, %v6187, %v6185
        %v6190 = vld [vmem:[%s282] sm:$0xff]
        %v6191 = vld [vmem:[%s282 + $0x8] sm:$0xff]
        %v6192 = vmul.f32 %v6189, %v6190
        %v6193 = vmul.f32 %v6188, %v6191
        %6194 = vst [vmem:[#allocation2 + $0x30] sm:$0xff] %v6192
        %6195 = vst [vmem:[#allocation2 + $0x38] sm:$0xff] %v6193
        %6196 = vst [vmem:[#allocation2 + $0x40] sm:$0xff] %v6146
        %6197 = vst [vmem:[#allocation2 + $0x48] sm:$0xff] %v6147
        %6198 = vrot.lane.b32.xlu0 %v6146, 127
        %v6199 = vpop.permute.xlu0 %6198
        %6200 = vrot.lane.b32.xlu0 %v6147, 127
        %v6201 = vpop.permute.xlu0 %6200
        %v6202 = vsel %vm295, %v6199, %v6201
        %v6203 = vsel %vm295, %v6201, %v6199
        %v6204 = vld [vmem:[%s298] sm:$0xff]
        %v6205 = vld [vmem:[%s298 + $0x8] sm:$0xff]
        %v6206 = vmul.f32 %v6202, %v6204
        %v6207 = vmul.f32 %v6203, %v6205
        %6208 = vst [vmem:[#allocation2 + $0x50] sm:$0xff] %v6206
        %6209 = vst [vmem:[#allocation2 + $0x58] sm:$0xff] %v6207
        %6210 = vrot.lane.b32.xlu0 %v6146, 113
        %v6211 = vpop.permute.xlu0 %6210
        %6212 = vrot.lane.b32.xlu0 %v6147, 113
        %v6213 = vpop.permute.xlu0 %6212
        %v6214 = vsel %vm309, %v6211, %v6213
        %v6215 = vsel %vm309, %v6213, %v6211
        %v6216 = vld [vmem:[%s312] sm:$0xff]
        %v6217 = vld [vmem:[%s312 + $0x8] sm:$0xff]
        %v6218 = vmul.f32 %v6214, %v6216
        %v6219 = vmul.f32 %v6215, %v6217
        %6220 = vst [vmem:[#allocation2 + $0x60] sm:$0xff] %v6218
        %6221 = vst [vmem:[#allocation2 + $0x68] sm:$0xff] %v6219
        %6222 = vrot.lane.b32.xlu0 %v6146, 112
        %v6223 = vpop.permute.xlu0 %6222
        %6224 = vrot.lane.b32.xlu0 %v6147, 112
        %v6225 = vpop.permute.xlu0 %6224
        %v6226 = vsel %vm323, %v6223, %v6225
        %v6227 = vsel %vm323, %v6225, %v6223
        %v6228 = vld [vmem:[%s326] sm:$0xff]
        %v6229 = vld [vmem:[%s326 + $0x8] sm:$0xff]
        %v6230 = vmul.f32 %v6226, %v6228
        %v6231 = vmul.f32 %v6227, %v6229
        %6232 = vst [vmem:[#allocation2 + $0x70] sm:$0xff] %v6230
        %6233 = vst [vmem:[#allocation2 + $0x78] sm:$0xff] %v6231
        %6234 = vrot.lane.b32.xlu0 %v6146, 111
        %v6235 = vpop.permute.xlu0 %6234
        %6236 = vrot.lane.b32.xlu0 %v6147, 111
        %v6237 = vpop.permute.xlu0 %6236
        %v6238 = vsel %vm337, %v6235, %v6237
        %v6239 = vsel %vm337, %v6237, %v6235
        %v6240 = vld [vmem:[%s340] sm:$0xff]
        %v6241 = vld [vmem:[%s340 + $0x8] sm:$0xff]
        %v6242 = vmul.f32 %v6238, %v6240
        %v6243 = vmul.f32 %v6239, %v6241
        %6244 = vst [vmem:[#allocation2 + $0x80] sm:$0xff] %v6242
        %6245 = vst [vmem:[#allocation2 + $0x88] sm:$0xff] %v6243
        %s6246 = scalar_lea.vmem [#allocation3], 224
        %v6247 = vld [vmem:[%s6246] sm:$0xff]
        %v6248 = vld [vmem:[%s6246 + $0x10] sm:$0xff]
        %v6249 = vld [vmem:[#allocation2] sm:$0xff]
        %v6250 = vld [vmem:[#allocation2 + $0x8] sm:$0xff]
        %v6251 = vld [vmem:[#allocation2 + $0x10] sm:$0xff]
        %v6252 = vld [vmem:[#allocation2 + $0x18] sm:$0xff]
        %v6253 = vld [vmem:[#allocation2 + $0x20] sm:$0xff]
        %v6254 = vld [vmem:[#allocation2 + $0x28] sm:$0xff]
        %v6255 = vld [vmem:[#allocation2 + $0x30] sm:$0xff]
        %v6256 = vld [vmem:[#allocation2 + $0x38] sm:$0xff]
        %v6257 = vld [vmem:[#allocation2 + $0x40] sm:$0xff]
        %v6258 = vld [vmem:[#allocation2 + $0x48] sm:$0xff]
        %v6259 = vld [vmem:[#allocation2 + $0x50] sm:$0xff]
        %v6260 = vld [vmem:[#allocation2 + $0x58] sm:$0xff]
        %v6261 = vld [vmem:[#allocation2 + $0x60] sm:$0xff]
        %v6262 = vld [vmem:[#allocation2 + $0x68] sm:$0xff]
        %v6263 = vld [vmem:[#allocation2 + $0x70] sm:$0xff]
        %v6264 = vld [vmem:[#allocation2 + $0x78] sm:$0xff]
        %v6265 = vld [vmem:[#allocation2 + $0x80] sm:$0xff]
        %v6266 = vld [vmem:[#allocation2 + $0x88] sm:$0xff]
        %s6267 = scalar_lea.vmem %s2, 112
        %v6268 = vld [vmem:[%s6267] sm:$0xff]
        %v6269 = vld [vmem:[%s6267 + $0x8] sm:$0xff]
        %6271 = vset.pattern.permute.xlu0 0
        %6272 = vperm.xlu0 %6271, %v6268
        %v6273 = vpop.permute.xlu0 %6272
        %6276 = vset.pattern.permute.xlu0 0
        %6277 = vperm.xlu0 %6276, %v6269
        %v6278 = vpop.permute.xlu0 %6277
        %v6281 = vsel %vm379, %v6247, 0
        %v6284 = vsel %vm379, %v6248, 0
        %6286 = vmatpush.msra.mxu0 0.0
        %6287 = vmatpush.msra.mxu0 0.0
        %6288 = vmatpush.msra.mxu0 0.0
        %6289 = vmatpush.msra.mxu0 0.0
        %6290 = vmatpush.msra.mxu0 0.0
        %6291 = vmatpush.msra.mxu0 0.0
        %6292 = vmatpush.msra.mxu0 0.0
        %v6293 = vand.u32 %v6265, 4294901760
        %6294 = vmatpush.msra.mxu0 %v6293
        %v6295 = vand.u32 %v6263, 4294901760
        %6296 = vmatpush.msra.mxu0 %v6295
        %v6297 = vand.u32 %v6261, 4294901760
        %6298 = vmatpush.msra.mxu0 %v6297
        %v6299 = vand.u32 %v6259, 4294901760
        %6300 = vmatpush.msra.mxu0 %v6299
        %v6301 = vand.u32 %v6257, 4294901760
        %6302 = vmatpush.msra.mxu0 %v6301
        %v6303 = vand.u32 %v6255, 4294901760
        %6304 = vmatpush.msra.mxu0 %v6303
        %v6305 = vand.u32 %v6253, 4294901760
        %6306 = vmatpush.msra.mxu0 %v6305
        %v6307 = vand.u32 %v6251, 4294901760
        %6308 = vmatpush.msra.mxu0 %v6307
        %v6309 = vand.u32 %v6249, 4294901760
        %6310 = vmatpush.msra.mxu0 %v6309
        %v6311 = vand.u32 %v6281, 4294901760
        %v6312 = vsub.f32 %v6281, %v6311
        %v6313 = vand.u32 %v6312, 4294901760
        %v6314 = vsub.f32 %v6312, %v6313
        %v6315 = vand.u32 %v6314, 4294901760
        %6316 = vmatmul.f32.gmra.mxu0 %v6315
        %v6317 = vpop.f32.mrf.mxu0
        %v6318 = vadd.f32 %v6273, %v6317
        %v6319 = vand.u32 %v6284, 4294901760
        %v6320 = vsub.f32 %v6284, %v6319
        %v6321 = vand.u32 %v6320, 4294901760
        %v6322 = vsub.f32 %v6320, %v6321
        %v6323 = vand.u32 %v6322, 4294901760
        %6324 = vmatmul.f32.gmra.mxu0 %v6323
        %v6325 = vpop.f32.mrf.mxu0
        %v6326 = vadd.f32 %v6278, %v6325
        %6327 = vdwg.mxu0
        %6328 = vmatpush.msra.mxu0 0.0
        %6329 = vmatpush.msra.mxu0 0.0
        %6330 = vmatpush.msra.mxu0 0.0
        %6331 = vmatpush.msra.mxu0 0.0
        %6332 = vmatpush.msra.mxu0 0.0
        %6333 = vmatpush.msra.mxu0 0.0
        %6334 = vmatpush.msra.mxu0 0.0
        %v6335 = vand.u32 %v6265, 4294901760
        %v6336 = vsub.f32 %v6265, %v6335
        %v6337 = vand.u32 %v6336, 4294901760
        %v6338 = vsub.f32 %v6336, %v6337
        %v6339 = vand.u32 %v6338, 4294901760
        %6340 = vmatpush.msra.mxu0 %v6339
        %v6341 = vand.u32 %v6263, 4294901760
        %v6342 = vsub.f32 %v6263, %v6341
        %v6343 = vand.u32 %v6342, 4294901760
        %v6344 = vsub.f32 %v6342, %v6343
        %v6345 = vand.u32 %v6344, 4294901760
        %6346 = vmatpush.msra.mxu0 %v6345
        %v6347 = vand.u32 %v6261, 4294901760
        %v6348 = vsub.f32 %v6261, %v6347
        %v6349 = vand.u32 %v6348, 4294901760
        %v6350 = vsub.f32 %v6348, %v6349
        %v6351 = vand.u32 %v6350, 4294901760
        %6352 = vmatpush.msra.mxu0 %v6351
        %v6353 = vand.u32 %v6259, 4294901760
        %v6354 = vsub.f32 %v6259, %v6353
        %v6355 = vand.u32 %v6354, 4294901760
        %v6356 = vsub.f32 %v6354, %v6355
        %v6357 = vand.u32 %v6356, 4294901760
        %6358 = vmatpush.msra.mxu0 %v6357
        %v6359 = vand.u32 %v6257, 4294901760
        %v6360 = vsub.f32 %v6257, %v6359
        %v6361 = vand.u32 %v6360, 4294901760
        %v6362 = vsub.f32 %v6360, %v6361
        %v6363 = vand.u32 %v6362, 4294901760
        %6364 = vmatpush.msra.mxu0 %v6363
        %v6365 = vand.u32 %v6255, 4294901760
        %v6366 = vsub.f32 %v6255, %v6365
        %v6367 = vand.u32 %v6366, 4294901760
        %v6368 = vsub.f32 %v6366, %v6367
        %v6369 = vand.u32 %v6368, 4294901760
        %6370 = vmatpush.msra.mxu0 %v6369
        %v6371 = vand.u32 %v6253, 4294901760
        %v6372 = vsub.f32 %v6253, %v6371
        %v6373 = vand.u32 %v6372, 4294901760
        %v6374 = vsub.f32 %v6372, %v6373
        %v6375 = vand.u32 %v6374, 4294901760
        %6376 = vmatpush.msra.mxu0 %v6375
        %v6377 = vand.u32 %v6251, 4294901760
        %v6378 = vsub.f32 %v6251, %v6377
        %v6379 = vand.u32 %v6378, 4294901760
        %v6380 = vsub.f32 %v6378, %v6379
        %v6381 = vand.u32 %v6380, 4294901760
        %6382 = vmatpush.msra.mxu0 %v6381
        %v6383 = vand.u32 %v6249, 4294901760
        %v6384 = vsub.f32 %v6249, %v6383
        %v6385 = vand.u32 %v6384, 4294901760
        %v6386 = vsub.f32 %v6384, %v6385
        %v6387 = vand.u32 %v6386, 4294901760
        %6388 = vmatpush.msra.mxu0 %v6387
        %v6389 = vand.u32 %v6281, 4294901760
        %6390 = vmatmul.f32.gmra.mxu0 %v6389
        %v6391 = vpop.f32.mrf.mxu0
        %v6392 = vadd.f32 %v6318, %v6391
        %v6393 = vand.u32 %v6284, 4294901760
        %6394 = vmatmul.f32.gmra.mxu0 %v6393
        %v6395 = vpop.f32.mrf.mxu0
        %v6396 = vadd.f32 %v6326, %v6395
        %6397 = vdwg.mxu0
        %6398 = vmatpush.msra.mxu0 0.0
        %6399 = vmatpush.msra.mxu0 0.0
        %6400 = vmatpush.msra.mxu0 0.0
        %6401 = vmatpush.msra.mxu0 0.0
        %6402 = vmatpush.msra.mxu0 0.0
        %6403 = vmatpush.msra.mxu0 0.0
        %6404 = vmatpush.msra.mxu0 0.0
        %v6405 = vand.u32 %v6265, 4294901760
        %v6406 = vsub.f32 %v6265, %v6405
        %6407 = vmatpush.msra.mxu0 %v6406
        %v6408 = vand.u32 %v6263, 4294901760
        %v6409 = vsub.f32 %v6263, %v6408
        %6410 = vmatpush.msra.mxu0 %v6409
        %v6411 = vand.u32 %v6261, 4294901760
        %v6412 = vsub.f32 %v6261, %v6411
        %6413 = vmatpush.msra.mxu0 %v6412
        %v6414 = vand.u32 %v6259, 4294901760
        %v6415 = vsub.f32 %v6259, %v6414
        %6416 = vmatpush.msra.mxu0 %v6415
        %v6417 = vand.u32 %v6257, 4294901760
        %v6418 = vsub.f32 %v6257, %v6417
        %6419 = vmatpush.msra.mxu0 %v6418
        %v6420 = vand.u32 %v6255, 4294901760
        %v6421 = vsub.f32 %v6255, %v6420
        %6422 = vmatpush.msra.mxu0 %v6421
        %v6423 = vand.u32 %v6253, 4294901760
        %v6424 = vsub.f32 %v6253, %v6423
        %6425 = vmatpush.msra.mxu0 %v6424
        %v6426 = vand.u32 %v6251, 4294901760
        %v6427 = vsub.f32 %v6251, %v6426
        %6428 = vmatpush.msra.mxu0 %v6427
        %v6429 = vand.u32 %v6249, 4294901760
        %v6430 = vsub.f32 %v6249, %v6429
        %6431 = vmatpush.msra.mxu0 %v6430
        %v6432 = vand.u32 %v6281, 4294901760
        %v6433 = vsub.f32 %v6281, %v6432
        %6434 = vmatmul.f32.gmra.mxu0 %v6433
        %v6435 = vpop.f32.mrf.mxu0
        %v6436 = vadd.f32 %v6392, %v6435
        %v6437 = vand.u32 %v6284, 4294901760
        %v6438 = vsub.f32 %v6284, %v6437
        %6439 = vmatmul.f32.gmra.mxu0 %v6438
        %v6440 = vpop.f32.mrf.mxu0
        %v6441 = vadd.f32 %v6396, %v6440
        %6442 = vdwg.mxu0
        %6443 = vmatpush.msra.mxu0 0.0
        %6444 = vmatpush.msra.mxu0 0.0
        %6445 = vmatpush.msra.mxu0 0.0
        %6446 = vmatpush.msra.mxu0 0.0
        %6447 = vmatpush.msra.mxu0 0.0
        %6448 = vmatpush.msra.mxu0 0.0
        %6449 = vmatpush.msra.mxu0 0.0
        %v6450 = vand.u32 %v6265, 4294901760
        %6451 = vmatpush.msra.mxu0 %v6450
        %v6452 = vand.u32 %v6263, 4294901760
        %6453 = vmatpush.msra.mxu0 %v6452
        %v6454 = vand.u32 %v6261, 4294901760
        %6455 = vmatpush.msra.mxu0 %v6454
        %v6456 = vand.u32 %v6259, 4294901760
        %6457 = vmatpush.msra.mxu0 %v6456
        %v6458 = vand.u32 %v6257, 4294901760
        %6459 = vmatpush.msra.mxu0 %v6458
        %v6460 = vand.u32 %v6255, 4294901760
        %6461 = vmatpush.msra.mxu0 %v6460
        %v6462 = vand.u32 %v6253, 4294901760
        %6463 = vmatpush.msra.mxu0 %v6462
        %v6464 = vand.u32 %v6251, 4294901760
        %6465 = vmatpush.msra.mxu0 %v6464
        %v6466 = vand.u32 %v6249, 4294901760
        %6467 = vmatpush.msra.mxu0 %v6466
        %v6468 = vand.u32 %v6281, 4294901760
        %v6469 = vsub.f32 %v6281, %v6468
        %v6470 = vand.u32 %v6469, 4294901760
        %6471 = vmatmul.f32.gmra.mxu0 %v6470
        %v6472 = vpop.f32.mrf.mxu0
        %v6473 = vadd.f32 %v6436, %v6472
        %v6474 = vand.u32 %v6284, 4294901760
        %v6475 = vsub.f32 %v6284, %v6474
        %v6476 = vand.u32 %v6475, 4294901760
        %6477 = vmatmul.f32.gmra.mxu0 %v6476
        %v6478 = vpop.f32.mrf.mxu0
        %v6479 = vadd.f32 %v6441, %v6478
        %6480 = vdwg.mxu0
        %6481 = vmatpush.msra.mxu0 0.0
        %6482 = vmatpush.msra.mxu0 0.0
        %6483 = vmatpush.msra.mxu0 0.0
        %6484 = vmatpush.msra.mxu0 0.0
        %6485 = vmatpush.msra.mxu0 0.0
        %6486 = vmatpush.msra.mxu0 0.0
        %6487 = vmatpush.msra.mxu0 0.0
        %v6488 = vand.u32 %v6265, 4294901760
        %v6489 = vsub.f32 %v6265, %v6488
        %v6490 = vand.u32 %v6489, 4294901760
        %6491 = vmatpush.msra.mxu0 %v6490
        %v6492 = vand.u32 %v6263, 4294901760
        %v6493 = vsub.f32 %v6263, %v6492
        %v6494 = vand.u32 %v6493, 4294901760
        %6495 = vmatpush.msra.mxu0 %v6494
        %v6496 = vand.u32 %v6261, 4294901760
        %v6497 = vsub.f32 %v6261, %v6496
        %v6498 = vand.u32 %v6497, 4294901760
        %6499 = vmatpush.msra.mxu0 %v6498
        %v6500 = vand.u32 %v6259, 4294901760
        %v6501 = vsub.f32 %v6259, %v6500
        %v6502 = vand.u32 %v6501, 4294901760
        %6503 = vmatpush.msra.mxu0 %v6502
        %v6504 = vand.u32 %v6257, 4294901760
        %v6505 = vsub.f32 %v6257, %v6504
        %v6506 = vand.u32 %v6505, 4294901760
        %6507 = vmatpush.msra.mxu0 %v6506
        %v6508 = vand.u32 %v6255, 4294901760
        %v6509 = vsub.f32 %v6255, %v6508
        %v6510 = vand.u32 %v6509, 4294901760
        %6511 = vmatpush.msra.mxu0 %v6510
        %v6512 = vand.u32 %v6253, 4294901760
        %v6513 = vsub.f32 %v6253, %v6512
        %v6514 = vand.u32 %v6513, 4294901760
        %6515 = vmatpush.msra.mxu0 %v6514
        %v6516 = vand.u32 %v6251, 4294901760
        %v6517 = vsub.f32 %v6251, %v6516
        %v6518 = vand.u32 %v6517, 4294901760
        %6519 = vmatpush.msra.mxu0 %v6518
        %v6520 = vand.u32 %v6249, 4294901760
        %v6521 = vsub.f32 %v6249, %v6520
        %v6522 = vand.u32 %v6521, 4294901760
        %6523 = vmatpush.msra.mxu0 %v6522
        %v6524 = vand.u32 %v6281, 4294901760
        %6525 = vmatmul.f32.gmra.mxu0 %v6524
        %v6526 = vpop.f32.mrf.mxu0
        %v6527 = vadd.f32 %v6473, %v6526
        %v6528 = vand.u32 %v6284, 4294901760
        %6529 = vmatmul.f32.gmra.mxu0 %v6528
        %v6530 = vpop.f32.mrf.mxu0
        %v6531 = vadd.f32 %v6479, %v6530
        %6532 = vdwg.mxu0
        %6533 = vmatpush.msra.mxu0 0.0
        %6534 = vmatpush.msra.mxu0 0.0
        %6535 = vmatpush.msra.mxu0 0.0
        %6536 = vmatpush.msra.mxu0 0.0
        %6537 = vmatpush.msra.mxu0 0.0
        %6538 = vmatpush.msra.mxu0 0.0
        %6539 = vmatpush.msra.mxu0 0.0
        %v6540 = vand.u32 %v6265, 4294901760
        %6541 = vmatpush.msra.mxu0 %v6540
        %v6542 = vand.u32 %v6263, 4294901760
        %6543 = vmatpush.msra.mxu0 %v6542
        %v6544 = vand.u32 %v6261, 4294901760
        %6545 = vmatpush.msra.mxu0 %v6544
        %v6546 = vand.u32 %v6259, 4294901760
        %6547 = vmatpush.msra.mxu0 %v6546
        %v6548 = vand.u32 %v6257, 4294901760
        %6549 = vmatpush.msra.mxu0 %v6548
        %v6550 = vand.u32 %v6255, 4294901760
        %6551 = vmatpush.msra.mxu0 %v6550
        %v6552 = vand.u32 %v6253, 4294901760
        %6553 = vmatpush.msra.mxu0 %v6552
        %v6554 = vand.u32 %v6251, 4294901760
        %6555 = vmatpush.msra.mxu0 %v6554
        %v6556 = vand.u32 %v6249, 4294901760
        %6557 = vmatpush.msra.mxu0 %v6556
        %v6558 = vand.u32 %v6281, 4294901760
        %6559 = vmatmul.f32.gmra.mxu0 %v6558
        %v6560 = vpop.f32.mrf.mxu0
        %v6561 = vadd.f32 %v6527, %v6560
        %v6562 = vand.u32 %v6284, 4294901760
        %6563 = vmatmul.f32.gmra.mxu0 %v6562
        %v6564 = vpop.f32.mrf.mxu0
        %v6565 = vadd.f32 %v6531, %v6564
        %6566 = vdwg.mxu0
        %6567 = vmatpush.msra.mxu0 0.0
        %6568 = vmatpush.msra.mxu0 0.0
        %6569 = vmatpush.msra.mxu0 0.0
        %6570 = vmatpush.msra.mxu0 0.0
        %6571 = vmatpush.msra.mxu0 0.0
        %6572 = vmatpush.msra.mxu0 0.0
        %6573 = vmatpush.msra.mxu0 0.0
        %v6574 = vand.u32 %v6266, 4294901760
        %6575 = vmatpush.msra.mxu0 %v6574
        %v6576 = vand.u32 %v6264, 4294901760
        %6577 = vmatpush.msra.mxu0 %v6576
        %v6578 = vand.u32 %v6262, 4294901760
        %6579 = vmatpush.msra.mxu0 %v6578
        %v6580 = vand.u32 %v6260, 4294901760
        %6581 = vmatpush.msra.mxu0 %v6580
        %v6582 = vand.u32 %v6258, 4294901760
        %6583 = vmatpush.msra.mxu0 %v6582
        %v6584 = vand.u32 %v6256, 4294901760
        %6585 = vmatpush.msra.mxu0 %v6584
        %v6586 = vand.u32 %v6254, 4294901760
        %6587 = vmatpush.msra.mxu0 %v6586
        %v6588 = vand.u32 %v6252, 4294901760
        %6589 = vmatpush.msra.mxu0 %v6588
        %v6590 = vand.u32 %v6250, 4294901760
        %6591 = vmatpush.msra.mxu0 %v6590
        %v6592 = vand.u32 %v6281, 4294901760
        %v6593 = vsub.f32 %v6281, %v6592
        %v6594 = vand.u32 %v6593, 4294901760
        %v6595 = vsub.f32 %v6593, %v6594
        %v6596 = vand.u32 %v6595, 4294901760
        %6597 = vmatmul.f32.gmra.mxu0 %v6596
        %v6598 = vpop.f32.mrf.mxu0
        %v6599 = vadd.f32 %v6273, %v6598
        %v6600 = vand.u32 %v6284, 4294901760
        %v6601 = vsub.f32 %v6284, %v6600
        %v6602 = vand.u32 %v6601, 4294901760
        %v6603 = vsub.f32 %v6601, %v6602
        %v6604 = vand.u32 %v6603, 4294901760
        %6605 = vmatmul.f32.gmra.mxu0 %v6604
        %v6606 = vpop.f32.mrf.mxu0
        %v6607 = vadd.f32 %v6278, %v6606
        %6608 = vdwg.mxu0
        %6609 = vmatpush.msra.mxu0 0.0
        %6610 = vmatpush.msra.mxu0 0.0
        %6611 = vmatpush.msra.mxu0 0.0
        %6612 = vmatpush.msra.mxu0 0.0
        %6613 = vmatpush.msra.mxu0 0.0
        %6614 = vmatpush.msra.mxu0 0.0
        %6615 = vmatpush.msra.mxu0 0.0
        %v6616 = vand.u32 %v6266, 4294901760
        %v6617 = vsub.f32 %v6266, %v6616
        %v6618 = vand.u32 %v6617, 4294901760
        %v6619 = vsub.f32 %v6617, %v6618
        %v6620 = vand.u32 %v6619, 4294901760
        %6621 = vmatpush.msra.mxu0 %v6620
        %v6622 = vand.u32 %v6264, 4294901760
        %v6623 = vsub.f32 %v6264, %v6622
        %v6624 = vand.u32 %v6623, 4294901760
        %v6625 = vsub.f32 %v6623, %v6624
        %v6626 = vand.u32 %v6625, 4294901760
        %6627 = vmatpush.msra.mxu0 %v6626
        %v6628 = vand.u32 %v6262, 4294901760
        %v6629 = vsub.f32 %v6262, %v6628
        %v6630 = vand.u32 %v6629, 4294901760
        %v6631 = vsub.f32 %v6629, %v6630
        %v6632 = vand.u32 %v6631, 4294901760
        %6633 = vmatpush.msra.mxu0 %v6632
        %v6634 = vand.u32 %v6260, 4294901760
        %v6635 = vsub.f32 %v6260, %v6634
        %v6636 = vand.u32 %v6635, 4294901760
        %v6637 = vsub.f32 %v6635, %v6636
        %v6638 = vand.u32 %v6637, 4294901760
        %6639 = vmatpush.msra.mxu0 %v6638
        %v6640 = vand.u32 %v6258, 4294901760
        %v6641 = vsub.f32 %v6258, %v6640
        %v6642 = vand.u32 %v6641, 4294901760
        %v6643 = vsub.f32 %v6641, %v6642
        %v6644 = vand.u32 %v6643, 4294901760
        %6645 = vmatpush.msra.mxu0 %v6644
        %v6646 = vand.u32 %v6256, 4294901760
        %v6647 = vsub.f32 %v6256, %v6646
        %v6648 = vand.u32 %v6647, 4294901760
        %v6649 = vsub.f32 %v6647, %v6648
        %v6650 = vand.u32 %v6649, 4294901760
        %6651 = vmatpush.msra.mxu0 %v6650
        %v6652 = vand.u32 %v6254, 4294901760
        %v6653 = vsub.f32 %v6254, %v6652
        %v6654 = vand.u32 %v6653, 4294901760
        %v6655 = vsub.f32 %v6653, %v6654
        %v6656 = vand.u32 %v6655, 4294901760
        %6657 = vmatpush.msra.mxu0 %v6656
        %v6658 = vand.u32 %v6252, 4294901760
        %v6659 = vsub.f32 %v6252, %v6658
        %v6660 = vand.u32 %v6659, 4294901760
        %v6661 = vsub.f32 %v6659, %v6660
        %v6662 = vand.u32 %v6661, 4294901760
        %6663 = vmatpush.msra.mxu0 %v6662
        %v6664 = vand.u32 %v6250, 4294901760
        %v6665 = vsub.f32 %v6250, %v6664
        %v6666 = vand.u32 %v6665, 4294901760
        %v6667 = vsub.f32 %v6665, %v6666
        %v6668 = vand.u32 %v6667, 4294901760
        %6669 = vmatpush.msra.mxu0 %v6668
        %v6670 = vand.u32 %v6281, 4294901760
        %6671 = vmatmul.f32.gmra.mxu0 %v6670
        %v6672 = vpop.f32.mrf.mxu0
        %v6673 = vadd.f32 %v6599, %v6672
        %v6674 = vand.u32 %v6284, 4294901760
        %6675 = vmatmul.f32.gmra.mxu0 %v6674
        %v6676 = vpop.f32.mrf.mxu0
        %v6677 = vadd.f32 %v6607, %v6676
        %6678 = vdwg.mxu0
        %6679 = vmatpush.msra.mxu0 0.0
        %6680 = vmatpush.msra.mxu0 0.0
        %6681 = vmatpush.msra.mxu0 0.0
        %6682 = vmatpush.msra.mxu0 0.0
        %6683 = vmatpush.msra.mxu0 0.0
        %6684 = vmatpush.msra.mxu0 0.0
        %6685 = vmatpush.msra.mxu0 0.0
        %v6686 = vand.u32 %v6266, 4294901760
        %v6687 = vsub.f32 %v6266, %v6686
        %6688 = vmatpush.msra.mxu0 %v6687
        %v6689 = vand.u32 %v6264, 4294901760
        %v6690 = vsub.f32 %v6264, %v6689
        %6691 = vmatpush.msra.mxu0 %v6690
        %v6692 = vand.u32 %v6262, 4294901760
        %v6693 = vsub.f32 %v6262, %v6692
        %6694 = vmatpush.msra.mxu0 %v6693
        %v6695 = vand.u32 %v6260, 4294901760
        %v6696 = vsub.f32 %v6260, %v6695
        %6697 = vmatpush.msra.mxu0 %v6696
        %v6698 = vand.u32 %v6258, 4294901760
        %v6699 = vsub.f32 %v6258, %v6698
        %6700 = vmatpush.msra.mxu0 %v6699
        %v6701 = vand.u32 %v6256, 4294901760
        %v6702 = vsub.f32 %v6256, %v6701
        %6703 = vmatpush.msra.mxu0 %v6702
        %v6704 = vand.u32 %v6254, 4294901760
        %v6705 = vsub.f32 %v6254, %v6704
        %6706 = vmatpush.msra.mxu0 %v6705
        %v6707 = vand.u32 %v6252, 4294901760
        %v6708 = vsub.f32 %v6252, %v6707
        %6709 = vmatpush.msra.mxu0 %v6708
        %v6710 = vand.u32 %v6250, 4294901760
        %v6711 = vsub.f32 %v6250, %v6710
        %6712 = vmatpush.msra.mxu0 %v6711
        %v6713 = vand.u32 %v6281, 4294901760
        %v6714 = vsub.f32 %v6281, %v6713
        %6715 = vmatmul.f32.gmra.mxu0 %v6714
        %v6716 = vpop.f32.mrf.mxu0
        %v6717 = vadd.f32 %v6673, %v6716
        %v6718 = vand.u32 %v6284, 4294901760
        %v6719 = vsub.f32 %v6284, %v6718
        %6720 = vmatmul.f32.gmra.mxu0 %v6719
        %v6721 = vpop.f32.mrf.mxu0
        %v6722 = vadd.f32 %v6677, %v6721
        %6723 = vdwg.mxu0
        %6724 = vmatpush.msra.mxu0 0.0
        %6725 = vmatpush.msra.mxu0 0.0
        %6726 = vmatpush.msra.mxu0 0.0
        %6727 = vmatpush.msra.mxu0 0.0
        %6728 = vmatpush.msra.mxu0 0.0
        %6729 = vmatpush.msra.mxu0 0.0
        %6730 = vmatpush.msra.mxu0 0.0
        %v6731 = vand.u32 %v6266, 4294901760
        %6732 = vmatpush.msra.mxu0 %v6731
        %v6733 = vand.u32 %v6264, 4294901760
        %6734 = vmatpush.msra.mxu0 %v6733
        %v6735 = vand.u32 %v6262, 4294901760
        %6736 = vmatpush.msra.mxu0 %v6735
        %v6737 = vand.u32 %v6260, 4294901760
        %6738 = vmatpush.msra.mxu0 %v6737
        %v6739 = vand.u32 %v6258, 4294901760
        %6740 = vmatpush.msra.mxu0 %v6739
        %v6741 = vand.u32 %v6256, 4294901760
        %6742 = vmatpush.msra.mxu0 %v6741
        %v6743 = vand.u32 %v6254, 4294901760
        %6744 = vmatpush.msra.mxu0 %v6743
        %v6745 = vand.u32 %v6252, 4294901760
        %6746 = vmatpush.msra.mxu0 %v6745
        %v6747 = vand.u32 %v6250, 4294901760
        %6748 = vmatpush.msra.mxu0 %v6747
        %v6749 = vand.u32 %v6281, 4294901760
        %v6750 = vsub.f32 %v6281, %v6749
        %v6751 = vand.u32 %v6750, 4294901760
        %6752 = vmatmul.f32.gmra.mxu0 %v6751
        %v6753 = vpop.f32.mrf.mxu0
        %v6754 = vadd.f32 %v6717, %v6753
        %v6755 = vand.u32 %v6284, 4294901760
        %v6756 = vsub.f32 %v6284, %v6755
        %v6757 = vand.u32 %v6756, 4294901760
        %6758 = vmatmul.f32.gmra.mxu0 %v6757
        %v6759 = vpop.f32.mrf.mxu0
        %v6760 = vadd.f32 %v6722, %v6759
        %6761 = vdwg.mxu0
        %6762 = vmatpush.msra.mxu0 0.0
        %6763 = vmatpush.msra.mxu0 0.0
        %6764 = vmatpush.msra.mxu0 0.0
        %6765 = vmatpush.msra.mxu0 0.0
        %6766 = vmatpush.msra.mxu0 0.0
        %6767 = vmatpush.msra.mxu0 0.0
        %6768 = vmatpush.msra.mxu0 0.0
        %v6769 = vand.u32 %v6266, 4294901760
        %v6770 = vsub.f32 %v6266, %v6769
        %v6771 = vand.u32 %v6770, 4294901760
        %6772 = vmatpush.msra.mxu0 %v6771
        %v6773 = vand.u32 %v6264, 4294901760
        %v6774 = vsub.f32 %v6264, %v6773
        %v6775 = vand.u32 %v6774, 4294901760
        %6776 = vmatpush.msra.mxu0 %v6775
        %v6777 = vand.u32 %v6262, 4294901760
        %v6778 = vsub.f32 %v6262, %v6777
        %v6779 = vand.u32 %v6778, 4294901760
        %6780 = vmatpush.msra.mxu0 %v6779
        %v6781 = vand.u32 %v6260, 4294901760
        %v6782 = vsub.f32 %v6260, %v6781
        %v6783 = vand.u32 %v6782, 4294901760
        %6784 = vmatpush.msra.mxu0 %v6783
        %v6785 = vand.u32 %v6258, 4294901760
        %v6786 = vsub.f32 %v6258, %v6785
        %v6787 = vand.u32 %v6786, 4294901760
        %6788 = vmatpush.msra.mxu0 %v6787
        %v6789 = vand.u32 %v6256, 4294901760
        %v6790 = vsub.f32 %v6256, %v6789
        %v6791 = vand.u32 %v6790, 4294901760
        %6792 = vmatpush.msra.mxu0 %v6791
        %v6793 = vand.u32 %v6254, 4294901760
        %v6794 = vsub.f32 %v6254, %v6793
        %v6795 = vand.u32 %v6794, 4294901760
        %6796 = vmatpush.msra.mxu0 %v6795
        %v6797 = vand.u32 %v6252, 4294901760
        %v6798 = vsub.f32 %v6252, %v6797
        %v6799 = vand.u32 %v6798, 4294901760
        %6800 = vmatpush.msra.mxu0 %v6799
        %v6801 = vand.u32 %v6250, 4294901760
        %v6802 = vsub.f32 %v6250, %v6801
        %v6803 = vand.u32 %v6802, 4294901760
        %6804 = vmatpush.msra.mxu0 %v6803
        %v6805 = vand.u32 %v6281, 4294901760
        %6806 = vmatmul.f32.gmra.mxu0 %v6805
        %v6807 = vpop.f32.mrf.mxu0
        %v6808 = vadd.f32 %v6754, %v6807
        %v6809 = vand.u32 %v6284, 4294901760
        %6810 = vmatmul.f32.gmra.mxu0 %v6809
        %v6811 = vpop.f32.mrf.mxu0
        %v6812 = vadd.f32 %v6760, %v6811
        %6813 = vdwg.mxu0
        %6814 = vmatpush.msra.mxu0 0.0
        %6815 = vmatpush.msra.mxu0 0.0
        %6816 = vmatpush.msra.mxu0 0.0
        %6817 = vmatpush.msra.mxu0 0.0
        %6818 = vmatpush.msra.mxu0 0.0
        %6819 = vmatpush.msra.mxu0 0.0
        %6820 = vmatpush.msra.mxu0 0.0
        %v6821 = vand.u32 %v6266, 4294901760
        %6822 = vmatpush.msra.mxu0 %v6821
        %v6823 = vand.u32 %v6264, 4294901760
        %6824 = vmatpush.msra.mxu0 %v6823
        %v6825 = vand.u32 %v6262, 4294901760
        %6826 = vmatpush.msra.mxu0 %v6825
        %v6827 = vand.u32 %v6260, 4294901760
        %6828 = vmatpush.msra.mxu0 %v6827
        %v6829 = vand.u32 %v6258, 4294901760
        %6830 = vmatpush.msra.mxu0 %v6829
        %v6831 = vand.u32 %v6256, 4294901760
        %6832 = vmatpush.msra.mxu0 %v6831
        %v6833 = vand.u32 %v6254, 4294901760
        %6834 = vmatpush.msra.mxu0 %v6833
        %v6835 = vand.u32 %v6252, 4294901760
        %6836 = vmatpush.msra.mxu0 %v6835
        %v6837 = vand.u32 %v6250, 4294901760
        %6838 = vmatpush.msra.mxu0 %v6837
        %v6839 = vand.u32 %v6281, 4294901760
        %6840 = vmatmul.f32.gmra.mxu0 %v6839
        %v6841 = vpop.f32.mrf.mxu0
        %v6842 = vadd.f32 %v6808, %v6841
        %v6843 = vand.u32 %v6284, 4294901760
        %6844 = vmatmul.f32.gmra.mxu0 %v6843
        %v6845 = vpop.f32.mrf.mxu0
        %v6846 = vadd.f32 %v6812, %v6845
        %6847 = vdwg.mxu0
        %vm6848 = vcmp.ge.f32.partialorder %v6561, 0.0
        %vm6849 = vcmp.ge.f32.partialorder %v6842, 0.0
        %vm6850 = vcmp.ge.f32.partialorder %v6565, 0.0
        %vm6851 = vcmp.ge.f32.partialorder %v6846, 0.0
        %v6852 = vmul.f32 %v6561, 0.01
        %v6853 = vmul.f32 %v6842, 0.01
        %v6854 = vmul.f32 %v6565, 0.01
        %v6855 = vmul.f32 %v6846, 0.01
        %v6856 = vsel %vm6848, %v6561, %v6852
        %v6857 = vsel %vm6849, %v6842, %v6853
        %v6858 = vsel %vm6850, %v6565, %v6854
        %v6859 = vsel %vm6851, %v6846, %v6855
        %6860 = vrot.lane.b32.xlu0 %v6856, 17
        %v6861 = vpop.permute.xlu0 %6860
        %6862 = vrot.lane.b32.xlu0 %v6858, 17
        %v6863 = vpop.permute.xlu0 %6862
        %6864 = vrot.lane.b32.xlu0 %v6857, 17
        %v6865 = vpop.permute.xlu0 %6864
        %6866 = vrot.lane.b32.xlu0 %v6859, 17
        %v6867 = vpop.permute.xlu0 %6866
        %v6868 = vsel %vm238, %v6861, %v6865
        %v6869 = vsel %vm238, %v6863, %v6867
        %v6870 = vsel %vm238, %v6865, %v6861
        %v6871 = vsel %vm238, %v6867, %v6863
        %v6872 = vld [vmem:[#allocation5] sm:$0xff]
        %v6873 = vld [vmem:[#allocation5 + $0x8] sm:$0xff]
        %v6874 = vld [vmem:[#allocation5 + $0x10] sm:$0xff]
        %v6875 = vld [vmem:[#allocation5 + $0x18] sm:$0xff]
        %v6876 = vmul.f32 %v6870, %v6872
        %v6877 = vmul.f32 %v6868, %v6873
        %v6878 = vmul.f32 %v6871, %v6874
        %v6879 = vmul.f32 %v6869, %v6875
        %6880 = vst [vmem:[#allocation2] sm:$0xff] %v6876
        %6881 = vst [vmem:[#allocation2 + $0x8] sm:$0xff] %v6877
        %6882 = vst [vmem:[#allocation2 + $0x10] sm:$0xff] %v6878
        %6883 = vst [vmem:[#allocation2 + $0x18] sm:$0xff] %v6879
        %6884 = vrot.lane.b32.xlu0 %v6856, 16
        %v6885 = vpop.permute.xlu0 %6884
        %6886 = vrot.lane.b32.xlu0 %v6858, 16
        %v6887 = vpop.permute.xlu0 %6886
        %6888 = vrot.lane.b32.xlu0 %v6857, 16
        %v6889 = vpop.permute.xlu0 %6888
        %6890 = vrot.lane.b32.xlu0 %v6859, 16
        %v6891 = vpop.permute.xlu0 %6890
        %v6892 = vsel %vm251, %v6885, %v6889
        %v6893 = vsel %vm251, %v6887, %v6891
        %v6894 = vsel %vm251, %v6889, %v6885
        %v6895 = vsel %vm251, %v6891, %v6887
        %v6896 = vld [vmem:[%s254] sm:$0xff]
        %v6897 = vld [vmem:[%s254 + $0x8] sm:$0xff]
        %v6898 = vld [vmem:[%s254 + $0x10] sm:$0xff]
        %v6899 = vld [vmem:[%s254 + $0x18] sm:$0xff]
        %v6900 = vmul.f32 %v6894, %v6896
        %v6901 = vmul.f32 %v6892, %v6897
        %v6902 = vmul.f32 %v6895, %v6898
        %v6903 = vmul.f32 %v6893, %v6899
        %6904 = vst [vmem:[#allocation2 + $0x20] sm:$0xff] %v6900
        %6905 = vst [vmem:[#allocation2 + $0x28] sm:$0xff] %v6901
        %6906 = vst [vmem:[#allocation2 + $0x30] sm:$0xff] %v6902
        %6907 = vst [vmem:[#allocation2 + $0x38] sm:$0xff] %v6903
        %6908 = vrot.lane.b32.xlu0 %v6856, 15
        %v6909 = vpop.permute.xlu0 %6908
        %6910 = vrot.lane.b32.xlu0 %v6858, 15
        %v6911 = vpop.permute.xlu0 %6910
        %6912 = vrot.lane.b32.xlu0 %v6857, 15
        %v6913 = vpop.permute.xlu0 %6912
        %6914 = vrot.lane.b32.xlu0 %v6859, 15
        %v6915 = vpop.permute.xlu0 %6914
        %v6916 = vsel %vm265, %v6909, %v6913
        %v6917 = vsel %vm265, %v6911, %v6915
        %v6918 = vsel %vm265, %v6913, %v6909
        %v6919 = vsel %vm265, %v6915, %v6911
        %v6920 = vld [vmem:[%s268] sm:$0xff]
        %v6921 = vld [vmem:[%s268 + $0x8] sm:$0xff]
        %v6922 = vld [vmem:[%s268 + $0x10] sm:$0xff]
        %v6923 = vld [vmem:[%s268 + $0x18] sm:$0xff]
        %v6924 = vmul.f32 %v6918, %v6920
        %v6925 = vmul.f32 %v6916, %v6921
        %v6926 = vmul.f32 %v6919, %v6922
        %v6927 = vmul.f32 %v6917, %v6923
        %6928 = vst [vmem:[#allocation2 + $0x40] sm:$0xff] %v6924
        %6929 = vst [vmem:[#allocation2 + $0x48] sm:$0xff] %v6925
        %6930 = vst [vmem:[#allocation2 + $0x50] sm:$0xff] %v6926
        %6931 = vst [vmem:[#allocation2 + $0x58] sm:$0xff] %v6927
        %6932 = vrot.lane.b32.xlu0 %v6856, 1
        %v6933 = vpop.permute.xlu0 %6932
        %6934 = vrot.lane.b32.xlu0 %v6858, 1
        %v6935 = vpop.permute.xlu0 %6934
        %6936 = vrot.lane.b32.xlu0 %v6857, 1
        %v6937 = vpop.permute.xlu0 %6936
        %6938 = vrot.lane.b32.xlu0 %v6859, 1
        %v6939 = vpop.permute.xlu0 %6938
        %v6940 = vsel %vm279, %v6933, %v6937
        %v6941 = vsel %vm279, %v6935, %v6939
        %v6942 = vsel %vm279, %v6937, %v6933
        %v6943 = vsel %vm279, %v6939, %v6935
        %v6944 = vld [vmem:[%s282] sm:$0xff]
        %v6945 = vld [vmem:[%s282 + $0x8] sm:$0xff]
        %v6946 = vld [vmem:[%s282 + $0x10] sm:$0xff]
        %v6947 = vld [vmem:[%s282 + $0x18] sm:$0xff]
        %v6948 = vmul.f32 %v6942, %v6944
        %v6949 = vmul.f32 %v6940, %v6945
        %v6950 = vmul.f32 %v6943, %v6946
        %v6951 = vmul.f32 %v6941, %v6947
        %6952 = vst [vmem:[#allocation2 + $0x60] sm:$0xff] %v6948
        %6953 = vst [vmem:[#allocation2 + $0x68] sm:$0xff] %v6949
        %6954 = vst [vmem:[#allocation2 + $0x70] sm:$0xff] %v6950
        %6955 = vst [vmem:[#allocation2 + $0x78] sm:$0xff] %v6951
        %6956 = vst [vmem:[#allocation2 + $0x80] sm:$0xff] %v6856
        %6957 = vst [vmem:[#allocation2 + $0x88] sm:$0xff] %v6857
        %6958 = vst [vmem:[#allocation2 + $0x90] sm:$0xff] %v6858
        %6959 = vst [vmem:[#allocation2 + $0x98] sm:$0xff] %v6859
        %6960 = vrot.lane.b32.xlu0 %v6856, 127
        %v6961 = vpop.permute.xlu0 %6960
        %6962 = vrot.lane.b32.xlu0 %v6858, 127
        %v6963 = vpop.permute.xlu0 %6962
        %6964 = vrot.lane.b32.xlu0 %v6857, 127
        %v6965 = vpop.permute.xlu0 %6964
        %6966 = vrot.lane.b32.xlu0 %v6859, 127
        %v6967 = vpop.permute.xlu0 %6966
        %v6968 = vsel %vm295, %v6961, %v6965
        %v6969 = vsel %vm295, %v6963, %v6967
        %v6970 = vsel %vm295, %v6965, %v6961
        %v6971 = vsel %vm295, %v6967, %v6963
        %v6972 = vld [vmem:[%s298] sm:$0xff]
        %v6973 = vld [vmem:[%s298 + $0x8] sm:$0xff]
        %v6974 = vld [vmem:[%s298 + $0x10] sm:$0xff]
        %v6975 = vld [vmem:[%s298 + $0x18] sm:$0xff]
        %v6976 = vmul.f32 %v6968, %v6972
        %v6977 = vmul.f32 %v6970, %v6973
        %v6978 = vmul.f32 %v6969, %v6974
        %v6979 = vmul.f32 %v6971, %v6975
        %6980 = vst [vmem:[#allocation2 + $0xa0] sm:$0xff] %v6976
        %6981 = vst [vmem:[#allocation2 + $0xa8] sm:$0xff] %v6977
        %6982 = vst [vmem:[#allocation2 + $0xb0] sm:$0xff] %v6978
        %6983 = vst [vmem:[#allocation2 + $0xb8] sm:$0xff] %v6979
        %6984 = vrot.lane.b32.xlu0 %v6856, 113
        %v6985 = vpop.permute.xlu0 %6984
        %6986 = vrot.lane.b32.xlu0 %v6858, 113
        %v6987 = vpop.permute.xlu0 %6986
        %6988 = vrot.lane.b32.xlu0 %v6857, 113
        %v6989 = vpop.permute.xlu0 %6988
        %6990 = vrot.lane.b32.xlu0 %v6859, 113
        %v6991 = vpop.permute.xlu0 %6990
        %v6992 = vsel %vm309, %v6985, %v6989
        %v6993 = vsel %vm309, %v6987, %v6991
        %v6994 = vsel %vm309, %v6989, %v6985
        %v6995 = vsel %vm309, %v6991, %v6987
        %v6996 = vld [vmem:[%s312] sm:$0xff]
        %v6997 = vld [vmem:[%s312 + $0x8] sm:$0xff]
        %v6998 = vld [vmem:[%s312 + $0x10] sm:$0xff]
        %v6999 = vld [vmem:[%s312 + $0x18] sm:$0xff]
        %v7000 = vmul.f32 %v6992, %v6996
        %v7001 = vmul.f32 %v6994, %v6997
        %v7002 = vmul.f32 %v6993, %v6998
        %v7003 = vmul.f32 %v6995, %v6999
        %7004 = vst [vmem:[#allocation2 + $0xc0] sm:$0xff] %v7000
        %7005 = vst [vmem:[#allocation2 + $0xc8] sm:$0xff] %v7001
        %7006 = vst [vmem:[#allocation2 + $0xd0] sm:$0xff] %v7002
        %7007 = vst [vmem:[#allocation2 + $0xd8] sm:$0xff] %v7003
        %7008 = vrot.lane.b32.xlu0 %v6856, 112
        %v7009 = vpop.permute.xlu0 %7008
        %7010 = vrot.lane.b32.xlu0 %v6858, 112
        %v7011 = vpop.permute.xlu0 %7010
        %7012 = vrot.lane.b32.xlu0 %v6857, 112
        %v7013 = vpop.permute.xlu0 %7012
        %7014 = vrot.lane.b32.xlu0 %v6859, 112
        %v7015 = vpop.permute.xlu0 %7014
        %v7016 = vsel %vm323, %v7009, %v7013
        %v7017 = vsel %vm323, %v7011, %v7015
        %v7018 = vsel %vm323, %v7013, %v7009
        %v7019 = vsel %vm323, %v7015, %v7011
        %v7020 = vld [vmem:[%s326] sm:$0xff]
        %v7021 = vld [vmem:[%s326 + $0x8] sm:$0xff]
        %v7022 = vld [vmem:[%s326 + $0x10] sm:$0xff]
        %v7023 = vld [vmem:[%s326 + $0x18] sm:$0xff]
        %v7024 = vmul.f32 %v7016, %v7020
        %v7025 = vmul.f32 %v7018, %v7021
        %v7026 = vmul.f32 %v7017, %v7022
        %v7027 = vmul.f32 %v7019, %v7023
        %7028 = vst [vmem:[#allocation2 + $0xe0] sm:$0xff] %v7024
        %7029 = vst [vmem:[#allocation2 + $0xe8] sm:$0xff] %v7025
        %7030 = vst [vmem:[#allocation2 + $0xf0] sm:$0xff] %v7026
        %7031 = vst [vmem:[#allocation2 + $0xf8] sm:$0xff] %v7027
        %7032 = vrot.lane.b32.xlu0 %v6856, 111
        %v7033 = vpop.permute.xlu0 %7032
        %7034 = vrot.lane.b32.xlu0 %v6858, 111
        %v7035 = vpop.permute.xlu0 %7034
        %7036 = vrot.lane.b32.xlu0 %v6857, 111
        %v7037 = vpop.permute.xlu0 %7036
        %7038 = vrot.lane.b32.xlu0 %v6859, 111
        %v7039 = vpop.permute.xlu0 %7038
        %v7040 = vsel %vm337, %v7033, %v7037
        %v7041 = vsel %vm337, %v7035, %v7039
        %v7042 = vsel %vm337, %v7037, %v7033
        %v7043 = vsel %vm337, %v7039, %v7035
        %v7044 = vld [vmem:[%s340] sm:$0xff]
        %v7045 = vld [vmem:[%s340 + $0x8] sm:$0xff]
        %v7046 = vld [vmem:[%s340 + $0x10] sm:$0xff]
        %v7047 = vld [vmem:[%s340 + $0x18] sm:$0xff]
        %v7048 = vmul.f32 %v7040, %v7044
        %v7049 = vmul.f32 %v7042, %v7045
        %v7050 = vmul.f32 %v7041, %v7046
        %v7051 = vmul.f32 %v7043, %v7047
        %7052 = vst [vmem:[#allocation2 + $0x100] sm:$0xff] %v7048
        %7053 = vst [vmem:[#allocation2 + $0x108] sm:$0xff] %v7049
        %7054 = vst [vmem:[#allocation2 + $0x110] sm:$0xff] %v7050
        %7055 = vst [vmem:[#allocation2 + $0x118] sm:$0xff] %v7051
        %s7056 = scalar_lea.vmem [#allocation3], 256
        %v7057 = vld [vmem:[%s7056] sm:$0xff]
        %v7058 = vld [vmem:[%s7056 + $0x8] sm:$0xff]
        %v7059 = vld [vmem:[#allocation2] sm:$0xff]
        %v7060 = vld [vmem:[#allocation2 + $0x8] sm:$0xff]
        %v7061 = vld [vmem:[#allocation2 + $0x10] sm:$0xff]
        %v7062 = vld [vmem:[#allocation2 + $0x18] sm:$0xff]
        %v7063 = vld [vmem:[#allocation2 + $0x20] sm:$0xff]
        %v7064 = vld [vmem:[#allocation2 + $0x28] sm:$0xff]
        %v7065 = vld [vmem:[#allocation2 + $0x30] sm:$0xff]
        %v7066 = vld [vmem:[#allocation2 + $0x38] sm:$0xff]
        %v7067 = vld [vmem:[#allocation2 + $0x40] sm:$0xff]
        %v7068 = vld [vmem:[#allocation2 + $0x48] sm:$0xff]
        %v7069 = vld [vmem:[#allocation2 + $0x50] sm:$0xff]
        %v7070 = vld [vmem:[#allocation2 + $0x58] sm:$0xff]
        %v7071 = vld [vmem:[#allocation2 + $0x60] sm:$0xff]
        %v7072 = vld [vmem:[#allocation2 + $0x68] sm:$0xff]
        %v7073 = vld [vmem:[#allocation2 + $0x70] sm:$0xff]
        %v7074 = vld [vmem:[#allocation2 + $0x78] sm:$0xff]
        %v7075 = vld [vmem:[#allocation2 + $0x80] sm:$0xff]
        %v7076 = vld [vmem:[#allocation2 + $0x88] sm:$0xff]
        %v7077 = vld [vmem:[#allocation2 + $0x90] sm:$0xff]
        %v7078 = vld [vmem:[#allocation2 + $0x98] sm:$0xff]
        %v7079 = vld [vmem:[#allocation2 + $0xa0] sm:$0xff]
        %v7080 = vld [vmem:[#allocation2 + $0xa8] sm:$0xff]
        %v7081 = vld [vmem:[#allocation2 + $0xb0] sm:$0xff]
        %v7082 = vld [vmem:[#allocation2 + $0xb8] sm:$0xff]
        %v7083 = vld [vmem:[#allocation2 + $0xc0] sm:$0xff]
        %v7084 = vld [vmem:[#allocation2 + $0xc8] sm:$0xff]
        %v7085 = vld [vmem:[#allocation2 + $0xd0] sm:$0xff]
        %v7086 = vld [vmem:[#allocation2 + $0xd8] sm:$0xff]
        %v7087 = vld [vmem:[#allocation2 + $0xe0] sm:$0xff]
        %v7088 = vld [vmem:[#allocation2 + $0xe8] sm:$0xff]
        %v7089 = vld [vmem:[#allocation2 + $0xf0] sm:$0xff]
        %v7090 = vld [vmem:[#allocation2 + $0xf8] sm:$0xff]
        %v7091 = vld [vmem:[#allocation2 + $0x100] sm:$0xff]
        %v7092 = vld [vmem:[#allocation2 + $0x108] sm:$0xff]
        %v7093 = vld [vmem:[#allocation2 + $0x110] sm:$0xff]
        %v7094 = vld [vmem:[#allocation2 + $0x118] sm:$0xff]
        %s7095 = scalar_lea.vmem %s2, 128
        %v7096 = vld [vmem:[%s7095] sm:$0xff]
        %7098 = vset.pattern.permute.xlu0 0
        %7099 = vperm.xlu0 %7098, %v7096
        %v7100 = vpop.permute.xlu0 %7099
        %v7103 = vsel %vm1210, %v7058, 0
        %v7105 = vand.u32 %v7089, 4294901760
        %7106 = vmatpush.msra.mxu0 %v7105
        %v7107 = vand.u32 %v7087, 4294901760
        %7108 = vmatpush.msra.mxu0 %v7107
        %v7109 = vand.u32 %v7085, 4294901760
        %7110 = vmatpush.msra.mxu0 %v7109
        %v7111 = vand.u32 %v7083, 4294901760
        %7112 = vmatpush.msra.mxu0 %v7111
        %v7113 = vand.u32 %v7081, 4294901760
        %7114 = vmatpush.msra.mxu0 %v7113
        %v7115 = vand.u32 %v7079, 4294901760
        %7116 = vmatpush.msra.mxu0 %v7115
        %v7117 = vand.u32 %v7077, 4294901760
        %7118 = vmatpush.msra.mxu0 %v7117
        %v7119 = vand.u32 %v7075, 4294901760
        %7120 = vmatpush.msra.mxu0 %v7119
        %v7121 = vand.u32 %v7073, 4294901760
        %7122 = vmatpush.msra.mxu0 %v7121
        %v7123 = vand.u32 %v7071, 4294901760
        %7124 = vmatpush.msra.mxu0 %v7123
        %v7125 = vand.u32 %v7069, 4294901760
        %7126 = vmatpush.msra.mxu0 %v7125
        %v7127 = vand.u32 %v7067, 4294901760
        %7128 = vmatpush.msra.mxu0 %v7127
        %v7129 = vand.u32 %v7065, 4294901760
        %7130 = vmatpush.msra.mxu0 %v7129
        %v7131 = vand.u32 %v7063, 4294901760
        %7132 = vmatpush.msra.mxu0 %v7131
        %v7133 = vand.u32 %v7061, 4294901760
        %7134 = vmatpush.msra.mxu0 %v7133
        %v7135 = vand.u32 %v7059, 4294901760
        %7136 = vmatpush.msra.mxu0 %v7135
        %v7137 = vand.u32 %v7057, 4294901760
        %v7138 = vsub.f32 %v7057, %v7137
        %v7139 = vand.u32 %v7138, 4294901760
        %v7140 = vsub.f32 %v7138, %v7139
        %v7141 = vand.u32 %v7140, 4294901760
        %7142 = vmatmul.f32.gmra.mxu0 %v7141
        %v7143 = vpop.f32.mrf.mxu0
        %v7144 = vadd.f32 %v7100, %v7143
        %7145 = vdwg.mxu0
        %v7146 = vand.u32 %v7089, 4294901760
        %v7147 = vsub.f32 %v7089, %v7146
        %v7148 = vand.u32 %v7147, 4294901760
        %v7149 = vsub.f32 %v7147, %v7148
        %v7150 = vand.u32 %v7149, 4294901760
        %7151 = vmatpush.msra.mxu0 %v7150
        %v7152 = vand.u32 %v7087, 4294901760
        %v7153 = vsub.f32 %v7087, %v7152
        %v7154 = vand.u32 %v7153, 4294901760
        %v7155 = vsub.f32 %v7153, %v7154
        %v7156 = vand.u32 %v7155, 4294901760
        %7157 = vmatpush.msra.mxu0 %v7156
        %v7158 = vand.u32 %v7085, 4294901760
        %v7159 = vsub.f32 %v7085, %v7158
        %v7160 = vand.u32 %v7159, 4294901760
        %v7161 = vsub.f32 %v7159, %v7160
        %v7162 = vand.u32 %v7161, 4294901760
        %7163 = vmatpush.msra.mxu0 %v7162
        %v7164 = vand.u32 %v7083, 4294901760
        %v7165 = vsub.f32 %v7083, %v7164
        %v7166 = vand.u32 %v7165, 4294901760
        %v7167 = vsub.f32 %v7165, %v7166
        %v7168 = vand.u32 %v7167, 4294901760
        %7169 = vmatpush.msra.mxu0 %v7168
        %v7170 = vand.u32 %v7081, 4294901760
        %v7171 = vsub.f32 %v7081, %v7170
        %v7172 = vand.u32 %v7171, 4294901760
        %v7173 = vsub.f32 %v7171, %v7172
        %v7174 = vand.u32 %v7173, 4294901760
        %7175 = vmatpush.msra.mxu0 %v7174
        %v7176 = vand.u32 %v7079, 4294901760
        %v7177 = vsub.f32 %v7079, %v7176
        %v7178 = vand.u32 %v7177, 4294901760
        %v7179 = vsub.f32 %v7177, %v7178
        %v7180 = vand.u32 %v7179, 4294901760
        %7181 = vmatpush.msra.mxu0 %v7180
        %v7182 = vand.u32 %v7077, 4294901760
        %v7183 = vsub.f32 %v7077, %v7182
        %v7184 = vand.u32 %v7183, 4294901760
        %v7185 = vsub.f32 %v7183, %v7184
        %v7186 = vand.u32 %v7185, 4294901760
        %7187 = vmatpush.msra.mxu0 %v7186
        %v7188 = vand.u32 %v7075, 4294901760
        %v7189 = vsub.f32 %v7075, %v7188
        %v7190 = vand.u32 %v7189, 4294901760
        %v7191 = vsub.f32 %v7189, %v7190
        %v7192 = vand.u32 %v7191, 4294901760
        %7193 = vmatpush.msra.mxu0 %v7192
        %v7194 = vand.u32 %v7073, 4294901760
        %v7195 = vsub.f32 %v7073, %v7194
        %v7196 = vand.u32 %v7195, 4294901760
        %v7197 = vsub.f32 %v7195, %v7196
        %v7198 = vand.u32 %v7197, 4294901760
        %7199 = vmatpush.msra.mxu0 %v7198
        %v7200 = vand.u32 %v7071, 4294901760
        %v7201 = vsub.f32 %v7071, %v7200
        %v7202 = vand.u32 %v7201, 4294901760
        %v7203 = vsub.f32 %v7201, %v7202
        %v7204 = vand.u32 %v7203, 4294901760
        %7205 = vmatpush.msra.mxu0 %v7204
        %v7206 = vand.u32 %v7069, 4294901760
        %v7207 = vsub.f32 %v7069, %v7206
        %v7208 = vand.u32 %v7207, 4294901760
        %v7209 = vsub.f32 %v7207, %v7208
        %v7210 = vand.u32 %v7209, 4294901760
        %7211 = vmatpush.msra.mxu0 %v7210
        %v7212 = vand.u32 %v7067, 4294901760
        %v7213 = vsub.f32 %v7067, %v7212
        %v7214 = vand.u32 %v7213, 4294901760
        %v7215 = vsub.f32 %v7213, %v7214
        %v7216 = vand.u32 %v7215, 4294901760
        %7217 = vmatpush.msra.mxu0 %v7216
        %v7218 = vand.u32 %v7065, 4294901760
        %v7219 = vsub.f32 %v7065, %v7218
        %v7220 = vand.u32 %v7219, 4294901760
        %v7221 = vsub.f32 %v7219, %v7220
        %v7222 = vand.u32 %v7221, 4294901760
        %7223 = vmatpush.msra.mxu0 %v7222
        %v7224 = vand.u32 %v7063, 4294901760
        %v7225 = vsub.f32 %v7063, %v7224
        %v7226 = vand.u32 %v7225, 4294901760
        %v7227 = vsub.f32 %v7225, %v7226
        %v7228 = vand.u32 %v7227, 4294901760
        %7229 = vmatpush.msra.mxu0 %v7228
        %v7230 = vand.u32 %v7061, 4294901760
        %v7231 = vsub.f32 %v7061, %v7230
        %v7232 = vand.u32 %v7231, 4294901760
        %v7233 = vsub.f32 %v7231, %v7232
        %v7234 = vand.u32 %v7233, 4294901760
        %7235 = vmatpush.msra.mxu0 %v7234
        %v7236 = vand.u32 %v7059, 4294901760
        %v7237 = vsub.f32 %v7059, %v7236
        %v7238 = vand.u32 %v7237, 4294901760
        %v7239 = vsub.f32 %v7237, %v7238
        %v7240 = vand.u32 %v7239, 4294901760
        %7241 = vmatpush.msra.mxu0 %v7240
        %v7242 = vand.u32 %v7057, 4294901760
        %7243 = vmatmul.f32.gmra.mxu0 %v7242
        %v7244 = vpop.f32.mrf.mxu0
        %v7245 = vadd.f32 %v7144, %v7244
        %7246 = vdwg.mxu0
        %v7247 = vand.u32 %v7089, 4294901760
        %v7248 = vsub.f32 %v7089, %v7247
        %7249 = vmatpush.msra.mxu0 %v7248
        %v7250 = vand.u32 %v7087, 4294901760
        %v7251 = vsub.f32 %v7087, %v7250
        %7252 = vmatpush.msra.mxu0 %v7251
        %v7253 = vand.u32 %v7085, 4294901760
        %v7254 = vsub.f32 %v7085, %v7253
        %7255 = vmatpush.msra.mxu0 %v7254
        %v7256 = vand.u32 %v7083, 4294901760
        %v7257 = vsub.f32 %v7083, %v7256
        %7258 = vmatpush.msra.mxu0 %v7257
        %v7259 = vand.u32 %v7081, 4294901760
        %v7260 = vsub.f32 %v7081, %v7259
        %7261 = vmatpush.msra.mxu0 %v7260
        %v7262 = vand.u32 %v7079, 4294901760
        %v7263 = vsub.f32 %v7079, %v7262
        %7264 = vmatpush.msra.mxu0 %v7263
        %v7265 = vand.u32 %v7077, 4294901760
        %v7266 = vsub.f32 %v7077, %v7265
        %7267 = vmatpush.msra.mxu0 %v7266
        %v7268 = vand.u32 %v7075, 4294901760
        %v7269 = vsub.f32 %v7075, %v7268
        %7270 = vmatpush.msra.mxu0 %v7269
        %v7271 = vand.u32 %v7073, 4294901760
        %v7272 = vsub.f32 %v7073, %v7271
        %7273 = vmatpush.msra.mxu0 %v7272
        %v7274 = vand.u32 %v7071, 4294901760
        %v7275 = vsub.f32 %v7071, %v7274
        %7276 = vmatpush.msra.mxu0 %v7275
        %v7277 = vand.u32 %v7069, 4294901760
        %v7278 = vsub.f32 %v7069, %v7277
        %7279 = vmatpush.msra.mxu0 %v7278
        %v7280 = vand.u32 %v7067, 4294901760
        %v7281 = vsub.f32 %v7067, %v7280
        %7282 = vmatpush.msra.mxu0 %v7281
        %v7283 = vand.u32 %v7065, 4294901760
        %v7284 = vsub.f32 %v7065, %v7283
        %7285 = vmatpush.msra.mxu0 %v7284
        %v7286 = vand.u32 %v7063, 4294901760
        %v7287 = vsub.f32 %v7063, %v7286
        %7288 = vmatpush.msra.mxu0 %v7287
        %v7289 = vand.u32 %v7061, 4294901760
        %v7290 = vsub.f32 %v7061, %v7289
        %7291 = vmatpush.msra.mxu0 %v7290
        %v7292 = vand.u32 %v7059, 4294901760
        %v7293 = vsub.f32 %v7059, %v7292
        %7294 = vmatpush.msra.mxu0 %v7293
        %v7295 = vand.u32 %v7057, 4294901760
        %v7296 = vsub.f32 %v7057, %v7295
        %7297 = vmatmul.f32.gmra.mxu0 %v7296
        %v7298 = vpop.f32.mrf.mxu0
        %v7299 = vadd.f32 %v7245, %v7298
        %7300 = vdwg.mxu0
        %v7301 = vand.u32 %v7089, 4294901760
        %7302 = vmatpush.msra.mxu0 %v7301
        %v7303 = vand.u32 %v7087, 4294901760
        %7304 = vmatpush.msra.mxu0 %v7303
        %v7305 = vand.u32 %v7085, 4294901760
        %7306 = vmatpush.msra.mxu0 %v7305
        %v7307 = vand.u32 %v7083, 4294901760
        %7308 = vmatpush.msra.mxu0 %v7307
        %v7309 = vand.u32 %v7081, 4294901760
        %7310 = vmatpush.msra.mxu0 %v7309
        %v7311 = vand.u32 %v7079, 4294901760
        %7312 = vmatpush.msra.mxu0 %v7311
        %v7313 = vand.u32 %v7077, 4294901760
        %7314 = vmatpush.msra.mxu0 %v7313
        %v7315 = vand.u32 %v7075, 4294901760
        %7316 = vmatpush.msra.mxu0 %v7315
        %v7317 = vand.u32 %v7073, 4294901760
        %7318 = vmatpush.msra.mxu0 %v7317
        %v7319 = vand.u32 %v7071, 4294901760
        %7320 = vmatpush.msra.mxu0 %v7319
        %v7321 = vand.u32 %v7069, 4294901760
        %7322 = vmatpush.msra.mxu0 %v7321
        %v7323 = vand.u32 %v7067, 4294901760
        %7324 = vmatpush.msra.mxu0 %v7323
        %v7325 = vand.u32 %v7065, 4294901760
        %7326 = vmatpush.msra.mxu0 %v7325
        %v7327 = vand.u32 %v7063, 4294901760
        %7328 = vmatpush.msra.mxu0 %v7327
        %v7329 = vand.u32 %v7061, 4294901760
        %7330 = vmatpush.msra.mxu0 %v7329
        %v7331 = vand.u32 %v7059, 4294901760
        %7332 = vmatpush.msra.mxu0 %v7331
        %v7333 = vand.u32 %v7057, 4294901760
        %v7334 = vsub.f32 %v7057, %v7333
        %v7335 = vand.u32 %v7334, 4294901760
        %7336 = vmatmul.f32.gmra.mxu0 %v7335
        %v7337 = vpop.f32.mrf.mxu0
        %v7338 = vadd.f32 %v7299, %v7337
        %7339 = vdwg.mxu0
        %v7340 = vand.u32 %v7089, 4294901760
        %v7341 = vsub.f32 %v7089, %v7340
        %v7342 = vand.u32 %v7341, 4294901760
        %7343 = vmatpush.msra.mxu0 %v7342
        %v7344 = vand.u32 %v7087, 4294901760
        %v7345 = vsub.f32 %v7087, %v7344
        %v7346 = vand.u32 %v7345, 4294901760
        %7347 = vmatpush.msra.mxu0 %v7346
        %v7348 = vand.u32 %v7085, 4294901760
        %v7349 = vsub.f32 %v7085, %v7348
        %v7350 = vand.u32 %v7349, 4294901760
        %7351 = vmatpush.msra.mxu0 %v7350
        %v7352 = vand.u32 %v7083, 4294901760
        %v7353 = vsub.f32 %v7083, %v7352
        %v7354 = vand.u32 %v7353, 4294901760
        %7355 = vmatpush.msra.mxu0 %v7354
        %v7356 = vand.u32 %v7081, 4294901760
        %v7357 = vsub.f32 %v7081, %v7356
        %v7358 = vand.u32 %v7357, 4294901760
        %7359 = vmatpush.msra.mxu0 %v7358
        %v7360 = vand.u32 %v7079, 4294901760
        %v7361 = vsub.f32 %v7079, %v7360
        %v7362 = vand.u32 %v7361, 4294901760
        %7363 = vmatpush.msra.mxu0 %v7362
        %v7364 = vand.u32 %v7077, 4294901760
        %v7365 = vsub.f32 %v7077, %v7364
        %v7366 = vand.u32 %v7365, 4294901760
        %7367 = vmatpush.msra.mxu0 %v7366
        %v7368 = vand.u32 %v7075, 4294901760
        %v7369 = vsub.f32 %v7075, %v7368
        %v7370 = vand.u32 %v7369, 4294901760
        %7371 = vmatpush.msra.mxu0 %v7370
        %v7372 = vand.u32 %v7073, 4294901760
        %v7373 = vsub.f32 %v7073, %v7372
        %v7374 = vand.u32 %v7373, 4294901760
        %7375 = vmatpush.msra.mxu0 %v7374
        %v7376 = vand.u32 %v7071, 4294901760
        %v7377 = vsub.f32 %v7071, %v7376
        %v7378 = vand.u32 %v7377, 4294901760
        %7379 = vmatpush.msra.mxu0 %v7378
        %v7380 = vand.u32 %v7069, 4294901760
        %v7381 = vsub.f32 %v7069, %v7380
        %v7382 = vand.u32 %v7381, 4294901760
        %7383 = vmatpush.msra.mxu0 %v7382
        %v7384 = vand.u32 %v7067, 4294901760
        %v7385 = vsub.f32 %v7067, %v7384
        %v7386 = vand.u32 %v7385, 4294901760
        %7387 = vmatpush.msra.mxu0 %v7386
        %v7388 = vand.u32 %v7065, 4294901760
        %v7389 = vsub.f32 %v7065, %v7388
        %v7390 = vand.u32 %v7389, 4294901760
        %7391 = vmatpush.msra.mxu0 %v7390
        %v7392 = vand.u32 %v7063, 4294901760
        %v7393 = vsub.f32 %v7063, %v7392
        %v7394 = vand.u32 %v7393, 4294901760
        %7395 = vmatpush.msra.mxu0 %v7394
        %v7396 = vand.u32 %v7061, 4294901760
        %v7397 = vsub.f32 %v7061, %v7396
        %v7398 = vand.u32 %v7397, 4294901760
        %7399 = vmatpush.msra.mxu0 %v7398
        %v7400 = vand.u32 %v7059, 4294901760
        %v7401 = vsub.f32 %v7059, %v7400
        %v7402 = vand.u32 %v7401, 4294901760
        %7403 = vmatpush.msra.mxu0 %v7402
        %v7404 = vand.u32 %v7057, 4294901760
        %7405 = vmatmul.f32.gmra.mxu0 %v7404
        %v7406 = vpop.f32.mrf.mxu0
        %v7407 = vadd.f32 %v7338, %v7406
        %7408 = vdwg.mxu0
        %v7409 = vand.u32 %v7089, 4294901760
        %7410 = vmatpush.msra.mxu0 %v7409
        %v7411 = vand.u32 %v7087, 4294901760
        %7412 = vmatpush.msra.mxu0 %v7411
        %v7413 = vand.u32 %v7085, 4294901760
        %7414 = vmatpush.msra.mxu0 %v7413
        %v7415 = vand.u32 %v7083, 4294901760
        %7416 = vmatpush.msra.mxu0 %v7415
        %v7417 = vand.u32 %v7081, 4294901760
        %7418 = vmatpush.msra.mxu0 %v7417
        %v7419 = vand.u32 %v7079, 4294901760
        %7420 = vmatpush.msra.mxu0 %v7419
        %v7421 = vand.u32 %v7077, 4294901760
        %7422 = vmatpush.msra.mxu0 %v7421
        %v7423 = vand.u32 %v7075, 4294901760
        %7424 = vmatpush.msra.mxu0 %v7423
        %v7425 = vand.u32 %v7073, 4294901760
        %7426 = vmatpush.msra.mxu0 %v7425
        %v7427 = vand.u32 %v7071, 4294901760
        %7428 = vmatpush.msra.mxu0 %v7427
        %v7429 = vand.u32 %v7069, 4294901760
        %7430 = vmatpush.msra.mxu0 %v7429
        %v7431 = vand.u32 %v7067, 4294901760
        %7432 = vmatpush.msra.mxu0 %v7431
        %v7433 = vand.u32 %v7065, 4294901760
        %7434 = vmatpush.msra.mxu0 %v7433
        %v7435 = vand.u32 %v7063, 4294901760
        %7436 = vmatpush.msra.mxu0 %v7435
        %v7437 = vand.u32 %v7061, 4294901760
        %7438 = vmatpush.msra.mxu0 %v7437
        %v7439 = vand.u32 %v7059, 4294901760
        %7440 = vmatpush.msra.mxu0 %v7439
        %v7441 = vand.u32 %v7057, 4294901760
        %7442 = vmatmul.f32.gmra.mxu0 %v7441
        %v7443 = vpop.f32.mrf.mxu0
        %v7444 = vadd.f32 %v7407, %v7443
        %7445 = vdwg.mxu0
        %7446 = vmatpush.msra.mxu0 0.0
        %7447 = vmatpush.msra.mxu0 0.0
        %7448 = vmatpush.msra.mxu0 0.0
        %7449 = vmatpush.msra.mxu0 0.0
        %7450 = vmatpush.msra.mxu0 0.0
        %7451 = vmatpush.msra.mxu0 0.0
        %7452 = vmatpush.msra.mxu0 0.0
        %7453 = vmatpush.msra.mxu0 0.0
        %7454 = vmatpush.msra.mxu0 0.0
        %7455 = vmatpush.msra.mxu0 0.0
        %7456 = vmatpush.msra.mxu0 0.0
        %7457 = vmatpush.msra.mxu0 0.0
        %7458 = vmatpush.msra.mxu0 0.0
        %7459 = vmatpush.msra.mxu0 0.0
        %v7460 = vand.u32 %v7093, 4294901760
        %7461 = vmatpush.msra.mxu0 %v7460
        %v7462 = vand.u32 %v7091, 4294901760
        %7463 = vmatpush.msra.mxu0 %v7462
        %v7464 = vand.u32 %v7103, 4294901760
        %v7465 = vsub.f32 %v7103, %v7464
        %v7466 = vand.u32 %v7465, 4294901760
        %v7467 = vsub.f32 %v7465, %v7466
        %v7468 = vand.u32 %v7467, 4294901760
        %7469 = vmatmul.f32.gmra.mxu0 %v7468
        %v7470 = vpop.f32.mrf.mxu0
        %v7471 = vadd.f32 %v7444, %v7470
        %7472 = vdwg.mxu0
        %7473 = vmatpush.msra.mxu0 0.0
        %7474 = vmatpush.msra.mxu0 0.0
        %7475 = vmatpush.msra.mxu0 0.0
        %7476 = vmatpush.msra.mxu0 0.0
        %7477 = vmatpush.msra.mxu0 0.0
        %7478 = vmatpush.msra.mxu0 0.0
        %7479 = vmatpush.msra.mxu0 0.0
        %7480 = vmatpush.msra.mxu0 0.0
        %7481 = vmatpush.msra.mxu0 0.0
        %7482 = vmatpush.msra.mxu0 0.0
        %7483 = vmatpush.msra.mxu0 0.0
        %7484 = vmatpush.msra.mxu0 0.0
        %7485 = vmatpush.msra.mxu0 0.0
        %7486 = vmatpush.msra.mxu0 0.0
        %v7487 = vand.u32 %v7093, 4294901760
        %v7488 = vsub.f32 %v7093, %v7487
        %v7489 = vand.u32 %v7488, 4294901760
        %v7490 = vsub.f32 %v7488, %v7489
        %v7491 = vand.u32 %v7490, 4294901760
        %7492 = vmatpush.msra.mxu0 %v7491
        %v7493 = vand.u32 %v7091, 4294901760
        %v7494 = vsub.f32 %v7091, %v7493
        %v7495 = vand.u32 %v7494, 4294901760
        %v7496 = vsub.f32 %v7494, %v7495
        %v7497 = vand.u32 %v7496, 4294901760
        %7498 = vmatpush.msra.mxu0 %v7497
        %v7499 = vand.u32 %v7103, 4294901760
        %7500 = vmatmul.f32.gmra.mxu0 %v7499
        %v7501 = vpop.f32.mrf.mxu0
        %v7502 = vadd.f32 %v7471, %v7501
        %7503 = vdwg.mxu0
        %7504 = vmatpush.msra.mxu0 0.0
        %7505 = vmatpush.msra.mxu0 0.0
        %7506 = vmatpush.msra.mxu0 0.0
        %7507 = vmatpush.msra.mxu0 0.0
        %7508 = vmatpush.msra.mxu0 0.0
        %7509 = vmatpush.msra.mxu0 0.0
        %7510 = vmatpush.msra.mxu0 0.0
        %7511 = vmatpush.msra.mxu0 0.0
        %7512 = vmatpush.msra.mxu0 0.0
        %7513 = vmatpush.msra.mxu0 0.0
        %7514 = vmatpush.msra.mxu0 0.0
        %7515 = vmatpush.msra.mxu0 0.0
        %7516 = vmatpush.msra.mxu0 0.0
        %7517 = vmatpush.msra.mxu0 0.0
        %v7518 = vand.u32 %v7093, 4294901760
        %v7519 = vsub.f32 %v7093, %v7518
        %7520 = vmatpush.msra.mxu0 %v7519
        %v7521 = vand.u32 %v7091, 4294901760
        %v7522 = vsub.f32 %v7091, %v7521
        %7523 = vmatpush.msra.mxu0 %v7522
        %v7524 = vand.u32 %v7103, 4294901760
        %v7525 = vsub.f32 %v7103, %v7524
        %7526 = vmatmul.f32.gmra.mxu0 %v7525
        %v7527 = vpop.f32.mrf.mxu0
        %v7528 = vadd.f32 %v7502, %v7527
        %7529 = vdwg.mxu0
        %7530 = vmatpush.msra.mxu0 0.0
        %7531 = vmatpush.msra.mxu0 0.0
        %7532 = vmatpush.msra.mxu0 0.0
        %7533 = vmatpush.msra.mxu0 0.0
        %7534 = vmatpush.msra.mxu0 0.0
        %7535 = vmatpush.msra.mxu0 0.0
        %7536 = vmatpush.msra.mxu0 0.0
        %7537 = vmatpush.msra.mxu0 0.0
        %7538 = vmatpush.msra.mxu0 0.0
        %7539 = vmatpush.msra.mxu0 0.0
        %7540 = vmatpush.msra.mxu0 0.0
        %7541 = vmatpush.msra.mxu0 0.0
        %7542 = vmatpush.msra.mxu0 0.0
        %7543 = vmatpush.msra.mxu0 0.0
        %v7544 = vand.u32 %v7093, 4294901760
        %7545 = vmatpush.msra.mxu0 %v7544
        %v7546 = vand.u32 %v7091, 4294901760
        %7547 = vmatpush.msra.mxu0 %v7546
        %v7548 = vand.u32 %v7103, 4294901760
        %v7549 = vsub.f32 %v7103, %v7548
        %v7550 = vand.u32 %v7549, 4294901760
        %7551 = vmatmul.f32.gmra.mxu0 %v7550
        %v7552 = vpop.f32.mrf.mxu0
        %v7553 = vadd.f32 %v7528, %v7552
        %7554 = vdwg.mxu0
        %7555 = vmatpush.msra.mxu0 0.0
        %7556 = vmatpush.msra.mxu0 0.0
        %7557 = vmatpush.msra.mxu0 0.0
        %7558 = vmatpush.msra.mxu0 0.0
        %7559 = vmatpush.msra.mxu0 0.0
        %7560 = vmatpush.msra.mxu0 0.0
        %7561 = vmatpush.msra.mxu0 0.0
        %7562 = vmatpush.msra.mxu0 0.0
        %7563 = vmatpush.msra.mxu0 0.0
        %7564 = vmatpush.msra.mxu0 0.0
        %7565 = vmatpush.msra.mxu0 0.0
        %7566 = vmatpush.msra.mxu0 0.0
        %7567 = vmatpush.msra.mxu0 0.0
        %7568 = vmatpush.msra.mxu0 0.0
        %v7569 = vand.u32 %v7093, 4294901760
        %v7570 = vsub.f32 %v7093, %v7569
        %v7571 = vand.u32 %v7570, 4294901760
        %7572 = vmatpush.msra.mxu0 %v7571
        %v7573 = vand.u32 %v7091, 4294901760
        %v7574 = vsub.f32 %v7091, %v7573
        %v7575 = vand.u32 %v7574, 4294901760
        %7576 = vmatpush.msra.mxu0 %v7575
        %v7577 = vand.u32 %v7103, 4294901760
        %7578 = vmatmul.f32.gmra.mxu0 %v7577
        %v7579 = vpop.f32.mrf.mxu0
        %v7580 = vadd.f32 %v7553, %v7579
        %7581 = vdwg.mxu0
        %7582 = vmatpush.msra.mxu0 0.0
        %7583 = vmatpush.msra.mxu0 0.0
        %7584 = vmatpush.msra.mxu0 0.0
        %7585 = vmatpush.msra.mxu0 0.0
        %7586 = vmatpush.msra.mxu0 0.0
        %7587 = vmatpush.msra.mxu0 0.0
        %7588 = vmatpush.msra.mxu0 0.0
        %7589 = vmatpush.msra.mxu0 0.0
        %7590 = vmatpush.msra.mxu0 0.0
        %7591 = vmatpush.msra.mxu0 0.0
        %7592 = vmatpush.msra.mxu0 0.0
        %7593 = vmatpush.msra.mxu0 0.0
        %7594 = vmatpush.msra.mxu0 0.0
        %7595 = vmatpush.msra.mxu0 0.0
        %v7596 = vand.u32 %v7093, 4294901760
        %7597 = vmatpush.msra.mxu0 %v7596
        %v7598 = vand.u32 %v7091, 4294901760
        %7599 = vmatpush.msra.mxu0 %v7598
        %v7600 = vand.u32 %v7103, 4294901760
        %7601 = vmatmul.f32.gmra.mxu0 %v7600
        %v7602 = vpop.f32.mrf.mxu0
        %v7603 = vadd.f32 %v7580, %v7602
        %7604 = vdwg.mxu0
        %v7605 = vand.u32 %v7090, 4294901760
        %7606 = vmatpush.msra.mxu0 %v7605
        %v7607 = vand.u32 %v7088, 4294901760
        %7608 = vmatpush.msra.mxu0 %v7607
        %v7609 = vand.u32 %v7086, 4294901760
        %7610 = vmatpush.msra.mxu0 %v7609
        %v7611 = vand.u32 %v7084, 4294901760
        %7612 = vmatpush.msra.mxu0 %v7611
        %v7613 = vand.u32 %v7082, 4294901760
        %7614 = vmatpush.msra.mxu0 %v7613
        %v7615 = vand.u32 %v7080, 4294901760
        %7616 = vmatpush.msra.mxu0 %v7615
        %v7617 = vand.u32 %v7078, 4294901760
        %7618 = vmatpush.msra.mxu0 %v7617
        %v7619 = vand.u32 %v7076, 4294901760
        %7620 = vmatpush.msra.mxu0 %v7619
        %v7621 = vand.u32 %v7074, 4294901760
        %7622 = vmatpush.msra.mxu0 %v7621
        %v7623 = vand.u32 %v7072, 4294901760
        %7624 = vmatpush.msra.mxu0 %v7623
        %v7625 = vand.u32 %v7070, 4294901760
        %7626 = vmatpush.msra.mxu0 %v7625
        %v7627 = vand.u32 %v7068, 4294901760
        %7628 = vmatpush.msra.mxu0 %v7627
        %v7629 = vand.u32 %v7066, 4294901760
        %7630 = vmatpush.msra.mxu0 %v7629
        %v7631 = vand.u32 %v7064, 4294901760
        %7632 = vmatpush.msra.mxu0 %v7631
        %v7633 = vand.u32 %v7062, 4294901760
        %7634 = vmatpush.msra.mxu0 %v7633
        %v7635 = vand.u32 %v7060, 4294901760
        %7636 = vmatpush.msra.mxu0 %v7635
        %v7637 = vand.u32 %v7057, 4294901760
        %v7638 = vsub.f32 %v7057, %v7637
        %v7639 = vand.u32 %v7638, 4294901760
        %v7640 = vsub.f32 %v7638, %v7639
        %v7641 = vand.u32 %v7640, 4294901760
        %7642 = vmatmul.f32.gmra.mxu0 %v7641
        %v7643 = vpop.f32.mrf.mxu0
        %v7644 = vadd.f32 %v7100, %v7643
        %7645 = vdwg.mxu0
        %v7646 = vand.u32 %v7090, 4294901760
        %v7647 = vsub.f32 %v7090, %v7646
        %v7648 = vand.u32 %v7647, 4294901760
        %v7649 = vsub.f32 %v7647, %v7648
        %v7650 = vand.u32 %v7649, 4294901760
        %7651 = vmatpush.msra.mxu0 %v7650
        %v7652 = vand.u32 %v7088, 4294901760
        %v7653 = vsub.f32 %v7088, %v7652
        %v7654 = vand.u32 %v7653, 4294901760
        %v7655 = vsub.f32 %v7653, %v7654
        %v7656 = vand.u32 %v7655, 4294901760
        %7657 = vmatpush.msra.mxu0 %v7656
        %v7658 = vand.u32 %v7086, 4294901760
        %v7659 = vsub.f32 %v7086, %v7658
        %v7660 = vand.u32 %v7659, 4294901760
        %v7661 = vsub.f32 %v7659, %v7660
        %v7662 = vand.u32 %v7661, 4294901760
        %7663 = vmatpush.msra.mxu0 %v7662
        %v7664 = vand.u32 %v7084, 4294901760
        %v7665 = vsub.f32 %v7084, %v7664
        %v7666 = vand.u32 %v7665, 4294901760
        %v7667 = vsub.f32 %v7665, %v7666
        %v7668 = vand.u32 %v7667, 4294901760
        %7669 = vmatpush.msra.mxu0 %v7668
        %v7670 = vand.u32 %v7082, 4294901760
        %v7671 = vsub.f32 %v7082, %v7670
        %v7672 = vand.u32 %v7671, 4294901760
        %v7673 = vsub.f32 %v7671, %v7672
        %v7674 = vand.u32 %v7673, 4294901760
        %7675 = vmatpush.msra.mxu0 %v7674
        %v7676 = vand.u32 %v7080, 4294901760
        %v7677 = vsub.f32 %v7080, %v7676
        %v7678 = vand.u32 %v7677, 4294901760
        %v7679 = vsub.f32 %v7677, %v7678
        %v7680 = vand.u32 %v7679, 4294901760
        %7681 = vmatpush.msra.mxu0 %v7680
        %v7682 = vand.u32 %v7078, 4294901760
        %v7683 = vsub.f32 %v7078, %v7682
        %v7684 = vand.u32 %v7683, 4294901760
        %v7685 = vsub.f32 %v7683, %v7684
        %v7686 = vand.u32 %v7685, 4294901760
        %7687 = vmatpush.msra.mxu0 %v7686
        %v7688 = vand.u32 %v7076, 4294901760
        %v7689 = vsub.f32 %v7076, %v7688
        %v7690 = vand.u32 %v7689, 4294901760
        %v7691 = vsub.f32 %v7689, %v7690
        %v7692 = vand.u32 %v7691, 4294901760
        %7693 = vmatpush.msra.mxu0 %v7692
        %v7694 = vand.u32 %v7074, 4294901760
        %v7695 = vsub.f32 %v7074, %v7694
        %v7696 = vand.u32 %v7695, 4294901760
        %v7697 = vsub.f32 %v7695, %v7696
        %v7698 = vand.u32 %v7697, 4294901760
        %7699 = vmatpush.msra.mxu0 %v7698
        %v7700 = vand.u32 %v7072, 4294901760
        %v7701 = vsub.f32 %v7072, %v7700
        %v7702 = vand.u32 %v7701, 4294901760
        %v7703 = vsub.f32 %v7701, %v7702
        %v7704 = vand.u32 %v7703, 4294901760
        %7705 = vmatpush.msra.mxu0 %v7704
        %v7706 = vand.u32 %v7070, 4294901760
        %v7707 = vsub.f32 %v7070, %v7706
        %v7708 = vand.u32 %v7707, 4294901760
        %v7709 = vsub.f32 %v7707, %v7708
        %v7710 = vand.u32 %v7709, 4294901760
        %7711 = vmatpush.msra.mxu0 %v7710
        %v7712 = vand.u32 %v7068, 4294901760
        %v7713 = vsub.f32 %v7068, %v7712
        %v7714 = vand.u32 %v7713, 4294901760
        %v7715 = vsub.f32 %v7713, %v7714
        %v7716 = vand.u32 %v7715, 4294901760
        %7717 = vmatpush.msra.mxu0 %v7716
        %v7718 = vand.u32 %v7066, 4294901760
        %v7719 = vsub.f32 %v7066, %v7718
        %v7720 = vand.u32 %v7719, 4294901760
        %v7721 = vsub.f32 %v7719, %v7720
        %v7722 = vand.u32 %v7721, 4294901760
        %7723 = vmatpush.msra.mxu0 %v7722
        %v7724 = vand.u32 %v7064, 4294901760
        %v7725 = vsub.f32 %v7064, %v7724
        %v7726 = vand.u32 %v7725, 4294901760
        %v7727 = vsub.f32 %v7725, %v7726
        %v7728 = vand.u32 %v7727, 4294901760
        %7729 = vmatpush.msra.mxu0 %v7728
        %v7730 = vand.u32 %v7062, 4294901760
        %v7731 = vsub.f32 %v7062, %v7730
        %v7732 = vand.u32 %v7731, 4294901760
        %v7733 = vsub.f32 %v7731, %v7732
        %v7734 = vand.u32 %v7733, 4294901760
        %7735 = vmatpush.msra.mxu0 %v7734
        %v7736 = vand.u32 %v7060, 4294901760
        %v7737 = vsub.f32 %v7060, %v7736
        %v7738 = vand.u32 %v7737, 4294901760
        %v7739 = vsub.f32 %v7737, %v7738
        %v7740 = vand.u32 %v7739, 4294901760
        %7741 = vmatpush.msra.mxu0 %v7740
        %v7742 = vand.u32 %v7057, 4294901760
        %7743 = vmatmul.f32.gmra.mxu0 %v7742
        %v7744 = vpop.f32.mrf.mxu0
        %v7745 = vadd.f32 %v7644, %v7744
        %7746 = vdwg.mxu0
        %v7747 = vand.u32 %v7090, 4294901760
        %v7748 = vsub.f32 %v7090, %v7747
        %7749 = vmatpush.msra.mxu0 %v7748
        %v7750 = vand.u32 %v7088, 4294901760
        %v7751 = vsub.f32 %v7088, %v7750
        %7752 = vmatpush.msra.mxu0 %v7751
        %v7753 = vand.u32 %v7086, 4294901760
        %v7754 = vsub.f32 %v7086, %v7753
        %7755 = vmatpush.msra.mxu0 %v7754
        %v7756 = vand.u32 %v7084, 4294901760
        %v7757 = vsub.f32 %v7084, %v7756
        %7758 = vmatpush.msra.mxu0 %v7757
        %v7759 = vand.u32 %v7082, 4294901760
        %v7760 = vsub.f32 %v7082, %v7759
        %7761 = vmatpush.msra.mxu0 %v7760
        %v7762 = vand.u32 %v7080, 4294901760
        %v7763 = vsub.f32 %v7080, %v7762
        %7764 = vmatpush.msra.mxu0 %v7763
        %v7765 = vand.u32 %v7078, 4294901760
        %v7766 = vsub.f32 %v7078, %v7765
        %7767 = vmatpush.msra.mxu0 %v7766
        %v7768 = vand.u32 %v7076, 4294901760
        %v7769 = vsub.f32 %v7076, %v7768
        %7770 = vmatpush.msra.mxu0 %v7769
        %v7771 = vand.u32 %v7074, 4294901760
        %v7772 = vsub.f32 %v7074, %v7771
        %7773 = vmatpush.msra.mxu0 %v7772
        %v7774 = vand.u32 %v7072, 4294901760
        %v7775 = vsub.f32 %v7072, %v7774
        %7776 = vmatpush.msra.mxu0 %v7775
        %v7777 = vand.u32 %v7070, 4294901760
        %v7778 = vsub.f32 %v7070, %v7777
        %7779 = vmatpush.msra.mxu0 %v7778
        %v7780 = vand.u32 %v7068, 4294901760
        %v7781 = vsub.f32 %v7068, %v7780
        %7782 = vmatpush.msra.mxu0 %v7781
        %v7783 = vand.u32 %v7066, 4294901760
        %v7784 = vsub.f32 %v7066, %v7783
        %7785 = vmatpush.msra.mxu0 %v7784
        %v7786 = vand.u32 %v7064, 4294901760
        %v7787 = vsub.f32 %v7064, %v7786
        %7788 = vmatpush.msra.mxu0 %v7787
        %v7789 = vand.u32 %v7062, 4294901760
        %v7790 = vsub.f32 %v7062, %v7789
        %7791 = vmatpush.msra.mxu0 %v7790
        %v7792 = vand.u32 %v7060, 4294901760
        %v7793 = vsub.f32 %v7060, %v7792
        %7794 = vmatpush.msra.mxu0 %v7793
        %v7795 = vand.u32 %v7057, 4294901760
        %v7796 = vsub.f32 %v7057, %v7795
        %7797 = vmatmul.f32.gmra.mxu0 %v7796
        %v7798 = vpop.f32.mrf.mxu0
        %v7799 = vadd.f32 %v7745, %v7798
        %7800 = vdwg.mxu0
        %v7801 = vand.u32 %v7090, 4294901760
        %7802 = vmatpush.msra.mxu0 %v7801
        %v7803 = vand.u32 %v7088, 4294901760
        %7804 = vmatpush.msra.mxu0 %v7803
        %v7805 = vand.u32 %v7086, 4294901760
        %7806 = vmatpush.msra.mxu0 %v7805
        %v7807 = vand.u32 %v7084, 4294901760
        %7808 = vmatpush.msra.mxu0 %v7807
        %v7809 = vand.u32 %v7082, 4294901760
        %7810 = vmatpush.msra.mxu0 %v7809
        %v7811 = vand.u32 %v7080, 4294901760
        %7812 = vmatpush.msra.mxu0 %v7811
        %v7813 = vand.u32 %v7078, 4294901760
        %7814 = vmatpush.msra.mxu0 %v7813
        %v7815 = vand.u32 %v7076, 4294901760
        %7816 = vmatpush.msra.mxu0 %v7815
        %v7817 = vand.u32 %v7074, 4294901760
        %7818 = vmatpush.msra.mxu0 %v7817
        %v7819 = vand.u32 %v7072, 4294901760
        %7820 = vmatpush.msra.mxu0 %v7819
        %v7821 = vand.u32 %v7070, 4294901760
        %7822 = vmatpush.msra.mxu0 %v7821
        %v7823 = vand.u32 %v7068, 4294901760
        %7824 = vmatpush.msra.mxu0 %v7823
        %v7825 = vand.u32 %v7066, 4294901760
        %7826 = vmatpush.msra.mxu0 %v7825
        %v7827 = vand.u32 %v7064, 4294901760
        %7828 = vmatpush.msra.mxu0 %v7827
        %v7829 = vand.u32 %v7062, 4294901760
        %7830 = vmatpush.msra.mxu0 %v7829
        %v7831 = vand.u32 %v7060, 4294901760
        %7832 = vmatpush.msra.mxu0 %v7831
        %v7833 = vand.u32 %v7057, 4294901760
        %v7834 = vsub.f32 %v7057, %v7833
        %v7835 = vand.u32 %v7834, 4294901760
        %7836 = vmatmul.f32.gmra.mxu0 %v7835
        %v7837 = vpop.f32.mrf.mxu0
        %v7838 = vadd.f32 %v7799, %v7837
        %7839 = vdwg.mxu0
        %v7840 = vand.u32 %v7090, 4294901760
        %v7841 = vsub.f32 %v7090, %v7840
        %v7842 = vand.u32 %v7841, 4294901760
        %7843 = vmatpush.msra.mxu0 %v7842
        %v7844 = vand.u32 %v7088, 4294901760
        %v7845 = vsub.f32 %v7088, %v7844
        %v7846 = vand.u32 %v7845, 4294901760
        %7847 = vmatpush.msra.mxu0 %v7846
        %v7848 = vand.u32 %v7086, 4294901760
        %v7849 = vsub.f32 %v7086, %v7848
        %v7850 = vand.u32 %v7849, 4294901760
        %7851 = vmatpush.msra.mxu0 %v7850
        %v7852 = vand.u32 %v7084, 4294901760
        %v7853 = vsub.f32 %v7084, %v7852
        %v7854 = vand.u32 %v7853, 4294901760
        %7855 = vmatpush.msra.mxu0 %v7854
        %v7856 = vand.u32 %v7082, 4294901760
        %v7857 = vsub.f32 %v7082, %v7856
        %v7858 = vand.u32 %v7857, 4294901760
        %7859 = vmatpush.msra.mxu0 %v7858
        %v7860 = vand.u32 %v7080, 4294901760
        %v7861 = vsub.f32 %v7080, %v7860
        %v7862 = vand.u32 %v7861, 4294901760
        %7863 = vmatpush.msra.mxu0 %v7862
        %v7864 = vand.u32 %v7078, 4294901760
        %v7865 = vsub.f32 %v7078, %v7864
        %v7866 = vand.u32 %v7865, 4294901760
        %7867 = vmatpush.msra.mxu0 %v7866
        %v7868 = vand.u32 %v7076, 4294901760
        %v7869 = vsub.f32 %v7076, %v7868
        %v7870 = vand.u32 %v7869, 4294901760
        %7871 = vmatpush.msra.mxu0 %v7870
        %v7872 = vand.u32 %v7074, 4294901760
        %v7873 = vsub.f32 %v7074, %v7872
        %v7874 = vand.u32 %v7873, 4294901760
        %7875 = vmatpush.msra.mxu0 %v7874
        %v7876 = vand.u32 %v7072, 4294901760
        %v7877 = vsub.f32 %v7072, %v7876
        %v7878 = vand.u32 %v7877, 4294901760
        %7879 = vmatpush.msra.mxu0 %v7878
        %v7880 = vand.u32 %v7070, 4294901760
        %v7881 = vsub.f32 %v7070, %v7880
        %v7882 = vand.u32 %v7881, 4294901760
        %7883 = vmatpush.msra.mxu0 %v7882
        %v7884 = vand.u32 %v7068, 4294901760
        %v7885 = vsub.f32 %v7068, %v7884
        %v7886 = vand.u32 %v7885, 4294901760
        %7887 = vmatpush.msra.mxu0 %v7886
        %v7888 = vand.u32 %v7066, 4294901760
        %v7889 = vsub.f32 %v7066, %v7888
        %v7890 = vand.u32 %v7889, 4294901760
        %7891 = vmatpush.msra.mxu0 %v7890
        %v7892 = vand.u32 %v7064, 4294901760
        %v7893 = vsub.f32 %v7064, %v7892
        %v7894 = vand.u32 %v7893, 4294901760
        %7895 = vmatpush.msra.mxu0 %v7894
        %v7896 = vand.u32 %v7062, 4294901760
        %v7897 = vsub.f32 %v7062, %v7896
        %v7898 = vand.u32 %v7897, 4294901760
        %7899 = vmatpush.msra.mxu0 %v7898
        %v7900 = vand.u32 %v7060, 4294901760
        %v7901 = vsub.f32 %v7060, %v7900
        %v7902 = vand.u32 %v7901, 4294901760
        %7903 = vmatpush.msra.mxu0 %v7902
        %v7904 = vand.u32 %v7057, 4294901760
        %7905 = vmatmul.f32.gmra.mxu0 %v7904
        %v7906 = vpop.f32.mrf.mxu0
        %v7907 = vadd.f32 %v7838, %v7906
        %7908 = vdwg.mxu0
        %v7909 = vand.u32 %v7090, 4294901760
        %7910 = vmatpush.msra.mxu0 %v7909
        %v7911 = vand.u32 %v7088, 4294901760
        %7912 = vmatpush.msra.mxu0 %v7911
        %v7913 = vand.u32 %v7086, 4294901760
        %7914 = vmatpush.msra.mxu0 %v7913
        %v7915 = vand.u32 %v7084, 4294901760
        %7916 = vmatpush.msra.mxu0 %v7915
        %v7917 = vand.u32 %v7082, 4294901760
        %7918 = vmatpush.msra.mxu0 %v7917
        %v7919 = vand.u32 %v7080, 4294901760
        %7920 = vmatpush.msra.mxu0 %v7919
        %v7921 = vand.u32 %v7078, 4294901760
        %7922 = vmatpush.msra.mxu0 %v7921
        %v7923 = vand.u32 %v7076, 4294901760
        %7924 = vmatpush.msra.mxu0 %v7923
        %v7925 = vand.u32 %v7074, 4294901760
        %7926 = vmatpush.msra.mxu0 %v7925
        %v7927 = vand.u32 %v7072, 4294901760
        %7928 = vmatpush.msra.mxu0 %v7927
        %v7929 = vand.u32 %v7070, 4294901760
        %7930 = vmatpush.msra.mxu0 %v7929
        %v7931 = vand.u32 %v7068, 4294901760
        %7932 = vmatpush.msra.mxu0 %v7931
        %v7933 = vand.u32 %v7066, 4294901760
        %7934 = vmatpush.msra.mxu0 %v7933
        %v7935 = vand.u32 %v7064, 4294901760
        %7936 = vmatpush.msra.mxu0 %v7935
        %v7937 = vand.u32 %v7062, 4294901760
        %7938 = vmatpush.msra.mxu0 %v7937
        %v7939 = vand.u32 %v7060, 4294901760
        %7940 = vmatpush.msra.mxu0 %v7939
        %v7941 = vand.u32 %v7057, 4294901760
        %7942 = vmatmul.f32.gmra.mxu0 %v7941
        %v7943 = vpop.f32.mrf.mxu0
        %v7944 = vadd.f32 %v7907, %v7943
        %7945 = vdwg.mxu0
        %7946 = vmatpush.msra.mxu0 0.0
        %7947 = vmatpush.msra.mxu0 0.0
        %7948 = vmatpush.msra.mxu0 0.0
        %7949 = vmatpush.msra.mxu0 0.0
        %7950 = vmatpush.msra.mxu0 0.0
        %7951 = vmatpush.msra.mxu0 0.0
        %7952 = vmatpush.msra.mxu0 0.0
        %7953 = vmatpush.msra.mxu0 0.0
        %7954 = vmatpush.msra.mxu0 0.0
        %7955 = vmatpush.msra.mxu0 0.0
        %7956 = vmatpush.msra.mxu0 0.0
        %7957 = vmatpush.msra.mxu0 0.0
        %7958 = vmatpush.msra.mxu0 0.0
        %7959 = vmatpush.msra.mxu0 0.0
        %v7960 = vand.u32 %v7094, 4294901760
        %7961 = vmatpush.msra.mxu0 %v7960
        %v7962 = vand.u32 %v7092, 4294901760
        %7963 = vmatpush.msra.mxu0 %v7962
        %v7964 = vand.u32 %v7103, 4294901760
        %v7965 = vsub.f32 %v7103, %v7964
        %v7966 = vand.u32 %v7965, 4294901760
        %v7967 = vsub.f32 %v7965, %v7966
        %v7968 = vand.u32 %v7967, 4294901760
        %7969 = vmatmul.f32.gmra.mxu0 %v7968
        %v7970 = vpop.f32.mrf.mxu0
        %v7971 = vadd.f32 %v7944, %v7970
        %7972 = vdwg.mxu0
        %7973 = vmatpush.msra.mxu0 0.0
        %7974 = vmatpush.msra.mxu0 0.0
        %7975 = vmatpush.msra.mxu0 0.0
        %7976 = vmatpush.msra.mxu0 0.0
        %7977 = vmatpush.msra.mxu0 0.0
        %7978 = vmatpush.msra.mxu0 0.0
        %7979 = vmatpush.msra.mxu0 0.0
        %7980 = vmatpush.msra.mxu0 0.0
        %7981 = vmatpush.msra.mxu0 0.0
        %7982 = vmatpush.msra.mxu0 0.0
        %7983 = vmatpush.msra.mxu0 0.0
        %7984 = vmatpush.msra.mxu0 0.0
        %7985 = vmatpush.msra.mxu0 0.0
        %7986 = vmatpush.msra.mxu0 0.0
        %v7987 = vand.u32 %v7094, 4294901760
        %v7988 = vsub.f32 %v7094, %v7987
        %v7989 = vand.u32 %v7988, 4294901760
        %v7990 = vsub.f32 %v7988, %v7989
        %v7991 = vand.u32 %v7990, 4294901760
        %7992 = vmatpush.msra.mxu0 %v7991
        %v7993 = vand.u32 %v7092, 4294901760
        %v7994 = vsub.f32 %v7092, %v7993
        %v7995 = vand.u32 %v7994, 4294901760
        %v7996 = vsub.f32 %v7994, %v7995
        %v7997 = vand.u32 %v7996, 4294901760
        %7998 = vmatpush.msra.mxu0 %v7997
        %v7999 = vand.u32 %v7103, 4294901760
        %8000 = vmatmul.f32.gmra.mxu0 %v7999
        %v8001 = vpop.f32.mrf.mxu0
        %v8002 = vadd.f32 %v7971, %v8001
        %8003 = vdwg.mxu0
        %8004 = vmatpush.msra.mxu0 0.0
        %8005 = vmatpush.msra.mxu0 0.0
        %8006 = vmatpush.msra.mxu0 0.0
        %8007 = vmatpush.msra.mxu0 0.0
        %8008 = vmatpush.msra.mxu0 0.0
        %8009 = vmatpush.msra.mxu0 0.0
        %8010 = vmatpush.msra.mxu0 0.0
        %8011 = vmatpush.msra.mxu0 0.0
        %8012 = vmatpush.msra.mxu0 0.0
        %8013 = vmatpush.msra.mxu0 0.0
        %8014 = vmatpush.msra.mxu0 0.0
        %8015 = vmatpush.msra.mxu0 0.0
        %8016 = vmatpush.msra.mxu0 0.0
        %8017 = vmatpush.msra.mxu0 0.0
        %v8018 = vand.u32 %v7094, 4294901760
        %v8019 = vsub.f32 %v7094, %v8018
        %8020 = vmatpush.msra.mxu0 %v8019
        %v8021 = vand.u32 %v7092, 4294901760
        %v8022 = vsub.f32 %v7092, %v8021
        %8023 = vmatpush.msra.mxu0 %v8022
        %v8024 = vand.u32 %v7103, 4294901760
        %v8025 = vsub.f32 %v7103, %v8024
        %8026 = vmatmul.f32.gmra.mxu0 %v8025
        %v8027 = vpop.f32.mrf.mxu0
        %v8028 = vadd.f32 %v8002, %v8027
        %8029 = vdwg.mxu0
        %8030 = vmatpush.msra.mxu0 0.0
        %8031 = vmatpush.msra.mxu0 0.0
        %8032 = vmatpush.msra.mxu0 0.0
        %8033 = vmatpush.msra.mxu0 0.0
        %8034 = vmatpush.msra.mxu0 0.0
        %8035 = vmatpush.msra.mxu0 0.0
        %8036 = vmatpush.msra.mxu0 0.0
        %8037 = vmatpush.msra.mxu0 0.0
        %8038 = vmatpush.msra.mxu0 0.0
        %8039 = vmatpush.msra.mxu0 0.0
        %8040 = vmatpush.msra.mxu0 0.0
        %8041 = vmatpush.msra.mxu0 0.0
        %8042 = vmatpush.msra.mxu0 0.0
        %8043 = vmatpush.msra.mxu0 0.0
        %v8044 = vand.u32 %v7094, 4294901760
        %8045 = vmatpush.msra.mxu0 %v8044
        %v8046 = vand.u32 %v7092, 4294901760
        %8047 = vmatpush.msra.mxu0 %v8046
        %v8048 = vand.u32 %v7103, 4294901760
        %v8049 = vsub.f32 %v7103, %v8048
        %v8050 = vand.u32 %v8049, 4294901760
        %8051 = vmatmul.f32.gmra.mxu0 %v8050
        %v8052 = vpop.f32.mrf.mxu0
        %v8053 = vadd.f32 %v8028, %v8052
        %8054 = vdwg.mxu0
        %8055 = vmatpush.msra.mxu0 0.0
        %8056 = vmatpush.msra.mxu0 0.0
        %8057 = vmatpush.msra.mxu0 0.0
        %8058 = vmatpush.msra.mxu0 0.0
        %8059 = vmatpush.msra.mxu0 0.0
        %8060 = vmatpush.msra.mxu0 0.0
        %8061 = vmatpush.msra.mxu0 0.0
        %8062 = vmatpush.msra.mxu0 0.0
        %8063 = vmatpush.msra.mxu0 0.0
        %8064 = vmatpush.msra.mxu0 0.0
        %8065 = vmatpush.msra.mxu0 0.0
        %8066 = vmatpush.msra.mxu0 0.0
        %8067 = vmatpush.msra.mxu0 0.0
        %8068 = vmatpush.msra.mxu0 0.0
        %v8069 = vand.u32 %v7094, 4294901760
        %v8070 = vsub.f32 %v7094, %v8069
        %v8071 = vand.u32 %v8070, 4294901760
        %8072 = vmatpush.msra.mxu0 %v8071
        %v8073 = vand.u32 %v7092, 4294901760
        %v8074 = vsub.f32 %v7092, %v8073
        %v8075 = vand.u32 %v8074, 4294901760
        %8076 = vmatpush.msra.mxu0 %v8075
        %v8077 = vand.u32 %v7103, 4294901760
        %8078 = vmatmul.f32.gmra.mxu0 %v8077
        %v8079 = vpop.f32.mrf.mxu0
        %v8080 = vadd.f32 %v8053, %v8079
        %8081 = vdwg.mxu0
        %8082 = vmatpush.msra.mxu0 0.0
        %8083 = vmatpush.msra.mxu0 0.0
        %8084 = vmatpush.msra.mxu0 0.0
        %8085 = vmatpush.msra.mxu0 0.0
        %8086 = vmatpush.msra.mxu0 0.0
        %8087 = vmatpush.msra.mxu0 0.0
        %8088 = vmatpush.msra.mxu0 0.0
        %8089 = vmatpush.msra.mxu0 0.0
        %8090 = vmatpush.msra.mxu0 0.0
        %8091 = vmatpush.msra.mxu0 0.0
        %8092 = vmatpush.msra.mxu0 0.0
        %8093 = vmatpush.msra.mxu0 0.0
        %8094 = vmatpush.msra.mxu0 0.0
        %8095 = vmatpush.msra.mxu0 0.0
        %v8096 = vand.u32 %v7094, 4294901760
        %8097 = vmatpush.msra.mxu0 %v8096
        %v8098 = vand.u32 %v7092, 4294901760
        %8099 = vmatpush.msra.mxu0 %v8098
        %v8100 = vand.u32 %v7103, 4294901760
        %8101 = vmatmul.f32.gmra.mxu0 %v8100
        %v8102 = vpop.f32.mrf.mxu0
        %v8103 = vadd.f32 %v8080, %v8102
        %8104 = vdwg.mxu0
        %v8107 = vrot.slane %v8103, 7
        %vm8108 = vcmask 1040384
        %v8109 = vsel %vm8108, %v7603, %v8107
        %v8111 = vlaneseq
        %vm8112 = vcmp.ge.s32.totalorder %v8111, 0
        %vm8113 = vcmp.lt.s32.totalorder %v8111, 256
        %vm8114 = vmand %vm8112, %vm8113
        %8115 = vst.msk [vmem:[%s229] sm:$0x3] %vm8114, %v8109
        %p8116 = scmp.lt.s32.totalorder %s17, 1
        %s8117 = scalar_select %p8116, %s17, 1
        %s8118 = smul.addr %s8117, 2
        %s8119 = scalar_lea.vmem %s4, %s8118
        // Predicated region
        $region45: #{shallow_network_forward.1} parent=35 // pred_check
          %p8120 = pneg %p124
        $region46: #{shallow_network_forward.1} parent=35 // pred_check_branch
          %8122 = sbr.rel (%p8120) target = $region48
        $region47: #{shallow_network_forward.1} parent=35 // pred_region
          _
        $region48: #{shallow_network_forward.1} parent=35 // pred_fallthru
          _
      $region36: #{shallow_network_forward.1} parent=5 // pred_fallthru
        _
      %p8123 = scmp.le.s32.totalorder 2, %s12
      // Predicated region
      $region49: #{shallow_network_forward.1} parent=5 // pred_check
        %p8124 = pneg %p8123
      $region50: #{shallow_network_forward.1} parent=5 // pred_check_branch
        %8126 = sbr.rel (%p8124) target = $region52
      $region51: #{shallow_network_forward.1} parent=5 // pred_region
        %s8127 = ssub.s32 %s12, 2
        // Predicated region
        $region53: #{shallow_network_forward.1} parent=51 // pred_check
          %p8128 = pneg %p130
        $region54: #{shallow_network_forward.1} parent=51 // pred_check_branch
          %8130 = sbr.rel (%p8128) target = $region56
        $region55: #{shallow_network_forward.1} parent=51 // pred_region
          %p8131 = scmp.lt.s32.totalorder %s18, 1
          %s8132 = scalar_select %p8131, %s18, 1
          %s8133 = smul.addr %s8132, 2
          %s8134 = scalar_lea.vmem %s4, %s8133
        $region56: #{shallow_network_forward.1} parent=51 // pred_fallthru
          _
      $region52: #{shallow_network_forward.1} parent=5 // pred_fallthru
        _
    $region6: #{shallow_network_forward.1} parent=1 // loop_footer
      %s16 = sadd.s32 1, %s12
    $region7: #{shallow_network_forward.1} parent=1 // loop_footer_branch
      %11 = sbr.rel target = $region3
    $region8: #{shallow_network_forward.1} parent=1 // loop_exit
      _
    %8135 = vsyncpa [#allocation4], 1
    %s8136 = scalar_lea.sflag [#allocation4], 1
    %8137 = vsyncpa %s8136, 1
    %8138 = vsyncpa [#allocation6], 1

</llo_original>
